<compile_context>
chip_gen: v7x
topology: tpu7x:2x2x1
jax: 0.10.0
libtpu: 0.0.40
codegen_flags: <defaults>
</compile_context>

<pallas_src>
import jax
import jax.numpy as jnp
from jax.experimental import pallas as pl
from jax.experimental.pallas import tpu as pltpu


# ---------------------------------------------------------------------------
# Pallas kernels
# ---------------------------------------------------------------------------

def _matmul_stats_kernel(x_ref, w_ref, y_ref, sum_ref, ssq_ref):
    # (tm, K)bf16 @ (K, C)bf16 -> (tm, C)f32 on the MXU, with fused
    # per-channel sum / sum-of-squares accumulators (BN batch statistics).
    @pl.when(pl.program_id(1) == 0)
    def _():
        sum_ref[...] = jnp.zeros_like(sum_ref)
        ssq_ref[...] = jnp.zeros_like(ssq_ref)

    y = jnp.dot(x_ref[...], w_ref[...], preferred_element_type=jnp.float32)
    y_ref[...] = y
    sum_ref[...] += jnp.sum(y, axis=0, keepdims=True)
    ssq_ref[...] += jnp.sum(y * y, axis=0, keepdims=True)


def _matmul_tanh_kernel(x_ref, w_ref, y_ref):
    # Final layer: matmul with tanh fused into the epilogue (EUP slot is free).
    y = jnp.dot(x_ref[...], w_ref[...], preferred_element_type=jnp.float32)
    y_ref[...] = jnp.tanh(y)


def _bn_relu_kernel(y_ref, scale_ref, shift_ref, o_ref):
    # Fused affine-normalize + ReLU, output cast to bf16 for the next matmul.
    o_ref[...] = jnp.maximum(
        y_ref[...] * scale_ref[...] + shift_ref[...], 0.0).astype(o_ref.dtype)


# ---------------------------------------------------------------------------
# Tiling helper (hardened)
# ---------------------------------------------------------------------------

def _choose_rows(m, cap):
    """Return (tile_rows, padded_rows).  cap must be a multiple of 8."""
    if m <= cap:
        return m, m                       # single full-extent block (always legal)
    tm = cap
    mp = ((m + tm - 1) // tm) * tm        # zero-pad M up to a multiple of tm
    return tm, mp


_VMEM_LIMIT = 32 * 1024 * 1024            # safe on v5e (128 MiB) .. v7x (64 MiB)


# ---------------------------------------------------------------------------
# Pallas wrappers
# ---------------------------------------------------------------------------

def pallas_matmul_stats(x, w, tm_cap=512):
    """x: (P, M, K) bf16, w: (P, K, C) bf16 -> (y (P,M,C) f32, sum, ssq (P,1,C) f32)."""
    P, M, K = x.shape
    C = w.shape[2]
    tm, Mp = _choose_rows(M, tm_cap)
    if Mp != M:
        x = jnp.pad(x, ((0, 0), (0, Mp - M), (0, 0)))   # zero rows -> 0 in stats
    y, s, ss = pl.pallas_call(
        _matmul_stats_kernel,
        out_shape=(jax.ShapeDtypeStruct((P, Mp, C), jnp.float32),
                   jax.ShapeDtypeStruct((P, 1, C), jnp.float32),
                   jax.ShapeDtypeStruct((P, 1, C), jnp.float32)),
        grid_spec=pltpu.PrefetchScalarGridSpec(
            num_scalar_prefetch=0,
            grid=(P, Mp // tm),
            in_specs=[pl.BlockSpec((None, tm, K), lambda p, i: (p, i, 0)),
                      pl.BlockSpec((None, K, C), lambda p, i: (p, 0, 0))],
            out_specs=[pl.BlockSpec((None, tm, C), lambda p, i: (p, i, 0)),
                       pl.BlockSpec((None, 1, C), lambda p, i: (p, 0, 0)),
                       pl.BlockSpec((None, 1, C), lambda p, i: (p, 0, 0))],
        ),
        compiler_params=pltpu.CompilerParams(
            dimension_semantics=("parallel", "arbitrary"),
            vmem_limit_bytes=_VMEM_LIMIT),
    )(x, w)
    if Mp != M:
        y = y[:, :M, :]
    return y, s, ss


def pallas_matmul_tanh(x, w, tm_cap=512):
    """x: (P, M, K) bf16, w: (P, K, C) bf16 -> tanh(x @ w) as (P, M, C) f32."""
    P, M, K = x.shape
    C = w.shape[2]
    tm, Mp = _choose_rows(M, tm_cap)
    if Mp != M:
        x = jnp.pad(x, ((0, 0), (0, Mp - M), (0, 0)))
    y = pl.pallas_call(
        _matmul_tanh_kernel,
        out_shape=jax.ShapeDtypeStruct((P, Mp, C), jnp.float32),
        grid_spec=pltpu.PrefetchScalarGridSpec(
            num_scalar_prefetch=0,
            grid=(P, Mp // tm),
            in_specs=[pl.BlockSpec((None, tm, K), lambda p, i: (p, i, 0)),
                      pl.BlockSpec((None, K, C), lambda p, i: (p, 0, 0))],
            out_specs=pl.BlockSpec((None, tm, C), lambda p, i: (p, i, 0)),
        ),
        compiler_params=pltpu.CompilerParams(
            dimension_semantics=("parallel", "parallel"),
            vmem_limit_bytes=_VMEM_LIMIT),
    )(x, w)
    if Mp != M:
        y = y[:, :M, :]
    return y


def pallas_bn_relu(y2, scale, shift, out_dtype=jnp.bfloat16, tm_cap=1024):
    """y2: (R, C) f32, per-channel scale/shift (C,) f32 -> relu(y*scale+shift) bf16."""
    R, C = y2.shape
    scale = scale.astype(jnp.float32)
    shift = shift.astype(jnp.float32)
    fold = 1
    # Lane-dense view: fold rows so the last dim is exactly 128 lanes.
    if C < 128 and 128 % C == 0 and (R * C) % 128 == 0:
        fold = 128 // C
        y2 = y2.reshape(R // fold, 128)
        scale = jnp.tile(scale, fold)
        shift = jnp.tile(shift, fold)
    Rf, Cf = y2.shape
    tm, Rp = _choose_rows(Rf, tm_cap)
    if Rp != Rf:
        y2 = jnp.pad(y2, ((0, Rp - Rf), (0, 0)))
    out = pl.pallas_call(
        _bn_relu_kernel,
        out_shape=jax.ShapeDtypeStruct((Rp, Cf), out_dtype),
        grid_spec=pltpu.PrefetchScalarGridSpec(
            num_scalar_prefetch=0,
            grid=(Rp // tm,),
            in_specs=[pl.BlockSpec((tm, Cf), lambda i: (i, 0)),
                      pl.BlockSpec((1, Cf), lambda i: (0, 0)),
                      pl.BlockSpec((1, Cf), lambda i: (0, 0))],
            out_specs=pl.BlockSpec((tm, Cf), lambda i: (i, 0)),
        ),
        compiler_params=pltpu.CompilerParams(
            dimension_semantics=("parallel",),
            vmem_limit_bytes=_VMEM_LIMIT),
    )(y2, scale.reshape(1, Cf), shift.reshape(1, Cf))
    if Rp != Rf:
        out = out[:Rf]
    if fold != 1:
        out = out.reshape(R, C)
    return out


# ---------------------------------------------------------------------------
# Polyphase ConvTranspose2d (k=4, s=2, p=1) glue
# ---------------------------------------------------------------------------

def _build_parity_patches(a_nhwc, w):
    """a_nhwc: (N, H, W, Cin) bf16, w: (Cin, Cout, 4, 4) f32.

    Returns patches (4, N*H*W, 4*Cin) bf16 and weights (4, 4*Cin, Cout) bf16,
    one matmul per output-parity class (oh%2, ow%2) with no zero rows.
    Output position (2a+ph, 2b+pw) uses xpad[a+ph+dh, b+pw+dw] with kernel tap
    (kh, kw) = (3-ph-2*dh, 3-pw-2*dw).
    """
    N, H, W_, Cin = a_nhwc.shape
    Cout = w.shape[1]
    xpad = jnp.zeros((N, H + 2, W_ + 2, Cin), a_nhwc.dtype)
    xpad = xpad.at[:, 1:H + 1, 1:W_ + 1, :].set(a_nhwc)
    patches, wmats = [], []
    for ph in range(2):
        for pw in range(2):
            taps = []
            for dh in range(2):
                for dw in range(2):
                    taps.append(xpad[:, ph + dh: ph + dh + H,
                                        pw + dw: pw + dw + W_, :])
            pat = jnp.stack(taps, axis=3)                    # (N,H,W,4,Cin)
            patches.append(pat.reshape(N * H * W_, 4 * Cin))
            wsub = jnp.stack(
                [jnp.stack([w[:, :, 3 - ph - 2 * dh, 3 - pw - 2 * dw]
                            for dw in range(2)], axis=2)
                 for dh in range(2)], axis=2)                # (Cin,Cout,dh,dw)
            wmats.append(wsub.transpose(2, 3, 0, 1).reshape(4 * Cin, Cout))
    P = jnp.stack(patches, axis=0)                           # bf16
    Wm = jnp.stack(wmats, axis=0).astype(jnp.bfloat16)
    return P, Wm


def _interleave_parity(y, N, H, W, C):
    """y: (4, N*H*W, C) [parity-major p=2*ph+pw] -> (N, 2H, 2W, C)."""
    y = y.reshape(2, 2, N, H, W, C)
    y = y.transpose(2, 3, 0, 4, 1, 5)          # (N, a, ph, b, pw, C)
    return y.reshape(N, 2 * H, 2 * W, C)


def _bn_affine(csum, cssq, count, gamma, beta, eps=1e-5):
    mean = csum / count
    var = jnp.maximum(cssq / count - mean * mean, 0.0)   # biased var (PyTorch BN fwd)
    scale = gamma / jnp.sqrt(var + eps)
    shift = beta - mean * scale
    return scale, shift


# ---------------------------------------------------------------------------
# Generator: parameters + forward
# ---------------------------------------------------------------------------

def init_generator_params(key, input_dim, im_chan, hidden_dim):
    dims = [input_dim, hidden_dim * 8, hidden_dim * 4,
            hidden_dim * 2, hidden_dim, im_chan]
    params = {"convs": [], "gammas": [], "betas": []}
    for li in range(5):
        key, sub = jax.random.split(key)
        cin, cout = dims[li], dims[li + 1]
        params["convs"].append(
            0.05 * jax.random.normal(sub, (cin, cout, 4, 4), jnp.float32))
        if li < 4:
            params["gammas"].append(jnp.ones((cout,), jnp.float32))
            params["betas"].append(jnp.zeros((cout,), jnp.float32))
    return params


def generator_forward(params, noise):
    # noise: (N, input_dim)  ==  PyTorch's noise.view(N, input_dim, 1, 1)
    N = noise.shape[0]

    # ---- layer 1: ConvT(k=4, s=1, p=0) on 1x1 input == pure matmul ----------
    w0 = params["convs"][0]                                  # (Cin, Cout, 4, 4)
    Cin0, Cout0 = w0.shape[0], w0.shape[1]
    x0 = noise.astype(jnp.bfloat16).reshape(1, N, Cin0)
    wm0 = w0.reshape(Cin0, Cout0 * 16).astype(jnp.bfloat16).reshape(1, Cin0, Cout0 * 16)
    y, s, ss = pallas_matmul_stats(x0, wm0)                  # cols = (co, kh, kw)
    y0 = y[0]                                                # (N, Cout0*16)
    csum = s[0, 0].reshape(Cout0, 16).sum(axis=1)
    cssq = ss[0, 0].reshape(Cout0, 16).sum(axis=1)
    scale, shift = _bn_affine(csum, cssq, float(N * 16),
                              params["gammas"][0], params["betas"][0])
    a = pallas_bn_relu(y0, jnp.repeat(scale, 16), jnp.repeat(shift, 16))
    a = a.reshape(N, Cout0, 4, 4).transpose(0, 2, 3, 1)      # NHWC bf16
    H = W = 4

    # ---- layers 2-4: polyphase ConvT(k=4, s=2, p=1) + fused BN stats --------
    for li in range(1, 4):
        w = params["convs"][li]
        Cout = w.shape[1]
        P, Wm = _build_parity_patches(a, w)
        y, s, ss = pallas_matmul_stats(P, Wm)                # (4, M, Cout)
        csum = s[:, 0, :].sum(axis=0)                        # combine parity partials
        cssq = ss[:, 0, :].sum(axis=0)
        scale, shift = _bn_affine(csum, cssq, float(4 * N * H * W),
                                  params["gammas"][li], params["betas"][li])
        yb = pallas_bn_relu(y.reshape(4 * N * H * W, Cout), scale, shift)
        a = _interleave_parity(yb.reshape(4, N * H * W, Cout), N, H, W, Cout)
        H, W = 2 * H, 2 * W

    # ---- layer 5: polyphase ConvT + fused tanh -------------------------------
    w = params["convs"][4]
    Cout = w.shape[1]
    P, Wm = _build_parity_patches(a, w)
    y = pallas_matmul_tanh(P, Wm)                            # (4, M, Cout) f32
    out = _interleave_parity(y, N, H, W, Cout)               # (N, 2H, 2W, Cout)
    return out.transpose(0, 3, 1, 2)                         # NCHW


# ---------------------------------------------------------------------------
# Pure-JAX f32 reference (independent formulation, for correctness check)
# ---------------------------------------------------------------------------

def _convT_ref(x, w, stride, pad):
    N, Cin, H, W = x.shape
    Cout, k = w.shape[1], w.shape[2]
    Hc, Wc = (H - 1) * stride + k, (W - 1) * stride + k
    y = jnp.zeros((N, Cout, Hc, Wc), jnp.float32)
    for kh in range(k):
        for kw in range(k):
            contrib = jnp.einsum('nchw,co->nohw', x, w[:, :, kh, kw])
            y = y.at[:, :, kh:kh + (H - 1) * stride + 1:stride,
                           kw:kw + (W - 1) * stride + 1:stride].add(contrib)
    OH = (H - 1) * stride - 2 * pad + k
    OW = (W - 1) * stride - 2 * pad + k
    return y[:, :, pad:pad + OH, pad:pad + OW]


def _bn_relu_ref(y, gamma, beta, eps=1e-5):
    mean = y.mean(axis=(0, 2, 3), keepdims=True)
    var = ((y - mean) ** 2).mean(axis=(0, 2, 3), keepdims=True)
    yn = ((y - mean) / jnp.sqrt(var + eps)) * gamma.reshape(1, -1, 1, 1) \
         + beta.reshape(1, -1, 1, 1)
    return jnp.maximum(yn, 0.0)


def generator_ref(params, noise):
    x = noise.reshape(noise.shape[0], -1, 1, 1).astype(jnp.float32)
    y = _convT_ref(x, params["convs"][0], 1, 0)
    y = _bn_relu_ref(y, params["gammas"][0], params["betas"][0])
    for li in range(1, 4):
        y = _convT_ref(y, params["convs"][li], 2, 1)
        y = _bn_relu_ref(y, params["gammas"][li], params["betas"][li])
    y = _convT_ref(y, params["convs"][4], 2, 1)
    return jnp.tanh(y)


# ---------------------------------------------------------------------------

if __name__ == "__main__":
    key = jax.random.PRNGKey(0)
    k_noise, k_params = jax.random.split(key)

    # Small config consistent with the module: Generator(input_dim=8,
    # im_chan=3, hidden_dim=16), batch=2 -> output (2, 3, 64, 64).
    N, input_dim, im_chan, hidden_dim = 2, 8, 3, 16
    noise = jax.random.normal(k_noise, (N, input_dim), jnp.float32)
    params = init_generator_params(k_params, input_dim, im_chan, hidden_dim)

    fwd = jax.jit(generator_forward)
    out = jax.block_until_ready(fwd(params, noise))
    assert out.shape == (N, im_chan, 64, 64), out.shape

    ref = jax.block_until_ready(generator_ref(params, noise))
    max_err = float(jnp.max(jnp.abs(out - ref)))
    assert max_err < 1e-1, f"max abs error too large: {max_err}"

    print("KERNEL_OK")
</pallas_src>

<mosaic_0001>
module attributes {stable_mosaic.version = 11 : i64} {
  func.func @_matmul_stats_kernel(%arg0: i32, %arg1: i32, %arg2: memref<1x2x8xbf16, #tpu.memory_space<vmem>>, %arg3: memref<1x8x2048xbf16, #tpu.memory_space<vmem>>, %arg4: memref<1x2x2048xf32, #tpu.memory_space<vmem>>, %arg5: memref<1x1x2048xf32, #tpu.memory_space<vmem>>, %arg6: memref<1x1x2048xf32, #tpu.memory_space<vmem>>) attributes {dimension_semantics = [#tpu.dimension_semantics<parallel>, #tpu.dimension_semantics<arbitrary>], iteration_bounds = array<i64: 1, 1>, scalar_prefetch = 0 : i64, scratch_operands = 0 : i64, tpu.core_type = #tpu.core_type<tc>, window_params = [{transform_indices = @transform_0, window_bounds = array<i64: 1, 2, 8>}, {transform_indices = @transform_1, window_bounds = array<i64: 1, 8, 2048>}, {transform_indices = @transform_2, window_bounds = array<i64: 1, 2, 2048>}, {transform_indices = @transform_3, window_bounds = array<i64: 1, 1, 2048>}, {transform_indices = @transform_4, window_bounds = array<i64: 1, 1, 2048>}]} {
    %c0_i32 = arith.constant 0 : i32
    %0 = arith.cmpi eq, %arg1, %c0_i32 : i32
    %1 = arith.extui %0 : i1 to i32
    %c0_i32_0 = arith.constant 0 : i32
    %2 = arith.cmpi ne, %1, %c0_i32_0 : i32
    scf.if %2 {
      %cst_23 = arith.constant 0.000000e+00 : f32
      %28 = vector.broadcast %cst_23 : f32 to vector<1x2048xf32>
      %c0_24 = arith.constant 0 : index
      %c0_25 = arith.constant 0 : index
      %c0_26 = arith.constant 0 : index
      %29 = vector.load %arg5[%c0_24, %c0_25, %c0_26] : memref<1x1x2048xf32, #tpu.memory_space<vmem>>, vector<1x1x2048xf32>
      %30 = vector.shape_cast %29 : vector<1x1x2048xf32> to vector<1x2048xf32>
      %31 = vector.shape_cast %28 : vector<1x2048xf32> to vector<1x1x2048xf32>
      tpu.vector_store %arg5[%c0_24, %c0_25, %c0_26], %31 {strides = array<i32>} : memref<1x1x2048xf32, #tpu.memory_space<vmem>>, vector<1x1x2048xf32>,
      %cst_27 = arith.constant 0.000000e+00 : f32
      %32 = vector.broadcast %cst_27 : f32 to vector<1x2048xf32>
      %c0_28 = arith.constant 0 : index
      %c0_29 = arith.constant 0 : index
      %c0_30 = arith.constant 0 : index
      %33 = vector.load %arg6[%c0_28, %c0_29, %c0_30] : memref<1x1x2048xf32, #tpu.memory_space<vmem>>, vector<1x1x2048xf32>
      %34 = vector.shape_cast %33 : vector<1x1x2048xf32> to vector<1x2048xf32>
      %35 = vector.shape_cast %32 : vector<1x2048xf32> to vector<1x1x2048xf32>
      tpu.vector_store %arg6[%c0_28, %c0_29, %c0_30], %35 {strides = array<i32>} : memref<1x1x2048xf32, #tpu.memory_space<vmem>>, vector<1x1x2048xf32>,
    } else {
    }
    %c0 = arith.constant 0 : index
    %c0_1 = arith.constant 0 : index
    %c0_2 = arith.constant 0 : index
    %3 = vector.load %arg2[%c0, %c0_1, %c0_2] : memref<1x2x8xbf16, #tpu.memory_space<vmem>>, vector<1x2x8xbf16>
    %4 = vector.shape_cast %3 : vector<1x2x8xbf16> to vector<2x8xbf16>
    %c0_3 = arith.constant 0 : index
    %c0_4 = arith.constant 0 : index
    %c0_5 = arith.constant 0 : index
    %5 = vector.load %arg3[%c0_3, %c0_4, %c0_5] : memref<1x8x2048xbf16, #tpu.memory_space<vmem>>, vector<1x8x2048xbf16>
    %6 = vector.shape_cast %5 : vector<1x8x2048xbf16> to vector<8x2048xbf16>
    %cst = arith.constant dense<0.000000e+00> : vector<2x2048xf32>
    %7 = tpu.matmul %4, %6, %cst {dimension_numbers = #tpu.dot_dimension_numbers<[1], [0], [0], [1], [0, 0, 1, 1], [], []>} : vector<2x8xbf16>, vector<8x2048xbf16>, vector<2x2048xf32> -> vector<2x2048xf32>
    %c0_6 = arith.constant 0 : index
    %c0_7 = arith.constant 0 : index
    %c0_8 = arith.constant 0 : index
    %8 = vector.load %arg4[%c0_6, %c0_7, %c0_8] : memref<1x2x2048xf32, #tpu.memory_space<vmem>>, vector<1x2x2048xf32>
    %9 = vector.shape_cast %8 : vector<1x2x2048xf32> to vector<2x2048xf32>
    %10 = vector.shape_cast %7 : vector<2x2048xf32> to vector<1x2x2048xf32>
    tpu.vector_store %arg4[%c0_6, %c0_7, %c0_8], %10 {strides = array<i32>} : memref<1x2x2048xf32, #tpu.memory_space<vmem>>, vector<1x2x2048xf32>,
    %c0_9 = arith.constant 0 : index
    %c0_10 = arith.constant 0 : index
    %c0_11 = arith.constant 0 : index
    %11 = vector.load %arg5[%c0_9, %c0_10, %c0_11] : memref<1x1x2048xf32, #tpu.memory_space<vmem>>, vector<1x1x2048xf32>
    %12 = vector.shape_cast %11 : vector<1x1x2048xf32> to vector<1x2048xf32>
    %cst_12 = arith.constant dense<0.000000e+00> : vector<2048xf32>
    %13 = vector.multi_reduction <add>, %7, %cst_12 [0] : vector<2x2048xf32> to vector<2048xf32>
    %14 = vector.shape_cast %13 : vector<2048xf32> to vector<1x2048xf32>
    %15 = arith.addf %12, %14 : vector<1x2048xf32>
    %c0_13 = arith.constant 0 : index
    %c0_14 = arith.constant 0 : index
    %c0_15 = arith.constant 0 : index
    %16 = vector.load %arg5[%c0_13, %c0_14, %c0_15] : memref<1x1x2048xf32, #tpu.memory_space<vmem>>, vector<1x1x2048xf32>
    %17 = vector.shape_cast %16 : vector<1x1x2048xf32> to vector<1x2048xf32>
    %18 = vector.shape_cast %15 : vector<1x2048xf32> to vector<1x1x2048xf32>
    tpu.vector_store %arg5[%c0_13, %c0_14, %c0_15], %18 {strides = array<i32>} : memref<1x1x2048xf32, #tpu.memory_space<vmem>>, vector<1x1x2048xf32>,
    %c0_16 = arith.constant 0 : index
    %c0_17 = arith.constant 0 : index
    %c0_18 = arith.constant 0 : index
    %19 = vector.load %arg6[%c0_16, %c0_17, %c0_18] : memref<1x1x2048xf32, #tpu.memory_space<vmem>>, vector<1x1x2048xf32>
    %20 = vector.shape_cast %19 : vector<1x1x2048xf32> to vector<1x2048xf32>
    %21 = arith.mulf %7, %7 : vector<2x2048xf32>
    %cst_19 = arith.constant dense<0.000000e+00> : vector<2048xf32>
    %22 = vector.multi_reduction <add>, %21, %cst_19 [0] : vector<2x2048xf32> to vector<2048xf32>
    %23 = vector.shape_cast %22 : vector<2048xf32> to vector<1x2048xf32>
    %24 = arith.addf %20, %23 : vector<1x2048xf32>
    %c0_20 = arith.constant 0 : index
    %c0_21 = arith.constant 0 : index
    %c0_22 = arith.constant 0 : index
    %25 = vector.load %arg6[%c0_20, %c0_21, %c0_22] : memref<1x1x2048xf32, #tpu.memory_space<vmem>>, vector<1x1x2048xf32>
    %26 = vector.shape_cast %25 : vector<1x1x2048xf32> to vector<1x2048xf32>
    %27 = vector.shape_cast %24 : vector<1x2048xf32> to vector<1x1x2048xf32>
    tpu.vector_store %arg6[%c0_20, %c0_21, %c0_22], %27 {strides = array<i32>} : memref<1x1x2048xf32, #tpu.memory_space<vmem>>, vector<1x1x2048xf32>,
    return
  }
  func.func @transform_0(%arg0: i32, %arg1: i32) -> (i32, i32, i32) {
    %c0_i32 = arith.constant 0 : i32
    %c0_i32_0 = arith.constant 0 : i32
    return %arg0, %arg1, %c0_i32 : i32, i32, i32
  }
  func.func @transform_1(%arg0: i32, %arg1: i32) -> (i32, i32, i32) {
    %c0_i32 = arith.constant 0 : i32
    %c0_i32_0 = arith.constant 0 : i32
    %c0_i32_1 = arith.constant 0 : i32
    return %arg0, %c0_i32, %c0_i32_0 : i32, i32, i32
  }
  func.func @transform_2(%arg0: i32, %arg1: i32) -> (i32, i32, i32) {
    %c0_i32 = arith.constant 0 : i32
    %c0_i32_0 = arith.constant 0 : i32
    return %arg0, %arg1, %c0_i32 : i32, i32, i32
  }
  func.func @transform_3(%arg0: i32, %arg1: i32) -> (i32, i32, i32) {
    %c0_i32 = arith.constant 0 : i32
    %c0_i32_0 = arith.constant 0 : i32
    %c0_i32_1 = arith.constant 0 : i32
    return %arg0, %c0_i32, %c0_i32_0 : i32, i32, i32
  }
  func.func @transform_4(%arg0: i32, %arg1: i32) -> (i32, i32, i32) {
    %c0_i32 = arith.constant 0 : i32
    %c0_i32_0 = arith.constant 0 : i32
    %c0_i32_1 = arith.constant 0 : i32
    return %arg0, %c0_i32, %c0_i32_0 : i32, i32, i32
  }
}

module attributes {stable_mosaic.version = 11 : i64} {
  func.func @_bn_relu_kernel(%arg0: i32, %arg1: memref<2x2048xf32, #tpu.memory_space<vmem>>, %arg2: memref<1x2048xf32, #tpu.memory_space<vmem>>, %arg3: memref<1x2048xf32, #tpu.memory_space<vmem>>, %arg4: memref<2x2048xbf16, #tpu.memory_space<vmem>>) attributes {dimension_semantics = [#tpu.dimension_semantics<parallel>], iteration_bounds = array<i64: 1>, scalar_prefetch = 0 : i64, scratch_operands = 0 : i64, tpu.core_type = #tpu.core_type<tc>, window_params = [{transform_indices = @transform_0, window_bounds = array<i64: 2, 2048>}, {pipeline_mode = #tpu.pipeline_mode<synchronous>, transform_indices = @transform_1, window_bounds = array<i64: 1, 2048>}, {pipeline_mode = #tpu.pipeline_mode<synchronous>, transform_indices = @transform_2, window_bounds = array<i64: 1, 2048>}, {transform_indices = @transform_3, window_bounds = array<i64: 2, 2048>}]} {
    %c0 = arith.constant 0 : index
    %c0_0 = arith.constant 0 : index
    %0 = vector.load %arg1[%c0, %c0_0] : memref<2x2048xf32, #tpu.memory_space<vmem>>, vector<2x2048xf32>
    %c0_1 = arith.constant 0 : index
    %c0_2 = arith.constant 0 : index
    %1 = vector.load %arg2[%c0_1, %c0_2] : memref<1x2048xf32, #tpu.memory_space<vmem>>, vector<1x2048xf32>
    %2 = vector.broadcast %1 : vector<1x2048xf32> to vector<2x2048xf32>
    %3 = arith.mulf %0, %2 : vector<2x2048xf32>
    %c0_3 = arith.constant 0 : index
    %c0_4 = arith.constant 0 : index
    %4 = vector.load %arg3[%c0_3, %c0_4] : memref<1x2048xf32, #tpu.memory_space<vmem>>, vector<1x2048xf32>
    %5 = vector.broadcast %4 : vector<1x2048xf32> to vector<2x2048xf32>
    %6 = arith.addf %3, %5 : vector<2x2048xf32>
    %cst = arith.constant 0.000000e+00 : f32
    %7 = vector.broadcast %cst : f32 to vector<2x2048xf32>
    %8 = arith.maximumf %6, %7 : vector<2x2048xf32>
    %9 = arith.truncf %8 : vector<2x2048xf32> to vector<2x2048xbf16>
    %c0_5 = arith.constant 0 : index
    %c0_6 = arith.constant 0 : index
    %10 = vector.load %arg4[%c0_5, %c0_6] : memref<2x2048xbf16, #tpu.memory_space<vmem>>, vector<2x2048xbf16>
    tpu.vector_store %arg4[%c0_5, %c0_6], %9 {strides = array<i32>} : memref<2x2048xbf16, #tpu.memory_space<vmem>>, vector<2x2048xbf16>,
    return
  }
  func.func @transform_0(%arg0: i32) -> (i32, i32) {
    %c0_i32 = arith.constant 0 : i32
    %c0_i32_0 = arith.constant 0 : i32
    return %arg0, %c0_i32 : i32, i32
  }
  func.func @transform_1(%arg0: i32) -> (i32, i32) {
    %c0_i32 = arith.constant 0 : i32
    %c0_i32_0 = arith.constant 0 : i32
    %c0_i32_1 = arith.constant 0 : i32
    return %c0_i32, %c0_i32_0 : i32, i32
  }
  func.func @transform_2(%arg0: i32) -> (i32, i32) {
    %c0_i32 = arith.constant 0 : i32
    %c0_i32_0 = arith.constant 0 : i32
    %c0_i32_1 = arith.constant 0 : i32
    return %c0_i32, %c0_i32_0 : i32, i32
  }
  func.func @transform_3(%arg0: i32) -> (i32, i32) {
    %c0_i32 = arith.constant 0 : i32
    %c0_i32_0 = arith.constant 0 : i32
    return %arg0, %c0_i32 : i32, i32
  }
}

module attributes {stable_mosaic.version = 11 : i64} {
  func.func @_matmul_stats_kernel(%arg0: i32, %arg1: i32, %arg2: memref<1x32x512xbf16, #tpu.memory_space<vmem>>, %arg3: memref<1x512x64xbf16, #tpu.memory_space<vmem>>, %arg4: memref<1x32x64xf32, #tpu.memory_space<vmem>>, %arg5: memref<1x1x64xf32, #tpu.memory_space<vmem>>, %arg6: memref<1x1x64xf32, #tpu.memory_space<vmem>>) attributes {dimension_semantics = [#tpu.dimension_semantics<parallel>, #tpu.dimension_semantics<arbitrary>], iteration_bounds = array<i64: 4, 1>, scalar_prefetch = 0 : i64, scratch_operands = 0 : i64, tpu.core_type = #tpu.core_type<tc>, window_params = [{transform_indices = @transform_0, window_bounds = array<i64: 1, 32, 512>}, {transform_indices = @transform_1, window_bounds = array<i64: 1, 512, 64>}, {transform_indices = @transform_2, window_bounds = array<i64: 1, 32, 64>}, {transform_indices = @transform_3, window_bounds = array<i64: 1, 1, 64>}, {transform_indices = @transform_4, window_bounds = array<i64: 1, 1, 64>}]} {
    %c0_i32 = arith.constant 0 : i32
    %0 = arith.cmpi eq, %arg1, %c0_i32 : i32
    %1 = arith.extui %0 : i1 to i32
    %c0_i32_0 = arith.constant 0 : i32
    %2 = arith.cmpi ne, %1, %c0_i32_0 : i32
    scf.if %2 {
      %cst_23 = arith.constant 0.000000e+00 : f32
      %28 = vector.broadcast %cst_23 : f32 to vector<1x64xf32>
      %c0_24 = arith.constant 0 : index
      %c0_25 = arith.constant 0 : index
      %c0_26 = arith.constant 0 : index
      %29 = vector.load %arg5[%c0_24, %c0_25, %c0_26] : memref<1x1x64xf32, #tpu.memory_space<vmem>>, vector<1x1x64xf32>
      %30 = vector.shape_cast %29 : vector<1x1x64xf32> to vector<1x64xf32>
      %31 = vector.shape_cast %28 : vector<1x64xf32> to vector<1x1x64xf32>
      tpu.vector_store %arg5[%c0_24, %c0_25, %c0_26], %31 {strides = array<i32>} : memref<1x1x64xf32, #tpu.memory_space<vmem>>, vector<1x1x64xf32>,
      %cst_27 = arith.constant 0.000000e+00 : f32
      %32 = vector.broadcast %cst_27 : f32 to vector<1x64xf32>
      %c0_28 = arith.constant 0 : index
      %c0_29 = arith.constant 0 : index
      %c0_30 = arith.constant 0 : index
      %33 = vector.load %arg6[%c0_28, %c0_29, %c0_30] : memref<1x1x64xf32, #tpu.memory_space<vmem>>, vector<1x1x64xf32>
      %34 = vector.shape_cast %33 : vector<1x1x64xf32> to vector<1x64xf32>
      %35 = vector.shape_cast %32 : vector<1x64xf32> to vector<1x1x64xf32>
      tpu.vector_store %arg6[%c0_28, %c0_29, %c0_30], %35 {strides = array<i32>} : memref<1x1x64xf32, #tpu.memory_space<vmem>>, vector<1x1x64xf32>,
    } else {
    }
    %c0 = arith.constant 0 : index
    %c0_1 = arith.constant 0 : index
    %c0_2 = arith.constant 0 : index
    %3 = vector.load %arg2[%c0, %c0_1, %c0_2] : memref<1x32x512xbf16, #tpu.memory_space<vmem>>, vector<1x32x512xbf16>
    %4 = vector.shape_cast %3 : vector<1x32x512xbf16> to vector<32x512xbf16>
    %c0_3 = arith.constant 0 : index
    %c0_4 = arith.constant 0 : index
    %c0_5 = arith.constant 0 : index
    %5 = vector.load %arg3[%c0_3, %c0_4, %c0_5] : memref<1x512x64xbf16, #tpu.memory_space<vmem>>, vector<1x512x64xbf16>
    %6 = vector.shape_cast %5 : vector<1x512x64xbf16> to vector<512x64xbf16>
    %cst = arith.constant dense<0.000000e+00> : vector<32x64xf32>
    %7 = tpu.matmul %4, %6, %cst {dimension_numbers = #tpu.dot_dimension_numbers<[1], [0], [0], [1], [0, 0, 1, 1], [], []>} : vector<32x512xbf16>, vector<512x64xbf16>, vector<32x64xf32> -> vector<32x64xf32>
    %c0_6 = arith.constant 0 : index
    %c0_7 = arith.constant 0 : index
    %c0_8 = arith.constant 0 : index
    %8 = vector.load %arg4[%c0_6, %c0_7, %c0_8] : memref<1x32x64xf32, #tpu.memory_space<vmem>>, vector<1x32x64xf32>
    %9 = vector.shape_cast %8 : vector<1x32x64xf32> to vector<32x64xf32>
    %10 = vector.shape_cast %7 : vector<32x64xf32> to vector<1x32x64xf32>
    tpu.vector_store %arg4[%c0_6, %c0_7, %c0_8], %10 {strides = array<i32>} : memref<1x32x64xf32, #tpu.memory_space<vmem>>, vector<1x32x64xf32>,
    %c0_9 = arith.constant 0 : index
    %c0_10 = arith.constant 0 : index
    %c0_11 = arith.constant 0 : index
    %11 = vector.load %arg5[%c0_9, %c0_10, %c0_11] : memref<1x1x64xf32, #tpu.memory_space<vmem>>, vector<1x1x64xf32>
    %12 = vector.shape_cast %11 : vector<1x1x64xf32> to vector<1x64xf32>
    %cst_12 = arith.constant dense<0.000000e+00> : vector<64xf32>
    %13 = vector.multi_reduction <add>, %7, %cst_12 [0] : vector<32x64xf32> to vector<64xf32>
    %14 = vector.shape_cast %13 : vector<64xf32> to vector<1x64xf32>
    %15 = arith.addf %12, %14 : vector<1x64xf32>
    %c0_13 = arith.constant 0 : index
    %c0_14 = arith.constant 0 : index
    %c0_15 = arith.constant 0 : index
    %16 = vector.load %arg5[%c0_13, %c0_14, %c0_15] : memref<1x1x64xf32, #tpu.memory_space<vmem>>, vector<1x1x64xf32>
    %17 = vector.shape_cast %16 : vector<1x1x64xf32> to vector<1x64xf32>
    %18 = vector.shape_cast %15 : vector<1x64xf32> to vector<1x1x64xf32>
    tpu.vector_store %arg5[%c0_13, %c0_14, %c0_15], %18 {strides = array<i32>} : memref<1x1x64xf32, #tpu.memory_space<vmem>>, vector<1x1x64xf32>,
    %c0_16 = arith.constant 0 : index
    %c0_17 = arith.constant 0 : index
    %c0_18 = arith.constant 0 : index
    %19 = vector.load %arg6[%c0_16, %c0_17, %c0_18] : memref<1x1x64xf32, #tpu.memory_space<vmem>>, vector<1x1x64xf32>
    %20 = vector.shape_cast %19 : vector<1x1x64xf32> to vector<1x64xf32>
    %21 = arith.mulf %7, %7 : vector<32x64xf32>
    %cst_19 = arith.constant dense<0.000000e+00> : vector<64xf32>
    %22 = vector.multi_reduction <add>, %21, %cst_19 [0] : vector<32x64xf32> to vector<64xf32>
    %23 = vector.shape_cast %22 : vector<64xf32> to vector<1x64xf32>
    %24 = arith.addf %20, %23 : vector<1x64xf32>
    %c0_20 = arith.constant 0 : index
    %c0_21 = arith.constant 0 : index
    %c0_22 = arith.constant 0 : index
    %25 = vector.load %arg6[%c0_20, %c0_21, %c0_22] : memref<1x1x64xf32, #tpu.memory_space<vmem>>, vector<1x1x64xf32>
    %26 = vector.shape_cast %25 : vector<1x1x64xf32> to vector<1x64xf32>
    %27 = vector.shape_cast %24 : vector<1x64xf32> to vector<1x1x64xf32>
    tpu.vector_store %arg6[%c0_20, %c0_21, %c0_22], %27 {strides = array<i32>} : memref<1x1x64xf32, #tpu.memory_space<vmem>>, vector<1x1x64xf32>,
    return
  }
  func.func @transform_0(%arg0: i32, %arg1: i32) -> (i32, i32, i32) {
    %c0_i32 = arith.constant 0 : i32
    %c0_i32_0 = arith.constant 0 : i32
    return %arg0, %arg1, %c0_i32 : i32, i32, i32
  }
  func.func @transform_1(%arg0: i32, %arg1: i32) -> (i32, i32, i32) {
    %c0_i32 = arith.constant 0 : i32
    %c0_i32_0 = arith.constant 0 : i32
    %c0_i32_1 = arith.constant 0 : i32
    return %arg0, %c0_i32, %c0_i32_0 : i32, i32, i32
  }
  func.func @transform_2(%arg0: i32, %arg1: i32) -> (i32, i32, i32) {
    %c0_i32 = arith.constant 0 : i32
    %c0_i32_0 = arith.constant 0 : i32
    return %arg0, %arg1, %c0_i32 : i32, i32, i32
  }
  func.func @transform_3(%arg0: i32, %arg1: i32) -> (i32, i32, i32) {
    %c0_i32 = arith.constant 0 : i32
    %c0_i32_0 = arith.constant 0 : i32
    %c0_i32_1 = arith.constant 0 : i32
    return %arg0, %c0_i32, %c0_i32_0 : i32, i32, i32
  }
  func.func @transform_4(%arg0: i32, %arg1: i32) -> (i32, i32, i32) {
    %c0_i32 = arith.constant 0 : i32
    %c0_i32_0 = arith.constant 0 : i32
    %c0_i32_1 = arith.constant 0 : i32
    return %arg0, %c0_i32, %c0_i32_0 : i32, i32, i32
  }
}

module attributes {stable_mosaic.version = 11 : i64} {
  func.func @_bn_relu_kernel(%arg0: i32, %arg1: memref<64x128xf32, #tpu.memory_space<vmem>>, %arg2: memref<1x128xf32, #tpu.memory_space<vmem>>, %arg3: memref<1x128xf32, #tpu.memory_space<vmem>>, %arg4: memref<64x128xbf16, #tpu.memory_space<vmem>>) attributes {dimension_semantics = [#tpu.dimension_semantics<parallel>], iteration_bounds = array<i64: 1>, scalar_prefetch = 0 : i64, scratch_operands = 0 : i64, tpu.core_type = #tpu.core_type<tc>, window_params = [{transform_indices = @transform_0, window_bounds = array<i64: 64, 128>}, {pipeline_mode = #tpu.pipeline_mode<synchronous>, transform_indices = @transform_1, window_bounds = array<i64: 1, 128>}, {pipeline_mode = #tpu.pipeline_mode<synchronous>, transform_indices = @transform_2, window_bounds = array<i64: 1, 128>}, {transform_indices = @transform_3, window_bounds = array<i64: 64, 128>}]} {
    %c0 = arith.constant 0 : index
    %c0_0 = arith.constant 0 : index
    %0 = vector.load %arg1[%c0, %c0_0] : memref<64x128xf32, #tpu.memory_space<vmem>>, vector<64x128xf32>
    %c0_1 = arith.constant 0 : index
    %c0_2 = arith.constant 0 : index
    %1 = vector.load %arg2[%c0_1, %c0_2] : memref<1x128xf32, #tpu.memory_space<vmem>>, vector<1x128xf32>
    %2 = vector.broadcast %1 : vector<1x128xf32> to vector<64x128xf32>
    %3 = arith.mulf %0, %2 : vector<64x128xf32>
    %c0_3 = arith.constant 0 : index
    %c0_4 = arith.constant 0 : index
    %4 = vector.load %arg3[%c0_3, %c0_4] : memref<1x128xf32, #tpu.memory_space<vmem>>, vector<1x128xf32>
    %5 = vector.broadcast %4 : vector<1x128xf32> to vector<64x128xf32>
    %6 = arith.addf %3, %5 : vector<64x128xf32>
    %cst = arith.constant 0.000000e+00 : f32
    %7 = vector.broadcast %cst : f32 to vector<64x128xf32>
    %8 = arith.maximumf %6, %7 : vector<64x128xf32>
    %9 = arith.truncf %8 : vector<64x128xf32> to vector<64x128xbf16>
    %c0_5 = arith.constant 0 : index
    %c0_6 = arith.constant 0 : index
    %10 = vector.load %arg4[%c0_5, %c0_6] : memref<64x128xbf16, #tpu.memory_space<vmem>>, vector<64x128xbf16>
    tpu.vector_store %arg4[%c0_5, %c0_6], %9 {strides = array<i32>} : memref<64x128xbf16, #tpu.memory_space<vmem>>, vector<64x128xbf16>,
    return
  }
  func.func @transform_0(%arg0: i32) -> (i32, i32) {
    %c0_i32 = arith.constant 0 : i32
    %c0_i32_0 = arith.constant 0 : i32
    return %arg0, %c0_i32 : i32, i32
  }
  func.func @transform_1(%arg0: i32) -> (i32, i32) {
    %c0_i32 = arith.constant 0 : i32
    %c0_i32_0 = arith.constant 0 : i32
    %c0_i32_1 = arith.constant 0 : i32
    return %c0_i32, %c0_i32_0 : i32, i32
  }
  func.func @transform_2(%arg0: i32) -> (i32, i32) {
    %c0_i32 = arith.constant 0 : i32
    %c0_i32_0 = arith.constant 0 : i32
    %c0_i32_1 = arith.constant 0 : i32
    return %c0_i32, %c0_i32_0 : i32, i32
  }
  func.func @transform_3(%arg0: i32) -> (i32, i32) {
    %c0_i32 = arith.constant 0 : i32
    %c0_i32_0 = arith.constant 0 : i32
    return %arg0, %c0_i32 : i32, i32
  }
}

module attributes {stable_mosaic.version = 11 : i64} {
  func.func @_matmul_stats_kernel(%arg0: i32, %arg1: i32, %arg2: memref<1x128x256xbf16, #tpu.memory_space<vmem>>, %arg3: memref<1x256x32xbf16, #tpu.memory_space<vmem>>, %arg4: memref<1x128x32xf32, #tpu.memory_space<vmem>>, %arg5: memref<1x1x32xf32, #tpu.memory_space<vmem>>, %arg6: memref<1x1x32xf32, #tpu.memory_space<vmem>>) attributes {dimension_semantics = [#tpu.dimension_semantics<parallel>, #tpu.dimension_semantics<arbitrary>], iteration_bounds = array<i64: 4, 1>, scalar_prefetch = 0 : i64, scratch_operands = 0 : i64, tpu.core_type = #tpu.core_type<tc>, window_params = [{transform_indices = @transform_0, window_bounds = array<i64: 1, 128, 256>}, {transform_indices = @transform_1, window_bounds = array<i64: 1, 256, 32>}, {transform_indices = @transform_2, window_bounds = array<i64: 1, 128, 32>}, {transform_indices = @transform_3, window_bounds = array<i64: 1, 1, 32>}, {transform_indices = @transform_4, window_bounds = array<i64: 1, 1, 32>}]} {
    %c0_i32 = arith.constant 0 : i32
    %0 = arith.cmpi eq, %arg1, %c0_i32 : i32
    %1 = arith.extui %0 : i1 to i32
    %c0_i32_0 = arith.constant 0 : i32
    %2 = arith.cmpi ne, %1, %c0_i32_0 : i32
    scf.if %2 {
      %cst_23 = arith.constant 0.000000e+00 : f32
      %28 = vector.broadcast %cst_23 : f32 to vector<1x32xf32>
      %c0_24 = arith.constant 0 : index
      %c0_25 = arith.constant 0 : index
      %c0_26 = arith.constant 0 : index
      %29 = vector.load %arg5[%c0_24, %c0_25, %c0_26] : memref<1x1x32xf32, #tpu.memory_space<vmem>>, vector<1x1x32xf32>
      %30 = vector.shape_cast %29 : vector<1x1x32xf32> to vector<1x32xf32>
      %31 = vector.shape_cast %28 : vector<1x32xf32> to vector<1x1x32xf32>
      tpu.vector_store %arg5[%c0_24, %c0_25, %c0_26], %31 {strides = array<i32>} : memref<1x1x32xf32, #tpu.memory_space<vmem>>, vector<1x1x32xf32>,
      %cst_27 = arith.constant 0.000000e+00 : f32
      %32 = vector.broadcast %cst_27 : f32 to vector<1x32xf32>
      %c0_28 = arith.constant 0 : index
      %c0_29 = arith.constant 0 : index
      %c0_30 = arith.constant 0 : index
      %33 = vector.load %arg6[%c0_28, %c0_29, %c0_30] : memref<1x1x32xf32, #tpu.memory_space<vmem>>, vector<1x1x32xf32>
      %34 = vector.shape_cast %33 : vector<1x1x32xf32> to vector<1x32xf32>
      %35 = vector.shape_cast %32 : vector<1x32xf32> to vector<1x1x32xf32>
      tpu.vector_store %arg6[%c0_28, %c0_29, %c0_30], %35 {strides = array<i32>} : memref<1x1x32xf32, #tpu.memory_space<vmem>>, vector<1x1x32xf32>,
    } else {
    }
    %c0 = arith.constant 0 : index
    %c0_1 = arith.constant 0 : index
    %c0_2 = arith.constant 0 : index
    %3 = vector.load %arg2[%c0, %c0_1, %c0_2] : memref<1x128x256xbf16, #tpu.memory_space<vmem>>, vector<1x128x256xbf16>
    %4 = vector.shape_cast %3 : vector<1x128x256xbf16> to vector<128x256xbf16>
    %c0_3 = arith.constant 0 : index
    %c0_4 = arith.constant 0 : index
    %c0_5 = arith.constant 0 : index
    %5 = vector.load %arg3[%c0_3, %c0_4, %c0_5] : memref<1x256x32xbf16, #tpu.memory_space<vmem>>, vector<1x256x32xbf16>
    %6 = vector.shape_cast %5 : vector<1x256x32xbf16> to vector<256x32xbf16>
    %cst = arith.constant dense<0.000000e+00> : vector<128x32xf32>
    %7 = tpu.matmul %4, %6, %cst {dimension_numbers = #tpu.dot_dimension_numbers<[1], [0], [0], [1], [0, 0, 1, 1], [], []>} : vector<128x256xbf16>, vector<256x32xbf16>, vector<128x32xf32> -> vector<128x32xf32>
    %c0_6 = arith.constant 0 : index
    %c0_7 = arith.constant 0 : index
    %c0_8 = arith.constant 0 : index
    %8 = vector.load %arg4[%c0_6, %c0_7, %c0_8] : memref<1x128x32xf32, #tpu.memory_space<vmem>>, vector<1x128x32xf32>
    %9 = vector.shape_cast %8 : vector<1x128x32xf32> to vector<128x32xf32>
    %10 = vector.shape_cast %7 : vector<128x32xf32> to vector<1x128x32xf32>
    tpu.vector_store %arg4[%c0_6, %c0_7, %c0_8], %10 {strides = array<i32>} : memref<1x128x32xf32, #tpu.memory_space<vmem>>, vector<1x128x32xf32>,
    %c0_9 = arith.constant 0 : index
    %c0_10 = arith.constant 0 : index
    %c0_11 = arith.constant 0 : index
    %11 = vector.load %arg5[%c0_9, %c0_10, %c0_11] : memref<1x1x32xf32, #tpu.memory_space<vmem>>, vector<1x1x32xf32>
    %12 = vector.shape_cast %11 : vector<1x1x32xf32> to vector<1x32xf32>
    %cst_12 = arith.constant dense<0.000000e+00> : vector<32xf32>
    %13 = vector.multi_reduction <add>, %7, %cst_12 [0] : vector<128x32xf32> to vector<32xf32>
    %14 = vector.shape_cast %13 : vector<32xf32> to vector<1x32xf32>
    %15 = arith.addf %12, %14 : vector<1x32xf32>
    %c0_13 = arith.constant 0 : index
    %c0_14 = arith.constant 0 : index
    %c0_15 = arith.constant 0 : index
    %16 = vector.load %arg5[%c0_13, %c0_14, %c0_15] : memref<1x1x32xf32, #tpu.memory_space<vmem>>, vector<1x1x32xf32>
    %17 = vector.shape_cast %16 : vector<1x1x32xf32> to vector<1x32xf32>
    %18 = vector.shape_cast %15 : vector<1x32xf32> to vector<1x1x32xf32>
    tpu.vector_store %arg5[%c0_13, %c0_14, %c0_15], %18 {strides = array<i32>} : memref<1x1x32xf32, #tpu.memory_space<vmem>>, vector<1x1x32xf32>,
    %c0_16 = arith.constant 0 : index
    %c0_17 = arith.constant 0 : index
    %c0_18 = arith.constant 0 : index
    %19 = vector.load %arg6[%c0_16, %c0_17, %c0_18] : memref<1x1x32xf32, #tpu.memory_space<vmem>>, vector<1x1x32xf32>
    %20 = vector.shape_cast %19 : vector<1x1x32xf32> to vector<1x32xf32>
    %21 = arith.mulf %7, %7 : vector<128x32xf32>
    %cst_19 = arith.constant dense<0.000000e+00> : vector<32xf32>
    %22 = vector.multi_reduction <add>, %21, %cst_19 [0] : vector<128x32xf32> to vector<32xf32>
    %23 = vector.shape_cast %22 : vector<32xf32> to vector<1x32xf32>
    %24 = arith.addf %20, %23 : vector<1x32xf32>
    %c0_20 = arith.constant 0 : index
    %c0_21 = arith.constant 0 : index
    %c0_22 = arith.constant 0 : index
    %25 = vector.load %arg6[%c0_20, %c0_21, %c0_22] : memref<1x1x32xf32, #tpu.memory_space<vmem>>, vector<1x1x32xf32>
    %26 = vector.shape_cast %25 : vector<1x1x32xf32> to vector<1x32xf32>
    %27 = vector.shape_cast %24 : vector<1x32xf32> to vector<1x1x32xf32>
    tpu.vector_store %arg6[%c0_20, %c0_21, %c0_22], %27 {strides = array<i32>} : memref<1x1x32xf32, #tpu.memory_space<vmem>>, vector<1x1x32xf32>,
    return
  }
  func.func @transform_0(%arg0: i32, %arg1: i32) -> (i32, i32, i32) {
    %c0_i32 = arith.constant 0 : i32
    %c0_i32_0 = arith.constant 0 : i32
    return %arg0, %arg1, %c0_i32 : i32, i32, i32
  }
  func.func @transform_1(%arg0: i32, %arg1: i32) -> (i32, i32, i32) {
    %c0_i32 = arith.constant 0 : i32
    %c0_i32_0 = arith.constant 0 : i32
    %c0_i32_1 = arith.constant 0 : i32
    return %arg0, %c0_i32, %c0_i32_0 : i32, i32, i32
  }
  func.func @transform_2(%arg0: i32, %arg1: i32) -> (i32, i32, i32) {
    %c0_i32 = arith.constant 0 : i32
    %c0_i32_0 = arith.constant 0 : i32
    return %arg0, %arg1, %c0_i32 : i32, i32, i32
  }
  func.func @transform_3(%arg0: i32, %arg1: i32) -> (i32, i32, i32) {
    %c0_i32 = arith.constant 0 : i32
    %c0_i32_0 = arith.constant 0 : i32
    %c0_i32_1 = arith.constant 0 : i32
    return %arg0, %c0_i32, %c0_i32_0 : i32, i32, i32
  }
  func.func @transform_4(%arg0: i32, %arg1: i32) -> (i32, i32, i32) {
    %c0_i32 = arith.constant 0 : i32
    %c0_i32_0 = arith.constant 0 : i32
    %c0_i32_1 = arith.constant 0 : i32
    return %arg0, %c0_i32, %c0_i32_0 : i32, i32, i32
  }
}

module attributes {stable_mosaic.version = 11 : i64} {
  func.func @_bn_relu_kernel(%arg0: i32, %arg1: memref<128x128xf32, #tpu.memory_space<vmem>>, %arg2: memref<1x128xf32, #tpu.memory_space<vmem>>, %arg3: memref<1x128xf32, #tpu.memory_space<vmem>>, %arg4: memref<128x128xbf16, #tpu.memory_space<vmem>>) attributes {dimension_semantics = [#tpu.dimension_semantics<parallel>], iteration_bounds = array<i64: 1>, scalar_prefetch = 0 : i64, scratch_operands = 0 : i64, tpu.core_type = #tpu.core_type<tc>, window_params = [{transform_indices = @transform_0, window_bounds = array<i64: 128, 128>}, {pipeline_mode = #tpu.pipeline_mode<synchronous>, transform_indices = @transform_1, window_bounds = array<i64: 1, 128>}, {pipeline_mode = #tpu.pipeline_mode<synchronous>, transform_indices = @transform_2, window_bounds = array<i64: 1, 128>}, {transform_indices = @transform_3, window_bounds = array<i64: 128, 128>}]} {
    %c0 = arith.constant 0 : index
    %c0_0 = arith.constant 0 : index
    %0 = vector.load %arg1[%c0, %c0_0] : memref<128x128xf32, #tpu.memory_space<vmem>>, vector<128x128xf32>
    %c0_1 = arith.constant 0 : index
    %c0_2 = arith.constant 0 : index
    %1 = vector.load %arg2[%c0_1, %c0_2] : memref<1x128xf32, #tpu.memory_space<vmem>>, vector<1x128xf32>
    %2 = vector.broadcast %1 : vector<1x128xf32> to vector<128x128xf32>
    %3 = arith.mulf %0, %2 : vector<128x128xf32>
    %c0_3 = arith.constant 0 : index
    %c0_4 = arith.constant 0 : index
    %4 = vector.load %arg3[%c0_3, %c0_4] : memref<1x128xf32, #tpu.memory_space<vmem>>, vector<1x128xf32>
    %5 = vector.broadcast %4 : vector<1x128xf32> to vector<128x128xf32>
    %6 = arith.addf %3, %5 : vector<128x128xf32>
    %cst = arith.constant 0.000000e+00 : f32
    %7 = vector.broadcast %cst : f32 to vector<128x128xf32>
    %8 = arith.maximumf %6, %7 : vector<128x128xf32>
    %9 = arith.truncf %8 : vector<128x128xf32> to vector<128x128xbf16>
    %c0_5 = arith.constant 0 : index
    %c0_6 = arith.constant 0 : index
    %10 = vector.load %arg4[%c0_5, %c0_6] : memref<128x128xbf16, #tpu.memory_space<vmem>>, vector<128x128xbf16>
    tpu.vector_store %arg4[%c0_5, %c0_6], %9 {strides = array<i32>} : memref<128x128xbf16, #tpu.memory_space<vmem>>, vector<128x128xbf16>,
    return
  }
  func.func @transform_0(%arg0: i32) -> (i32, i32) {
    %c0_i32 = arith.constant 0 : i32
    %c0_i32_0 = arith.constant 0 : i32
    return %arg0, %c0_i32 : i32, i32
  }
  func.func @transform_1(%arg0: i32) -> (i32, i32) {
    %c0_i32 = arith.constant 0 : i32
    %c0_i32_0 = arith.constant 0 : i32
    %c0_i32_1 = arith.constant 0 : i32
    return %c0_i32, %c0_i32_0 : i32, i32
  }
  func.func @transform_2(%arg0: i32) -> (i32, i32) {
    %c0_i32 = arith.constant 0 : i32
    %c0_i32_0 = arith.constant 0 : i32
    %c0_i32_1 = arith.constant 0 : i32
    return %c0_i32, %c0_i32_0 : i32, i32
  }
  func.func @transform_3(%arg0: i32) -> (i32, i32) {
    %c0_i32 = arith.constant 0 : i32
    %c0_i32_0 = arith.constant 0 : i32
    return %arg0, %c0_i32 : i32, i32
  }
}

module attributes {stable_mosaic.version = 11 : i64} {
  func.func @_matmul_stats_kernel(%arg0: i32, %arg1: i32, %arg2: memref<1x512x128xbf16, #tpu.memory_space<vmem>>, %arg3: memref<1x128x16xbf16, #tpu.memory_space<vmem>>, %arg4: memref<1x512x16xf32, #tpu.memory_space<vmem>>, %arg5: memref<1x1x16xf32, #tpu.memory_space<vmem>>, %arg6: memref<1x1x16xf32, #tpu.memory_space<vmem>>) attributes {dimension_semantics = [#tpu.dimension_semantics<parallel>, #tpu.dimension_semantics<arbitrary>], iteration_bounds = array<i64: 4, 1>, scalar_prefetch = 0 : i64, scratch_operands = 0 : i64, tpu.core_type = #tpu.core_type<tc>, window_params = [{transform_indices = @transform_0, window_bounds = array<i64: 1, 512, 128>}, {transform_indices = @transform_1, window_bounds = array<i64: 1, 128, 16>}, {transform_indices = @transform_2, window_bounds = array<i64: 1, 512, 16>}, {transform_indices = @transform_3, window_bounds = array<i64: 1, 1, 16>}, {transform_indices = @transform_4, window_bounds = array<i64: 1, 1, 16>}]} {
    %c0_i32 = arith.constant 0 : i32
    %0 = arith.cmpi eq, %arg1, %c0_i32 : i32
    %1 = arith.extui %0 : i1 to i32
    %c0_i32_0 = arith.constant 0 : i32
    %2 = arith.cmpi ne, %1, %c0_i32_0 : i32
    scf.if %2 {
      %cst_23 = arith.constant 0.000000e+00 : f32
      %28 = vector.broadcast %cst_23 : f32 to vector<1x16xf32>
      %c0_24 = arith.constant 0 : index
      %c0_25 = arith.constant 0 : index
      %c0_26 = arith.constant 0 : index
      %29 = vector.load %arg5[%c0_24, %c0_25, %c0_26] : memref<1x1x16xf32, #tpu.memory_space<vmem>>, vector<1x1x16xf32>
      %30 = vector.shape_cast %29 : vector<1x1x16xf32> to vector<1x16xf32>
      %31 = vector.shape_cast %28 : vector<1x16xf32> to vector<1x1x16xf32>
      tpu.vector_store %arg5[%c0_24, %c0_25, %c0_26], %31 {strides = array<i32>} : memref<1x1x16xf32, #tpu.memory_space<vmem>>, vector<1x1x16xf32>,
      %cst_27 = arith.constant 0.000000e+00 : f32
      %32 = vector.broadcast %cst_27 : f32 to vector<1x16xf32>
      %c0_28 = arith.constant 0 : index
      %c0_29 = arith.constant 0 : index
      %c0_30 = arith.constant 0 : index
      %33 = vector.load %arg6[%c0_28, %c0_29, %c0_30] : memref<1x1x16xf32, #tpu.memory_space<vmem>>, vector<1x1x16xf32>
      %34 = vector.shape_cast %33 : vector<1x1x16xf32> to vector<1x16xf32>
      %35 = vector.shape_cast %32 : vector<1x16xf32> to vector<1x1x16xf32>
      tpu.vector_store %arg6[%c0_28, %c0_29, %c0_30], %35 {strides = array<i32>} : memref<1x1x16xf32, #tpu.memory_space<vmem>>, vector<1x1x16xf32>,
    } else {
    }
    %c0 = arith.constant 0 : index
    %c0_1 = arith.constant 0 : index
    %c0_2 = arith.constant 0 : index
    %3 = vector.load %arg2[%c0, %c0_1, %c0_2] : memref<1x512x128xbf16, #tpu.memory_space<vmem>>, vector<1x512x128xbf16>
    %4 = vector.shape_cast %3 : vector<1x512x128xbf16> to vector<512x128xbf16>
    %c0_3 = arith.constant 0 : index
    %c0_4 = arith.constant 0 : index
    %c0_5 = arith.constant 0 : index
    %5 = vector.load %arg3[%c0_3, %c0_4, %c0_5] : memref<1x128x16xbf16, #tpu.memory_space<vmem>>, vector<1x128x16xbf16>
    %6 = vector.shape_cast %5 : vector<1x128x16xbf16> to vector<128x16xbf16>
    %cst = arith.constant dense<0.000000e+00> : vector<512x16xf32>
    %7 = tpu.matmul %4, %6, %cst {dimension_numbers = #tpu.dot_dimension_numbers<[1], [0], [0], [1], [0, 0, 1, 1], [], []>} : vector<512x128xbf16>, vector<128x16xbf16>, vector<512x16xf32> -> vector<512x16xf32>
    %c0_6 = arith.constant 0 : index
    %c0_7 = arith.constant 0 : index
    %c0_8 = arith.constant 0 : index
    %8 = vector.load %arg4[%c0_6, %c0_7, %c0_8] : memref<1x512x16xf32, #tpu.memory_space<vmem>>, vector<1x512x16xf32>
    %9 = vector.shape_cast %8 : vector<1x512x16xf32> to vector<512x16xf32>
    %10 = vector.shape_cast %7 : vector<512x16xf32> to vector<1x512x16xf32>
    tpu.vector_store %arg4[%c0_6, %c0_7, %c0_8], %10 {strides = array<i32>} : memref<1x512x16xf32, #tpu.memory_space<vmem>>, vector<1x512x16xf32>,
    %c0_9 = arith.constant 0 : index
    %c0_10 = arith.constant 0 : index
    %c0_11 = arith.constant 0 : index
    %11 = vector.load %arg5[%c0_9, %c0_10, %c0_11] : memref<1x1x16xf32, #tpu.memory_space<vmem>>, vector<1x1x16xf32>
    %12 = vector.shape_cast %11 : vector<1x1x16xf32> to vector<1x16xf32>
    %cst_12 = arith.constant dense<0.000000e+00> : vector<16xf32>
    %13 = vector.multi_reduction <add>, %7, %cst_12 [0] : vector<512x16xf32> to vector<16xf32>
    %14 = vector.shape_cast %13 : vector<16xf32> to vector<1x16xf32>
    %15 = arith.addf %12, %14 : vector<1x16xf32>
    %c0_13 = arith.constant 0 : index
    %c0_14 = arith.constant 0 : index
    %c0_15 = arith.constant 0 : index
    %16 = vector.load %arg5[%c0_13, %c0_14, %c0_15] : memref<1x1x16xf32, #tpu.memory_space<vmem>>, vector<1x1x16xf32>
    %17 = vector.shape_cast %16 : vector<1x1x16xf32> to vector<1x16xf32>
    %18 = vector.shape_cast %15 : vector<1x16xf32> to vector<1x1x16xf32>
    tpu.vector_store %arg5[%c0_13, %c0_14, %c0_15], %18 {strides = array<i32>} : memref<1x1x16xf32, #tpu.memory_space<vmem>>, vector<1x1x16xf32>,
    %c0_16 = arith.constant 0 : index
    %c0_17 = arith.constant 0 : index
    %c0_18 = arith.constant 0 : index
    %19 = vector.load %arg6[%c0_16, %c0_17, %c0_18] : memref<1x1x16xf32, #tpu.memory_space<vmem>>, vector<1x1x16xf32>
    %20 = vector.shape_cast %19 : vector<1x1x16xf32> to vector<1x16xf32>
    %21 = arith.mulf %7, %7 : vector<512x16xf32>
    %cst_19 = arith.constant dense<0.000000e+00> : vector<16xf32>
    %22 = vector.multi_reduction <add>, %21, %cst_19 [0] : vector<512x16xf32> to vector<16xf32>
    %23 = vector.shape_cast %22 : vector<16xf32> to vector<1x16xf32>
    %24 = arith.addf %20, %23 : vector<1x16xf32>
    %c0_20 = arith.constant 0 : index
    %c0_21 = arith.constant 0 : index
    %c0_22 = arith.constant 0 : index
    %25 = vector.load %arg6[%c0_20, %c0_21, %c0_22] : memref<1x1x16xf32, #tpu.memory_space<vmem>>, vector<1x1x16xf32>
    %26 = vector.shape_cast %25 : vector<1x1x16xf32> to vector<1x16xf32>
    %27 = vector.shape_cast %24 : vector<1x16xf32> to vector<1x1x16xf32>
    tpu.vector_store %arg6[%c0_20, %c0_21, %c0_22], %27 {strides = array<i32>} : memref<1x1x16xf32, #tpu.memory_space<vmem>>, vector<1x1x16xf32>,
    return
  }
  func.func @transform_0(%arg0: i32, %arg1: i32) -> (i32, i32, i32) {
    %c0_i32 = arith.constant 0 : i32
    %c0_i32_0 = arith.constant 0 : i32
    return %arg0, %arg1, %c0_i32 : i32, i32, i32
  }
  func.func @transform_1(%arg0: i32, %arg1: i32) -> (i32, i32, i32) {
    %c0_i32 = arith.constant 0 : i32
    %c0_i32_0 = arith.constant 0 : i32
    %c0_i32_1 = arith.constant 0 : i32
    return %arg0, %c0_i32, %c0_i32_0 : i32, i32, i32
  }
  func.func @transform_2(%arg0: i32, %arg1: i32) -> (i32, i32, i32) {
    %c0_i32 = arith.constant 0 : i32
    %c0_i32_0 = arith.constant 0 : i32
    return %arg0, %arg1, %c0_i32 : i32, i32, i32
  }
  func.func @transform_3(%arg0: i32, %arg1: i32) -> (i32, i32, i32) {
    %c0_i32 = arith.constant 0 : i32
    %c0_i32_0 = arith.constant 0 : i32
    %c0_i32_1 = arith.constant 0 : i32
    return %arg0, %c0_i32, %c0_i32_0 : i32, i32, i32
  }
  func.func @transform_4(%arg0: i32, %arg1: i32) -> (i32, i32, i32) {
    %c0_i32 = arith.constant 0 : i32
    %c0_i32_0 = arith.constant 0 : i32
    %c0_i32_1 = arith.constant 0 : i32
    return %arg0, %c0_i32, %c0_i32_0 : i32, i32, i32
  }
}

module attributes {stable_mosaic.version = 11 : i64} {
  func.func @_bn_relu_kernel(%arg0: i32, %arg1: memref<256x128xf32, #tpu.memory_space<vmem>>, %arg2: memref<1x128xf32, #tpu.memory_space<vmem>>, %arg3: memref<1x128xf32, #tpu.memory_space<vmem>>, %arg4: memref<256x128xbf16, #tpu.memory_space<vmem>>) attributes {dimension_semantics = [#tpu.dimension_semantics<parallel>], iteration_bounds = array<i64: 1>, scalar_prefetch = 0 : i64, scratch_operands = 0 : i64, tpu.core_type = #tpu.core_type<tc>, window_params = [{transform_indices = @transform_0, window_bounds = array<i64: 256, 128>}, {pipeline_mode = #tpu.pipeline_mode<synchronous>, transform_indices = @transform_1, window_bounds = array<i64: 1, 128>}, {pipeline_mode = #tpu.pipeline_mode<synchronous>, transform_indices = @transform_2, window_bounds = array<i64: 1, 128>}, {transform_indices = @transform_3, window_bounds = array<i64: 256, 128>}]} {
    %c0 = arith.constant 0 : index
    %c0_0 = arith.constant 0 : index
    %0 = vector.load %arg1[%c0, %c0_0] : memref<256x128xf32, #tpu.memory_space<vmem>>, vector<256x128xf32>
    %c0_1 = arith.constant 0 : index
    %c0_2 = arith.constant 0 : index
    %1 = vector.load %arg2[%c0_1, %c0_2] : memref<1x128xf32, #tpu.memory_space<vmem>>, vector<1x128xf32>
    %2 = vector.broadcast %1 : vector<1x128xf32> to vector<256x128xf32>
    %3 = arith.mulf %0, %2 : vector<256x128xf32>
    %c0_3 = arith.constant 0 : index
    %c0_4 = arith.constant 0 : index
    %4 = vector.load %arg3[%c0_3, %c0_4] : memref<1x128xf32, #tpu.memory_space<vmem>>, vector<1x128xf32>
    %5 = vector.broadcast %4 : vector<1x128xf32> to vector<256x128xf32>
    %6 = arith.addf %3, %5 : vector<256x128xf32>
    %cst = arith.constant 0.000000e+00 : f32
    %7 = vector.broadcast %cst : f32 to vector<256x128xf32>
    %8 = arith.maximumf %6, %7 : vector<256x128xf32>
    %9 = arith.truncf %8 : vector<256x128xf32> to vector<256x128xbf16>
    %c0_5 = arith.constant 0 : index
    %c0_6 = arith.constant 0 : index
    %10 = vector.load %arg4[%c0_5, %c0_6] : memref<256x128xbf16, #tpu.memory_space<vmem>>, vector<256x128xbf16>
    tpu.vector_store %arg4[%c0_5, %c0_6], %9 {strides = array<i32>} : memref<256x128xbf16, #tpu.memory_space<vmem>>, vector<256x128xbf16>,
    return
  }
  func.func @transform_0(%arg0: i32) -> (i32, i32) {
    %c0_i32 = arith.constant 0 : i32
    %c0_i32_0 = arith.constant 0 : i32
    return %arg0, %c0_i32 : i32, i32
  }
  func.func @transform_1(%arg0: i32) -> (i32, i32) {
    %c0_i32 = arith.constant 0 : i32
    %c0_i32_0 = arith.constant 0 : i32
    %c0_i32_1 = arith.constant 0 : i32
    return %c0_i32, %c0_i32_0 : i32, i32
  }
  func.func @transform_2(%arg0: i32) -> (i32, i32) {
    %c0_i32 = arith.constant 0 : i32
    %c0_i32_0 = arith.constant 0 : i32
    %c0_i32_1 = arith.constant 0 : i32
    return %c0_i32, %c0_i32_0 : i32, i32
  }
  func.func @transform_3(%arg0: i32) -> (i32, i32) {
    %c0_i32 = arith.constant 0 : i32
    %c0_i32_0 = arith.constant 0 : i32
    return %arg0, %c0_i32 : i32, i32
  }
}

module attributes {stable_mosaic.version = 11 : i64} {
  func.func @_matmul_tanh_kernel(%arg0: i32, %arg1: i32, %arg2: memref<1x512x64xbf16, #tpu.memory_space<vmem>>, %arg3: memref<1x64x3xbf16, #tpu.memory_space<vmem>>, %arg4: memref<1x512x3xf32, #tpu.memory_space<vmem>>) attributes {dimension_semantics = [#tpu.dimension_semantics<parallel>, #tpu.dimension_semantics<parallel>], iteration_bounds = array<i64: 4, 4>, scalar_prefetch = 0 : i64, scratch_operands = 0 : i64, tpu.core_type = #tpu.core_type<tc>, window_params = [{transform_indices = @transform_0, window_bounds = array<i64: 1, 512, 64>}, {transform_indices = @transform_1, window_bounds = array<i64: 1, 64, 3>}, {transform_indices = @transform_2, window_bounds = array<i64: 1, 512, 3>}]} {
    %c0 = arith.constant 0 : index
    %c0_0 = arith.constant 0 : index
    %c0_1 = arith.constant 0 : index
    %0 = vector.load %arg2[%c0, %c0_0, %c0_1] : memref<1x512x64xbf16, #tpu.memory_space<vmem>>, vector<1x512x64xbf16>
    %1 = vector.shape_cast %0 : vector<1x512x64xbf16> to vector<512x64xbf16>
    %c0_2 = arith.constant 0 : index
    %c0_3 = arith.constant 0 : index
    %c0_4 = arith.constant 0 : index
    %2 = vector.load %arg3[%c0_2, %c0_3, %c0_4] : memref<1x64x3xbf16, #tpu.memory_space<vmem>>, vector<1x64x3xbf16>
    %3 = vector.shape_cast %2 : vector<1x64x3xbf16> to vector<64x3xbf16>
    %cst = arith.constant dense<0.000000e+00> : vector<512x3xf32>
    %4 = tpu.matmul %1, %3, %cst {dimension_numbers = #tpu.dot_dimension_numbers<[1], [0], [0], [1], [0, 0, 1, 1], [], []>} : vector<512x64xbf16>, vector<64x3xbf16>, vector<512x3xf32> -> vector<512x3xf32>
    %5 = math.tanh %4 : vector<512x3xf32>
    %c0_5 = arith.constant 0 : index
    %c0_6 = arith.constant 0 : index
    %c0_7 = arith.constant 0 : index
    %6 = vector.load %arg4[%c0_5, %c0_6, %c0_7] : memref<1x512x3xf32, #tpu.memory_space<vmem>>, vector<1x512x3xf32>
    %7 = vector.shape_cast %6 : vector<1x512x3xf32> to vector<512x3xf32>
    %8 = vector.shape_cast %5 : vector<512x3xf32> to vector<1x512x3xf32>
    tpu.vector_store %arg4[%c0_5, %c0_6, %c0_7], %8 {strides = array<i32>} : memref<1x512x3xf32, #tpu.memory_space<vmem>>, vector<1x512x3xf32>,
    return
  }
  func.func @transform_0(%arg0: i32, %arg1: i32) -> (i32, i32, i32) {
    %c0_i32 = arith.constant 0 : i32
    %c0_i32_0 = arith.constant 0 : i32
    return %arg0, %arg1, %c0_i32 : i32, i32, i32
  }
  func.func @transform_1(%arg0: i32, %arg1: i32) -> (i32, i32, i32) {
    %c0_i32 = arith.constant 0 : i32
    %c0_i32_0 = arith.constant 0 : i32
    %c0_i32_1 = arith.constant 0 : i32
    return %arg0, %c0_i32, %c0_i32_0 : i32, i32, i32
  }
  func.func @transform_2(%arg0: i32, %arg1: i32) -> (i32, i32, i32) {
    %c0_i32 = arith.constant 0 : i32
    %c0_i32_0 = arith.constant 0 : i32
    return %arg0, %arg1, %c0_i32 : i32, i32, i32
  }
}

</mosaic_0001>

<llo_original>
// kernel: squeeze.74
$region0: #{squeeze.74}
  %s0 = inlined_call_operand.vmem [shape: f32[2048], index: 0, kind: input, shape index: {}]
  %s1 = inlined_call_operand.vmem [shape: f32[128,16], index: 1, kind: output, shape index: {}]
  %v2 = vld [vmem:[%s0] sm:$0xff]
  %vm3 = vcmask 130048
  %4 = vst.msk [vmem:[%s1] ss:$8 sm:$0xf] %vm3, %v2
  %5 = vst.msk [vmem:[%s1] ss:$8 sm:$0xf0] %vm3, %v2
  %s6 = scalar_lea.vmem %s0, 8
  %v7 = vld [vmem:[%s6] sm:$0xff]
  %vm8 = vcmask 130048
  %s9 = scalar_lea.vmem %s1, 64
  %10 = vst.msk [vmem:[%s9] ss:$8 sm:$0xf] %vm8, %v7
  %s11 = scalar_lea.vmem %s1, 64
  %12 = vst.msk [vmem:[%s11] ss:$8 sm:$0xf0] %vm8, %v7
  %v13 = vld [vmem:[%s0] sm:$0xff]
  %14 = vrot.lane.b32.xlu0 %v13, 112
  %v15 = vpop.permute.xlu0 %14
  %vm16 = vcmask 130048
  %s17 = scalar_lea.vmem %s1, 1
  %18 = vst.msk [vmem:[%s17] ss:$8 sm:$0xf] %vm16, %v15
  %s19 = scalar_lea.vmem %s1, 1
  %20 = vst.msk [vmem:[%s19] ss:$8 sm:$0xf0] %vm16, %v15
  %s21 = scalar_lea.vmem %s0, 8
  %v22 = vld [vmem:[%s21] sm:$0xff]
  %23 = vrot.lane.b32.xlu0 %v22, 112
  %v24 = vpop.permute.xlu0 %23
  %vm25 = vcmask 130048
  %s26 = scalar_lea.vmem %s1, 65
  %27 = vst.msk [vmem:[%s26] ss:$8 sm:$0xf] %vm25, %v24
  %s28 = scalar_lea.vmem %s1, 65
  %29 = vst.msk [vmem:[%s28] ss:$8 sm:$0xf0] %vm25, %v24
  %v30 = vld [vmem:[%s0] sm:$0xff]
  %31 = vrot.lane.b32.xlu0 %v30, 96
  %v32 = vpop.permute.xlu0 %31
  %vm33 = vcmask 130048
  %s34 = scalar_lea.vmem %s1, 2
  %35 = vst.msk [vmem:[%s34] ss:$8 sm:$0xf] %vm33, %v32
  %s36 = scalar_lea.vmem %s1, 2
  %37 = vst.msk [vmem:[%s36] ss:$8 sm:$0xf0] %vm33, %v32
  %s38 = scalar_lea.vmem %s0, 8
  %v39 = vld [vmem:[%s38] sm:$0xff]
  %40 = vrot.lane.b32.xlu0 %v39, 96
  %v41 = vpop.permute.xlu0 %40
  %vm42 = vcmask 130048
  %s43 = scalar_lea.vmem %s1, 66
  %44 = vst.msk [vmem:[%s43] ss:$8 sm:$0xf] %vm42, %v41
  %s45 = scalar_lea.vmem %s1, 66
  %46 = vst.msk [vmem:[%s45] ss:$8 sm:$0xf0] %vm42, %v41
  %v47 = vld [vmem:[%s0] sm:$0xff]
  %48 = vrot.lane.b32.xlu0 %v47, 80
  %v49 = vpop.permute.xlu0 %48
  %vm50 = vcmask 130048
  %s51 = scalar_lea.vmem %s1, 3
  %52 = vst.msk [vmem:[%s51] ss:$8 sm:$0xf] %vm50, %v49
  %s53 = scalar_lea.vmem %s1, 3
  %54 = vst.msk [vmem:[%s53] ss:$8 sm:$0xf0] %vm50, %v49
  %s55 = scalar_lea.vmem %s0, 8
  %v56 = vld [vmem:[%s55] sm:$0xff]
  %57 = vrot.lane.b32.xlu0 %v56, 80
  %v58 = vpop.permute.xlu0 %57
  %vm59 = vcmask 130048
  %s60 = scalar_lea.vmem %s1, 67
  %61 = vst.msk [vmem:[%s60] ss:$8 sm:$0xf] %vm59, %v58
  %s62 = scalar_lea.vmem %s1, 67
  %63 = vst.msk [vmem:[%s62] ss:$8 sm:$0xf0] %vm59, %v58
  %v64 = vld [vmem:[%s0] sm:$0xff]
  %65 = vrot.lane.b32.xlu0 %v64, 64
  %v66 = vpop.permute.xlu0 %65
  %vm67 = vcmask 130048
  %s68 = scalar_lea.vmem %s1, 4
  %69 = vst.msk [vmem:[%s68] ss:$8 sm:$0xf] %vm67, %v66
  %s70 = scalar_lea.vmem %s1, 4
  %71 = vst.msk [vmem:[%s70] ss:$8 sm:$0xf0] %vm67, %v66
  %s72 = scalar_lea.vmem %s0, 8
  %v73 = vld [vmem:[%s72] sm:$0xff]
  %74 = vrot.lane.b32.xlu0 %v73, 64
  %v75 = vpop.permute.xlu0 %74
  %vm76 = vcmask 130048
  %s77 = scalar_lea.vmem %s1, 68
  %78 = vst.msk [vmem:[%s77] ss:$8 sm:$0xf] %vm76, %v75
  %s79 = scalar_lea.vmem %s1, 68
  %80 = vst.msk [vmem:[%s79] ss:$8 sm:$0xf0] %vm76, %v75
  %v81 = vld [vmem:[%s0] sm:$0xff]
  %82 = vrot.lane.b32.xlu0 %v81, 48
  %v83 = vpop.permute.xlu0 %82
  %vm84 = vcmask 130048
  %s85 = scalar_lea.vmem %s1, 5
  %86 = vst.msk [vmem:[%s85] ss:$8 sm:$0xf] %vm84, %v83
  %s87 = scalar_lea.vmem %s1, 5
  %88 = vst.msk [vmem:[%s87] ss:$8 sm:$0xf0] %vm84, %v83
  %s89 = scalar_lea.vmem %s0, 8
  %v90 = vld [vmem:[%s89] sm:$0xff]
  %91 = vrot.lane.b32.xlu0 %v90, 48
  %v92 = vpop.permute.xlu0 %91
  %vm93 = vcmask 130048
  %s94 = scalar_lea.vmem %s1, 69
  %95 = vst.msk [vmem:[%s94] ss:$8 sm:$0xf] %vm93, %v92
  %s96 = scalar_lea.vmem %s1, 69
  %97 = vst.msk [vmem:[%s96] ss:$8 sm:$0xf0] %vm93, %v92
  %v98 = vld [vmem:[%s0] sm:$0xff]
  %99 = vrot.lane.b32.xlu0 %v98, 32
  %v100 = vpop.permute.xlu0 %99
  %vm101 = vcmask 130048
  %s102 = scalar_lea.vmem %s1, 6
  %103 = vst.msk [vmem:[%s102] ss:$8 sm:$0xf] %vm101, %v100
  %s104 = scalar_lea.vmem %s1, 6
  %105 = vst.msk [vmem:[%s104] ss:$8 sm:$0xf0] %vm101, %v100
  %s106 = scalar_lea.vmem %s0, 8
  %v107 = vld [vmem:[%s106] sm:$0xff]
  %108 = vrot.lane.b32.xlu0 %v107, 32
  %v109 = vpop.permute.xlu0 %108
  %vm110 = vcmask 130048
  %s111 = scalar_lea.vmem %s1, 70
  %112 = vst.msk [vmem:[%s111] ss:$8 sm:$0xf] %vm110, %v109
  %s113 = scalar_lea.vmem %s1, 70
  %114 = vst.msk [vmem:[%s113] ss:$8 sm:$0xf0] %vm110, %v109
  %v115 = vld [vmem:[%s0] sm:$0xff]
  %116 = vrot.lane.b32.xlu0 %v115, 16
  %v117 = vpop.permute.xlu0 %116
  %vm118 = vcmask 130048
  %s119 = scalar_lea.vmem %s1, 7
  %120 = vst.msk [vmem:[%s119] ss:$8 sm:$0xf] %vm118, %v117
  %s121 = scalar_lea.vmem %s1, 7
  %122 = vst.msk [vmem:[%s121] ss:$8 sm:$0xf0] %vm118, %v117
  %s123 = scalar_lea.vmem %s0, 8
  %v124 = vld [vmem:[%s123] sm:$0xff]
  %125 = vrot.lane.b32.xlu0 %v124, 16
  %v126 = vpop.permute.xlu0 %125
  %vm127 = vcmask 130048
  %s128 = scalar_lea.vmem %s1, 71
  %129 = vst.msk [vmem:[%s128] ss:$8 sm:$0xf] %vm127, %v126
  %s130 = scalar_lea.vmem %s1, 71
  %131 = vst.msk [vmem:[%s130] ss:$8 sm:$0xf0] %vm127, %v126

// kernel: generator_forward.9
$region0: #{generator_forward.9}
  #allocation0 [shape = 'u32[]', space=smem, size = 0x4, offset = 0x4, fixed_abs, tag = 'smem constant byte address 0x4 - core index']
  #allocation1 [shape = 'u32[144,128]{1,0:T(1,128)}', space=vmem, size = 0x12000, scoped, tag = 'internal scratch']
  %s0 = inlined_call_operand.vmem [shape: bf16[1,2,8], index: 0, kind: input, shape index: {}]
  %s1 = inlined_call_operand.vmem [shape: bf16[1,8,2048], index: 1, kind: input, shape index: {}]
  %s2 = inlined_call_operand.vmem [shape: f32[1,2,2048], index: 2, kind: output, shape index: {0}]
  %s3 = inlined_call_operand.vmem [shape: f32[1,1,2048], index: 3, kind: output, shape index: {1}]
  %s4 = inlined_call_operand.vmem [shape: f32[1,1,2048], index: 4, kind: output, shape index: {2}]
  %5 = xla_tuple %s2, %s3, %s4
  %s6 = sld [smem:[#allocation0]]
  $region38: #{generator_forward.9} parent=0
    _
  %s8 = ssub.s32 1, %s6
  %s9 = scalar_select 0, %s8, %s6
  // Predicated region
  $region2: #{generator_forward.9} parent=0 // pred_check
    _
  $region3: #{generator_forward.9} parent=0 // pred_check_branch
    %11 = sbr.rel (0) target = $region5
  $region4: #{generator_forward.9} parent=0 // pred_region
    _
  $region5: #{generator_forward.9} parent=0 // pred_fallthru
    _
  // Predicated region
  $region6: #{generator_forward.9} parent=0 // pred_check
    _
  $region7: #{generator_forward.9} parent=0 // pred_check_branch
    %13 = sbr.rel (0) target = $region9
  $region8: #{generator_forward.9} parent=0 // pred_region
    _
  $region9: #{generator_forward.9} parent=0 // pred_fallthru
    _
  %p15 = scmp.eq.s32.totalorder 0, 0
  // Predicated region
  $region10: #{generator_forward.9} parent=0 // pred_check
    %p16 = pneg %p15
  $region11: #{generator_forward.9} parent=0 // pred_check_branch
    %18 = sbr.rel (%p16) target = $region13
  $region12: #{generator_forward.9} parent=0 // pred_region
    %19 = vst [vmem:[%s3] sm:$0xff] 0.0
    %20 = vst [vmem:[%s3 + $0x8] sm:$0xff] 0.0
    %21 = vst [vmem:[%s4] sm:$0xff] 0.0
    %22 = vst [vmem:[%s4 + $0x8] sm:$0xff] 0.0
  $region13: #{generator_forward.9} parent=0 // pred_fallthru
    _
  %v23 = vld [vmem:[%s0] sm:$0x1]
  %v24 = vld [vmem:[%s1] sm:$0xff]
  %v25 = vld [vmem:[%s1 + $0x8] sm:$0xff]
  %v26 = vld [vmem:[%s1 + $0x10] sm:$0xff]
  %v27 = vld [vmem:[%s1 + $0x18] sm:$0xff]
  %v28 = vld [vmem:[%s1 + $0x20] sm:$0xff]
  %v29 = vld [vmem:[%s1 + $0x28] sm:$0xff]
  %v30 = vld [vmem:[%s1 + $0x30] sm:$0xff]
  %v31 = vld [vmem:[%s1 + $0x38] sm:$0xff]
  %v40 = vunpack.c.l.b16 %v24
  %v41 = vunpack.c.h.b16 %v24
  %v42 = vunpack.c.l.b16 %v25
  %v43 = vunpack.c.h.b16 %v25
  %v44 = vunpack.c.l.b16 %v26
  %v45 = vunpack.c.h.b16 %v26
  %v46 = vunpack.c.l.b16 %v27
  %v47 = vunpack.c.h.b16 %v27
  %v48 = vunpack.c.l.b16 %v28
  %v49 = vunpack.c.h.b16 %v28
  %v50 = vunpack.c.l.b16 %v29
  %v51 = vunpack.c.h.b16 %v29
  %v52 = vunpack.c.l.b16 %v30
  %v53 = vunpack.c.h.b16 %v30
  %v54 = vunpack.c.l.b16 %v31
  %v55 = vunpack.c.h.b16 %v31
  %v56 = vpack.c.b16 %v40, %v40
  %v57 = vpack.c.b16 %v41, %v41
  %v58 = vpack.c.b16 %v42, %v42
  %v59 = vpack.c.b16 %v43, %v43
  %v60 = vpack.c.b16 %v44, %v44
  %v61 = vpack.c.b16 %v45, %v45
  %v62 = vpack.c.b16 %v46, %v46
  %v63 = vpack.c.b16 %v47, %v47
  %v64 = vpack.c.b16 %v48, %v48
  %v65 = vpack.c.b16 %v49, %v49
  %v66 = vpack.c.b16 %v50, %v50
  %v67 = vpack.c.b16 %v51, %v51
  %v68 = vpack.c.b16 %v52, %v52
  %v69 = vpack.c.b16 %v53, %v53
  %v70 = vpack.c.b16 %v54, %v54
  %v71 = vpack.c.b16 %v55, %v55
  %vm72 = vcmask 64512
  %v74 = vsel %vm72, %v23, 0
  %vm76 = vcmask 1043456
  %v78 = vsel %vm76, %v56, 0
  %v81 = vsel %vm76, %v57, 0
  %v84 = vsel %vm76, %v58, 0
  %v87 = vsel %vm76, %v59, 0
  %v90 = vsel %vm76, %v60, 0
  %v93 = vsel %vm76, %v61, 0
  %v96 = vsel %vm76, %v62, 0
  %v99 = vsel %vm76, %v63, 0
  %v102 = vsel %vm76, %v64, 0
  %v105 = vsel %vm76, %v65, 0
  %v108 = vsel %vm76, %v66, 0
  %v111 = vsel %vm76, %v67, 0
  %v114 = vsel %vm76, %v68, 0
  %v117 = vsel %vm76, %v69, 0
  %v120 = vsel %vm76, %v70, 0
  %v123 = vsel %vm76, %v71, 0
  %125 = vmatprep.subr.bf16.mxu0 %v81
  %126 = vmatpush1.bf16.msra.mxu0 %v78
  %127 = vmatprep.subr.bf16.mxu0 0
  %128 = vmatpush1.bf16.msra.mxu0 0
  %129 = vmatprep.subr.bf16.mxu0 0
  %130 = vmatpush1.bf16.msra.mxu0 0
  %131 = vmatprep.subr.bf16.mxu0 0
  %132 = vmatpush1.bf16.msra.mxu0 0
  %133 = vmatprep.subr.bf16.mxu0 0
  %134 = vmatpush1.bf16.msra.mxu0 0
  %135 = vmatprep.subr.bf16.mxu0 0
  %136 = vmatpush1.bf16.msra.mxu0 0
  %137 = vmatprep.subr.bf16.mxu0 0
  %138 = vmatpush1.bf16.msra.mxu0 0
  %139 = vmatprep.subr.bf16.mxu0 0
  %140 = vmatpush1.bf16.msra.mxu0 0
  %141 = vmatprep.subr.bf16.mxu0 0
  %142 = vmatpush1.bf16.msra.mxu0 0
  %143 = vmatprep.subr.bf16.mxu0 0
  %144 = vmatpush1.bf16.msra.mxu0 0
  %145 = vmatprep.subr.bf16.mxu0 0
  %146 = vmatpush1.bf16.msra.mxu0 0
  %147 = vmatprep.subr.bf16.mxu0 0
  %148 = vmatpush1.bf16.msra.mxu0 0
  %149 = vmatprep.subr.bf16.mxu0 0
  %150 = vmatpush1.bf16.msra.mxu0 0
  %151 = vmatprep.subr.bf16.mxu0 0
  %152 = vmatpush1.bf16.msra.mxu0 0
  %153 = vmatprep.subr.bf16.mxu0 0
  %154 = vmatpush1.bf16.msra.mxu0 0
  %155 = vmatprep.subr.bf16.mxu0 0
  %156 = vmatpush1.bf16.msra.mxu0 0
  %157 = vmatprep.mubr.bf16.mxu0 0
  %158 = vmatmul.mubr.bf16.gmra.mrb[0].mxu0 %v74
  %v159 = vpop.f32.mrb[0].mxu0
  %v160 = vadd.f32 0.0, %v159
  %v161 = vpop.f32.mrb[0].mxu0
  %v162 = vadd.f32 0.0, %v161
  %v163 = vpop.f32.mrb[0].mxu0
  %v164 = vpop.f32.mrb[0].mxu0
  %165 = vdwg.mxu0
  %166 = vmatprep.subr.bf16.mxu0 %v87
  %167 = vmatpush1.bf16.msra.mxu0 %v84
  %168 = vmatprep.subr.bf16.mxu0 0
  %169 = vmatpush1.bf16.msra.mxu0 0
  %170 = vmatprep.subr.bf16.mxu0 0
  %171 = vmatpush1.bf16.msra.mxu0 0
  %172 = vmatprep.subr.bf16.mxu0 0
  %173 = vmatpush1.bf16.msra.mxu0 0
  %174 = vmatprep.subr.bf16.mxu0 0
  %175 = vmatpush1.bf16.msra.mxu0 0
  %176 = vmatprep.subr.bf16.mxu0 0
  %177 = vmatpush1.bf16.msra.mxu0 0
  %178 = vmatprep.subr.bf16.mxu0 0
  %179 = vmatpush1.bf16.msra.mxu0 0
  %180 = vmatprep.subr.bf16.mxu0 0
  %181 = vmatpush1.bf16.msra.mxu0 0
  %182 = vmatprep.subr.bf16.mxu0 0
  %183 = vmatpush1.bf16.msra.mxu0 0
  %184 = vmatprep.subr.bf16.mxu0 0
  %185 = vmatpush1.bf16.msra.mxu0 0
  %186 = vmatprep.subr.bf16.mxu0 0
  %187 = vmatpush1.bf16.msra.mxu0 0
  %188 = vmatprep.subr.bf16.mxu0 0
  %189 = vmatpush1.bf16.msra.mxu0 0
  %190 = vmatprep.subr.bf16.mxu0 0
  %191 = vmatpush1.bf16.msra.mxu0 0
  %192 = vmatprep.subr.bf16.mxu0 0
  %193 = vmatpush1.bf16.msra.mxu0 0
  %194 = vmatprep.subr.bf16.mxu0 0
  %195 = vmatpush1.bf16.msra.mxu0 0
  %196 = vmatprep.subr.bf16.mxu0 0
  %197 = vmatpush1.bf16.msra.mxu0 0
  %198 = vmatprep.mubr.bf16.mxu0 0
  %199 = vmatmul.mubr.bf16.gmra.mrb[0].mxu0 %v74
  %v200 = vpop.f32.mrb[0].mxu0
  %v201 = vadd.f32 0.0, %v200
  %v202 = vpop.f32.mrb[0].mxu0
  %v203 = vadd.f32 0.0, %v202
  %v204 = vpop.f32.mrb[0].mxu0
  %v205 = vpop.f32.mrb[0].mxu0
  %206 = vdwg.mxu0
  %207 = vmatprep.subr.bf16.mxu0 %v93
  %208 = vmatpush1.bf16.msra.mxu0 %v90
  %209 = vmatprep.subr.bf16.mxu0 0
  %210 = vmatpush1.bf16.msra.mxu0 0
  %211 = vmatprep.subr.bf16.mxu0 0
  %212 = vmatpush1.bf16.msra.mxu0 0
  %213 = vmatprep.subr.bf16.mxu0 0
  %214 = vmatpush1.bf16.msra.mxu0 0
  %215 = vmatprep.subr.bf16.mxu0 0
  %216 = vmatpush1.bf16.msra.mxu0 0
  %217 = vmatprep.subr.bf16.mxu0 0
  %218 = vmatpush1.bf16.msra.mxu0 0
  %219 = vmatprep.subr.bf16.mxu0 0
  %220 = vmatpush1.bf16.msra.mxu0 0
  %221 = vmatprep.subr.bf16.mxu0 0
  %222 = vmatpush1.bf16.msra.mxu0 0
  %223 = vmatprep.subr.bf16.mxu0 0
  %224 = vmatpush1.bf16.msra.mxu0 0
  %225 = vmatprep.subr.bf16.mxu0 0
  %226 = vmatpush1.bf16.msra.mxu0 0
  %227 = vmatprep.subr.bf16.mxu0 0
  %228 = vmatpush1.bf16.msra.mxu0 0
  %229 = vmatprep.subr.bf16.mxu0 0
  %230 = vmatpush1.bf16.msra.mxu0 0
  %231 = vmatprep.subr.bf16.mxu0 0
  %232 = vmatpush1.bf16.msra.mxu0 0
  %233 = vmatprep.subr.bf16.mxu0 0
  %234 = vmatpush1.bf16.msra.mxu0 0
  %235 = vmatprep.subr.bf16.mxu0 0
  %236 = vmatpush1.bf16.msra.mxu0 0
  %237 = vmatprep.subr.bf16.mxu0 0
  %238 = vmatpush1.bf16.msra.mxu0 0
  %239 = vmatprep.mubr.bf16.mxu0 0
  %240 = vmatmul.mubr.bf16.gmra.mrb[0].mxu0 %v74
  %v241 = vpop.f32.mrb[0].mxu0
  %v242 = vadd.f32 0.0, %v241
  %v243 = vpop.f32.mrb[0].mxu0
  %v244 = vadd.f32 0.0, %v243
  %v245 = vpop.f32.mrb[0].mxu0
  %v246 = vpop.f32.mrb[0].mxu0
  %247 = vdwg.mxu0
  %248 = vmatprep.subr.bf16.mxu0 %v99
  %249 = vmatpush1.bf16.msra.mxu0 %v96
  %250 = vmatprep.subr.bf16.mxu0 0
  %251 = vmatpush1.bf16.msra.mxu0 0
  %252 = vmatprep.subr.bf16.mxu0 0
  %253 = vmatpush1.bf16.msra.mxu0 0
  %254 = vmatprep.subr.bf16.mxu0 0
  %255 = vmatpush1.bf16.msra.mxu0 0
  %256 = vmatprep.subr.bf16.mxu0 0
  %257 = vmatpush1.bf16.msra.mxu0 0
  %258 = vmatprep.subr.bf16.mxu0 0
  %259 = vmatpush1.bf16.msra.mxu0 0
  %260 = vmatprep.subr.bf16.mxu0 0
  %261 = vmatpush1.bf16.msra.mxu0 0
  %262 = vmatprep.subr.bf16.mxu0 0
  %263 = vmatpush1.bf16.msra.mxu0 0
  %264 = vmatprep.subr.bf16.mxu0 0
  %265 = vmatpush1.bf16.msra.mxu0 0
  %266 = vmatprep.subr.bf16.mxu0 0
  %267 = vmatpush1.bf16.msra.mxu0 0
  %268 = vmatprep.subr.bf16.mxu0 0
  %269 = vmatpush1.bf16.msra.mxu0 0
  %270 = vmatprep.subr.bf16.mxu0 0
  %271 = vmatpush1.bf16.msra.mxu0 0
  %272 = vmatprep.subr.bf16.mxu0 0
  %273 = vmatpush1.bf16.msra.mxu0 0
  %274 = vmatprep.subr.bf16.mxu0 0
  %275 = vmatpush1.bf16.msra.mxu0 0
  %276 = vmatprep.subr.bf16.mxu0 0
  %277 = vmatpush1.bf16.msra.mxu0 0
  %278 = vmatprep.subr.bf16.mxu0 0
  %279 = vmatpush1.bf16.msra.mxu0 0
  %280 = vmatprep.mubr.bf16.mxu0 0
  %281 = vmatmul.mubr.bf16.gmra.mrb[0].mxu0 %v74
  %v282 = vpop.f32.mrb[0].mxu0
  %v283 = vadd.f32 0.0, %v282
  %v284 = vpop.f32.mrb[0].mxu0
  %v285 = vadd.f32 0.0, %v284
  %v286 = vpop.f32.mrb[0].mxu0
  %v287 = vpop.f32.mrb[0].mxu0
  %288 = vdwg.mxu0
  %289 = vmatprep.subr.bf16.mxu0 %v105
  %290 = vmatpush1.bf16.msra.mxu0 %v102
  %291 = vmatprep.subr.bf16.mxu0 0
  %292 = vmatpush1.bf16.msra.mxu0 0
  %293 = vmatprep.subr.bf16.mxu0 0
  %294 = vmatpush1.bf16.msra.mxu0 0
  %295 = vmatprep.subr.bf16.mxu0 0
  %296 = vmatpush1.bf16.msra.mxu0 0
  %297 = vmatprep.subr.bf16.mxu0 0
  %298 = vmatpush1.bf16.msra.mxu0 0
  %299 = vmatprep.subr.bf16.mxu0 0
  %300 = vmatpush1.bf16.msra.mxu0 0
  %301 = vmatprep.subr.bf16.mxu0 0
  %302 = vmatpush1.bf16.msra.mxu0 0
  %303 = vmatprep.subr.bf16.mxu0 0
  %304 = vmatpush1.bf16.msra.mxu0 0
  %305 = vmatprep.subr.bf16.mxu0 0
  %306 = vmatpush1.bf16.msra.mxu0 0
  %307 = vmatprep.subr.bf16.mxu0 0
  %308 = vmatpush1.bf16.msra.mxu0 0
  %309 = vmatprep.subr.bf16.mxu0 0
  %310 = vmatpush1.bf16.msra.mxu0 0
  %311 = vmatprep.subr.bf16.mxu0 0
  %312 = vmatpush1.bf16.msra.mxu0 0
  %313 = vmatprep.subr.bf16.mxu0 0
  %314 = vmatpush1.bf16.msra.mxu0 0
  %315 = vmatprep.subr.bf16.mxu0 0
  %316 = vmatpush1.bf16.msra.mxu0 0
  %317 = vmatprep.subr.bf16.mxu0 0
  %318 = vmatpush1.bf16.msra.mxu0 0
  %319 = vmatprep.subr.bf16.mxu0 0
  %320 = vmatpush1.bf16.msra.mxu0 0
  %321 = vmatprep.mubr.bf16.mxu0 0
  %322 = vmatmul.mubr.bf16.gmra.mrb[0].mxu0 %v74
  %v323 = vpop.f32.mrb[0].mxu0
  %v324 = vadd.f32 0.0, %v323
  %v325 = vpop.f32.mrb[0].mxu0
  %v326 = vadd.f32 0.0, %v325
  %v327 = vpop.f32.mrb[0].mxu0
  %v328 = vpop.f32.mrb[0].mxu0
  %329 = vdwg.mxu0
  %330 = vmatprep.subr.bf16.mxu0 %v111
  %331 = vmatpush1.bf16.msra.mxu0 %v108
  %332 = vmatprep.subr.bf16.mxu0 0
  %333 = vmatpush1.bf16.msra.mxu0 0
  %334 = vmatprep.subr.bf16.mxu0 0
  %335 = vmatpush1.bf16.msra.mxu0 0
  %336 = vmatprep.subr.bf16.mxu0 0
  %337 = vmatpush1.bf16.msra.mxu0 0
  %338 = vmatprep.subr.bf16.mxu0 0
  %339 = vmatpush1.bf16.msra.mxu0 0
  %340 = vmatprep.subr.bf16.mxu0 0
  %341 = vmatpush1.bf16.msra.mxu0 0
  %342 = vmatprep.subr.bf16.mxu0 0
  %343 = vmatpush1.bf16.msra.mxu0 0
  %344 = vmatprep.subr.bf16.mxu0 0
  %345 = vmatpush1.bf16.msra.mxu0 0
  %346 = vmatprep.subr.bf16.mxu0 0
  %347 = vmatpush1.bf16.msra.mxu0 0
  %348 = vmatprep.subr.bf16.mxu0 0
  %349 = vmatpush1.bf16.msra.mxu0 0
  %350 = vmatprep.subr.bf16.mxu0 0
  %351 = vmatpush1.bf16.msra.mxu0 0
  %352 = vmatprep.subr.bf16.mxu0 0
  %353 = vmatpush1.bf16.msra.mxu0 0
  %354 = vmatprep.subr.bf16.mxu0 0
  %355 = vmatpush1.bf16.msra.mxu0 0
  %356 = vmatprep.subr.bf16.mxu0 0
  %357 = vmatpush1.bf16.msra.mxu0 0
  %358 = vmatprep.subr.bf16.mxu0 0
  %359 = vmatpush1.bf16.msra.mxu0 0
  %360 = vmatprep.subr.bf16.mxu0 0
  %361 = vmatpush1.bf16.msra.mxu0 0
  %362 = vmatprep.mubr.bf16.mxu0 0
  %363 = vmatmul.mubr.bf16.gmra.mrb[0].mxu0 %v74
  %v364 = vpop.f32.mrb[0].mxu0
  %v365 = vadd.f32 0.0, %v364
  %v366 = vpop.f32.mrb[0].mxu0
  %v367 = vadd.f32 0.0, %v366
  %v368 = vpop.f32.mrb[0].mxu0
  %v369 = vpop.f32.mrb[0].mxu0
  %370 = vdwg.mxu0
  %371 = vmatprep.subr.bf16.mxu0 %v117
  %372 = vmatpush1.bf16.msra.mxu0 %v114
  %373 = vmatprep.subr.bf16.mxu0 0
  %374 = vmatpush1.bf16.msra.mxu0 0
  %375 = vmatprep.subr.bf16.mxu0 0
  %376 = vmatpush1.bf16.msra.mxu0 0
  %377 = vmatprep.subr.bf16.mxu0 0
  %378 = vmatpush1.bf16.msra.mxu0 0
  %379 = vmatprep.subr.bf16.mxu0 0
  %380 = vmatpush1.bf16.msra.mxu0 0
  %381 = vmatprep.subr.bf16.mxu0 0
  %382 = vmatpush1.bf16.msra.mxu0 0
  %383 = vmatprep.subr.bf16.mxu0 0
  %384 = vmatpush1.bf16.msra.mxu0 0
  %385 = vmatprep.subr.bf16.mxu0 0
  %386 = vmatpush1.bf16.msra.mxu0 0
  %387 = vmatprep.subr.bf16.mxu0 0
  %388 = vmatpush1.bf16.msra.mxu0 0
  %389 = vmatprep.subr.bf16.mxu0 0
  %390 = vmatpush1.bf16.msra.mxu0 0
  %391 = vmatprep.subr.bf16.mxu0 0
  %392 = vmatpush1.bf16.msra.mxu0 0
  %393 = vmatprep.subr.bf16.mxu0 0
  %394 = vmatpush1.bf16.msra.mxu0 0
  %395 = vmatprep.subr.bf16.mxu0 0
  %396 = vmatpush1.bf16.msra.mxu0 0
  %397 = vmatprep.subr.bf16.mxu0 0
  %398 = vmatpush1.bf16.msra.mxu0 0
  %399 = vmatprep.subr.bf16.mxu0 0
  %400 = vmatpush1.bf16.msra.mxu0 0
  %401 = vmatprep.subr.bf16.mxu0 0
  %402 = vmatpush1.bf16.msra.mxu0 0
  %403 = vmatprep.mubr.bf16.mxu0 0
  %404 = vmatmul.mubr.bf16.gmra.mrb[0].mxu0 %v74
  %v405 = vpop.f32.mrb[0].mxu0
  %v406 = vadd.f32 0.0, %v405
  %v407 = vpop.f32.mrb[0].mxu0
  %v408 = vadd.f32 0.0, %v407
  %v409 = vpop.f32.mrb[0].mxu0
  %v410 = vpop.f32.mrb[0].mxu0
  %411 = vdwg.mxu0
  %412 = vmatprep.subr.bf16.mxu0 %v123
  %413 = vmatpush1.bf16.msra.mxu0 %v120
  %414 = vmatprep.subr.bf16.mxu0 0
  %415 = vmatpush1.bf16.msra.mxu0 0
  %416 = vmatprep.subr.bf16.mxu0 0
  %417 = vmatpush1.bf16.msra.mxu0 0
  %418 = vmatprep.subr.bf16.mxu0 0
  %419 = vmatpush1.bf16.msra.mxu0 0
  %420 = vmatprep.subr.bf16.mxu0 0
  %421 = vmatpush1.bf16.msra.mxu0 0
  %422 = vmatprep.subr.bf16.mxu0 0
  %423 = vmatpush1.bf16.msra.mxu0 0
  %424 = vmatprep.subr.bf16.mxu0 0
  %425 = vmatpush1.bf16.msra.mxu0 0
  %426 = vmatprep.subr.bf16.mxu0 0
  %427 = vmatpush1.bf16.msra.mxu0 0
  %428 = vmatprep.subr.bf16.mxu0 0
  %429 = vmatpush1.bf16.msra.mxu0 0
  %430 = vmatprep.subr.bf16.mxu0 0
  %431 = vmatpush1.bf16.msra.mxu0 0
  %432 = vmatprep.subr.bf16.mxu0 0
  %433 = vmatpush1.bf16.msra.mxu0 0
  %434 = vmatprep.subr.bf16.mxu0 0
  %435 = vmatpush1.bf16.msra.mxu0 0
  %436 = vmatprep.subr.bf16.mxu0 0
  %437 = vmatpush1.bf16.msra.mxu0 0
  %438 = vmatprep.subr.bf16.mxu0 0
  %439 = vmatpush1.bf16.msra.mxu0 0
  %440 = vmatprep.subr.bf16.mxu0 0
  %441 = vmatpush1.bf16.msra.mxu0 0
  %442 = vmatprep.subr.bf16.mxu0 0
  %443 = vmatpush1.bf16.msra.mxu0 0
  %444 = vmatprep.mubr.bf16.mxu0 0
  %445 = vmatmul.mubr.bf16.gmra.mrb[0].mxu0 %v74
  %v446 = vpop.f32.mrb[0].mxu0
  %v447 = vadd.f32 0.0, %v446
  %v448 = vpop.f32.mrb[0].mxu0
  %v449 = vadd.f32 0.0, %v448
  %v450 = vpop.f32.mrb[0].mxu0
  %v451 = vpop.f32.mrb[0].mxu0
  %452 = vdwg.mxu0
  %v469 = vcombine.low %v160, %v162
  %v470 = vcombine.low %v201, %v203
  %v472 = vunpack.c.l.s4 1983009808
  %v473 = vunpack.c.0.s8 %v472
  %v474 = vlaneseq
  %v475 = vshrl.u32 %v474, 7
  %v476 = vsub.s32 %v473, %v475
  %v477 = vrot.slane %v469, %v476
  %v479 = vunpack.c.l.s4 1983009808
  %v480 = vunpack.c.0.s8 %v479
  %v481 = vlaneseq
  %v482 = vshrl.u32 %v481, 7
  %v483 = vsub.s32 %v480, %v482
  %v484 = vrot.slane %v470, %v483
  %v485 = vcombine.low %v477, %v484
  %v486 = vcombine.low %v242, %v244
  %v487 = vcombine.low %v283, %v285
  %v489 = vunpack.c.l.s4 1983009808
  %v490 = vunpack.c.0.s8 %v489
  %v491 = vlaneseq
  %v492 = vshrl.u32 %v491, 7
  %v493 = vsub.s32 %v490, %v492
  %v494 = vrot.slane %v486, %v493
  %v496 = vunpack.c.l.s4 1983009808
  %v497 = vunpack.c.0.s8 %v496
  %v498 = vlaneseq
  %v499 = vshrl.u32 %v498, 7
  %v500 = vsub.s32 %v497, %v499
  %v501 = vrot.slane %v487, %v500
  %v502 = vcombine.low %v494, %v501
  %v503 = vcombine.low %v324, %v326
  %v504 = vcombine.low %v365, %v367
  %v506 = vunpack.c.l.s4 1983009808
  %v507 = vunpack.c.0.s8 %v506
  %v508 = vlaneseq
  %v509 = vshrl.u32 %v508, 7
  %v510 = vsub.s32 %v507, %v509
  %v511 = vrot.slane %v503, %v510
  %v513 = vunpack.c.l.s4 1983009808
  %v514 = vunpack.c.0.s8 %v513
  %v515 = vlaneseq
  %v516 = vshrl.u32 %v515, 7
  %v517 = vsub.s32 %v514, %v516
  %v518 = vrot.slane %v504, %v517
  %v519 = vcombine.low %v511, %v518
  %v520 = vcombine.low %v406, %v408
  %v521 = vcombine.low %v447, %v449
  %v523 = vunpack.c.l.s4 1983009808
  %v524 = vunpack.c.0.s8 %v523
  %v525 = vlaneseq
  %v526 = vshrl.u32 %v525, 7
  %v527 = vsub.s32 %v524, %v526
  %v528 = vrot.slane %v520, %v527
  %v530 = vunpack.c.l.s4 1983009808
  %v531 = vunpack.c.0.s8 %v530
  %v532 = vlaneseq
  %v533 = vshrl.u32 %v532, 7
  %v534 = vsub.s32 %v531, %v533
  %v535 = vrot.slane %v521, %v534
  %v536 = vcombine.low %v528, %v535
  %541 = vst [vmem:[%s2] sm:$0xff] %v485
  %542 = vst [vmem:[%s2 + $0x8] sm:$0xff] %v502
  %543 = vst [vmem:[%s2 + $0x10] sm:$0xff] %v519
  %544 = vst [vmem:[%s2 + $0x18] sm:$0xff] %v536
  %v545 = vld [vmem:[%s3] sm:$0xff]
  %v546 = vld [vmem:[%s3 + $0x8] sm:$0xff]
  %vm547 = vcmask 1041408
  %v548 = vsel %vm547, %v160, 0.0
  %v549 = vrot.slane %v548, 4
  %v550 = vadd.f32 %v548, %v549
  %v551 = vrot.slane %v550, 2
  %v552 = vadd.f32 %v550, %v551
  %v553 = vrot.slane %v552, 1
  %v554 = vadd.f32 %v552, %v553
  %v555 = vsel %vm547, %v162, 0.0
  %v556 = vrot.slane %v555, 4
  %v557 = vadd.f32 %v555, %v556
  %v558 = vrot.slane %v557, 2
  %v559 = vadd.f32 %v557, %v558
  %v560 = vrot.slane %v559, 1
  %v561 = vadd.f32 %v559, %v560
  %v562 = vsel %vm547, %v201, 0.0
  %v563 = vrot.slane %v562, 4
  %v564 = vadd.f32 %v562, %v563
  %v565 = vrot.slane %v564, 2
  %v566 = vadd.f32 %v564, %v565
  %v567 = vrot.slane %v566, 1
  %v568 = vadd.f32 %v566, %v567
  %v569 = vsel %vm547, %v203, 0.0
  %v570 = vrot.slane %v569, 4
  %v571 = vadd.f32 %v569, %v570
  %v572 = vrot.slane %v571, 2
  %v573 = vadd.f32 %v571, %v572
  %v574 = vrot.slane %v573, 1
  %v575 = vadd.f32 %v573, %v574
  %v576 = vsel %vm547, %v242, 0.0
  %v577 = vrot.slane %v576, 4
  %v578 = vadd.f32 %v576, %v577
  %v579 = vrot.slane %v578, 2
  %v580 = vadd.f32 %v578, %v579
  %v581 = vrot.slane %v580, 1
  %v582 = vadd.f32 %v580, %v581
  %v583 = vsel %vm547, %v244, 0.0
  %v584 = vrot.slane %v583, 4
  %v585 = vadd.f32 %v583, %v584
  %v586 = vrot.slane %v585, 2
  %v587 = vadd.f32 %v585, %v586
  %v588 = vrot.slane %v587, 1
  %v589 = vadd.f32 %v587, %v588
  %v590 = vsel %vm547, %v283, 0.0
  %v591 = vrot.slane %v590, 4
  %v592 = vadd.f32 %v590, %v591
  %v593 = vrot.slane %v592, 2
  %v594 = vadd.f32 %v592, %v593
  %v595 = vrot.slane %v594, 1
  %v596 = vadd.f32 %v594, %v595
  %v597 = vsel %vm547, %v285, 0.0
  %v598 = vrot.slane %v597, 4
  %v599 = vadd.f32 %v597, %v598
  %v600 = vrot.slane %v599, 2
  %v601 = vadd.f32 %v599, %v600
  %v602 = vrot.slane %v601, 1
  %v603 = vadd.f32 %v601, %v602
  %v604 = vsel %vm547, %v324, 0.0
  %v605 = vrot.slane %v604, 4
  %v606 = vadd.f32 %v604, %v605
  %v607 = vrot.slane %v606, 2
  %v608 = vadd.f32 %v606, %v607
  %v609 = vrot.slane %v608, 1
  %v610 = vadd.f32 %v608, %v609
  %v611 = vsel %vm547, %v326, 0.0
  %v612 = vrot.slane %v611, 4
  %v613 = vadd.f32 %v611, %v612
  %v614 = vrot.slane %v613, 2
  %v615 = vadd.f32 %v613, %v614
  %v616 = vrot.slane %v615, 1
  %v617 = vadd.f32 %v615, %v616
  %v618 = vsel %vm547, %v365, 0.0
  %v619 = vrot.slane %v618, 4
  %v620 = vadd.f32 %v618, %v619
  %v621 = vrot.slane %v620, 2
  %v622 = vadd.f32 %v620, %v621
  %v623 = vrot.slane %v622, 1
  %v624 = vadd.f32 %v622, %v623
  %v625 = vsel %vm547, %v367, 0.0
  %v626 = vrot.slane %v625, 4
  %v627 = vadd.f32 %v625, %v626
  %v628 = vrot.slane %v627, 2
  %v629 = vadd.f32 %v627, %v628
  %v630 = vrot.slane %v629, 1
  %v631 = vadd.f32 %v629, %v630
  %v632 = vsel %vm547, %v406, 0.0
  %v633 = vrot.slane %v632, 4
  %v634 = vadd.f32 %v632, %v633
  %v635 = vrot.slane %v634, 2
  %v636 = vadd.f32 %v634, %v635
  %v637 = vrot.slane %v636, 1
  %v638 = vadd.f32 %v636, %v637
  %v639 = vsel %vm547, %v408, 0.0
  %v640 = vrot.slane %v639, 4
  %v641 = vadd.f32 %v639, %v640
  %v642 = vrot.slane %v641, 2
  %v643 = vadd.f32 %v641, %v642
  %v644 = vrot.slane %v643, 1
  %v645 = vadd.f32 %v643, %v644
  %v646 = vsel %vm547, %v447, 0.0
  %v647 = vrot.slane %v646, 4
  %v648 = vadd.f32 %v646, %v647
  %v649 = vrot.slane %v648, 2
  %v650 = vadd.f32 %v648, %v649
  %v651 = vrot.slane %v650, 1
  %v652 = vadd.f32 %v650, %v651
  %v653 = vsel %vm547, %v449, 0.0
  %v654 = vrot.slane %v653, 4
  %v655 = vadd.f32 %v653, %v654
  %v656 = vrot.slane %v655, 2
  %v657 = vadd.f32 %v655, %v656
  %v658 = vrot.slane %v657, 1
  %v659 = vadd.f32 %v657, %v658
  %v676 = vcombine.low %v554, %v561
  %v677 = vcombine.low %v568, %v575
  %v678 = vcombine.low %v582, %v589
  %v679 = vcombine.low %v596, %v603
  %v681 = vunpack.c.l.s4 1966171168
  %v682 = vunpack.c.0.s8 %v681
  %v683 = vlaneseq
  %v684 = vshrl.u32 %v683, 7
  %v685 = vsub.s32 %v682, %v684
  %v686 = vrot.slane %v676, %v685
  %v688 = vunpack.c.l.s4 1966171168
  %v689 = vunpack.c.0.s8 %v688
  %v690 = vlaneseq
  %v691 = vshrl.u32 %v690, 7
  %v692 = vsub.s32 %v689, %v691
  %v693 = vrot.slane %v677, %v692
  %v695 = vunpack.c.l.s4 1966171168
  %v696 = vunpack.c.0.s8 %v695
  %v697 = vlaneseq
  %v698 = vshrl.u32 %v697, 7
  %v699 = vsub.s32 %v696, %v698
  %v700 = vrot.slane %v678, %v699
  %v702 = vunpack.c.l.s4 1966171168
  %v703 = vunpack.c.0.s8 %v702
  %v704 = vlaneseq
  %v705 = vshrl.u32 %v704, 7
  %v706 = vsub.s32 %v703, %v705
  %v707 = vrot.slane %v679, %v706
  %v708 = vcombine.low %v686, %v693
  %v709 = vcombine.low %v700, %v707
  %v711 = vunpack.c.l.s4 1966171168
  %v712 = vunpack.c.0.s8 %v711
  %v713 = vlaneseq
  %v714 = vshrl.u32 %v713, 7
  %v715 = vsub.s32 %v712, %v714
  %v716 = vrot.slane %v708, %v715
  %v718 = vunpack.c.l.s4 1966171168
  %v719 = vunpack.c.0.s8 %v718
  %v720 = vlaneseq
  %v721 = vshrl.u32 %v720, 7
  %v722 = vsub.s32 %v719, %v721
  %v723 = vrot.slane %v709, %v722
  %v724 = vcombine.low %v716, %v723
  %v725 = vcombine.low %v610, %v617
  %v726 = vcombine.low %v624, %v631
  %v727 = vcombine.low %v638, %v645
  %v728 = vcombine.low %v652, %v659
  %v730 = vunpack.c.l.s4 1966171168
  %v731 = vunpack.c.0.s8 %v730
  %v732 = vlaneseq
  %v733 = vshrl.u32 %v732, 7
  %v734 = vsub.s32 %v731, %v733
  %v735 = vrot.slane %v725, %v734
  %v737 = vunpack.c.l.s4 1966171168
  %v738 = vunpack.c.0.s8 %v737
  %v739 = vlaneseq
  %v740 = vshrl.u32 %v739, 7
  %v741 = vsub.s32 %v738, %v740
  %v742 = vrot.slane %v726, %v741
  %v744 = vunpack.c.l.s4 1966171168
  %v745 = vunpack.c.0.s8 %v744
  %v746 = vlaneseq
  %v747 = vshrl.u32 %v746, 7
  %v748 = vsub.s32 %v745, %v747
  %v749 = vrot.slane %v727, %v748
  %v751 = vunpack.c.l.s4 1966171168
  %v752 = vunpack.c.0.s8 %v751
  %v753 = vlaneseq
  %v754 = vshrl.u32 %v753, 7
  %v755 = vsub.s32 %v752, %v754
  %v756 = vrot.slane %v728, %v755
  %v757 = vcombine.low %v735, %v742
  %v758 = vcombine.low %v749, %v756
  %v760 = vunpack.c.l.s4 1966171168
  %v761 = vunpack.c.0.s8 %v760
  %v762 = vlaneseq
  %v763 = vshrl.u32 %v762, 7
  %v764 = vsub.s32 %v761, %v763
  %v765 = vrot.slane %v757, %v764
  %v767 = vunpack.c.l.s4 1966171168
  %v768 = vunpack.c.0.s8 %v767
  %v769 = vlaneseq
  %v770 = vshrl.u32 %v769, 7
  %v771 = vsub.s32 %v768, %v770
  %v772 = vrot.slane %v758, %v771
  %v773 = vcombine.low %v765, %v772
  %v776 = vadd.f32 %v545, %v724
  %v777 = vadd.f32 %v546, %v773
  %778 = vst [vmem:[%s3] sm:$0xff] %v776
  %779 = vst [vmem:[%s3 + $0x8] sm:$0xff] %v777
  %v780 = vld [vmem:[%s4] sm:$0xff]
  %v781 = vld [vmem:[%s4 + $0x8] sm:$0xff]
  %v782 = vmul.f32 %v160, %v160
  %v783 = vmul.f32 %v162, %v162
  %v784 = vmul.f32 %v201, %v201
  %v785 = vmul.f32 %v203, %v203
  %v786 = vmul.f32 %v242, %v242
  %v787 = vmul.f32 %v244, %v244
  %v788 = vmul.f32 %v283, %v283
  %v789 = vmul.f32 %v285, %v285
  %v790 = vmul.f32 %v324, %v324
  %v791 = vmul.f32 %v326, %v326
  %v792 = vmul.f32 %v365, %v365
  %v793 = vmul.f32 %v367, %v367
  %v794 = vmul.f32 %v406, %v406
  %v795 = vmul.f32 %v408, %v408
  %v796 = vmul.f32 %v447, %v447
  %v797 = vmul.f32 %v449, %v449
  %v798 = vsel %vm547, %v782, 0.0
  %v799 = vrot.slane %v798, 4
  %v800 = vadd.f32 %v798, %v799
  %v801 = vrot.slane %v800, 2
  %v802 = vadd.f32 %v800, %v801
  %v803 = vrot.slane %v802, 1
  %v804 = vadd.f32 %v802, %v803
  %v805 = vsel %vm547, %v783, 0.0
  %v806 = vrot.slane %v805, 4
  %v807 = vadd.f32 %v805, %v806
  %v808 = vrot.slane %v807, 2
  %v809 = vadd.f32 %v807, %v808
  %v810 = vrot.slane %v809, 1
  %v811 = vadd.f32 %v809, %v810
  %v812 = vsel %vm547, %v784, 0.0
  %v813 = vrot.slane %v812, 4
  %v814 = vadd.f32 %v812, %v813
  %v815 = vrot.slane %v814, 2
  %v816 = vadd.f32 %v814, %v815
  %v817 = vrot.slane %v816, 1
  %v818 = vadd.f32 %v816, %v817
  %v819 = vsel %vm547, %v785, 0.0
  %v820 = vrot.slane %v819, 4
  %v821 = vadd.f32 %v819, %v820
  %v822 = vrot.slane %v821, 2
  %v823 = vadd.f32 %v821, %v822
  %v824 = vrot.slane %v823, 1
  %v825 = vadd.f32 %v823, %v824
  %v826 = vsel %vm547, %v786, 0.0
  %v827 = vrot.slane %v826, 4
  %v828 = vadd.f32 %v826, %v827
  %v829 = vrot.slane %v828, 2
  %v830 = vadd.f32 %v828, %v829
  %v831 = vrot.slane %v830, 1
  %v832 = vadd.f32 %v830, %v831
  %v833 = vsel %vm547, %v787, 0.0
  %v834 = vrot.slane %v833, 4
  %v835 = vadd.f32 %v833, %v834
  %v836 = vrot.slane %v835, 2
  %v837 = vadd.f32 %v835, %v836
  %v838 = vrot.slane %v837, 1
  %v839 = vadd.f32 %v837, %v838
  %v840 = vsel %vm547, %v788, 0.0
  %v841 = vrot.slane %v840, 4
  %v842 = vadd.f32 %v840, %v841
  %v843 = vrot.slane %v842, 2
  %v844 = vadd.f32 %v842, %v843
  %v845 = vrot.slane %v844, 1
  %v846 = vadd.f32 %v844, %v845
  %v847 = vsel %vm547, %v789, 0.0
  %v848 = vrot.slane %v847, 4
  %v849 = vadd.f32 %v847, %v848
  %v850 = vrot.slane %v849, 2
  %v851 = vadd.f32 %v849, %v850
  %v852 = vrot.slane %v851, 1
  %v853 = vadd.f32 %v851, %v852
  %v854 = vsel %vm547, %v790, 0.0
  %v855 = vrot.slane %v854, 4
  %v856 = vadd.f32 %v854, %v855
  %v857 = vrot.slane %v856, 2
  %v858 = vadd.f32 %v856, %v857
  %v859 = vrot.slane %v858, 1
  %v860 = vadd.f32 %v858, %v859
  %v861 = vsel %vm547, %v791, 0.0
  %v862 = vrot.slane %v861, 4
  %v863 = vadd.f32 %v861, %v862
  %v864 = vrot.slane %v863, 2
  %v865 = vadd.f32 %v863, %v864
  %v866 = vrot.slane %v865, 1
  %v867 = vadd.f32 %v865, %v866
  %v868 = vsel %vm547, %v792, 0.0
  %v869 = vrot.slane %v868, 4
  %v870 = vadd.f32 %v868, %v869
  %v871 = vrot.slane %v870, 2
  %v872 = vadd.f32 %v870, %v871
  %v873 = vrot.slane %v872, 1
  %v874 = vadd.f32 %v872, %v873
  %v875 = vsel %vm547, %v793, 0.0
  %v876 = vrot.slane %v875, 4
  %v877 = vadd.f32 %v875, %v876
  %v878 = vrot.slane %v877, 2
  %v879 = vadd.f32 %v877, %v878
  %v880 = vrot.slane %v879, 1
  %v881 = vadd.f32 %v879, %v880
  %v882 = vsel %vm547, %v794, 0.0
  %v883 = vrot.slane %v882, 4
  %v884 = vadd.f32 %v882, %v883
  %v885 = vrot.slane %v884, 2
  %v886 = vadd.f32 %v884, %v885
  %v887 = vrot.slane %v886, 1
  %v888 = vadd.f32 %v886, %v887
  %v889 = vsel %vm547, %v795, 0.0
  %v890 = vrot.slane %v889, 4
  %v891 = vadd.f32 %v889, %v890
  %v892 = vrot.slane %v891, 2
  %v893 = vadd.f32 %v891, %v892
  %v894 = vrot.slane %v893, 1
  %v895 = vadd.f32 %v893, %v894
  %v896 = vsel %vm547, %v796, 0.0
  %v897 = vrot.slane %v896, 4
  %v898 = vadd.f32 %v896, %v897
  %v899 = vrot.slane %v898, 2
  %v900 = vadd.f32 %v898, %v899
  %v901 = vrot.slane %v900, 1
  %v902 = vadd.f32 %v900, %v901
  %v903 = vsel %vm547, %v797, 0.0
  %v904 = vrot.slane %v903, 4
  %v905 = vadd.f32 %v903, %v904
  %v906 = vrot.slane %v905, 2
  %v907 = vadd.f32 %v905, %v906
  %v908 = vrot.slane %v907, 1
  %v909 = vadd.f32 %v907, %v908
  %v926 = vcombine.low %v804, %v811
  %v927 = vcombine.low %v818, %v825
  %v928 = vcombine.low %v832, %v839
  %v929 = vcombine.low %v846, %v853
  %v931 = vunpack.c.l.s4 1966171168
  %v932 = vunpack.c.0.s8 %v931
  %v933 = vlaneseq
  %v934 = vshrl.u32 %v933, 7
  %v935 = vsub.s32 %v932, %v934
  %v936 = vrot.slane %v926, %v935
  %v938 = vunpack.c.l.s4 1966171168
  %v939 = vunpack.c.0.s8 %v938
  %v940 = vlaneseq
  %v941 = vshrl.u32 %v940, 7
  %v942 = vsub.s32 %v939, %v941
  %v943 = vrot.slane %v927, %v942
  %v945 = vunpack.c.l.s4 1966171168
  %v946 = vunpack.c.0.s8 %v945
  %v947 = vlaneseq
  %v948 = vshrl.u32 %v947, 7
  %v949 = vsub.s32 %v946, %v948
  %v950 = vrot.slane %v928, %v949
  %v952 = vunpack.c.l.s4 1966171168
  %v953 = vunpack.c.0.s8 %v952
  %v954 = vlaneseq
  %v955 = vshrl.u32 %v954, 7
  %v956 = vsub.s32 %v953, %v955
  %v957 = vrot.slane %v929, %v956
  %v958 = vcombine.low %v936, %v943
  %v959 = vcombine.low %v950, %v957
  %v961 = vunpack.c.l.s4 1966171168
  %v962 = vunpack.c.0.s8 %v961
  %v963 = vlaneseq
  %v964 = vshrl.u32 %v963, 7
  %v965 = vsub.s32 %v962, %v964
  %v966 = vrot.slane %v958, %v965
  %v968 = vunpack.c.l.s4 1966171168
  %v969 = vunpack.c.0.s8 %v968
  %v970 = vlaneseq
  %v971 = vshrl.u32 %v970, 7
  %v972 = vsub.s32 %v969, %v971
  %v973 = vrot.slane %v959, %v972
  %v974 = vcombine.low %v966, %v973
  %v975 = vcombine.low %v860, %v867
  %v976 = vcombine.low %v874, %v881
  %v977 = vcombine.low %v888, %v895
  %v978 = vcombine.low %v902, %v909
  %v980 = vunpack.c.l.s4 1966171168
  %v981 = vunpack.c.0.s8 %v980
  %v982 = vlaneseq
  %v983 = vshrl.u32 %v982, 7
  %v984 = vsub.s32 %v981, %v983
  %v985 = vrot.slane %v975, %v984
  %v987 = vunpack.c.l.s4 1966171168
  %v988 = vunpack.c.0.s8 %v987
  %v989 = vlaneseq
  %v990 = vshrl.u32 %v989, 7
  %v991 = vsub.s32 %v988, %v990
  %v992 = vrot.slane %v976, %v991
  %v994 = vunpack.c.l.s4 1966171168
  %v995 = vunpack.c.0.s8 %v994
  %v996 = vlaneseq
  %v997 = vshrl.u32 %v996, 7
  %v998 = vsub.s32 %v995, %v997
  %v999 = vrot.slane %v977, %v998
  %v1001 = vunpack.c.l.s4 1966171168
  %v1002 = vunpack.c.0.s8 %v1001
  %v1003 = vlaneseq
  %v1004 = vshrl.u32 %v1003, 7
  %v1005 = vsub.s32 %v1002, %v1004
  %v1006 = vrot.slane %v978, %v1005
  %v1007 = vcombine.low %v985, %v992
  %v1008 = vcombine.low %v999, %v1006
  %v1010 = vunpack.c.l.s4 1966171168
  %v1011 = vunpack.c.0.s8 %v1010
  %v1012 = vlaneseq
  %v1013 = vshrl.u32 %v1012, 7
  %v1014 = vsub.s32 %v1011, %v1013
  %v1015 = vrot.slane %v1007, %v1014
  %v1017 = vunpack.c.l.s4 1966171168
  %v1018 = vunpack.c.0.s8 %v1017
  %v1019 = vlaneseq
  %v1020 = vshrl.u32 %v1019, 7
  %v1021 = vsub.s32 %v1018, %v1020
  %v1022 = vrot.slane %v1008, %v1021
  %v1023 = vcombine.low %v1015, %v1022
  %v1026 = vadd.f32 %v780, %v974
  %v1027 = vadd.f32 %v781, %v1023
  %1028 = vst [vmem:[%s4] sm:$0xff] %v1026
  %1029 = vst [vmem:[%s4 + $0x8] sm:$0xff] %v1027
  // Predicated region
  $region14: #{generator_forward.9} parent=0 // pred_check
    _
  $region15: #{generator_forward.9} parent=0 // pred_check_branch
    %1031 = sbr.rel (0) target = $region17
  $region16: #{generator_forward.9} parent=0 // pred_region
    _
  $region17: #{generator_forward.9} parent=0 // pred_fallthru
    _
  // Predicated region
  $region18: #{generator_forward.9} parent=0 // pred_check
    _
  $region19: #{generator_forward.9} parent=0 // pred_check_branch
    %1033 = sbr.rel (0) target = $region21
  $region20: #{generator_forward.9} parent=0 // pred_region
    _
  $region21: #{generator_forward.9} parent=0 // pred_fallthru
    _
  // Predicated region
  $region22: #{generator_forward.9} parent=0 // pred_check
    _
  $region23: #{generator_forward.9} parent=0 // pred_check_branch
    %1035 = sbr.rel (0) target = $region25
  $region24: #{generator_forward.9} parent=0 // pred_region
    _
  $region25: #{generator_forward.9} parent=0 // pred_fallthru
    _
  // Predicated region
  $region26: #{generator_forward.9} parent=0 // pred_check
    _
  $region27: #{generator_forward.9} parent=0 // pred_check_branch
    %1037 = sbr.rel (0) target = $region29
  $region28: #{generator_forward.9} parent=0 // pred_region
    _
  $region29: #{generator_forward.9} parent=0 // pred_fallthru
    _
  // Predicated region
  $region30: #{generator_forward.9} parent=0 // pred_check
    _
  $region31: #{generator_forward.9} parent=0 // pred_check_branch
    %1039 = sbr.rel (0) target = $region33
  $region32: #{generator_forward.9} parent=0 // pred_region
    _
  $region33: #{generator_forward.9} parent=0 // pred_fallthru
    _
  // Predicated region
  $region34: #{generator_forward.9} parent=0 // pred_check
    _
  $region35: #{generator_forward.9} parent=0 // pred_check_branch
    %1041 = sbr.rel (0) target = $region37
  $region36: #{generator_forward.9} parent=0 // pred_region
    _
  $region37: #{generator_forward.9} parent=0 // pred_fallthru
    _

// kernel: generator_forward.10
$region0: #{generator_forward.10}
  #allocation0 [shape = 'u32[]', space=smem, size = 0x4, offset = 0x4, fixed_abs, tag = 'smem constant byte address 0x4 - core index']
  #allocation1 [shape = 'u32[144,128]{1,0:T(1,128)}', space=vmem, size = 0x12000, scoped, tag = 'internal scratch']
  %s0 = inlined_call_operand.vmem [shape: f32[2,2048], index: 0, kind: input, shape index: {}]
  %s1 = inlined_call_operand.vmem [shape: f32[1,2048], index: 1, kind: input, shape index: {}]
  %s2 = inlined_call_operand.vmem [shape: f32[1,2048], index: 2, kind: input, shape index: {}]
  %s3 = inlined_call_operand.vmem [shape: bf16[2,2048], index: 3, kind: output, shape index: {}]
  %s4 = sld [smem:[#allocation0]]
  $region22: #{generator_forward.10} parent=0
    _
  %s6 = ssub.s32 1, %s4
  %s7 = scalar_select 0, %s6, %s4
  // Predicated region
  $region2: #{generator_forward.10} parent=0 // pred_check
    _
  $region3: #{generator_forward.10} parent=0 // pred_check_branch
    %9 = sbr.rel (0) target = $region5
  $region4: #{generator_forward.10} parent=0 // pred_region
    _
  $region5: #{generator_forward.10} parent=0 // pred_fallthru
    _
  // Predicated region
  $region6: #{generator_forward.10} parent=0 // pred_check
    _
  $region7: #{generator_forward.10} parent=0 // pred_check_branch
    %11 = sbr.rel (0) target = $region9
  $region8: #{generator_forward.10} parent=0 // pred_region
    _
  $region9: #{generator_forward.10} parent=0 // pred_fallthru
    _
  // Predicated region
  $region10: #{generator_forward.10} parent=0 // pred_check
    _
  $region11: #{generator_forward.10} parent=0 // pred_check_branch
    %13 = sbr.rel (0) target = $region13
  $region12: #{generator_forward.10} parent=0 // pred_region
    _
  $region13: #{generator_forward.10} parent=0 // pred_fallthru
    _
  %v14 = vld [vmem:[%s0] sm:$0xff]
  %v15 = vld [vmem:[%s0 + $0x8] sm:$0xff]
  %v16 = vld [vmem:[%s0 + $0x10] sm:$0xff]
  %v17 = vld [vmem:[%s0 + $0x18] sm:$0xff]
  %v18 = vld [vmem:[%s1] sm:$0xff]
  %v19 = vld [vmem:[%s1 + $0x8] sm:$0xff]
  %v22 = vlaneseq
  %v23 = vshrl.u32 %v22, 7
  %v24 = vsub.s32 0, %v23
  %v25 = vrot.slane %v18, %v24
  %v26 = vlaneseq
  %v27 = vshrl.u32 %v26, 7
  %v28 = vsub.s32 1, %v27
  %v29 = vrot.slane %v18, %v28
  %v30 = vlaneseq
  %v31 = vshrl.u32 %v30, 7
  %v32 = vsub.s32 2, %v31
  %v33 = vrot.slane %v18, %v32
  %v34 = vlaneseq
  %v35 = vshrl.u32 %v34, 7
  %v36 = vsub.s32 3, %v35
  %v37 = vrot.slane %v18, %v36
  %v38 = vlaneseq
  %v39 = vshrl.u32 %v38, 7
  %v40 = vsub.s32 4, %v39
  %v41 = vrot.slane %v18, %v40
  %v42 = vlaneseq
  %v43 = vshrl.u32 %v42, 7
  %v44 = vsub.s32 5, %v43
  %v45 = vrot.slane %v18, %v44
  %v46 = vlaneseq
  %v47 = vshrl.u32 %v46, 7
  %v48 = vsub.s32 6, %v47
  %v49 = vrot.slane %v18, %v48
  %v50 = vlaneseq
  %v51 = vshrl.u32 %v50, 7
  %v52 = vsub.s32 7, %v51
  %v53 = vrot.slane %v18, %v52
  %v54 = vlaneseq
  %v55 = vshrl.u32 %v54, 7
  %v56 = vsub.s32 0, %v55
  %v57 = vrot.slane %v19, %v56
  %v58 = vlaneseq
  %v59 = vshrl.u32 %v58, 7
  %v60 = vsub.s32 1, %v59
  %v61 = vrot.slane %v19, %v60
  %v62 = vlaneseq
  %v63 = vshrl.u32 %v62, 7
  %v64 = vsub.s32 2, %v63
  %v65 = vrot.slane %v19, %v64
  %v66 = vlaneseq
  %v67 = vshrl.u32 %v66, 7
  %v68 = vsub.s32 3, %v67
  %v69 = vrot.slane %v19, %v68
  %v70 = vlaneseq
  %v71 = vshrl.u32 %v70, 7
  %v72 = vsub.s32 4, %v71
  %v73 = vrot.slane %v19, %v72
  %v74 = vlaneseq
  %v75 = vshrl.u32 %v74, 7
  %v76 = vsub.s32 5, %v75
  %v77 = vrot.slane %v19, %v76
  %v78 = vlaneseq
  %v79 = vshrl.u32 %v78, 7
  %v80 = vsub.s32 6, %v79
  %v81 = vrot.slane %v19, %v80
  %v82 = vlaneseq
  %v83 = vshrl.u32 %v82, 7
  %v84 = vsub.s32 7, %v83
  %v85 = vrot.slane %v19, %v84
  %v86 = vcombine.low %v25, %v29
  %v87 = vcombine.low %v33, %v37
  %v89 = vunpack.c.l.s4 1983009808
  %v90 = vunpack.c.0.s8 %v89
  %v91 = vlaneseq
  %v92 = vshrl.u32 %v91, 7
  %v93 = vsub.s32 %v90, %v92
  %v94 = vrot.slane %v86, %v93
  %v96 = vunpack.c.l.s4 1983009808
  %v97 = vunpack.c.0.s8 %v96
  %v98 = vlaneseq
  %v99 = vshrl.u32 %v98, 7
  %v100 = vsub.s32 %v97, %v99
  %v101 = vrot.slane %v87, %v100
  %v102 = vcombine.low %v94, %v101
  %v103 = vcombine.low %v41, %v45
  %v104 = vcombine.low %v49, %v53
  %v106 = vunpack.c.l.s4 1983009808
  %v107 = vunpack.c.0.s8 %v106
  %v108 = vlaneseq
  %v109 = vshrl.u32 %v108, 7
  %v110 = vsub.s32 %v107, %v109
  %v111 = vrot.slane %v103, %v110
  %v113 = vunpack.c.l.s4 1983009808
  %v114 = vunpack.c.0.s8 %v113
  %v115 = vlaneseq
  %v116 = vshrl.u32 %v115, 7
  %v117 = vsub.s32 %v114, %v116
  %v118 = vrot.slane %v104, %v117
  %v119 = vcombine.low %v111, %v118
  %v120 = vcombine.low %v57, %v61
  %v121 = vcombine.low %v65, %v69
  %v123 = vunpack.c.l.s4 1983009808
  %v124 = vunpack.c.0.s8 %v123
  %v125 = vlaneseq
  %v126 = vshrl.u32 %v125, 7
  %v127 = vsub.s32 %v124, %v126
  %v128 = vrot.slane %v120, %v127
  %v130 = vunpack.c.l.s4 1983009808
  %v131 = vunpack.c.0.s8 %v130
  %v132 = vlaneseq
  %v133 = vshrl.u32 %v132, 7
  %v134 = vsub.s32 %v131, %v133
  %v135 = vrot.slane %v121, %v134
  %v136 = vcombine.low %v128, %v135
  %v137 = vcombine.low %v73, %v77
  %v138 = vcombine.low %v81, %v85
  %v140 = vunpack.c.l.s4 1983009808
  %v141 = vunpack.c.0.s8 %v140
  %v142 = vlaneseq
  %v143 = vshrl.u32 %v142, 7
  %v144 = vsub.s32 %v141, %v143
  %v145 = vrot.slane %v137, %v144
  %v147 = vunpack.c.l.s4 1983009808
  %v148 = vunpack.c.0.s8 %v147
  %v149 = vlaneseq
  %v150 = vshrl.u32 %v149, 7
  %v151 = vsub.s32 %v148, %v150
  %v152 = vrot.slane %v138, %v151
  %v153 = vcombine.low %v145, %v152
  %v158 = vmul.f32 %v14, %v102
  %v159 = vmul.f32 %v15, %v119
  %v160 = vmul.f32 %v16, %v136
  %v161 = vmul.f32 %v17, %v153
  %v162 = vld [vmem:[%s2] sm:$0xff]
  %v163 = vld [vmem:[%s2 + $0x8] sm:$0xff]
  %v166 = vlaneseq
  %v167 = vshrl.u32 %v166, 7
  %v168 = vsub.s32 0, %v167
  %v169 = vrot.slane %v162, %v168
  %v170 = vlaneseq
  %v171 = vshrl.u32 %v170, 7
  %v172 = vsub.s32 1, %v171
  %v173 = vrot.slane %v162, %v172
  %v174 = vlaneseq
  %v175 = vshrl.u32 %v174, 7
  %v176 = vsub.s32 2, %v175
  %v177 = vrot.slane %v162, %v176
  %v178 = vlaneseq
  %v179 = vshrl.u32 %v178, 7
  %v180 = vsub.s32 3, %v179
  %v181 = vrot.slane %v162, %v180
  %v182 = vlaneseq
  %v183 = vshrl.u32 %v182, 7
  %v184 = vsub.s32 4, %v183
  %v185 = vrot.slane %v162, %v184
  %v186 = vlaneseq
  %v187 = vshrl.u32 %v186, 7
  %v188 = vsub.s32 5, %v187
  %v189 = vrot.slane %v162, %v188
  %v190 = vlaneseq
  %v191 = vshrl.u32 %v190, 7
  %v192 = vsub.s32 6, %v191
  %v193 = vrot.slane %v162, %v192
  %v194 = vlaneseq
  %v195 = vshrl.u32 %v194, 7
  %v196 = vsub.s32 7, %v195
  %v197 = vrot.slane %v162, %v196
  %v198 = vlaneseq
  %v199 = vshrl.u32 %v198, 7
  %v200 = vsub.s32 0, %v199
  %v201 = vrot.slane %v163, %v200
  %v202 = vlaneseq
  %v203 = vshrl.u32 %v202, 7
  %v204 = vsub.s32 1, %v203
  %v205 = vrot.slane %v163, %v204
  %v206 = vlaneseq
  %v207 = vshrl.u32 %v206, 7
  %v208 = vsub.s32 2, %v207
  %v209 = vrot.slane %v163, %v208
  %v210 = vlaneseq
  %v211 = vshrl.u32 %v210, 7
  %v212 = vsub.s32 3, %v211
  %v213 = vrot.slane %v163, %v212
  %v214 = vlaneseq
  %v215 = vshrl.u32 %v214, 7
  %v216 = vsub.s32 4, %v215
  %v217 = vrot.slane %v163, %v216
  %v218 = vlaneseq
  %v219 = vshrl.u32 %v218, 7
  %v220 = vsub.s32 5, %v219
  %v221 = vrot.slane %v163, %v220
  %v222 = vlaneseq
  %v223 = vshrl.u32 %v222, 7
  %v224 = vsub.s32 6, %v223
  %v225 = vrot.slane %v163, %v224
  %v226 = vlaneseq
  %v227 = vshrl.u32 %v226, 7
  %v228 = vsub.s32 7, %v227
  %v229 = vrot.slane %v163, %v228
  %v230 = vcombine.low %v169, %v173
  %v231 = vcombine.low %v177, %v181
  %v233 = vunpack.c.l.s4 1983009808
  %v234 = vunpack.c.0.s8 %v233
  %v235 = vlaneseq
  %v236 = vshrl.u32 %v235, 7
  %v237 = vsub.s32 %v234, %v236
  %v238 = vrot.slane %v230, %v237
  %v240 = vunpack.c.l.s4 1983009808
  %v241 = vunpack.c.0.s8 %v240
  %v242 = vlaneseq
  %v243 = vshrl.u32 %v242, 7
  %v244 = vsub.s32 %v241, %v243
  %v245 = vrot.slane %v231, %v244
  %v246 = vcombine.low %v238, %v245
  %v247 = vcombine.low %v185, %v189
  %v248 = vcombine.low %v193, %v197
  %v250 = vunpack.c.l.s4 1983009808
  %v251 = vunpack.c.0.s8 %v250
  %v252 = vlaneseq
  %v253 = vshrl.u32 %v252, 7
  %v254 = vsub.s32 %v251, %v253
  %v255 = vrot.slane %v247, %v254
  %v257 = vunpack.c.l.s4 1983009808
  %v258 = vunpack.c.0.s8 %v257
  %v259 = vlaneseq
  %v260 = vshrl.u32 %v259, 7
  %v261 = vsub.s32 %v258, %v260
  %v262 = vrot.slane %v248, %v261
  %v263 = vcombine.low %v255, %v262
  %v264 = vcombine.low %v201, %v205
  %v265 = vcombine.low %v209, %v213
  %v267 = vunpack.c.l.s4 1983009808
  %v268 = vunpack.c.0.s8 %v267
  %v269 = vlaneseq
  %v270 = vshrl.u32 %v269, 7
  %v271 = vsub.s32 %v268, %v270
  %v272 = vrot.slane %v264, %v271
  %v274 = vunpack.c.l.s4 1983009808
  %v275 = vunpack.c.0.s8 %v274
  %v276 = vlaneseq
  %v277 = vshrl.u32 %v276, 7
  %v278 = vsub.s32 %v275, %v277
  %v279 = vrot.slane %v265, %v278
  %v280 = vcombine.low %v272, %v279
  %v281 = vcombine.low %v217, %v221
  %v282 = vcombine.low %v225, %v229
  %v284 = vunpack.c.l.s4 1983009808
  %v285 = vunpack.c.0.s8 %v284
  %v286 = vlaneseq
  %v287 = vshrl.u32 %v286, 7
  %v288 = vsub.s32 %v285, %v287
  %v289 = vrot.slane %v281, %v288
  %v291 = vunpack.c.l.s4 1983009808
  %v292 = vunpack.c.0.s8 %v291
  %v293 = vlaneseq
  %v294 = vshrl.u32 %v293, 7
  %v295 = vsub.s32 %v292, %v294
  %v296 = vrot.slane %v282, %v295
  %v297 = vcombine.low %v289, %v296
  %v302 = vadd.f32 %v158, %v246
  %v303 = vadd.f32 %v159, %v263
  %v304 = vadd.f32 %v160, %v280
  %v305 = vadd.f32 %v161, %v297
  %v306 = vmax.f32 %v302, 0.0
  %v307 = vmax.f32 %v303, 0.0
  %v308 = vmax.f32 %v304, 0.0
  %v309 = vmax.f32 %v305, 0.0
  %v314 = vcombine.high %v306, %v306
  %v316 = vunpack.c.l.s4 1983009808
  %v317 = vunpack.c.0.s8 %v316
  %v318 = vlaneseq
  %v319 = vshrl.u32 %v318, 7
  %v320 = vsub.s32 %v317, %v319
  %v321 = vrot.slane %v306, %v320
  %v323 = vunpack.c.l.s4 1983009808
  %v324 = vunpack.c.0.s8 %v323
  %v325 = vlaneseq
  %v326 = vshrl.u32 %v325, 7
  %v327 = vsub.s32 %v324, %v326
  %v328 = vrot.slane %v314, %v327
  %v329 = vcombine.high %v321, %v321
  %v330 = vcombine.high %v328, %v328
  %v331 = vcombine.high %v307, %v307
  %v333 = vunpack.c.l.s4 1983009808
  %v334 = vunpack.c.0.s8 %v333
  %v335 = vlaneseq
  %v336 = vshrl.u32 %v335, 7
  %v337 = vsub.s32 %v334, %v336
  %v338 = vrot.slane %v307, %v337
  %v340 = vunpack.c.l.s4 1983009808
  %v341 = vunpack.c.0.s8 %v340
  %v342 = vlaneseq
  %v343 = vshrl.u32 %v342, 7
  %v344 = vsub.s32 %v341, %v343
  %v345 = vrot.slane %v331, %v344
  %v346 = vcombine.high %v338, %v338
  %v347 = vcombine.high %v345, %v345
  %v348 = vcombine.high %v308, %v308
  %v350 = vunpack.c.l.s4 1983009808
  %v351 = vunpack.c.0.s8 %v350
  %v352 = vlaneseq
  %v353 = vshrl.u32 %v352, 7
  %v354 = vsub.s32 %v351, %v353
  %v355 = vrot.slane %v308, %v354
  %v357 = vunpack.c.l.s4 1983009808
  %v358 = vunpack.c.0.s8 %v357
  %v359 = vlaneseq
  %v360 = vshrl.u32 %v359, 7
  %v361 = vsub.s32 %v358, %v360
  %v362 = vrot.slane %v348, %v361
  %v363 = vcombine.high %v355, %v355
  %v364 = vcombine.high %v362, %v362
  %v365 = vcombine.high %v309, %v309
  %v367 = vunpack.c.l.s4 1983009808
  %v368 = vunpack.c.0.s8 %v367
  %v369 = vlaneseq
  %v370 = vshrl.u32 %v369, 7
  %v371 = vsub.s32 %v368, %v370
  %v372 = vrot.slane %v309, %v371
  %v374 = vunpack.c.l.s4 1983009808
  %v375 = vunpack.c.0.s8 %v374
  %v376 = vlaneseq
  %v377 = vshrl.u32 %v376, 7
  %v378 = vsub.s32 %v375, %v377
  %v379 = vrot.slane %v365, %v378
  %v380 = vcombine.high %v372, %v372
  %v381 = vcombine.high %v379, %v379
  %v398 = vpack.c.bf16 %v321, %v321
  %v399 = vpack.c.bf16 %v329, %v329
  %v400 = vpack.c.bf16 %v328, %v328
  %v401 = vpack.c.bf16 %v330, %v330
  %v402 = vpack.c.bf16 %v338, %v338
  %v403 = vpack.c.bf16 %v346, %v346
  %v404 = vpack.c.bf16 %v345, %v345
  %v405 = vpack.c.bf16 %v347, %v347
  %v406 = vpack.c.bf16 %v355, %v355
  %v407 = vpack.c.bf16 %v363, %v363
  %v408 = vpack.c.bf16 %v362, %v362
  %v409 = vpack.c.bf16 %v364, %v364
  %v410 = vpack.c.bf16 %v372, %v372
  %v411 = vpack.c.bf16 %v380, %v380
  %v412 = vpack.c.bf16 %v379, %v379
  %v413 = vpack.c.bf16 %v381, %v381
  %v430 = vcombine.low %v398, %v399
  %v431 = vcombine.low %v400, %v401
  %v432 = vcombine.low %v402, %v403
  %v433 = vcombine.low %v404, %v405
  %v435 = vunpack.c.l.s4 1966171168
  %v436 = vunpack.c.0.s8 %v435
  %v437 = vlaneseq
  %v438 = vshrl.u32 %v437, 7
  %v439 = vsub.s32 %v436, %v438
  %v440 = vrot.slane %v430, %v439
  %v442 = vunpack.c.l.s4 1966171168
  %v443 = vunpack.c.0.s8 %v442
  %v444 = vlaneseq
  %v445 = vshrl.u32 %v444, 7
  %v446 = vsub.s32 %v443, %v445
  %v447 = vrot.slane %v431, %v446
  %v449 = vunpack.c.l.s4 1966171168
  %v450 = vunpack.c.0.s8 %v449
  %v451 = vlaneseq
  %v452 = vshrl.u32 %v451, 7
  %v453 = vsub.s32 %v450, %v452
  %v454 = vrot.slane %v432, %v453
  %v456 = vunpack.c.l.s4 1966171168
  %v457 = vunpack.c.0.s8 %v456
  %v458 = vlaneseq
  %v459 = vshrl.u32 %v458, 7
  %v460 = vsub.s32 %v457, %v459
  %v461 = vrot.slane %v433, %v460
  %v462 = vcombine.low %v440, %v447
  %v463 = vcombine.low %v454, %v461
  %v465 = vunpack.c.l.s4 1966171168
  %v466 = vunpack.c.0.s8 %v465
  %v467 = vlaneseq
  %v468 = vshrl.u32 %v467, 7
  %v469 = vsub.s32 %v466, %v468
  %v470 = vrot.slane %v462, %v469
  %v472 = vunpack.c.l.s4 1966171168
  %v473 = vunpack.c.0.s8 %v472
  %v474 = vlaneseq
  %v475 = vshrl.u32 %v474, 7
  %v476 = vsub.s32 %v473, %v475
  %v477 = vrot.slane %v463, %v476
  %v478 = vcombine.low %v470, %v477
  %v479 = vcombine.low %v406, %v407
  %v480 = vcombine.low %v408, %v409
  %v481 = vcombine.low %v410, %v411
  %v482 = vcombine.low %v412, %v413
  %v484 = vunpack.c.l.s4 1966171168
  %v485 = vunpack.c.0.s8 %v484
  %v486 = vlaneseq
  %v487 = vshrl.u32 %v486, 7
  %v488 = vsub.s32 %v485, %v487
  %v489 = vrot.slane %v479, %v488
  %v491 = vunpack.c.l.s4 1966171168
  %v492 = vunpack.c.0.s8 %v491
  %v493 = vlaneseq
  %v494 = vshrl.u32 %v493, 7
  %v495 = vsub.s32 %v492, %v494
  %v496 = vrot.slane %v480, %v495
  %v498 = vunpack.c.l.s4 1966171168
  %v499 = vunpack.c.0.s8 %v498
  %v500 = vlaneseq
  %v501 = vshrl.u32 %v500, 7
  %v502 = vsub.s32 %v499, %v501
  %v503 = vrot.slane %v481, %v502
  %v505 = vunpack.c.l.s4 1966171168
  %v506 = vunpack.c.0.s8 %v505
  %v507 = vlaneseq
  %v508 = vshrl.u32 %v507, 7
  %v509 = vsub.s32 %v506, %v508
  %v510 = vrot.slane %v482, %v509
  %v511 = vcombine.low %v489, %v496
  %v512 = vcombine.low %v503, %v510
  %v514 = vunpack.c.l.s4 1966171168
  %v515 = vunpack.c.0.s8 %v514
  %v516 = vlaneseq
  %v517 = vshrl.u32 %v516, 7
  %v518 = vsub.s32 %v515, %v517
  %v519 = vrot.slane %v511, %v518
  %v521 = vunpack.c.l.s4 1966171168
  %v522 = vunpack.c.0.s8 %v521
  %v523 = vlaneseq
  %v524 = vshrl.u32 %v523, 7
  %v525 = vsub.s32 %v522, %v524
  %v526 = vrot.slane %v512, %v525
  %v527 = vcombine.low %v519, %v526
  %530 = vst [vmem:[%s3] sm:$0xff] %v478
  %531 = vst [vmem:[%s3 + $0x8] sm:$0xff] %v527
  // Predicated region
  $region14: #{generator_forward.10} parent=0 // pred_check
    _
  $region15: #{generator_forward.10} parent=0 // pred_check_branch
    %533 = sbr.rel (0) target = $region17
  $region16: #{generator_forward.10} parent=0 // pred_region
    _
  $region17: #{generator_forward.10} parent=0 // pred_fallthru
    _
  // Predicated region
  $region18: #{generator_forward.10} parent=0 // pred_check
    _
  $region19: #{generator_forward.10} parent=0 // pred_check_branch
    %535 = sbr.rel (0) target = $region21
  $region20: #{generator_forward.10} parent=0 // pred_region
    _
  $region21: #{generator_forward.10} parent=0 // pred_fallthru
    _

// kernel: tile.33
$region0: #{tile.33}
  #allocation0 [shape = 's32[1]{0}', space=sflag, size = 0x4, scoped, tag = 'scoped memory for tile.33']
  %s0 = inlined_call_operand.vmem [shape: f32[64], index: 0, kind: input, shape index: {}]
  %s1 = inlined_call_operand.vmem [shape: f32[2,64], index: 1, kind: output, shape index: {}]
  // Predicated region
  $region2: #{tile.33} parent=0 // pred_check
    _
  $region3: #{tile.33} parent=0 // pred_check_branch
    %3 = sbr.rel (0) target = $region5
  $region4: #{tile.33} parent=0 // pred_region
    _
  $region5: #{tile.33} parent=0 // pred_fallthru
    _
  %v4 = vld [vmem:[%s0] ss:$0 sm:$0xff]
  %5 = vst [vmem:[%s1] sm:$0x3] %v4

// kernel: tile.38
$region0: #{tile.38}
  %s0 = inlined_call_operand.vmem [shape: f32[2,64], index: 0, kind: input, shape index: {}]
  %s1 = inlined_call_operand.vmem [shape: f32[1,128], index: 1, kind: output, shape index: {}]
  $region1: #{tile.38} parent=0
    #allocation0 [shape = 'u8[4096]{0}', space=vmem, size = 0x1000, scoped, tag = 'scoped mem for output reshape']
    #allocation1 [shape = 'u8[4096]{0}', space=vmem, size = 0x1000, scoped, tag = 'scoped mem for input reshape']
    %s3 = sshllo.u32 0, 2
    %v4 = vld [vmem:[%s0] sm:%s3]
    %5 = vst [vmem:[#allocation1] sm:%s3] %v4
    %v6 = vld [vmem:[#allocation1] sm:$0x1]
    %vm7 = vcmask 523264
    %8 = vst.msk [vmem:[#allocation0] sm:$0x1] %vm7, %v6
    %s9 = scalar_lea.vmem [#allocation1], 1
    %v10 = vld [vmem:[%s9] sm:$0x1]
    %11 = vrot.lane.b32.xlu0 %v10, 64
    %v12 = vpop.permute.xlu0 %11
    %vm13 = vcmask 1048064
    %14 = vst.msk [vmem:[#allocation0] sm:$0x1] %vm13, %v12
    %s16 = sshllo.u32 0, 1
    %v18 = vld [vmem:[#allocation0] sm:%s16]
    %s19 = sshllo.u32 0, 1
    %20 = vst [vmem:[%s1] sm:%s19] %v18

// kernel: generator_forward.12
$region0: #{generator_forward.12}
  #allocation0 [shape = 'u32[]', space=smem, size = 0x4, offset = 0x4, fixed_abs, tag = 'smem constant byte address 0x4 - core index']
  #allocation1 [shape = 'u32[144,128]{1,0:T(1,128)}', space=vmem, size = 0x12000, scoped, tag = 'internal scratch']
  %s0 = inlined_call_operand.vmem [shape: f32[64,128], index: 0, kind: input, shape index: {}]
  %s1 = inlined_call_operand.vmem [shape: f32[1,128], index: 1, kind: input, shape index: {}]
  %s2 = inlined_call_operand.vmem [shape: f32[1,128], index: 2, kind: input, shape index: {}]
  %s3 = inlined_call_operand.vmem [shape: bf16[64,128], index: 3, kind: output, shape index: {}]
  %s4 = sld [smem:[#allocation0]]
  $region22: #{generator_forward.12} parent=0
    _
  %s6 = ssub.s32 1, %s4
  %s7 = scalar_select 0, %s6, %s4
  // Predicated region
  $region2: #{generator_forward.12} parent=0 // pred_check
    _
  $region3: #{generator_forward.12} parent=0 // pred_check_branch
    %9 = sbr.rel (0) target = $region5
  $region4: #{generator_forward.12} parent=0 // pred_region
    _
  $region5: #{generator_forward.12} parent=0 // pred_fallthru
    _
  // Predicated region
  $region6: #{generator_forward.12} parent=0 // pred_check
    _
  $region7: #{generator_forward.12} parent=0 // pred_check_branch
    %11 = sbr.rel (0) target = $region9
  $region8: #{generator_forward.12} parent=0 // pred_region
    _
  $region9: #{generator_forward.12} parent=0 // pred_fallthru
    _
  // Predicated region
  $region10: #{generator_forward.12} parent=0 // pred_check
    _
  $region11: #{generator_forward.12} parent=0 // pred_check_branch
    %13 = sbr.rel (0) target = $region13
  $region12: #{generator_forward.12} parent=0 // pred_region
    _
  $region13: #{generator_forward.12} parent=0 // pred_fallthru
    _
  %v14 = vld [vmem:[%s0] sm:$0xff]
  %v15 = vld [vmem:[%s0 + $0x8] sm:$0xff]
  %v16 = vld [vmem:[%s0 + $0x10] sm:$0xff]
  %v17 = vld [vmem:[%s0 + $0x18] sm:$0xff]
  %v18 = vld [vmem:[%s0 + $0x20] sm:$0xff]
  %v19 = vld [vmem:[%s0 + $0x28] sm:$0xff]
  %v20 = vld [vmem:[%s0 + $0x30] sm:$0xff]
  %v21 = vld [vmem:[%s0 + $0x38] sm:$0xff]
  %v22 = vld [vmem:[%s1] sm:$0x1]
  %v24 = vlaneseq
  %v25 = vshrl.u32 %v24, 7
  %v26 = vsub.s32 0, %v25
  %v27 = vrot.slane %v22, %v26
  %v29 = vmul.f32 %v14, %v27
  %v30 = vmul.f32 %v15, %v27
  %v31 = vmul.f32 %v16, %v27
  %v32 = vmul.f32 %v17, %v27
  %v33 = vmul.f32 %v18, %v27
  %v34 = vmul.f32 %v19, %v27
  %v35 = vmul.f32 %v20, %v27
  %v36 = vmul.f32 %v21, %v27
  %v37 = vld [vmem:[%s2] sm:$0x1]
  %v39 = vlaneseq
  %v40 = vshrl.u32 %v39, 7
  %v41 = vsub.s32 0, %v40
  %v42 = vrot.slane %v37, %v41
  %v44 = vadd.f32 %v29, %v42
  %v45 = vadd.f32 %v30, %v42
  %v46 = vadd.f32 %v31, %v42
  %v47 = vadd.f32 %v32, %v42
  %v48 = vadd.f32 %v33, %v42
  %v49 = vadd.f32 %v34, %v42
  %v50 = vadd.f32 %v35, %v42
  %v51 = vadd.f32 %v36, %v42
  %v52 = vmax.f32 %v44, 0.0
  %v53 = vmax.f32 %v45, 0.0
  %v54 = vmax.f32 %v46, 0.0
  %v55 = vmax.f32 %v47, 0.0
  %v56 = vmax.f32 %v48, 0.0
  %v57 = vmax.f32 %v49, 0.0
  %v58 = vmax.f32 %v50, 0.0
  %v59 = vmax.f32 %v51, 0.0
  %v60 = vpack.c.bf16 %v53, %v52
  %v61 = vpack.c.bf16 %v55, %v54
  %v62 = vpack.c.bf16 %v57, %v56
  %v63 = vpack.c.bf16 %v59, %v58
  %v68 = vunpack.c.l.b16 %v60
  %v69 = vunpack.c.h.b16 %v60
  %v70 = vunpack.c.l.b16 %v61
  %v71 = vunpack.c.h.b16 %v61
  %v72 = vunpack.c.l.b16 %v62
  %v73 = vunpack.c.h.b16 %v62
  %v74 = vunpack.c.l.b16 %v63
  %v75 = vunpack.c.h.b16 %v63
  %v76 = vpack.c.b16 %v68, %v68
  %v77 = vpack.c.b16 %v69, %v69
  %v78 = vpack.c.b16 %v70, %v70
  %v79 = vpack.c.b16 %v71, %v71
  %v80 = vpack.c.b16 %v72, %v72
  %v81 = vpack.c.b16 %v73, %v73
  %v82 = vpack.c.b16 %v74, %v74
  %v83 = vpack.c.b16 %v75, %v75
  %92 = vst [vmem:[%s3] sm:$0xf] %v76
  %93 = vst [vmem:[%s3 + $0x4] sm:$0xf] %v77
  %94 = vst [vmem:[%s3 + $0x8] sm:$0xf] %v78
  %95 = vst [vmem:[%s3 + $0xc] sm:$0xf] %v79
  %96 = vst [vmem:[%s3 + $0x10] sm:$0xf] %v80
  %97 = vst [vmem:[%s3 + $0x14] sm:$0xf] %v81
  %98 = vst [vmem:[%s3 + $0x18] sm:$0xf] %v82
  %99 = vst [vmem:[%s3 + $0x1c] sm:$0xf] %v83
  // Predicated region
  $region14: #{generator_forward.12} parent=0 // pred_check
    _
  $region15: #{generator_forward.12} parent=0 // pred_check_branch
    %101 = sbr.rel (0) target = $region17
  $region16: #{generator_forward.12} parent=0 // pred_region
    _
  $region17: #{generator_forward.12} parent=0 // pred_fallthru
    _
  // Predicated region
  $region18: #{generator_forward.12} parent=0 // pred_check
    _
  $region19: #{generator_forward.12} parent=0 // pred_check_branch
    %103 = sbr.rel (0) target = $region21
  $region20: #{generator_forward.12} parent=0 // pred_region
    _
  $region21: #{generator_forward.12} parent=0 // pred_fallthru
    _

// kernel: generator_forward.11
$region0: #{generator_forward.11}
  #allocation0 [shape = 'u32[]', space=smem, size = 0x4, offset = 0x4, fixed_abs, tag = 'smem constant byte address 0x4 - core index']
  #allocation1 [shape = 'u32[144,128]{1,0:T(1,128)}', space=vmem, size = 0x12000, scoped, tag = 'internal scratch']
  %s0 = inlined_call_operand.vmem [shape: bf16[4,32,512], index: 0, kind: input, shape index: {}]
  %s1 = inlined_call_operand.vmem [shape: bf16[4,512,64], index: 1, kind: input, shape index: {}]
  %s2 = inlined_call_operand.vmem [shape: f32[4,32,64], index: 2, kind: output, shape index: {0}]
  %s3 = inlined_call_operand.vmem [shape: f32[4,1,64], index: 3, kind: output, shape index: {1}]
  %s4 = inlined_call_operand.vmem [shape: f32[4,1,64], index: 4, kind: output, shape index: {2}]
  %5 = xla_tuple %s2, %s3, %s4
  %s6 = sld [smem:[#allocation0]]
  $region61: #{generator_forward.11} parent=0
    _
  %s8 = ssub.s32 1, %s6
  %s9 = scalar_select 0, %s8, %s6
  loop: start=0, step=1, limit=6
  $region2: #{generator_forward.11} parent=0 // loop_pre_header
    _
  $region3: #{generator_forward.11} parent=0 // loop_header
    %s11 = sphi 0, %s15
    %p12 = scmp.ge.s32.totalorder %s11, 6
    %s18 = sphi 0, %s30
    %s19 = sphi 0, %s26
    %s20 = sphi 0, %s18
    %s21 = sphi 0, %s19
    %s22 = sphi 0, %s20
    %s23 = sphi 0, %s21
    %s35 = sphi 0, %s37
    %s38 = sphi 0, %s35
    %s39 = sphi 0, %s38
    %s55 = sphi 0, %s39
    %s61 = sphi 0, %s63
    %s64 = sphi 0, %s61
    %s65 = sphi 0, %s64
    %s81 = sphi 0, %s65
    %s89 = sphi 0, %s91
    %s92 = sphi 0, %s89
    %s93 = sphi 0, %s92
    %s109 = sphi 0, %s93
    %s115 = sphi 0, %s117
    %s118 = sphi 0, %s115
    %s119 = sphi 0, %s118
    %s135 = sphi 0, %s119
    %s141 = sphi 0, %s143
    %s144 = sphi 0, %s141
    %s145 = sphi 0, %s144
    %s161 = sphi 0, %s145
  $region4: #{generator_forward.11} parent=0 // loop_header_branch
    %14 = sbr.rel (%p12) target = $region8
  $region5: #{generator_forward.11} parent=0 // loop_body
    %s16 = ssub.s32 %s11, 1
    %s17 = ssub.s32 %s11, 2
    %s24 = sadd.s32 1, %s19
    %p25 = scmp.ge.s32.totalorder %s24, 1
    %s26 = scalar_select %p25, 0, %s24
    %s27 = sadd.s32 1, %s18
    %s28 = scalar_select %p25, %s27, %s18
    %p29 = scmp.ge.s32.totalorder %s28, 4
    %s30 = scalar_select %p29, 0, %s28
    %s31 = ssub.s32 %s18, %s30
    %s32 = ssub.s32 %s19, %s26
    %s33 = sor.u32 %s31, %s32
    %p34 = scmp.eq.s32.totalorder %s33, 0
    %s36 = sadd.s32 %s35, 1
    %s37 = scalar_select %p34, %s35, %s36
    %p40 = pneg %p34
    %p41 = scmp.eq.s32.totalorder %s11, 3
    %p42 = por %p40, %p41
    %p43 = scmp.ne.s32.totalorder %s35, %s38
    %p44 = scmp.eq.s32.totalorder %s11, 0
    %p45 = por %p43, %p44
    %p46 = scmp.ne.s32.totalorder %s35, %s38
    %p47 = scmp.eq.s32.totalorder %s16, 3
    %p48 = por %p46, %p47
    %p49 = scmp.ne.s32.totalorder %s38, %s39
    %p50 = scmp.eq.s32.totalorder %s16, 0
    %p51 = por %p49, %p50
    %p52 = scmp.ne.s32.totalorder %s38, %s39
    %p53 = scmp.eq.s32.totalorder %s17, 3
    %p54 = por %p52, %p53
    %p56 = scmp.ne.s32.totalorder %s39, %s55
    %p57 = scmp.eq.s32.totalorder %s17, 0
    %p58 = por %p56, %p57
    %s59 = ssub.s32 %s18, %s30
    %p60 = scmp.eq.s32.totalorder %s59, 0
    %s62 = sadd.s32 %s61, 1
    %s63 = scalar_select %p60, %s61, %s62
    %p66 = pneg %p60
    %p67 = scmp.eq.s32.totalorder %s11, 3
    %p68 = por %p66, %p67
    %p69 = scmp.ne.s32.totalorder %s61, %s64
    %p70 = scmp.eq.s32.totalorder %s11, 0
    %p71 = por %p69, %p70
    %p72 = scmp.ne.s32.totalorder %s61, %s64
    %p73 = scmp.eq.s32.totalorder %s16, 3
    %p74 = por %p72, %p73
    %p75 = scmp.ne.s32.totalorder %s64, %s65
    %p76 = scmp.eq.s32.totalorder %s16, 0
    %p77 = por %p75, %p76
    %p78 = scmp.ne.s32.totalorder %s64, %s65
    %p79 = scmp.eq.s32.totalorder %s17, 3
    %p80 = por %p78, %p79
    %p82 = scmp.ne.s32.totalorder %s65, %s81
    %p83 = scmp.eq.s32.totalorder %s17, 0
    %p84 = por %p82, %p83
    %s85 = ssub.s32 %s18, %s30
    %s86 = ssub.s32 %s19, %s26
    %s87 = sor.u32 %s85, %s86
    %p88 = scmp.eq.s32.totalorder %s87, 0
    %s90 = sadd.s32 %s89, 1
    %s91 = scalar_select %p88, %s89, %s90
    %p94 = pneg %p88
    %p95 = scmp.eq.s32.totalorder %s11, 3
    %p96 = por %p94, %p95
    %p97 = scmp.ne.s32.totalorder %s89, %s92
    %p98 = scmp.eq.s32.totalorder %s11, 0
    %p99 = por %p97, %p98
    %p100 = scmp.ne.s32.totalorder %s89, %s92
    %p101 = scmp.eq.s32.totalorder %s16, 3
    %p102 = por %p100, %p101
    %p103 = scmp.ne.s32.totalorder %s92, %s93
    %p104 = scmp.eq.s32.totalorder %s16, 0
    %p105 = por %p103, %p104
    %p106 = scmp.ne.s32.totalorder %s92, %s93
    %p107 = scmp.eq.s32.totalorder %s17, 3
    %p108 = por %p106, %p107
    %p110 = scmp.ne.s32.totalorder %s93, %s109
    %p111 = scmp.eq.s32.totalorder %s17, 0
    %p112 = por %p110, %p111
    %s113 = ssub.s32 %s18, %s30
    %p114 = scmp.eq.s32.totalorder %s113, 0
    %s116 = sadd.s32 %s115, 1
    %s117 = scalar_select %p114, %s115, %s116
    %p120 = pneg %p114
    %p121 = scmp.eq.s32.totalorder %s11, 3
    %p122 = por %p120, %p121
    %p123 = scmp.ne.s32.totalorder %s115, %s118
    %p124 = scmp.eq.s32.totalorder %s11, 0
    %p125 = por %p123, %p124
    %p126 = scmp.ne.s32.totalorder %s115, %s118
    %p127 = scmp.eq.s32.totalorder %s16, 3
    %p128 = por %p126, %p127
    %p129 = scmp.ne.s32.totalorder %s118, %s119
    %p130 = scmp.eq.s32.totalorder %s16, 0
    %p131 = por %p129, %p130
    %p132 = scmp.ne.s32.totalorder %s118, %s119
    %p133 = scmp.eq.s32.totalorder %s17, 3
    %p134 = por %p132, %p133
    %p136 = scmp.ne.s32.totalorder %s119, %s135
    %p137 = scmp.eq.s32.totalorder %s17, 0
    %p138 = por %p136, %p137
    %s139 = ssub.s32 %s18, %s30
    %p140 = scmp.eq.s32.totalorder %s139, 0
    %s142 = sadd.s32 %s141, 1
    %s143 = scalar_select %p140, %s141, %s142
    %p146 = pneg %p140
    %p147 = scmp.eq.s32.totalorder %s11, 3
    %p148 = por %p146, %p147
    %p149 = scmp.ne.s32.totalorder %s141, %s144
    %p150 = scmp.eq.s32.totalorder %s11, 0
    %p151 = por %p149, %p150
    %p152 = scmp.ne.s32.totalorder %s141, %s144
    %p153 = scmp.eq.s32.totalorder %s16, 3
    %p154 = por %p152, %p153
    %p155 = scmp.ne.s32.totalorder %s144, %s145
    %p156 = scmp.eq.s32.totalorder %s16, 0
    %p157 = por %p155, %p156
    %p158 = scmp.ne.s32.totalorder %s144, %s145
    %p159 = scmp.eq.s32.totalorder %s17, 3
    %p160 = por %p158, %p159
    %p162 = scmp.ne.s32.totalorder %s145, %s161
    %p163 = scmp.eq.s32.totalorder %s17, 0
    %p164 = por %p162, %p163
    %p165 = scmp.le.s32.totalorder 1, %s11
    %p166 = scmp.lt.s32.totalorder %s11, 5
    %p167 = pnand %p165, %p166
    %p168 = pneg %p167
    // Predicated region
    $region9: #{generator_forward.11} parent=5 // pred_check
      _
    $region10: #{generator_forward.11} parent=5 // pred_check_branch
      %170 = sbr.rel (%p167) target = $region12
    $region11: #{generator_forward.11} parent=5 // pred_region
      %s171 = ssub.s32 %s11, 1
    $region12: #{generator_forward.11} parent=5 // pred_fallthru
      _
    %p172 = scmp.lt.s32.totalorder %s11, 4
    // Predicated region
    $region13: #{generator_forward.11} parent=5 // pred_check
      %p173 = pneg %p172
    $region14: #{generator_forward.11} parent=5 // pred_check_branch
      %175 = sbr.rel (%p173) target = $region16
    $region15: #{generator_forward.11} parent=5 // pred_region
      // Predicated region
      $region17: #{generator_forward.11} parent=15 // pred_check
        %p176 = pneg %p45
      $region18: #{generator_forward.11} parent=15 // pred_check_branch
        %178 = sbr.rel (%p176) target = $region20
      $region19: #{generator_forward.11} parent=15 // pred_region
        %s179 = smul.u32 4, %s19
        %p180 = scmp.lt.s32.totalorder %s18, 3
        %s181 = scalar_select %p180, %s18, 3
        %p182 = scmp.lt.s32.totalorder %s179, 3
        %s183 = scalar_select %p182, %s179, 3
        %s184 = smul.addr %s183, 4
        %s185 = smul.addr %s181, 16
        %s186 = sadd.s32 %s184, %s185
        %s187 = smul.addr %s186, 4
        %s188 = scalar_lea.vmem %s0, %s187
        %s189 = smul.u32 4, %s19
      $region20: #{generator_forward.11} parent=15 // pred_fallthru
        _
      // Predicated region
      $region21: #{generator_forward.11} parent=15 // pred_check
        %p190 = pneg %p71
      $region22: #{generator_forward.11} parent=15 // pred_check_branch
        %192 = sbr.rel (%p190) target = $region24
      $region23: #{generator_forward.11} parent=15 // pred_region
        %p193 = scmp.lt.s32.totalorder %s18, 3
        %s194 = scalar_select %p193, %s18, 3
        %s195 = smul.addr %s194, 64
        %s196 = smul.addr %s195, 4
        %s197 = scalar_lea.vmem %s1, %s196
      $region24: #{generator_forward.11} parent=15 // pred_fallthru
        _
    $region16: #{generator_forward.11} parent=5 // pred_fallthru
      _
    %p198 = scmp.le.s32.totalorder 1, %s11
    %p199 = scmp.lt.s32.totalorder %s11, 5
    %p200 = pnand %p198, %p199
    %p201 = pneg %p200
    // Predicated region
    $region25: #{generator_forward.11} parent=5 // pred_check
      _
    $region26: #{generator_forward.11} parent=5 // pred_check_branch
      %203 = sbr.rel (%p200) target = $region28
    $region27: #{generator_forward.11} parent=5 // pred_region
      %s204 = ssub.s32 %s11, 1
      %s205 = smul.u32 4, %s21
      %p206 = scmp.lt.s32.totalorder %s20, 3
      %s207 = scalar_select %p206, %s20, 3
      %p208 = scmp.lt.s32.totalorder %s205, 3
      %s209 = scalar_select %p208, %s205, 3
      %s210 = smul.addr %s209, 4
      %s211 = smul.addr %s207, 16
      %s212 = sadd.s32 %s210, %s211
      %s213 = smul.addr %s212, 4
      %s214 = scalar_lea.vmem %s0, %s213
      %p215 = pneg %p51
      %p216 = pneg %p48
      %p217 = scmp.lt.s32.totalorder %s20, 3
      %s218 = scalar_select %p217, %s20, 3
      %s219 = smul.addr %s218, 64
      %s220 = smul.addr %s219, 4
      %s221 = scalar_lea.vmem %s1, %s220
      %p222 = pneg %p77
      %p223 = pneg %p74
      %p224 = pneg %p105
      %p225 = pneg %p102
      %s226 = smul.u32 4, %s21
      %p227 = scmp.lt.s32.totalorder %s20, 3
      %s228 = scalar_select %p227, %s20, 3
      %p229 = scmp.lt.s32.totalorder %s226, 3
      %s230 = scalar_select %p229, %s226, 3
      %s231 = smul.addr %s228, 4
      %s232 = sadd.s32 %s230, %s231
      %s233 = smul.addr %s232, 8
      %s234 = scalar_lea.vmem %s2, %s233
      %p235 = pneg %p131
      %p236 = pneg %p128
      %p237 = scmp.lt.s32.totalorder %s20, 3
      %s238 = scalar_select %p237, %s20, 3
      %s239 = scalar_lea.vmem %s3, %s238
      %p240 = pneg %p157
      %p241 = pneg %p154
      %p242 = scmp.lt.s32.totalorder %s20, 3
      %s243 = scalar_select %p242, %s20, 3
      %s244 = scalar_lea.vmem %s4, %s243
      %s245 = smul.u32 4, %s21
      %p246 = scmp.lt.s32.totalorder %s20, 3
      %s247 = scalar_select %p246, %s20, 3
      %p248 = scmp.lt.s32.totalorder %s245, 3
      %s249 = scalar_select %p248, %s245, 3
      %s250 = smul.addr %s249, 4
      %s251 = smul.addr %s247, 16
      %s252 = sadd.s32 %s250, %s251
      %s253 = smul.addr %s252, 4
      %s254 = scalar_lea.vmem %s0, %s253
      %s255 = smul.u32 4, %s21
      %p256 = scmp.lt.s32.totalorder %s20, 3
      %s257 = scalar_select %p256, %s20, 3
      %s258 = smul.addr %s257, 64
      %s259 = smul.addr %s258, 4
      %s260 = scalar_lea.vmem %s1, %s259
      %s261 = smul.u32 4, %s21
      %p262 = scmp.lt.s32.totalorder %s20, 3
      %s263 = scalar_select %p262, %s20, 3
      %p264 = scmp.lt.s32.totalorder %s261, 3
      %s265 = scalar_select %p264, %s261, 3
      %s266 = smul.addr %s263, 4
      %s267 = sadd.s32 %s265, %s266
      %s268 = smul.addr %s267, 8
      %s269 = scalar_lea.vmem %s2, %s268
      %s270 = smul.u32 4, %s21
      %p271 = scmp.lt.s32.totalorder %s20, 3
      %s272 = scalar_select %p271, %s20, 3
      %s273 = scalar_lea.vmem %s3, %s272
      %p274 = scmp.lt.s32.totalorder %s20, 3
      %s275 = scalar_select %p274, %s20, 3
      %s276 = scalar_lea.vmem %s4, %s275
      %p278 = scmp.eq.s32.totalorder %s21, 0
      // Predicated region
      $region29: #{generator_forward.11} parent=27 // pred_check
        %p279 = pneg %p278
      $region30: #{generator_forward.11} parent=27 // pred_check_branch
        %281 = sbr.rel (%p279) target = $region32
      $region31: #{generator_forward.11} parent=27 // pred_region
        %vm282 = vcmask 516096
        %283 = vst.msk [vmem:[%s273] sm:$0x1] %vm282, 0.0
        %284 = vst.msk [vmem:[%s276] sm:$0x1] %vm282, 0.0
      $region32: #{generator_forward.11} parent=27 // pred_fallthru
        _
      %v285 = vld [vmem:[%s254] sm:$0xff]
      %v286 = vld [vmem:[%s254 + $0x8] sm:$0xff]
      %v287 = vld [vmem:[%s254 + $0x10] sm:$0xff]
      %v288 = vld [vmem:[%s254 + $0x18] sm:$0xff]
      %v289 = vld [vmem:[%s254 + $0x20] sm:$0xff]
      %v290 = vld [vmem:[%s254 + $0x28] sm:$0xff]
      %v291 = vld [vmem:[%s254 + $0x30] sm:$0xff]
      %v292 = vld [vmem:[%s254 + $0x38] sm:$0xff]
      %v293 = vld [vmem:[%s260] sm:$0xf]
      %v294 = vld [vmem:[%s260 + $0x4] sm:$0xf]
      %v295 = vld [vmem:[%s260 + $0x8] sm:$0xf]
      %v296 = vld [vmem:[%s260 + $0xc] sm:$0xf]
      %v297 = vld [vmem:[%s260 + $0x10] sm:$0xf]
      %v298 = vld [vmem:[%s260 + $0x14] sm:$0xf]
      %v299 = vld [vmem:[%s260 + $0x18] sm:$0xf]
      %v300 = vld [vmem:[%s260 + $0x1c] sm:$0xf]
      %v301 = vld [vmem:[%s260 + $0x20] sm:$0xf]
      %v302 = vld [vmem:[%s260 + $0x24] sm:$0xf]
      %v303 = vld [vmem:[%s260 + $0x28] sm:$0xf]
      %v304 = vld [vmem:[%s260 + $0x2c] sm:$0xf]
      %v305 = vld [vmem:[%s260 + $0x30] sm:$0xf]
      %v306 = vld [vmem:[%s260 + $0x34] sm:$0xf]
      %v307 = vld [vmem:[%s260 + $0x38] sm:$0xf]
      %v308 = vld [vmem:[%s260 + $0x3c] sm:$0xf]
      %v309 = vld [vmem:[%s260 + $0x40] sm:$0xf]
      %v310 = vld [vmem:[%s260 + $0x44] sm:$0xf]
      %v311 = vld [vmem:[%s260 + $0x48] sm:$0xf]
      %v312 = vld [vmem:[%s260 + $0x4c] sm:$0xf]
      %v313 = vld [vmem:[%s260 + $0x50] sm:$0xf]
      %v314 = vld [vmem:[%s260 + $0x54] sm:$0xf]
      %v315 = vld [vmem:[%s260 + $0x58] sm:$0xf]
      %v316 = vld [vmem:[%s260 + $0x5c] sm:$0xf]
      %v317 = vld [vmem:[%s260 + $0x60] sm:$0xf]
      %v318 = vld [vmem:[%s260 + $0x64] sm:$0xf]
      %v319 = vld [vmem:[%s260 + $0x68] sm:$0xf]
      %v320 = vld [vmem:[%s260 + $0x6c] sm:$0xf]
      %v321 = vld [vmem:[%s260 + $0x70] sm:$0xf]
      %v322 = vld [vmem:[%s260 + $0x74] sm:$0xf]
      %v323 = vld [vmem:[%s260 + $0x78] sm:$0xf]
      %v324 = vld [vmem:[%s260 + $0x7c] sm:$0xf]
      %v325 = vld [vmem:[%s260 + $0x80] sm:$0xf]
      %v326 = vld [vmem:[%s260 + $0x84] sm:$0xf]
      %v327 = vld [vmem:[%s260 + $0x88] sm:$0xf]
      %v328 = vld [vmem:[%s260 + $0x8c] sm:$0xf]
      %v329 = vld [vmem:[%s260 + $0x90] sm:$0xf]
      %v330 = vld [vmem:[%s260 + $0x94] sm:$0xf]
      %v331 = vld [vmem:[%s260 + $0x98] sm:$0xf]
      %v332 = vld [vmem:[%s260 + $0x9c] sm:$0xf]
      %v333 = vld [vmem:[%s260 + $0xa0] sm:$0xf]
      %v334 = vld [vmem:[%s260 + $0xa4] sm:$0xf]
      %v335 = vld [vmem:[%s260 + $0xa8] sm:$0xf]
      %v336 = vld [vmem:[%s260 + $0xac] sm:$0xf]
      %v337 = vld [vmem:[%s260 + $0xb0] sm:$0xf]
      %v338 = vld [vmem:[%s260 + $0xb4] sm:$0xf]
      %v339 = vld [vmem:[%s260 + $0xb8] sm:$0xf]
      %v340 = vld [vmem:[%s260 + $0xbc] sm:$0xf]
      %v341 = vld [vmem:[%s260 + $0xc0] sm:$0xf]
      %v342 = vld [vmem:[%s260 + $0xc4] sm:$0xf]
      %v343 = vld [vmem:[%s260 + $0xc8] sm:$0xf]
      %v344 = vld [vmem:[%s260 + $0xcc] sm:$0xf]
      %v345 = vld [vmem:[%s260 + $0xd0] sm:$0xf]
      %v346 = vld [vmem:[%s260 + $0xd4] sm:$0xf]
      %v347 = vld [vmem:[%s260 + $0xd8] sm:$0xf]
      %v348 = vld [vmem:[%s260 + $0xdc] sm:$0xf]
      %v349 = vld [vmem:[%s260 + $0xe0] sm:$0xf]
      %v350 = vld [vmem:[%s260 + $0xe4] sm:$0xf]
      %v351 = vld [vmem:[%s260 + $0xe8] sm:$0xf]
      %v352 = vld [vmem:[%s260 + $0xec] sm:$0xf]
      %v353 = vld [vmem:[%s260 + $0xf0] sm:$0xf]
      %v354 = vld [vmem:[%s260 + $0xf4] sm:$0xf]
      %v355 = vld [vmem:[%s260 + $0xf8] sm:$0xf]
      %v356 = vld [vmem:[%s260 + $0xfc] sm:$0xf]
      %v365 = vunpack.c.l.b16 %v285
      %v366 = vunpack.c.h.b16 %v285
      %v367 = vunpack.c.l.b16 %v286
      %v368 = vunpack.c.h.b16 %v286
      %v369 = vunpack.c.l.b16 %v287
      %v370 = vunpack.c.h.b16 %v287
      %v371 = vunpack.c.l.b16 %v288
      %v372 = vunpack.c.h.b16 %v288
      %v373 = vunpack.c.l.b16 %v289
      %v374 = vunpack.c.h.b16 %v289
      %v375 = vunpack.c.l.b16 %v290
      %v376 = vunpack.c.h.b16 %v290
      %v377 = vunpack.c.l.b16 %v291
      %v378 = vunpack.c.h.b16 %v291
      %v379 = vunpack.c.l.b16 %v292
      %v380 = vunpack.c.h.b16 %v292
      %v381 = vpack.c.b16 %v369, %v365
      %v382 = vpack.c.b16 %v370, %v366
      %v383 = vpack.c.b16 %v371, %v367
      %v384 = vpack.c.b16 %v372, %v368
      %v385 = vpack.c.b16 %v377, %v373
      %v386 = vpack.c.b16 %v378, %v374
      %v387 = vpack.c.b16 %v379, %v375
      %v388 = vpack.c.b16 %v380, %v376
      %v461 = vunpack.c.l.b16 %v293
      %v462 = vunpack.c.l.b16 %v294
      %v463 = vunpack.c.l.b16 %v295
      %v464 = vunpack.c.l.b16 %v296
      %v465 = vunpack.c.l.b16 %v297
      %v466 = vunpack.c.l.b16 %v298
      %v467 = vunpack.c.l.b16 %v299
      %v468 = vunpack.c.l.b16 %v300
      %v469 = vunpack.c.l.b16 %v301
      %v470 = vunpack.c.l.b16 %v302
      %v471 = vunpack.c.l.b16 %v303
      %v472 = vunpack.c.l.b16 %v304
      %v473 = vunpack.c.l.b16 %v305
      %v474 = vunpack.c.l.b16 %v306
      %v475 = vunpack.c.l.b16 %v307
      %v476 = vunpack.c.l.b16 %v308
      %v477 = vunpack.c.l.b16 %v309
      %v478 = vunpack.c.l.b16 %v310
      %v479 = vunpack.c.l.b16 %v311
      %v480 = vunpack.c.l.b16 %v312
      %v481 = vunpack.c.l.b16 %v313
      %v482 = vunpack.c.l.b16 %v314
      %v483 = vunpack.c.l.b16 %v315
      %v484 = vunpack.c.l.b16 %v316
      %v485 = vunpack.c.l.b16 %v317
      %v486 = vunpack.c.l.b16 %v318
      %v487 = vunpack.c.l.b16 %v319
      %v488 = vunpack.c.l.b16 %v320
      %v489 = vunpack.c.l.b16 %v321
      %v490 = vunpack.c.l.b16 %v322
      %v491 = vunpack.c.l.b16 %v323
      %v492 = vunpack.c.l.b16 %v324
      %v493 = vunpack.c.l.b16 %v325
      %v494 = vunpack.c.l.b16 %v326
      %v495 = vunpack.c.l.b16 %v327
      %v496 = vunpack.c.l.b16 %v328
      %v497 = vunpack.c.l.b16 %v329
      %v498 = vunpack.c.l.b16 %v330
      %v499 = vunpack.c.l.b16 %v331
      %v500 = vunpack.c.l.b16 %v332
      %v501 = vunpack.c.l.b16 %v333
      %v502 = vunpack.c.l.b16 %v334
      %v503 = vunpack.c.l.b16 %v335
      %v504 = vunpack.c.l.b16 %v336
      %v505 = vunpack.c.l.b16 %v337
      %v506 = vunpack.c.l.b16 %v338
      %v507 = vunpack.c.l.b16 %v339
      %v508 = vunpack.c.l.b16 %v340
      %v509 = vunpack.c.l.b16 %v341
      %v510 = vunpack.c.l.b16 %v342
      %v511 = vunpack.c.l.b16 %v343
      %v512 = vunpack.c.l.b16 %v344
      %v513 = vunpack.c.l.b16 %v345
      %v514 = vunpack.c.l.b16 %v346
      %v515 = vunpack.c.l.b16 %v347
      %v516 = vunpack.c.l.b16 %v348
      %v517 = vunpack.c.l.b16 %v349
      %v518 = vunpack.c.l.b16 %v350
      %v519 = vunpack.c.l.b16 %v351
      %v520 = vunpack.c.l.b16 %v352
      %v521 = vunpack.c.l.b16 %v353
      %v522 = vunpack.c.l.b16 %v354
      %v523 = vunpack.c.l.b16 %v355
      %v524 = vunpack.c.l.b16 %v356
      %v525 = vpack.c.b16 %v462, %v461
      %v526 = vpack.c.b16 %v464, %v463
      %v527 = vpack.c.b16 %v466, %v465
      %v528 = vpack.c.b16 %v468, %v467
      %v529 = vpack.c.b16 %v470, %v469
      %v530 = vpack.c.b16 %v472, %v471
      %v531 = vpack.c.b16 %v474, %v473
      %v532 = vpack.c.b16 %v476, %v475
      %v533 = vpack.c.b16 %v478, %v477
      %v534 = vpack.c.b16 %v480, %v479
      %v535 = vpack.c.b16 %v482, %v481
      %v536 = vpack.c.b16 %v484, %v483
      %v537 = vpack.c.b16 %v486, %v485
      %v538 = vpack.c.b16 %v488, %v487
      %v539 = vpack.c.b16 %v490, %v489
      %v540 = vpack.c.b16 %v492, %v491
      %v541 = vpack.c.b16 %v494, %v493
      %v542 = vpack.c.b16 %v496, %v495
      %v543 = vpack.c.b16 %v498, %v497
      %v544 = vpack.c.b16 %v500, %v499
      %v545 = vpack.c.b16 %v502, %v501
      %v546 = vpack.c.b16 %v504, %v503
      %v547 = vpack.c.b16 %v506, %v505
      %v548 = vpack.c.b16 %v508, %v507
      %v549 = vpack.c.b16 %v510, %v509
      %v550 = vpack.c.b16 %v512, %v511
      %v551 = vpack.c.b16 %v514, %v513
      %v552 = vpack.c.b16 %v516, %v515
      %v553 = vpack.c.b16 %v518, %v517
      %v554 = vpack.c.b16 %v520, %v519
      %v555 = vpack.c.b16 %v522, %v521
      %v556 = vpack.c.b16 %v524, %v523
      %589 = vmatprep.subr.bf16.mxu0 0
      %590 = vmatpush1.bf16.msra.mxu0 %v525
      %591 = vmatprep.subr.bf16.mxu0 0
      %592 = vmatpush1.bf16.msra.mxu0 %v526
      %593 = vmatprep.subr.bf16.mxu0 0
      %594 = vmatpush1.bf16.msra.mxu0 %v527
      %595 = vmatprep.subr.bf16.mxu0 0
      %596 = vmatpush1.bf16.msra.mxu0 %v528
      %597 = vmatprep.subr.bf16.mxu0 0
      %598 = vmatpush1.bf16.msra.mxu0 %v529
      %599 = vmatprep.subr.bf16.mxu0 0
      %600 = vmatpush1.bf16.msra.mxu0 %v530
      %601 = vmatprep.subr.bf16.mxu0 0
      %602 = vmatpush1.bf16.msra.mxu0 %v531
      %603 = vmatprep.subr.bf16.mxu0 0
      %604 = vmatpush1.bf16.msra.mxu0 %v532
      %605 = vmatprep.subr.bf16.mxu0 0
      %606 = vmatpush1.bf16.msra.mxu0 %v533
      %607 = vmatprep.subr.bf16.mxu0 0
      %608 = vmatpush1.bf16.msra.mxu0 %v534
      %609 = vmatprep.subr.bf16.mxu0 0
      %610 = vmatpush1.bf16.msra.mxu0 %v535
      %611 = vmatprep.subr.bf16.mxu0 0
      %612 = vmatpush1.bf16.msra.mxu0 %v536
      %613 = vmatprep.subr.bf16.mxu0 0
      %614 = vmatpush1.bf16.msra.mxu0 %v537
      %615 = vmatprep.subr.bf16.mxu0 0
      %616 = vmatpush1.bf16.msra.mxu0 %v538
      %617 = vmatprep.subr.bf16.mxu0 0
      %618 = vmatpush1.bf16.msra.mxu0 %v539
      %619 = vmatprep.subr.bf16.mxu0 0
      %620 = vmatpush1.bf16.msra.mxu0 %v540
      %621 = vmatprep.mubr.bf16.mxu0 %v382
      %622 = vmatmul.mubr.bf16.gmra.mrb[0].mxu0 %v381
      %v623 = vpop.f32.mrb[0].mxu0
      %v624 = vadd.f32 0.0, %v623
      %v625 = vpop.f32.mrb[0].mxu0
      %v626 = vpop.f32.mrb[0].mxu0
      %v627 = vadd.f32 0.0, %v626
      %v628 = vpop.f32.mrb[0].mxu0
      %629 = vmatprep.mubr.bf16.mxu0 %v386
      %630 = vmatmul.mubr.bf16.gmra.mrb[0].mxu0 %v385
      %v631 = vpop.f32.mrb[0].mxu0
      %v632 = vadd.f32 0.0, %v631
      %v633 = vpop.f32.mrb[0].mxu0
      %v634 = vpop.f32.mrb[0].mxu0
      %v635 = vadd.f32 0.0, %v634
      %v636 = vpop.f32.mrb[0].mxu0
      %637 = vdwg.mxu0
      %638 = vmatprep.subr.bf16.mxu0 0
      %639 = vmatpush1.bf16.msra.mxu0 %v541
      %640 = vmatprep.subr.bf16.mxu0 0
      %641 = vmatpush1.bf16.msra.mxu0 %v542
      %642 = vmatprep.subr.bf16.mxu0 0
      %643 = vmatpush1.bf16.msra.mxu0 %v543
      %644 = vmatprep.subr.bf16.mxu0 0
      %645 = vmatpush1.bf16.msra.mxu0 %v544
      %646 = vmatprep.subr.bf16.mxu0 0
      %647 = vmatpush1.bf16.msra.mxu0 %v545
      %648 = vmatprep.subr.bf16.mxu0 0
      %649 = vmatpush1.bf16.msra.mxu0 %v546
      %650 = vmatprep.subr.bf16.mxu0 0
      %651 = vmatpush1.bf16.msra.mxu0 %v547
      %652 = vmatprep.subr.bf16.mxu0 0
      %653 = vmatpush1.bf16.msra.mxu0 %v548
      %654 = vmatprep.subr.bf16.mxu0 0
      %655 = vmatpush1.bf16.msra.mxu0 %v549
      %656 = vmatprep.subr.bf16.mxu0 0
      %657 = vmatpush1.bf16.msra.mxu0 %v550
      %658 = vmatprep.subr.bf16.mxu0 0
      %659 = vmatpush1.bf16.msra.mxu0 %v551
      %660 = vmatprep.subr.bf16.mxu0 0
      %661 = vmatpush1.bf16.msra.mxu0 %v552
      %662 = vmatprep.subr.bf16.mxu0 0
      %663 = vmatpush1.bf16.msra.mxu0 %v553
      %664 = vmatprep.subr.bf16.mxu0 0
      %665 = vmatpush1.bf16.msra.mxu0 %v554
      %666 = vmatprep.subr.bf16.mxu0 0
      %667 = vmatpush1.bf16.msra.mxu0 %v555
      %668 = vmatprep.subr.bf16.mxu0 0
      %669 = vmatpush1.bf16.msra.mxu0 %v556
      %670 = vmatprep.mubr.bf16.mxu0 %v384
      %671 = vmatmul.mubr.bf16.gmra.mrb[0].mxu0 %v383
      %v672 = vpop.f32.mrb[0].mxu0
      %v673 = vadd.f32 %v624, %v672
      %v674 = vpop.f32.mrb[0].mxu0
      %v675 = vpop.f32.mrb[0].mxu0
      %v676 = vadd.f32 %v627, %v675
      %v677 = vpop.f32.mrb[0].mxu0
      %678 = vmatprep.mubr.bf16.mxu0 %v388
      %679 = vmatmul.mubr.bf16.gmra.mrb[0].mxu0 %v387
      %v680 = vpop.f32.mrb[0].mxu0
      %v681 = vadd.f32 %v632, %v680
      %v682 = vpop.f32.mrb[0].mxu0
      %v683 = vpop.f32.mrb[0].mxu0
      %v684 = vadd.f32 %v635, %v683
      %v685 = vpop.f32.mrb[0].mxu0
      %686 = vdwg.mxu0
      %vm687 = vcmask 523264
      %688 = vst.msk [vmem:[%s269] sm:$0xff] %vm687, %v673
      %689 = vst.msk [vmem:[%s269 + $0x8] sm:$0xff] %vm687, %v676
      %690 = vst.msk [vmem:[%s269 + $0x10] sm:$0xff] %vm687, %v681
      %691 = vst.msk [vmem:[%s269 + $0x18] sm:$0xff] %vm687, %v684
      %v692 = vld [vmem:[%s273] sm:$0x1]
      %v693 = vsel %vm687, %v673, 0.0
      %v694 = vsel %vm687, %v676, 0.0
      %v695 = vadd.f32 %v693, %v694
      %v696 = vsel %vm687, %v681, 0.0
      %v697 = vadd.f32 %v695, %v696
      %v698 = vsel %vm687, %v684, 0.0
      %v699 = vadd.f32 %v697, %v698
      %v700 = vrot.slane %v699, 4
      %v701 = vadd.f32 %v699, %v700
      %v702 = vrot.slane %v701, 2
      %v703 = vadd.f32 %v701, %v702
      %v704 = vrot.slane %v703, 1
      %v705 = vadd.f32 %v703, %v704
      %v706 = vadd.f32 %v692, %v705
      %vm707 = vcmask 516096
      %708 = vst.msk [vmem:[%s273] sm:$0x1] %vm707, %v706
      %v709 = vld [vmem:[%s276] sm:$0x1]
      %v710 = vmul.f32 %v673, %v673
      %v711 = vmul.f32 %v676, %v676
      %v712 = vmul.f32 %v681, %v681
      %v713 = vmul.f32 %v684, %v684
      %v714 = vsel %vm687, %v710, 0.0
      %v715 = vsel %vm687, %v711, 0.0
      %v716 = vadd.f32 %v714, %v715
      %v717 = vsel %vm687, %v712, 0.0
      %v718 = vadd.f32 %v716, %v717
      %v719 = vsel %vm687, %v713, 0.0
      %v720 = vadd.f32 %v718, %v719
      %v721 = vrot.slane %v720, 4
      %v722 = vadd.f32 %v720, %v721
      %v723 = vrot.slane %v722, 2
      %v724 = vadd.f32 %v722, %v723
      %v725 = vrot.slane %v724, 1
      %v726 = vadd.f32 %v724, %v725
      %v727 = vadd.f32 %v709, %v726
      %728 = vst.msk [vmem:[%s276] sm:$0x1] %vm707, %v727
      %s729 = smul.u32 4, %s21
      %p730 = scmp.lt.s32.totalorder %s20, 3
      %s731 = scalar_select %p730, %s20, 3
      %p732 = scmp.lt.s32.totalorder %s729, 3
      %s733 = scalar_select %p732, %s729, 3
      %s734 = smul.addr %s731, 4
      %s735 = sadd.s32 %s733, %s734
      %s736 = smul.addr %s735, 8
      %s737 = scalar_lea.vmem %s2, %s736
      %p738 = scmp.lt.s32.totalorder %s20, 3
      %s739 = scalar_select %p738, %s20, 3
      %s740 = scalar_lea.vmem %s3, %s739
      %p741 = scmp.lt.s32.totalorder %s20, 3
      %s742 = scalar_select %p741, %s20, 3
      %s743 = scalar_lea.vmem %s4, %s742
      // Predicated region
      $region33: #{generator_forward.11} parent=27 // pred_check
        %p744 = pneg %p102
      $region34: #{generator_forward.11} parent=27 // pred_check_branch
        %746 = sbr.rel (%p744) target = $region36
      $region35: #{generator_forward.11} parent=27 // pred_region
        %s747 = smul.u32 4, %s21
      $region36: #{generator_forward.11} parent=27 // pred_fallthru
        _
      // Predicated region
      $region37: #{generator_forward.11} parent=27 // pred_check
        %p748 = pneg %p128
      $region38: #{generator_forward.11} parent=27 // pred_check_branch
        %750 = sbr.rel (%p748) target = $region40
      $region39: #{generator_forward.11} parent=27 // pred_region
        _
      $region40: #{generator_forward.11} parent=27 // pred_fallthru
        _
      // Predicated region
      $region41: #{generator_forward.11} parent=27 // pred_check
        %p751 = pneg %p154
      $region42: #{generator_forward.11} parent=27 // pred_check_branch
        %753 = sbr.rel (%p751) target = $region44
      $region43: #{generator_forward.11} parent=27 // pred_region
        _
      $region44: #{generator_forward.11} parent=27 // pred_fallthru
        _
    $region28: #{generator_forward.11} parent=5 // pred_fallthru
      _
    %p754 = scmp.le.s32.totalorder 2, %s11
    // Predicated region
    $region45: #{generator_forward.11} parent=5 // pred_check
      %p755 = pneg %p754
    $region46: #{generator_forward.11} parent=5 // pred_check_branch
      %757 = sbr.rel (%p755) target = $region48
    $region47: #{generator_forward.11} parent=5 // pred_region
      %s758 = ssub.s32 %s11, 2
      // Predicated region
      $region49: #{generator_forward.11} parent=47 // pred_check
        %p759 = pneg %p108
      $region50: #{generator_forward.11} parent=47 // pred_check_branch
        %761 = sbr.rel (%p759) target = $region52
      $region51: #{generator_forward.11} parent=47 // pred_region
        %s762 = smul.u32 4, %s23
        %p763 = scmp.lt.s32.totalorder %s22, 3
        %s764 = scalar_select %p763, %s22, 3
        %p765 = scmp.lt.s32.totalorder %s762, 3
        %s766 = scalar_select %p765, %s762, 3
        %s767 = smul.addr %s764, 4
        %s768 = sadd.s32 %s766, %s767
        %s769 = smul.addr %s768, 8
        %s770 = scalar_lea.vmem %s2, %s769
      $region52: #{generator_forward.11} parent=47 // pred_fallthru
        _
      // Predicated region
      $region53: #{generator_forward.11} parent=47 // pred_check
        %p771 = pneg %p134
      $region54: #{generator_forward.11} parent=47 // pred_check_branch
        %773 = sbr.rel (%p771) target = $region56
      $region55: #{generator_forward.11} parent=47 // pred_region
        %p774 = scmp.lt.s32.totalorder %s22, 3
        %s775 = scalar_select %p774, %s22, 3
        %s776 = scalar_lea.vmem %s3, %s775
      $region56: #{generator_forward.11} parent=47 // pred_fallthru
        _
      // Predicated region
      $region57: #{generator_forward.11} parent=47 // pred_check
        %p777 = pneg %p160
      $region58: #{generator_forward.11} parent=47 // pred_check_branch
        %779 = sbr.rel (%p777) target = $region60
      $region59: #{generator_forward.11} parent=47 // pred_region
        %p780 = scmp.lt.s32.totalorder %s22, 3
        %s781 = scalar_select %p780, %s22, 3
        %s782 = scalar_lea.vmem %s4, %s781
      $region60: #{generator_forward.11} parent=47 // pred_fallthru
        _
    $region48: #{generator_forward.11} parent=5 // pred_fallthru
      _
  $region6: #{generator_forward.11} parent=0 // loop_footer
    %s15 = sadd.s32 1, %s11
  $region7: #{generator_forward.11} parent=0 // loop_footer_branch
    %10 = sbr.rel target = $region3
  $region8: #{generator_forward.11} parent=0 // loop_exit
    _

// kernel: tile.43
$region0: #{tile.43}
  #allocation0 [shape = 's32[1]{0}', space=sflag, size = 0x4, scoped, tag = 'scoped memory for tile.43']
  %s0 = inlined_call_operand.vmem [shape: f32[32], index: 0, kind: input, shape index: {}]
  %s1 = inlined_call_operand.vmem [shape: f32[4,32], index: 1, kind: output, shape index: {}]
  // Predicated region
  $region2: #{tile.43} parent=0 // pred_check
    _
  $region3: #{tile.43} parent=0 // pred_check_branch
    %3 = sbr.rel (0) target = $region5
  $region4: #{tile.43} parent=0 // pred_region
    _
  $region5: #{tile.43} parent=0 // pred_fallthru
    _
  %v4 = vld [vmem:[%s0] ss:$0 sm:$0xff]
  %5 = vst [vmem:[%s1] sm:$0xf] %v4

// kernel: tile.48
$region0: #{tile.48}
  %s0 = inlined_call_operand.vmem [shape: f32[4,32], index: 0, kind: input, shape index: {}]
  %s1 = inlined_call_operand.vmem [shape: f32[1,128], index: 1, kind: output, shape index: {}]
  $region1: #{tile.48} parent=0
    #allocation0 [shape = 'u8[4096]{0}', space=vmem, size = 0x1000, scoped, tag = 'scoped mem for output reshape']
    #allocation1 [shape = 'u8[4096]{0}', space=vmem, size = 0x1000, scoped, tag = 'scoped mem for input reshape']
    %s3 = sshllo.u32 0, 4
    %v4 = vld [vmem:[%s0] sm:%s3]
    %5 = vst [vmem:[#allocation1] sm:%s3] %v4
    %v6 = vld [vmem:[#allocation1] sm:$0x1]
    %vm7 = vcmask 261120
    %8 = vst.msk [vmem:[#allocation0] sm:$0x1] %vm7, %v6
    %s9 = scalar_lea.vmem [#allocation1], 3
    %v10 = vld [vmem:[%s9] sm:$0x1]
    %11 = vrot.lane.b32.xlu0 %v10, 96
    %v12 = vpop.permute.xlu0 %11
    %vm13 = vcmask 1048320
    %14 = vst.msk [vmem:[#allocation0] sm:$0x1] %vm13, %v12
    %s15 = scalar_lea.vmem [#allocation1], 2
    %v16 = vld [vmem:[%s15] sm:$0x1]
    %17 = vrot.lane.b32.xlu0 %v16, 64
    %v18 = vpop.permute.xlu0 %17
    %vm19 = vcmask 785920
    %20 = vst.msk [vmem:[#allocation0] sm:$0x1] %vm19, %v18
    %s21 = scalar_lea.vmem [#allocation1], 1
    %v22 = vld [vmem:[%s21] sm:$0x1]
    %23 = vrot.lane.b32.xlu0 %v22, 32
    %v24 = vpop.permute.xlu0 %23
    %vm25 = vcmask 523520
    %26 = vst.msk [vmem:[#allocation0] sm:$0x1] %vm25, %v24
    %s28 = sshllo.u32 0, 1
    %v30 = vld [vmem:[#allocation0] sm:%s28]
    %s31 = sshllo.u32 0, 1
    %32 = vst [vmem:[%s1] sm:%s31] %v30

// kernel: generator_forward.13
$region0: #{generator_forward.13}
  #allocation0 [shape = 'u32[]', space=smem, size = 0x4, offset = 0x4, fixed_abs, tag = 'smem constant byte address 0x4 - core index']
  #allocation1 [shape = 'u32[144,128]{1,0:T(1,128)}', space=vmem, size = 0x12000, scoped, tag = 'internal scratch']
  %s0 = inlined_call_operand.vmem [shape: bf16[4,128,256], index: 0, kind: input, shape index: {}]
  %s1 = inlined_call_operand.vmem [shape: bf16[4,256,32], index: 1, kind: input, shape index: {}]
  %s2 = inlined_call_operand.vmem [shape: f32[4,128,32], index: 2, kind: output, shape index: {0}]
  %s3 = inlined_call_operand.vmem [shape: f32[4,1,32], index: 3, kind: output, shape index: {1}]
  %s4 = inlined_call_operand.vmem [shape: f32[4,1,32], index: 4, kind: output, shape index: {2}]
  %5 = xla_tuple %s2, %s3, %s4
  %s6 = sld [smem:[#allocation0]]
  $region61: #{generator_forward.13} parent=0
    _
  %s8 = ssub.s32 1, %s6
  %s9 = scalar_select 0, %s8, %s6
  loop: start=0, step=1, limit=6
  $region2: #{generator_forward.13} parent=0 // loop_pre_header
    _
  $region3: #{generator_forward.13} parent=0 // loop_header
    %s11 = sphi 0, %s15
    %p12 = scmp.ge.s32.totalorder %s11, 6
    %s18 = sphi 0, %s30
    %s19 = sphi 0, %s26
    %s20 = sphi 0, %s18
    %s21 = sphi 0, %s19
    %s22 = sphi 0, %s20
    %s23 = sphi 0, %s21
    %s35 = sphi 0, %s37
    %s38 = sphi 0, %s35
    %s39 = sphi 0, %s38
    %s55 = sphi 0, %s39
    %s61 = sphi 0, %s63
    %s64 = sphi 0, %s61
    %s65 = sphi 0, %s64
    %s81 = sphi 0, %s65
    %s89 = sphi 0, %s91
    %s92 = sphi 0, %s89
    %s93 = sphi 0, %s92
    %s109 = sphi 0, %s93
    %s115 = sphi 0, %s117
    %s118 = sphi 0, %s115
    %s119 = sphi 0, %s118
    %s135 = sphi 0, %s119
    %s141 = sphi 0, %s143
    %s144 = sphi 0, %s141
    %s145 = sphi 0, %s144
    %s161 = sphi 0, %s145
  $region4: #{generator_forward.13} parent=0 // loop_header_branch
    %14 = sbr.rel (%p12) target = $region8
  $region5: #{generator_forward.13} parent=0 // loop_body
    %s16 = ssub.s32 %s11, 1
    %s17 = ssub.s32 %s11, 2
    %s24 = sadd.s32 1, %s19
    %p25 = scmp.ge.s32.totalorder %s24, 1
    %s26 = scalar_select %p25, 0, %s24
    %s27 = sadd.s32 1, %s18
    %s28 = scalar_select %p25, %s27, %s18
    %p29 = scmp.ge.s32.totalorder %s28, 4
    %s30 = scalar_select %p29, 0, %s28
    %s31 = ssub.s32 %s18, %s30
    %s32 = ssub.s32 %s19, %s26
    %s33 = sor.u32 %s31, %s32
    %p34 = scmp.eq.s32.totalorder %s33, 0
    %s36 = sadd.s32 %s35, 1
    %s37 = scalar_select %p34, %s35, %s36
    %p40 = pneg %p34
    %p41 = scmp.eq.s32.totalorder %s11, 3
    %p42 = por %p40, %p41
    %p43 = scmp.ne.s32.totalorder %s35, %s38
    %p44 = scmp.eq.s32.totalorder %s11, 0
    %p45 = por %p43, %p44
    %p46 = scmp.ne.s32.totalorder %s35, %s38
    %p47 = scmp.eq.s32.totalorder %s16, 3
    %p48 = por %p46, %p47
    %p49 = scmp.ne.s32.totalorder %s38, %s39
    %p50 = scmp.eq.s32.totalorder %s16, 0
    %p51 = por %p49, %p50
    %p52 = scmp.ne.s32.totalorder %s38, %s39
    %p53 = scmp.eq.s32.totalorder %s17, 3
    %p54 = por %p52, %p53
    %p56 = scmp.ne.s32.totalorder %s39, %s55
    %p57 = scmp.eq.s32.totalorder %s17, 0
    %p58 = por %p56, %p57
    %s59 = ssub.s32 %s18, %s30
    %p60 = scmp.eq.s32.totalorder %s59, 0
    %s62 = sadd.s32 %s61, 1
    %s63 = scalar_select %p60, %s61, %s62
    %p66 = pneg %p60
    %p67 = scmp.eq.s32.totalorder %s11, 3
    %p68 = por %p66, %p67
    %p69 = scmp.ne.s32.totalorder %s61, %s64
    %p70 = scmp.eq.s32.totalorder %s11, 0
    %p71 = por %p69, %p70
    %p72 = scmp.ne.s32.totalorder %s61, %s64
    %p73 = scmp.eq.s32.totalorder %s16, 3
    %p74 = por %p72, %p73
    %p75 = scmp.ne.s32.totalorder %s64, %s65
    %p76 = scmp.eq.s32.totalorder %s16, 0
    %p77 = por %p75, %p76
    %p78 = scmp.ne.s32.totalorder %s64, %s65
    %p79 = scmp.eq.s32.totalorder %s17, 3
    %p80 = por %p78, %p79
    %p82 = scmp.ne.s32.totalorder %s65, %s81
    %p83 = scmp.eq.s32.totalorder %s17, 0
    %p84 = por %p82, %p83
    %s85 = ssub.s32 %s18, %s30
    %s86 = ssub.s32 %s19, %s26
    %s87 = sor.u32 %s85, %s86
    %p88 = scmp.eq.s32.totalorder %s87, 0
    %s90 = sadd.s32 %s89, 1
    %s91 = scalar_select %p88, %s89, %s90
    %p94 = pneg %p88
    %p95 = scmp.eq.s32.totalorder %s11, 3
    %p96 = por %p94, %p95
    %p97 = scmp.ne.s32.totalorder %s89, %s92
    %p98 = scmp.eq.s32.totalorder %s11, 0
    %p99 = por %p97, %p98
    %p100 = scmp.ne.s32.totalorder %s89, %s92
    %p101 = scmp.eq.s32.totalorder %s16, 3
    %p102 = por %p100, %p101
    %p103 = scmp.ne.s32.totalorder %s92, %s93
    %p104 = scmp.eq.s32.totalorder %s16, 0
    %p105 = por %p103, %p104
    %p106 = scmp.ne.s32.totalorder %s92, %s93
    %p107 = scmp.eq.s32.totalorder %s17, 3
    %p108 = por %p106, %p107
    %p110 = scmp.ne.s32.totalorder %s93, %s109
    %p111 = scmp.eq.s32.totalorder %s17, 0
    %p112 = por %p110, %p111
    %s113 = ssub.s32 %s18, %s30
    %p114 = scmp.eq.s32.totalorder %s113, 0
    %s116 = sadd.s32 %s115, 1
    %s117 = scalar_select %p114, %s115, %s116
    %p120 = pneg %p114
    %p121 = scmp.eq.s32.totalorder %s11, 3
    %p122 = por %p120, %p121
    %p123 = scmp.ne.s32.totalorder %s115, %s118
    %p124 = scmp.eq.s32.totalorder %s11, 0
    %p125 = por %p123, %p124
    %p126 = scmp.ne.s32.totalorder %s115, %s118
    %p127 = scmp.eq.s32.totalorder %s16, 3
    %p128 = por %p126, %p127
    %p129 = scmp.ne.s32.totalorder %s118, %s119
    %p130 = scmp.eq.s32.totalorder %s16, 0
    %p131 = por %p129, %p130
    %p132 = scmp.ne.s32.totalorder %s118, %s119
    %p133 = scmp.eq.s32.totalorder %s17, 3
    %p134 = por %p132, %p133
    %p136 = scmp.ne.s32.totalorder %s119, %s135
    %p137 = scmp.eq.s32.totalorder %s17, 0
    %p138 = por %p136, %p137
    %s139 = ssub.s32 %s18, %s30
    %p140 = scmp.eq.s32.totalorder %s139, 0
    %s142 = sadd.s32 %s141, 1
    %s143 = scalar_select %p140, %s141, %s142
    %p146 = pneg %p140
    %p147 = scmp.eq.s32.totalorder %s11, 3
    %p148 = por %p146, %p147
    %p149 = scmp.ne.s32.totalorder %s141, %s144
    %p150 = scmp.eq.s32.totalorder %s11, 0
    %p151 = por %p149, %p150
    %p152 = scmp.ne.s32.totalorder %s141, %s144
    %p153 = scmp.eq.s32.totalorder %s16, 3
    %p154 = por %p152, %p153
    %p155 = scmp.ne.s32.totalorder %s144, %s145
    %p156 = scmp.eq.s32.totalorder %s16, 0
    %p157 = por %p155, %p156
    %p158 = scmp.ne.s32.totalorder %s144, %s145
    %p159 = scmp.eq.s32.totalorder %s17, 3
    %p160 = por %p158, %p159
    %p162 = scmp.ne.s32.totalorder %s145, %s161
    %p163 = scmp.eq.s32.totalorder %s17, 0
    %p164 = por %p162, %p163
    %p165 = scmp.le.s32.totalorder 1, %s11
    %p166 = scmp.lt.s32.totalorder %s11, 5
    %p167 = pnand %p165, %p166
    %p168 = pneg %p167
    // Predicated region
    $region9: #{generator_forward.13} parent=5 // pred_check
      _
    $region10: #{generator_forward.13} parent=5 // pred_check_branch
      %170 = sbr.rel (%p167) target = $region12
    $region11: #{generator_forward.13} parent=5 // pred_region
      %s171 = ssub.s32 %s11, 1
    $region12: #{generator_forward.13} parent=5 // pred_fallthru
      _
    %p172 = scmp.lt.s32.totalorder %s11, 4
    // Predicated region
    $region13: #{generator_forward.13} parent=5 // pred_check
      %p173 = pneg %p172
    $region14: #{generator_forward.13} parent=5 // pred_check_branch
      %175 = sbr.rel (%p173) target = $region16
    $region15: #{generator_forward.13} parent=5 // pred_region
      // Predicated region
      $region17: #{generator_forward.13} parent=15 // pred_check
        %p176 = pneg %p45
      $region18: #{generator_forward.13} parent=15 // pred_check_branch
        %178 = sbr.rel (%p176) target = $region20
      $region19: #{generator_forward.13} parent=15 // pred_region
        %s179 = smul.u32 16, %s19
        %p180 = scmp.lt.s32.totalorder %s18, 3
        %s181 = scalar_select %p180, %s18, 3
        %p182 = scmp.lt.s32.totalorder %s179, 15
        %s183 = scalar_select %p182, %s179, 15
        %s184 = smul.addr %s183, 2
        %s185 = smul.addr %s181, 32
        %s186 = sadd.s32 %s184, %s185
        %s187 = smul.addr %s186, 4
        %s188 = scalar_lea.vmem %s0, %s187
        %s189 = smul.u32 16, %s19
      $region20: #{generator_forward.13} parent=15 // pred_fallthru
        _
      // Predicated region
      $region21: #{generator_forward.13} parent=15 // pred_check
        %p190 = pneg %p71
      $region22: #{generator_forward.13} parent=15 // pred_check_branch
        %192 = sbr.rel (%p190) target = $region24
      $region23: #{generator_forward.13} parent=15 // pred_region
        %p193 = scmp.lt.s32.totalorder %s18, 3
        %s194 = scalar_select %p193, %s18, 3
        %s195 = smul.addr %s194, 32
        %s196 = smul.addr %s195, 4
        %s197 = scalar_lea.vmem %s1, %s196
      $region24: #{generator_forward.13} parent=15 // pred_fallthru
        _
    $region16: #{generator_forward.13} parent=5 // pred_fallthru
      _
    %p198 = scmp.le.s32.totalorder 1, %s11
    %p199 = scmp.lt.s32.totalorder %s11, 5
    %p200 = pnand %p198, %p199
    %p201 = pneg %p200
    // Predicated region
    $region25: #{generator_forward.13} parent=5 // pred_check
      _
    $region26: #{generator_forward.13} parent=5 // pred_check_branch
      %203 = sbr.rel (%p200) target = $region28
    $region27: #{generator_forward.13} parent=5 // pred_region
      %s204 = ssub.s32 %s11, 1
      %s205 = smul.u32 16, %s21
      %p206 = scmp.lt.s32.totalorder %s20, 3
      %s207 = scalar_select %p206, %s20, 3
      %p208 = scmp.lt.s32.totalorder %s205, 15
      %s209 = scalar_select %p208, %s205, 15
      %s210 = smul.addr %s209, 2
      %s211 = smul.addr %s207, 32
      %s212 = sadd.s32 %s210, %s211
      %s213 = smul.addr %s212, 4
      %s214 = scalar_lea.vmem %s0, %s213
      %p215 = pneg %p51
      %p216 = pneg %p48
      %p217 = scmp.lt.s32.totalorder %s20, 3
      %s218 = scalar_select %p217, %s20, 3
      %s219 = smul.addr %s218, 32
      %s220 = smul.addr %s219, 4
      %s221 = scalar_lea.vmem %s1, %s220
      %p222 = pneg %p77
      %p223 = pneg %p74
      %p224 = pneg %p105
      %p225 = pneg %p102
      %s226 = smul.u32 16, %s21
      %p227 = scmp.lt.s32.totalorder %s20, 3
      %s228 = scalar_select %p227, %s20, 3
      %p229 = scmp.lt.s32.totalorder %s226, 15
      %s230 = scalar_select %p229, %s226, 15
      %s231 = smul.addr %s228, 16
      %s232 = sadd.s32 %s230, %s231
      %s233 = smul.addr %s232, 8
      %s234 = scalar_lea.vmem %s2, %s233
      %p235 = pneg %p131
      %p236 = pneg %p128
      %p237 = scmp.lt.s32.totalorder %s20, 3
      %s238 = scalar_select %p237, %s20, 3
      %s239 = scalar_lea.vmem %s3, %s238
      %p240 = pneg %p157
      %p241 = pneg %p154
      %p242 = scmp.lt.s32.totalorder %s20, 3
      %s243 = scalar_select %p242, %s20, 3
      %s244 = scalar_lea.vmem %s4, %s243
      %s245 = smul.u32 16, %s21
      %p246 = scmp.lt.s32.totalorder %s20, 3
      %s247 = scalar_select %p246, %s20, 3
      %p248 = scmp.lt.s32.totalorder %s245, 15
      %s249 = scalar_select %p248, %s245, 15
      %s250 = smul.addr %s249, 2
      %s251 = smul.addr %s247, 32
      %s252 = sadd.s32 %s250, %s251
      %s253 = smul.addr %s252, 4
      %s254 = scalar_lea.vmem %s0, %s253
      %s255 = smul.u32 16, %s21
      %p256 = scmp.lt.s32.totalorder %s20, 3
      %s257 = scalar_select %p256, %s20, 3
      %s258 = smul.addr %s257, 32
      %s259 = smul.addr %s258, 4
      %s260 = scalar_lea.vmem %s1, %s259
      %s261 = smul.u32 16, %s21
      %p262 = scmp.lt.s32.totalorder %s20, 3
      %s263 = scalar_select %p262, %s20, 3
      %p264 = scmp.lt.s32.totalorder %s261, 15
      %s265 = scalar_select %p264, %s261, 15
      %s266 = smul.addr %s263, 16
      %s267 = sadd.s32 %s265, %s266
      %s268 = smul.addr %s267, 8
      %s269 = scalar_lea.vmem %s2, %s268
      %s270 = smul.u32 16, %s21
      %p271 = scmp.lt.s32.totalorder %s20, 3
      %s272 = scalar_select %p271, %s20, 3
      %s273 = scalar_lea.vmem %s3, %s272
      %p274 = scmp.lt.s32.totalorder %s20, 3
      %s275 = scalar_select %p274, %s20, 3
      %s276 = scalar_lea.vmem %s4, %s275
      %p278 = scmp.eq.s32.totalorder %s21, 0
      // Predicated region
      $region29: #{generator_forward.13} parent=27 // pred_check
        %p279 = pneg %p278
      $region30: #{generator_forward.13} parent=27 // pred_check_branch
        %281 = sbr.rel (%p279) target = $region32
      $region31: #{generator_forward.13} parent=27 // pred_region
        %vm282 = vcmask 253952
        %283 = vst.msk [vmem:[%s273] sm:$0x1] %vm282, 0.0
        %284 = vst.msk [vmem:[%s276] sm:$0x1] %vm282, 0.0
      $region32: #{generator_forward.13} parent=27 // pred_fallthru
        _
      %v285 = vld [vmem:[%s254] sm:$0xff]
      %v286 = vld [vmem:[%s254 + $0x8] sm:$0xff]
      %v287 = vld [vmem:[%s254 + $0x10] sm:$0xff]
      %v288 = vld [vmem:[%s254 + $0x18] sm:$0xff]
      %v289 = vld [vmem:[%s254 + $0x20] sm:$0xff]
      %v290 = vld [vmem:[%s254 + $0x28] sm:$0xff]
      %v291 = vld [vmem:[%s254 + $0x30] sm:$0xff]
      %v292 = vld [vmem:[%s254 + $0x38] sm:$0xff]
      %v293 = vld [vmem:[%s254 + $0x40] sm:$0xff]
      %v294 = vld [vmem:[%s254 + $0x48] sm:$0xff]
      %v295 = vld [vmem:[%s254 + $0x50] sm:$0xff]
      %v296 = vld [vmem:[%s254 + $0x58] sm:$0xff]
      %v297 = vld [vmem:[%s254 + $0x60] sm:$0xff]
      %v298 = vld [vmem:[%s254 + $0x68] sm:$0xff]
      %v299 = vld [vmem:[%s254 + $0x70] sm:$0xff]
      %v300 = vld [vmem:[%s254 + $0x78] sm:$0xff]
      %v301 = vld [vmem:[%s260] sm:$0xf]
      %v302 = vld [vmem:[%s260 + $0x4] sm:$0xf]
      %v303 = vld [vmem:[%s260 + $0x8] sm:$0xf]
      %v304 = vld [vmem:[%s260 + $0xc] sm:$0xf]
      %v305 = vld [vmem:[%s260 + $0x10] sm:$0xf]
      %v306 = vld [vmem:[%s260 + $0x14] sm:$0xf]
      %v307 = vld [vmem:[%s260 + $0x18] sm:$0xf]
      %v308 = vld [vmem:[%s260 + $0x1c] sm:$0xf]
      %v309 = vld [vmem:[%s260 + $0x20] sm:$0xf]
      %v310 = vld [vmem:[%s260 + $0x24] sm:$0xf]
      %v311 = vld [vmem:[%s260 + $0x28] sm:$0xf]
      %v312 = vld [vmem:[%s260 + $0x2c] sm:$0xf]
      %v313 = vld [vmem:[%s260 + $0x30] sm:$0xf]
      %v314 = vld [vmem:[%s260 + $0x34] sm:$0xf]
      %v315 = vld [vmem:[%s260 + $0x38] sm:$0xf]
      %v316 = vld [vmem:[%s260 + $0x3c] sm:$0xf]
      %v317 = vld [vmem:[%s260 + $0x40] sm:$0xf]
      %v318 = vld [vmem:[%s260 + $0x44] sm:$0xf]
      %v319 = vld [vmem:[%s260 + $0x48] sm:$0xf]
      %v320 = vld [vmem:[%s260 + $0x4c] sm:$0xf]
      %v321 = vld [vmem:[%s260 + $0x50] sm:$0xf]
      %v322 = vld [vmem:[%s260 + $0x54] sm:$0xf]
      %v323 = vld [vmem:[%s260 + $0x58] sm:$0xf]
      %v324 = vld [vmem:[%s260 + $0x5c] sm:$0xf]
      %v325 = vld [vmem:[%s260 + $0x60] sm:$0xf]
      %v326 = vld [vmem:[%s260 + $0x64] sm:$0xf]
      %v327 = vld [vmem:[%s260 + $0x68] sm:$0xf]
      %v328 = vld [vmem:[%s260 + $0x6c] sm:$0xf]
      %v329 = vld [vmem:[%s260 + $0x70] sm:$0xf]
      %v330 = vld [vmem:[%s260 + $0x74] sm:$0xf]
      %v331 = vld [vmem:[%s260 + $0x78] sm:$0xf]
      %v332 = vld [vmem:[%s260 + $0x7c] sm:$0xf]
      %v349 = vunpack.c.l.b16 %v285
      %v350 = vunpack.c.h.b16 %v285
      %v351 = vunpack.c.l.b16 %v286
      %v352 = vunpack.c.h.b16 %v286
      %v353 = vunpack.c.l.b16 %v287
      %v354 = vunpack.c.h.b16 %v287
      %v355 = vunpack.c.l.b16 %v288
      %v356 = vunpack.c.h.b16 %v288
      %v357 = vunpack.c.l.b16 %v289
      %v358 = vunpack.c.h.b16 %v289
      %v359 = vunpack.c.l.b16 %v290
      %v360 = vunpack.c.h.b16 %v290
      %v361 = vunpack.c.l.b16 %v291
      %v362 = vunpack.c.h.b16 %v291
      %v363 = vunpack.c.l.b16 %v292
      %v364 = vunpack.c.h.b16 %v292
      %v365 = vunpack.c.l.b16 %v293
      %v366 = vunpack.c.h.b16 %v293
      %v367 = vunpack.c.l.b16 %v294
      %v368 = vunpack.c.h.b16 %v294
      %v369 = vunpack.c.l.b16 %v295
      %v370 = vunpack.c.h.b16 %v295
      %v371 = vunpack.c.l.b16 %v296
      %v372 = vunpack.c.h.b16 %v296
      %v373 = vunpack.c.l.b16 %v297
      %v374 = vunpack.c.h.b16 %v297
      %v375 = vunpack.c.l.b16 %v298
      %v376 = vunpack.c.h.b16 %v298
      %v377 = vunpack.c.l.b16 %v299
      %v378 = vunpack.c.h.b16 %v299
      %v379 = vunpack.c.l.b16 %v300
      %v380 = vunpack.c.h.b16 %v300
      %v381 = vpack.c.b16 %v351, %v349
      %v382 = vpack.c.b16 %v352, %v350
      %v383 = vpack.c.b16 %v355, %v353
      %v384 = vpack.c.b16 %v356, %v354
      %v385 = vpack.c.b16 %v359, %v357
      %v386 = vpack.c.b16 %v360, %v358
      %v387 = vpack.c.b16 %v363, %v361
      %v388 = vpack.c.b16 %v364, %v362
      %v389 = vpack.c.b16 %v367, %v365
      %v390 = vpack.c.b16 %v368, %v366
      %v391 = vpack.c.b16 %v371, %v369
      %v392 = vpack.c.b16 %v372, %v370
      %v393 = vpack.c.b16 %v375, %v373
      %v394 = vpack.c.b16 %v376, %v374
      %v395 = vpack.c.b16 %v379, %v377
      %v396 = vpack.c.b16 %v380, %v378
      %v445 = vunpack.c.l.b16 %v301
      %v446 = vunpack.c.l.b16 %v302
      %v447 = vunpack.c.l.b16 %v303
      %v448 = vunpack.c.l.b16 %v304
      %v449 = vunpack.c.l.b16 %v305
      %v450 = vunpack.c.l.b16 %v306
      %v451 = vunpack.c.l.b16 %v307
      %v452 = vunpack.c.l.b16 %v308
      %v453 = vunpack.c.l.b16 %v309
      %v454 = vunpack.c.l.b16 %v310
      %v455 = vunpack.c.l.b16 %v311
      %v456 = vunpack.c.l.b16 %v312
      %v457 = vunpack.c.l.b16 %v313
      %v458 = vunpack.c.l.b16 %v314
      %v459 = vunpack.c.l.b16 %v315
      %v460 = vunpack.c.l.b16 %v316
      %v461 = vunpack.c.l.b16 %v317
      %v462 = vunpack.c.l.b16 %v318
      %v463 = vunpack.c.l.b16 %v319
      %v464 = vunpack.c.l.b16 %v320
      %v465 = vunpack.c.l.b16 %v321
      %v466 = vunpack.c.l.b16 %v322
      %v467 = vunpack.c.l.b16 %v323
      %v468 = vunpack.c.l.b16 %v324
      %v469 = vunpack.c.l.b16 %v325
      %v470 = vunpack.c.l.b16 %v326
      %v471 = vunpack.c.l.b16 %v327
      %v472 = vunpack.c.l.b16 %v328
      %v473 = vunpack.c.l.b16 %v329
      %v474 = vunpack.c.l.b16 %v330
      %v475 = vunpack.c.l.b16 %v331
      %v476 = vunpack.c.l.b16 %v332
      %v477 = vpack.c.b16 %v446, %v445
      %v478 = vpack.c.b16 %v448, %v447
      %v479 = vpack.c.b16 %v450, %v449
      %v480 = vpack.c.b16 %v452, %v451
      %v481 = vpack.c.b16 %v454, %v453
      %v482 = vpack.c.b16 %v456, %v455
      %v483 = vpack.c.b16 %v458, %v457
      %v484 = vpack.c.b16 %v460, %v459
      %v485 = vpack.c.b16 %v462, %v461
      %v486 = vpack.c.b16 %v464, %v463
      %v487 = vpack.c.b16 %v466, %v465
      %v488 = vpack.c.b16 %v468, %v467
      %v489 = vpack.c.b16 %v470, %v469
      %v490 = vpack.c.b16 %v472, %v471
      %v491 = vpack.c.b16 %v474, %v473
      %v492 = vpack.c.b16 %v476, %v475
      %509 = vmatprep.subr.bf16.mxu0 0
      %510 = vmatpush1.bf16.msra.mxu0 %v477
      %511 = vmatprep.subr.bf16.mxu0 0
      %512 = vmatpush1.bf16.msra.mxu0 %v478
      %513 = vmatprep.subr.bf16.mxu0 0
      %514 = vmatpush1.bf16.msra.mxu0 %v479
      %515 = vmatprep.subr.bf16.mxu0 0
      %516 = vmatpush1.bf16.msra.mxu0 %v480
      %517 = vmatprep.subr.bf16.mxu0 0
      %518 = vmatpush1.bf16.msra.mxu0 %v481
      %519 = vmatprep.subr.bf16.mxu0 0
      %520 = vmatpush1.bf16.msra.mxu0 %v482
      %521 = vmatprep.subr.bf16.mxu0 0
      %522 = vmatpush1.bf16.msra.mxu0 %v483
      %523 = vmatprep.subr.bf16.mxu0 0
      %524 = vmatpush1.bf16.msra.mxu0 %v484
      %525 = vmatprep.subr.bf16.mxu0 0
      %526 = vmatpush1.bf16.msra.mxu0 %v485
      %527 = vmatprep.subr.bf16.mxu0 0
      %528 = vmatpush1.bf16.msra.mxu0 %v486
      %529 = vmatprep.subr.bf16.mxu0 0
      %530 = vmatpush1.bf16.msra.mxu0 %v487
      %531 = vmatprep.subr.bf16.mxu0 0
      %532 = vmatpush1.bf16.msra.mxu0 %v488
      %533 = vmatprep.subr.bf16.mxu0 0
      %534 = vmatpush1.bf16.msra.mxu0 %v489
      %535 = vmatprep.subr.bf16.mxu0 0
      %536 = vmatpush1.bf16.msra.mxu0 %v490
      %537 = vmatprep.subr.bf16.mxu0 0
      %538 = vmatpush1.bf16.msra.mxu0 %v491
      %539 = vmatprep.subr.bf16.mxu0 0
      %540 = vmatpush1.bf16.msra.mxu0 %v492
      %541 = vmatprep.mubr.bf16.mxu0 %v382
      %542 = vmatmul.mubr.bf16.gmra.mrb[0].mxu0 %v381
      %v543 = vpop.f32.mrb[0].mxu0
      %v544 = vadd.f32 0.0, %v543
      %v545 = vpop.f32.mrb[0].mxu0
      %v546 = vpop.f32.mrb[0].mxu0
      %v547 = vadd.f32 0.0, %v546
      %v548 = vpop.f32.mrb[0].mxu0
      %549 = vmatprep.mubr.bf16.mxu0 %v384
      %550 = vmatmul.mubr.bf16.gmra.mrb[0].mxu0 %v383
      %v551 = vpop.f32.mrb[0].mxu0
      %v552 = vadd.f32 0.0, %v551
      %v553 = vpop.f32.mrb[0].mxu0
      %v554 = vpop.f32.mrb[0].mxu0
      %v555 = vadd.f32 0.0, %v554
      %v556 = vpop.f32.mrb[0].mxu0
      %557 = vmatprep.mubr.bf16.mxu0 %v386
      %558 = vmatmul.mubr.bf16.gmra.mrb[0].mxu0 %v385
      %v559 = vpop.f32.mrb[0].mxu0
      %v560 = vadd.f32 0.0, %v559
      %v561 = vpop.f32.mrb[0].mxu0
      %v562 = vpop.f32.mrb[0].mxu0
      %v563 = vadd.f32 0.0, %v562
      %v564 = vpop.f32.mrb[0].mxu0
      %565 = vmatprep.mubr.bf16.mxu0 %v388
      %566 = vmatmul.mubr.bf16.gmra.mrb[0].mxu0 %v387
      %v567 = vpop.f32.mrb[0].mxu0
      %v568 = vadd.f32 0.0, %v567
      %v569 = vpop.f32.mrb[0].mxu0
      %v570 = vpop.f32.mrb[0].mxu0
      %v571 = vadd.f32 0.0, %v570
      %v572 = vpop.f32.mrb[0].mxu0
      %573 = vmatprep.mubr.bf16.mxu0 %v390
      %574 = vmatmul.mubr.bf16.gmra.mrb[0].mxu0 %v389
      %v575 = vpop.f32.mrb[0].mxu0
      %v576 = vadd.f32 0.0, %v575
      %v577 = vpop.f32.mrb[0].mxu0
      %v578 = vpop.f32.mrb[0].mxu0
      %v579 = vadd.f32 0.0, %v578
      %v580 = vpop.f32.mrb[0].mxu0
      %581 = vmatprep.mubr.bf16.mxu0 %v392
      %582 = vmatmul.mubr.bf16.gmra.mrb[0].mxu0 %v391
      %v583 = vpop.f32.mrb[0].mxu0
      %v584 = vadd.f32 0.0, %v583
      %v585 = vpop.f32.mrb[0].mxu0
      %v586 = vpop.f32.mrb[0].mxu0
      %v587 = vadd.f32 0.0, %v586
      %v588 = vpop.f32.mrb[0].mxu0
      %589 = vmatprep.mubr.bf16.mxu0 %v394
      %590 = vmatmul.mubr.bf16.gmra.mrb[0].mxu0 %v393
      %v591 = vpop.f32.mrb[0].mxu0
      %v592 = vadd.f32 0.0, %v591
      %v593 = vpop.f32.mrb[0].mxu0
      %v594 = vpop.f32.mrb[0].mxu0
      %v595 = vadd.f32 0.0, %v594
      %v596 = vpop.f32.mrb[0].mxu0
      %597 = vmatprep.mubr.bf16.mxu0 %v396
      %598 = vmatmul.mubr.bf16.gmra.mrb[0].mxu0 %v395
      %v599 = vpop.f32.mrb[0].mxu0
      %v600 = vadd.f32 0.0, %v599
      %v601 = vpop.f32.mrb[0].mxu0
      %v602 = vpop.f32.mrb[0].mxu0
      %v603 = vadd.f32 0.0, %v602
      %v604 = vpop.f32.mrb[0].mxu0
      %605 = vdwg.mxu0
      %vm606 = vcmask 261120
      %607 = vst.msk [vmem:[%s269] sm:$0xff] %vm606, %v544
      %608 = vst.msk [vmem:[%s269 + $0x8] sm:$0xff] %vm606, %v547
      %609 = vst.msk [vmem:[%s269 + $0x10] sm:$0xff] %vm606, %v552
      %610 = vst.msk [vmem:[%s269 + $0x18] sm:$0xff] %vm606, %v555
      %611 = vst.msk [vmem:[%s269 + $0x20] sm:$0xff] %vm606, %v560
      %612 = vst.msk [vmem:[%s269 + $0x28] sm:$0xff] %vm606, %v563
      %613 = vst.msk [vmem:[%s269 + $0x30] sm:$0xff] %vm606, %v568
      %614 = vst.msk [vmem:[%s269 + $0x38] sm:$0xff] %vm606, %v571
      %615 = vst.msk [vmem:[%s269 + $0x40] sm:$0xff] %vm606, %v576
      %616 = vst.msk [vmem:[%s269 + $0x48] sm:$0xff] %vm606, %v579
      %617 = vst.msk [vmem:[%s269 + $0x50] sm:$0xff] %vm606, %v584
      %618 = vst.msk [vmem:[%s269 + $0x58] sm:$0xff] %vm606, %v587
      %619 = vst.msk [vmem:[%s269 + $0x60] sm:$0xff] %vm606, %v592
      %620 = vst.msk [vmem:[%s269 + $0x68] sm:$0xff] %vm606, %v595
      %621 = vst.msk [vmem:[%s269 + $0x70] sm:$0xff] %vm606, %v600
      %622 = vst.msk [vmem:[%s269 + $0x78] sm:$0xff] %vm606, %v603
      %v623 = vld [vmem:[%s273] sm:$0x1]
      %v624 = vsel %vm606, %v544, 0.0
      %v625 = vsel %vm606, %v547, 0.0
      %v626 = vadd.f32 %v624, %v625
      %v627 = vsel %vm606, %v552, 0.0
      %v628 = vadd.f32 %v626, %v627
      %v629 = vsel %vm606, %v555, 0.0
      %v630 = vadd.f32 %v628, %v629
      %v631 = vsel %vm606, %v560, 0.0
      %v632 = vadd.f32 %v630, %v631
      %v633 = vsel %vm606, %v563, 0.0
      %v634 = vadd.f32 %v632, %v633
      %v635 = vsel %vm606, %v568, 0.0
      %v636 = vadd.f32 %v634, %v635
      %v637 = vsel %vm606, %v571, 0.0
      %v638 = vadd.f32 %v636, %v637
      %v639 = vsel %vm606, %v576, 0.0
      %v640 = vadd.f32 %v638, %v639
      %v641 = vsel %vm606, %v579, 0.0
      %v642 = vadd.f32 %v640, %v641
      %v643 = vsel %vm606, %v584, 0.0
      %v644 = vadd.f32 %v642, %v643
      %v645 = vsel %vm606, %v587, 0.0
      %v646 = vadd.f32 %v644, %v645
      %v647 = vsel %vm606, %v592, 0.0
      %v648 = vadd.f32 %v646, %v647
      %v649 = vsel %vm606, %v595, 0.0
      %v650 = vadd.f32 %v648, %v649
      %v651 = vsel %vm606, %v600, 0.0
      %v652 = vadd.f32 %v650, %v651
      %v653 = vsel %vm606, %v603, 0.0
      %v654 = vadd.f32 %v652, %v653
      %v655 = vrot.slane %v654, 4
      %v656 = vadd.f32 %v654, %v655
      %v657 = vrot.slane %v656, 2
      %v658 = vadd.f32 %v656, %v657
      %v659 = vrot.slane %v658, 1
      %v660 = vadd.f32 %v658, %v659
      %v661 = vadd.f32 %v623, %v660
      %vm662 = vcmask 253952
      %663 = vst.msk [vmem:[%s273] sm:$0x1] %vm662, %v661
      %v664 = vld [vmem:[%s276] sm:$0x1]
      %v665 = vmul.f32 %v544, %v544
      %v666 = vmul.f32 %v547, %v547
      %v667 = vmul.f32 %v552, %v552
      %v668 = vmul.f32 %v555, %v555
      %v669 = vmul.f32 %v560, %v560
      %v670 = vmul.f32 %v563, %v563
      %v671 = vmul.f32 %v568, %v568
      %v672 = vmul.f32 %v571, %v571
      %v673 = vmul.f32 %v576, %v576
      %v674 = vmul.f32 %v579, %v579
      %v675 = vmul.f32 %v584, %v584
      %v676 = vmul.f32 %v587, %v587
      %v677 = vmul.f32 %v592, %v592
      %v678 = vmul.f32 %v595, %v595
      %v679 = vmul.f32 %v600, %v600
      %v680 = vmul.f32 %v603, %v603
      %v681 = vsel %vm606, %v665, 0.0
      %v682 = vsel %vm606, %v666, 0.0
      %v683 = vadd.f32 %v681, %v682
      %v684 = vsel %vm606, %v667, 0.0
      %v685 = vadd.f32 %v683, %v684
      %v686 = vsel %vm606, %v668, 0.0
      %v687 = vadd.f32 %v685, %v686
      %v688 = vsel %vm606, %v669, 0.0
      %v689 = vadd.f32 %v687, %v688
      %v690 = vsel %vm606, %v670, 0.0
      %v691 = vadd.f32 %v689, %v690
      %v692 = vsel %vm606, %v671, 0.0
      %v693 = vadd.f32 %v691, %v692
      %v694 = vsel %vm606, %v672, 0.0
      %v695 = vadd.f32 %v693, %v694
      %v696 = vsel %vm606, %v673, 0.0
      %v697 = vadd.f32 %v695, %v696
      %v698 = vsel %vm606, %v674, 0.0
      %v699 = vadd.f32 %v697, %v698
      %v700 = vsel %vm606, %v675, 0.0
      %v701 = vadd.f32 %v699, %v700
      %v702 = vsel %vm606, %v676, 0.0
      %v703 = vadd.f32 %v701, %v702
      %v704 = vsel %vm606, %v677, 0.0
      %v705 = vadd.f32 %v703, %v704
      %v706 = vsel %vm606, %v678, 0.0
      %v707 = vadd.f32 %v705, %v706
      %v708 = vsel %vm606, %v679, 0.0
      %v709 = vadd.f32 %v707, %v708
      %v710 = vsel %vm606, %v680, 0.0
      %v711 = vadd.f32 %v709, %v710
      %v712 = vrot.slane %v711, 4
      %v713 = vadd.f32 %v711, %v712
      %v714 = vrot.slane %v713, 2
      %v715 = vadd.f32 %v713, %v714
      %v716 = vrot.slane %v715, 1
      %v717 = vadd.f32 %v715, %v716
      %v718 = vadd.f32 %v664, %v717
      %719 = vst.msk [vmem:[%s276] sm:$0x1] %vm662, %v718
      %s720 = smul.u32 16, %s21
      %p721 = scmp.lt.s32.totalorder %s20, 3
      %s722 = scalar_select %p721, %s20, 3
      %p723 = scmp.lt.s32.totalorder %s720, 15
      %s724 = scalar_select %p723, %s720, 15
      %s725 = smul.addr %s722, 16
      %s726 = sadd.s32 %s724, %s725
      %s727 = smul.addr %s726, 8
      %s728 = scalar_lea.vmem %s2, %s727
      %p729 = scmp.lt.s32.totalorder %s20, 3
      %s730 = scalar_select %p729, %s20, 3
      %s731 = scalar_lea.vmem %s3, %s730
      %p732 = scmp.lt.s32.totalorder %s20, 3
      %s733 = scalar_select %p732, %s20, 3
      %s734 = scalar_lea.vmem %s4, %s733
      // Predicated region
      $region33: #{generator_forward.13} parent=27 // pred_check
        %p735 = pneg %p102
      $region34: #{generator_forward.13} parent=27 // pred_check_branch
        %737 = sbr.rel (%p735) target = $region36
      $region35: #{generator_forward.13} parent=27 // pred_region
        %s738 = smul.u32 16, %s21
      $region36: #{generator_forward.13} parent=27 // pred_fallthru
        _
      // Predicated region
      $region37: #{generator_forward.13} parent=27 // pred_check
        %p739 = pneg %p128
      $region38: #{generator_forward.13} parent=27 // pred_check_branch
        %741 = sbr.rel (%p739) target = $region40
      $region39: #{generator_forward.13} parent=27 // pred_region
        _
      $region40: #{generator_forward.13} parent=27 // pred_fallthru
        _
      // Predicated region
      $region41: #{generator_forward.13} parent=27 // pred_check
        %p742 = pneg %p154
      $region42: #{generator_forward.13} parent=27 // pred_check_branch
        %744 = sbr.rel (%p742) target = $region44
      $region43: #{generator_forward.13} parent=27 // pred_region
        _
      $region44: #{generator_forward.13} parent=27 // pred_fallthru
        _
    $region28: #{generator_forward.13} parent=5 // pred_fallthru
      _
    %p745 = scmp.le.s32.totalorder 2, %s11
    // Predicated region
    $region45: #{generator_forward.13} parent=5 // pred_check
      %p746 = pneg %p745
    $region46: #{generator_forward.13} parent=5 // pred_check_branch
      %748 = sbr.rel (%p746) target = $region48
    $region47: #{generator_forward.13} parent=5 // pred_region
      %s749 = ssub.s32 %s11, 2
      // Predicated region
      $region49: #{generator_forward.13} parent=47 // pred_check
        %p750 = pneg %p108
      $region50: #{generator_forward.13} parent=47 // pred_check_branch
        %752 = sbr.rel (%p750) target = $region52
      $region51: #{generator_forward.13} parent=47 // pred_region
        %s753 = smul.u32 16, %s23
        %p754 = scmp.lt.s32.totalorder %s22, 3
        %s755 = scalar_select %p754, %s22, 3
        %p756 = scmp.lt.s32.totalorder %s753, 15
        %s757 = scalar_select %p756, %s753, 15
        %s758 = smul.addr %s755, 16
        %s759 = sadd.s32 %s757, %s758
        %s760 = smul.addr %s759, 8
        %s761 = scalar_lea.vmem %s2, %s760
      $region52: #{generator_forward.13} parent=47 // pred_fallthru
        _
      // Predicated region
      $region53: #{generator_forward.13} parent=47 // pred_check
        %p762 = pneg %p134
      $region54: #{generator_forward.13} parent=47 // pred_check_branch
        %764 = sbr.rel (%p762) target = $region56
      $region55: #{generator_forward.13} parent=47 // pred_region
        %p765 = scmp.lt.s32.totalorder %s22, 3
        %s766 = scalar_select %p765, %s22, 3
        %s767 = scalar_lea.vmem %s3, %s766
      $region56: #{generator_forward.13} parent=47 // pred_fallthru
        _
      // Predicated region
      $region57: #{generator_forward.13} parent=47 // pred_check
        %p768 = pneg %p160
      $region58: #{generator_forward.13} parent=47 // pred_check_branch
        %770 = sbr.rel (%p768) target = $region60
      $region59: #{generator_forward.13} parent=47 // pred_region
        %p771 = scmp.lt.s32.totalorder %s22, 3
        %s772 = scalar_select %p771, %s22, 3
        %s773 = scalar_lea.vmem %s4, %s772
      $region60: #{generator_forward.13} parent=47 // pred_fallthru
        _
    $region48: #{generator_forward.13} parent=5 // pred_fallthru
      _
  $region6: #{generator_forward.13} parent=0 // loop_footer
    %s15 = sadd.s32 1, %s11
  $region7: #{generator_forward.13} parent=0 // loop_footer_branch
    %10 = sbr.rel target = $region3
  $region8: #{generator_forward.13} parent=0 // loop_exit
    _

// kernel: generator_forward.14
$region0: #{generator_forward.14}
  #allocation0 [shape = 'u32[]', space=smem, size = 0x4, offset = 0x4, fixed_abs, tag = 'smem constant byte address 0x4 - core index']
  #allocation1 [shape = 'u32[144,128]{1,0:T(1,128)}', space=vmem, size = 0x12000, scoped, tag = 'internal scratch']
  %s0 = inlined_call_operand.vmem [shape: f32[128,128], index: 0, kind: input, shape index: {}]
  %s1 = inlined_call_operand.vmem [shape: f32[1,128], index: 1, kind: input, shape index: {}]
  %s2 = inlined_call_operand.vmem [shape: f32[1,128], index: 2, kind: input, shape index: {}]
  %s3 = inlined_call_operand.vmem [shape: bf16[128,128], index: 3, kind: output, shape index: {}]
  %s4 = sld [smem:[#allocation0]]
  $region22: #{generator_forward.14} parent=0
    _
  %s6 = ssub.s32 1, %s4
  %s7 = scalar_select 0, %s6, %s4
  // Predicated region
  $region2: #{generator_forward.14} parent=0 // pred_check
    _
  $region3: #{generator_forward.14} parent=0 // pred_check_branch
    %9 = sbr.rel (0) target = $region5
  $region4: #{generator_forward.14} parent=0 // pred_region
    _
  $region5: #{generator_forward.14} parent=0 // pred_fallthru
    _
  // Predicated region
  $region6: #{generator_forward.14} parent=0 // pred_check
    _
  $region7: #{generator_forward.14} parent=0 // pred_check_branch
    %11 = sbr.rel (0) target = $region9
  $region8: #{generator_forward.14} parent=0 // pred_region
    _
  $region9: #{generator_forward.14} parent=0 // pred_fallthru
    _
  // Predicated region
  $region10: #{generator_forward.14} parent=0 // pred_check
    _
  $region11: #{generator_forward.14} parent=0 // pred_check_branch
    %13 = sbr.rel (0) target = $region13
  $region12: #{generator_forward.14} parent=0 // pred_region
    _
  $region13: #{generator_forward.14} parent=0 // pred_fallthru
    _
  %v14 = vld [vmem:[%s0] sm:$0xff]
  %v15 = vld [vmem:[%s0 + $0x8] sm:$0xff]
  %v16 = vld [vmem:[%s0 + $0x10] sm:$0xff]
  %v17 = vld [vmem:[%s0 + $0x18] sm:$0xff]
  %v18 = vld [vmem:[%s0 + $0x20] sm:$0xff]
  %v19 = vld [vmem:[%s0 + $0x28] sm:$0xff]
  %v20 = vld [vmem:[%s0 + $0x30] sm:$0xff]
  %v21 = vld [vmem:[%s0 + $0x38] sm:$0xff]
  %v22 = vld [vmem:[%s0 + $0x40] sm:$0xff]
  %v23 = vld [vmem:[%s0 + $0x48] sm:$0xff]
  %v24 = vld [vmem:[%s0 + $0x50] sm:$0xff]
  %v25 = vld [vmem:[%s0 + $0x58] sm:$0xff]
  %v26 = vld [vmem:[%s0 + $0x60] sm:$0xff]
  %v27 = vld [vmem:[%s0 + $0x68] sm:$0xff]
  %v28 = vld [vmem:[%s0 + $0x70] sm:$0xff]
  %v29 = vld [vmem:[%s0 + $0x78] sm:$0xff]
  %v30 = vld [vmem:[%s1] sm:$0x1]
  %v32 = vlaneseq
  %v33 = vshrl.u32 %v32, 7
  %v34 = vsub.s32 0, %v33
  %v35 = vrot.slane %v30, %v34
  %v37 = vmul.f32 %v14, %v35
  %v38 = vmul.f32 %v15, %v35
  %v39 = vmul.f32 %v16, %v35
  %v40 = vmul.f32 %v17, %v35
  %v41 = vmul.f32 %v18, %v35
  %v42 = vmul.f32 %v19, %v35
  %v43 = vmul.f32 %v20, %v35
  %v44 = vmul.f32 %v21, %v35
  %v45 = vmul.f32 %v22, %v35
  %v46 = vmul.f32 %v23, %v35
  %v47 = vmul.f32 %v24, %v35
  %v48 = vmul.f32 %v25, %v35
  %v49 = vmul.f32 %v26, %v35
  %v50 = vmul.f32 %v27, %v35
  %v51 = vmul.f32 %v28, %v35
  %v52 = vmul.f32 %v29, %v35
  %v53 = vld [vmem:[%s2] sm:$0x1]
  %v55 = vlaneseq
  %v56 = vshrl.u32 %v55, 7
  %v57 = vsub.s32 0, %v56
  %v58 = vrot.slane %v53, %v57
  %v60 = vadd.f32 %v37, %v58
  %v61 = vadd.f32 %v38, %v58
  %v62 = vadd.f32 %v39, %v58
  %v63 = vadd.f32 %v40, %v58
  %v64 = vadd.f32 %v41, %v58
  %v65 = vadd.f32 %v42, %v58
  %v66 = vadd.f32 %v43, %v58
  %v67 = vadd.f32 %v44, %v58
  %v68 = vadd.f32 %v45, %v58
  %v69 = vadd.f32 %v46, %v58
  %v70 = vadd.f32 %v47, %v58
  %v71 = vadd.f32 %v48, %v58
  %v72 = vadd.f32 %v49, %v58
  %v73 = vadd.f32 %v50, %v58
  %v74 = vadd.f32 %v51, %v58
  %v75 = vadd.f32 %v52, %v58
  %v76 = vmax.f32 %v60, 0.0
  %v77 = vmax.f32 %v61, 0.0
  %v78 = vmax.f32 %v62, 0.0
  %v79 = vmax.f32 %v63, 0.0
  %v80 = vmax.f32 %v64, 0.0
  %v81 = vmax.f32 %v65, 0.0
  %v82 = vmax.f32 %v66, 0.0
  %v83 = vmax.f32 %v67, 0.0
  %v84 = vmax.f32 %v68, 0.0
  %v85 = vmax.f32 %v69, 0.0
  %v86 = vmax.f32 %v70, 0.0
  %v87 = vmax.f32 %v71, 0.0
  %v88 = vmax.f32 %v72, 0.0
  %v89 = vmax.f32 %v73, 0.0
  %v90 = vmax.f32 %v74, 0.0
  %v91 = vmax.f32 %v75, 0.0
  %v92 = vpack.c.bf16 %v77, %v76
  %v93 = vpack.c.bf16 %v79, %v78
  %v94 = vpack.c.bf16 %v81, %v80
  %v95 = vpack.c.bf16 %v83, %v82
  %v96 = vpack.c.bf16 %v85, %v84
  %v97 = vpack.c.bf16 %v87, %v86
  %v98 = vpack.c.bf16 %v89, %v88
  %v99 = vpack.c.bf16 %v91, %v90
  %v108 = vunpack.c.l.b16 %v92
  %v109 = vunpack.c.h.b16 %v92
  %v110 = vunpack.c.l.b16 %v93
  %v111 = vunpack.c.h.b16 %v93
  %v112 = vunpack.c.l.b16 %v94
  %v113 = vunpack.c.h.b16 %v94
  %v114 = vunpack.c.l.b16 %v95
  %v115 = vunpack.c.h.b16 %v95
  %v116 = vunpack.c.l.b16 %v96
  %v117 = vunpack.c.h.b16 %v96
  %v118 = vunpack.c.l.b16 %v97
  %v119 = vunpack.c.h.b16 %v97
  %v120 = vunpack.c.l.b16 %v98
  %v121 = vunpack.c.h.b16 %v98
  %v122 = vunpack.c.l.b16 %v99
  %v123 = vunpack.c.h.b16 %v99
  %v124 = vpack.c.b16 %v108, %v108
  %v125 = vpack.c.b16 %v109, %v109
  %v126 = vpack.c.b16 %v110, %v110
  %v127 = vpack.c.b16 %v111, %v111
  %v128 = vpack.c.b16 %v112, %v112
  %v129 = vpack.c.b16 %v113, %v113
  %v130 = vpack.c.b16 %v114, %v114
  %v131 = vpack.c.b16 %v115, %v115
  %v132 = vpack.c.b16 %v116, %v116
  %v133 = vpack.c.b16 %v117, %v117
  %v134 = vpack.c.b16 %v118, %v118
  %v135 = vpack.c.b16 %v119, %v119
  %v136 = vpack.c.b16 %v120, %v120
  %v137 = vpack.c.b16 %v121, %v121
  %v138 = vpack.c.b16 %v122, %v122
  %v139 = vpack.c.b16 %v123, %v123
  %156 = vst [vmem:[%s3] sm:$0xf] %v124
  %157 = vst [vmem:[%s3 + $0x4] sm:$0xf] %v125
  %158 = vst [vmem:[%s3 + $0x8] sm:$0xf] %v126
  %159 = vst [vmem:[%s3 + $0xc] sm:$0xf] %v127
  %160 = vst [vmem:[%s3 + $0x10] sm:$0xf] %v128
  %161 = vst [vmem:[%s3 + $0x14] sm:$0xf] %v129
  %162 = vst [vmem:[%s3 + $0x18] sm:$0xf] %v130
  %163 = vst [vmem:[%s3 + $0x1c] sm:$0xf] %v131
  %164 = vst [vmem:[%s3 + $0x20] sm:$0xf] %v132
  %165 = vst [vmem:[%s3 + $0x24] sm:$0xf] %v133
  %166 = vst [vmem:[%s3 + $0x28] sm:$0xf] %v134
  %167 = vst [vmem:[%s3 + $0x2c] sm:$0xf] %v135
  %168 = vst [vmem:[%s3 + $0x30] sm:$0xf] %v136
  %169 = vst [vmem:[%s3 + $0x34] sm:$0xf] %v137
  %170 = vst [vmem:[%s3 + $0x38] sm:$0xf] %v138
  %171 = vst [vmem:[%s3 + $0x3c] sm:$0xf] %v139
  // Predicated region
  $region14: #{generator_forward.14} parent=0 // pred_check
    _
  $region15: #{generator_forward.14} parent=0 // pred_check_branch
    %173 = sbr.rel (0) target = $region17
  $region16: #{generator_forward.14} parent=0 // pred_region
    _
  $region17: #{generator_forward.14} parent=0 // pred_fallthru
    _
  // Predicated region
  $region18: #{generator_forward.14} parent=0 // pred_check
    _
  $region19: #{generator_forward.14} parent=0 // pred_check_branch
    %175 = sbr.rel (0) target = $region21
  $region20: #{generator_forward.14} parent=0 // pred_region
    _
  $region21: #{generator_forward.14} parent=0 // pred_fallthru
    _

// kernel: tile.53
$region0: #{tile.53}
  #allocation0 [shape = 's32[1]{0}', space=sflag, size = 0x4, scoped, tag = 'scoped memory for tile.53']
  %s0 = inlined_call_operand.vmem [shape: f32[16], index: 0, kind: input, shape index: {}]
  %s1 = inlined_call_operand.vmem [shape: f32[8,16], index: 1, kind: output, shape index: {}]
  // Predicated region
  $region2: #{tile.53} parent=0 // pred_check
    _
  $region3: #{tile.53} parent=0 // pred_check_branch
    %3 = sbr.rel (0) target = $region5
  $region4: #{tile.53} parent=0 // pred_region
    _
  $region5: #{tile.53} parent=0 // pred_fallthru
    _
  %v4 = vld [vmem:[%s0] ss:$0 sm:$0xff]
  %5 = vst [vmem:[%s1] sm:$0xff] %v4

// kernel: tile.58
$region0: #{tile.58}
  %s0 = inlined_call_operand.vmem [shape: f32[8,16], index: 0, kind: input, shape index: {}]
  %s1 = inlined_call_operand.vmem [shape: f32[1,128], index: 1, kind: output, shape index: {}]
  $region1: #{tile.58} parent=0
    #allocation0 [shape = 'u8[4096]{0}', space=vmem, size = 0x1000, scoped, tag = 'scoped mem for output reshape']
    %v2 = vld [vmem:[%s0] sm:$0x1]
    %vm3 = vcmask 130048
    %4 = vst.msk [vmem:[#allocation0] sm:$0x1] %vm3, %v2
    %s5 = scalar_lea.vmem %s0, 7
    %v6 = vld [vmem:[%s5] sm:$0x1]
    %7 = vrot.lane.b32.xlu0 %v6, 112
    %v8 = vpop.permute.xlu0 %7
    %vm9 = vcmask 1048448
    %10 = vst.msk [vmem:[#allocation0] sm:$0x1] %vm9, %v8
    %s11 = scalar_lea.vmem %s0, 6
    %v12 = vld [vmem:[%s11] sm:$0x1]
    %13 = vrot.lane.b32.xlu0 %v12, 96
    %v14 = vpop.permute.xlu0 %13
    %vm15 = vcmask 917248
    %16 = vst.msk [vmem:[#allocation0] sm:$0x1] %vm15, %v14
    %s17 = scalar_lea.vmem %s0, 5
    %v18 = vld [vmem:[%s17] sm:$0x1]
    %19 = vrot.lane.b32.xlu0 %v18, 80
    %v20 = vpop.permute.xlu0 %19
    %vm21 = vcmask 786048
    %22 = vst.msk [vmem:[#allocation0] sm:$0x1] %vm21, %v20
    %s23 = scalar_lea.vmem %s0, 4
    %v24 = vld [vmem:[%s23] sm:$0x1]
    %25 = vrot.lane.b32.xlu0 %v24, 64
    %v26 = vpop.permute.xlu0 %25
    %vm27 = vcmask 654848
    %28 = vst.msk [vmem:[#allocation0] sm:$0x1] %vm27, %v26
    %s29 = scalar_lea.vmem %s0, 3
    %v30 = vld [vmem:[%s29] sm:$0x1]
    %31 = vrot.lane.b32.xlu0 %v30, 48
    %v32 = vpop.permute.xlu0 %31
    %vm33 = vcmask 523648
    %34 = vst.msk [vmem:[#allocation0] sm:$0x1] %vm33, %v32
    %s35 = scalar_lea.vmem %s0, 2
    %v36 = vld [vmem:[%s35] sm:$0x1]
    %37 = vrot.lane.b32.xlu0 %v36, 32
    %v38 = vpop.permute.xlu0 %37
    %vm39 = vcmask 392448
    %40 = vst.msk [vmem:[#allocation0] sm:$0x1] %vm39, %v38
    %s41 = scalar_lea.vmem %s0, 1
    %v42 = vld [vmem:[%s41] sm:$0x1]
    %43 = vrot.lane.b32.xlu0 %v42, 16
    %v44 = vpop.permute.xlu0 %43
    %vm45 = vcmask 261248
    %46 = vst.msk [vmem:[#allocation0] sm:$0x1] %vm45, %v44
    %s48 = sshllo.u32 0, 1
    %v50 = vld [vmem:[#allocation0] sm:%s48]
    %s51 = sshllo.u32 0, 1
    %52 = vst [vmem:[%s1] sm:%s51] %v50

// kernel: generator_forward.16
$region0: #{generator_forward.16}
  #allocation0 [shape = 'u32[]', space=smem, size = 0x4, offset = 0x4, fixed_abs, tag = 'smem constant byte address 0x4 - core index']
  #allocation1 [shape = 'u32[144,128]{1,0:T(1,128)}', space=vmem, size = 0x12000, scoped, tag = 'internal scratch']
  %s0 = inlined_call_operand.vmem [shape: f32[256,128], index: 0, kind: input, shape index: {}]
  %s1 = inlined_call_operand.vmem [shape: f32[1,128], index: 1, kind: input, shape index: {}]
  %s2 = inlined_call_operand.vmem [shape: f32[1,128], index: 2, kind: input, shape index: {}]
  %s3 = inlined_call_operand.vmem [shape: bf16[256,128], index: 3, kind: output, shape index: {}]
  %s4 = sld [smem:[#allocation0]]
  $region22: #{generator_forward.16} parent=0
    _
  %s6 = ssub.s32 1, %s4
  %s7 = scalar_select 0, %s6, %s4
  // Predicated region
  $region2: #{generator_forward.16} parent=0 // pred_check
    _
  $region3: #{generator_forward.16} parent=0 // pred_check_branch
    %9 = sbr.rel (0) target = $region5
  $region4: #{generator_forward.16} parent=0 // pred_region
    _
  $region5: #{generator_forward.16} parent=0 // pred_fallthru
    _
  // Predicated region
  $region6: #{generator_forward.16} parent=0 // pred_check
    _
  $region7: #{generator_forward.16} parent=0 // pred_check_branch
    %11 = sbr.rel (0) target = $region9
  $region8: #{generator_forward.16} parent=0 // pred_region
    _
  $region9: #{generator_forward.16} parent=0 // pred_fallthru
    _
  // Predicated region
  $region10: #{generator_forward.16} parent=0 // pred_check
    _
  $region11: #{generator_forward.16} parent=0 // pred_check_branch
    %13 = sbr.rel (0) target = $region13
  $region12: #{generator_forward.16} parent=0 // pred_region
    _
  $region13: #{generator_forward.16} parent=0 // pred_fallthru
    _
  %v14 = vld [vmem:[%s0] sm:$0xff]
  %v15 = vld [vmem:[%s0 + $0x8] sm:$0xff]
  %v16 = vld [vmem:[%s0 + $0x10] sm:$0xff]
  %v17 = vld [vmem:[%s0 + $0x18] sm:$0xff]
  %v18 = vld [vmem:[%s0 + $0x20] sm:$0xff]
  %v19 = vld [vmem:[%s0 + $0x28] sm:$0xff]
  %v20 = vld [vmem:[%s0 + $0x30] sm:$0xff]
  %v21 = vld [vmem:[%s0 + $0x38] sm:$0xff]
  %v22 = vld [vmem:[%s0 + $0x40] sm:$0xff]
  %v23 = vld [vmem:[%s0 + $0x48] sm:$0xff]
  %v24 = vld [vmem:[%s0 + $0x50] sm:$0xff]
  %v25 = vld [vmem:[%s0 + $0x58] sm:$0xff]
  %v26 = vld [vmem:[%s0 + $0x60] sm:$0xff]
  %v27 = vld [vmem:[%s0 + $0x68] sm:$0xff]
  %v28 = vld [vmem:[%s0 + $0x70] sm:$0xff]
  %v29 = vld [vmem:[%s0 + $0x78] sm:$0xff]
  %v30 = vld [vmem:[%s0 + $0x80] sm:$0xff]
  %v31 = vld [vmem:[%s0 + $0x88] sm:$0xff]
  %v32 = vld [vmem:[%s0 + $0x90] sm:$0xff]
  %v33 = vld [vmem:[%s0 + $0x98] sm:$0xff]
  %v34 = vld [vmem:[%s0 + $0xa0] sm:$0xff]
  %v35 = vld [vmem:[%s0 + $0xa8] sm:$0xff]
  %v36 = vld [vmem:[%s0 + $0xb0] sm:$0xff]
  %v37 = vld [vmem:[%s0 + $0xb8] sm:$0xff]
  %v38 = vld [vmem:[%s0 + $0xc0] sm:$0xff]
  %v39 = vld [vmem:[%s0 + $0xc8] sm:$0xff]
  %v40 = vld [vmem:[%s0 + $0xd0] sm:$0xff]
  %v41 = vld [vmem:[%s0 + $0xd8] sm:$0xff]
  %v42 = vld [vmem:[%s0 + $0xe0] sm:$0xff]
  %v43 = vld [vmem:[%s0 + $0xe8] sm:$0xff]
  %v44 = vld [vmem:[%s0 + $0xf0] sm:$0xff]
  %v45 = vld [vmem:[%s0 + $0xf8] sm:$0xff]
  %v46 = vld [vmem:[%s1] sm:$0x1]
  %v48 = vlaneseq
  %v49 = vshrl.u32 %v48, 7
  %v50 = vsub.s32 0, %v49
  %v51 = vrot.slane %v46, %v50
  %v53 = vmul.f32 %v14, %v51
  %v54 = vmul.f32 %v15, %v51
  %v55 = vmul.f32 %v16, %v51
  %v56 = vmul.f32 %v17, %v51
  %v57 = vmul.f32 %v18, %v51
  %v58 = vmul.f32 %v19, %v51
  %v59 = vmul.f32 %v20, %v51
  %v60 = vmul.f32 %v21, %v51
  %v61 = vmul.f32 %v22, %v51
  %v62 = vmul.f32 %v23, %v51
  %v63 = vmul.f32 %v24, %v51
  %v64 = vmul.f32 %v25, %v51
  %v65 = vmul.f32 %v26, %v51
  %v66 = vmul.f32 %v27, %v51
  %v67 = vmul.f32 %v28, %v51
  %v68 = vmul.f32 %v29, %v51
  %v69 = vmul.f32 %v30, %v51
  %v70 = vmul.f32 %v31, %v51
  %v71 = vmul.f32 %v32, %v51
  %v72 = vmul.f32 %v33, %v51
  %v73 = vmul.f32 %v34, %v51
  %v74 = vmul.f32 %v35, %v51
  %v75 = vmul.f32 %v36, %v51
  %v76 = vmul.f32 %v37, %v51
  %v77 = vmul.f32 %v38, %v51
  %v78 = vmul.f32 %v39, %v51
  %v79 = vmul.f32 %v40, %v51
  %v80 = vmul.f32 %v41, %v51
  %v81 = vmul.f32 %v42, %v51
  %v82 = vmul.f32 %v43, %v51
  %v83 = vmul.f32 %v44, %v51
  %v84 = vmul.f32 %v45, %v51
  %v85 = vld [vmem:[%s2] sm:$0x1]
  %v87 = vlaneseq
  %v88 = vshrl.u32 %v87, 7
  %v89 = vsub.s32 0, %v88
  %v90 = vrot.slane %v85, %v89
  %v92 = vadd.f32 %v53, %v90
  %v93 = vadd.f32 %v54, %v90
  %v94 = vadd.f32 %v55, %v90
  %v95 = vadd.f32 %v56, %v90
  %v96 = vadd.f32 %v57, %v90
  %v97 = vadd.f32 %v58, %v90
  %v98 = vadd.f32 %v59, %v90
  %v99 = vadd.f32 %v60, %v90
  %v100 = vadd.f32 %v61, %v90
  %v101 = vadd.f32 %v62, %v90
  %v102 = vadd.f32 %v63, %v90
  %v103 = vadd.f32 %v64, %v90
  %v104 = vadd.f32 %v65, %v90
  %v105 = vadd.f32 %v66, %v90
  %v106 = vadd.f32 %v67, %v90
  %v107 = vadd.f32 %v68, %v90
  %v108 = vadd.f32 %v69, %v90
  %v109 = vadd.f32 %v70, %v90
  %v110 = vadd.f32 %v71, %v90
  %v111 = vadd.f32 %v72, %v90
  %v112 = vadd.f32 %v73, %v90
  %v113 = vadd.f32 %v74, %v90
  %v114 = vadd.f32 %v75, %v90
  %v115 = vadd.f32 %v76, %v90
  %v116 = vadd.f32 %v77, %v90
  %v117 = vadd.f32 %v78, %v90
  %v118 = vadd.f32 %v79, %v90
  %v119 = vadd.f32 %v80, %v90
  %v120 = vadd.f32 %v81, %v90
  %v121 = vadd.f32 %v82, %v90
  %v122 = vadd.f32 %v83, %v90
  %v123 = vadd.f32 %v84, %v90
  %v124 = vmax.f32 %v92, 0.0
  %v125 = vmax.f32 %v93, 0.0
  %v126 = vmax.f32 %v94, 0.0
  %v127 = vmax.f32 %v95, 0.0
  %v128 = vmax.f32 %v96, 0.0
  %v129 = vmax.f32 %v97, 0.0
  %v130 = vmax.f32 %v98, 0.0
  %v131 = vmax.f32 %v99, 0.0
  %v132 = vmax.f32 %v100, 0.0
  %v133 = vmax.f32 %v101, 0.0
  %v134 = vmax.f32 %v102, 0.0
  %v135 = vmax.f32 %v103, 0.0
  %v136 = vmax.f32 %v104, 0.0
  %v137 = vmax.f32 %v105, 0.0
  %v138 = vmax.f32 %v106, 0.0
  %v139 = vmax.f32 %v107, 0.0
  %v140 = vmax.f32 %v108, 0.0
  %v141 = vmax.f32 %v109, 0.0
  %v142 = vmax.f32 %v110, 0.0
  %v143 = vmax.f32 %v111, 0.0
  %v144 = vmax.f32 %v112, 0.0
  %v145 = vmax.f32 %v113, 0.0
  %v146 = vmax.f32 %v114, 0.0
  %v147 = vmax.f32 %v115, 0.0
  %v148 = vmax.f32 %v116, 0.0
  %v149 = vmax.f32 %v117, 0.0
  %v150 = vmax.f32 %v118, 0.0
  %v151 = vmax.f32 %v119, 0.0
  %v152 = vmax.f32 %v120, 0.0
  %v153 = vmax.f32 %v121, 0.0
  %v154 = vmax.f32 %v122, 0.0
  %v155 = vmax.f32 %v123, 0.0
  %v156 = vpack.c.bf16 %v125, %v124
  %v157 = vpack.c.bf16 %v127, %v126
  %v158 = vpack.c.bf16 %v129, %v128
  %v159 = vpack.c.bf16 %v131, %v130
  %v160 = vpack.c.bf16 %v133, %v132
  %v161 = vpack.c.bf16 %v135, %v134
  %v162 = vpack.c.bf16 %v137, %v136
  %v163 = vpack.c.bf16 %v139, %v138
  %v164 = vpack.c.bf16 %v141, %v140
  %v165 = vpack.c.bf16 %v143, %v142
  %v166 = vpack.c.bf16 %v145, %v144
  %v167 = vpack.c.bf16 %v147, %v146
  %v168 = vpack.c.bf16 %v149, %v148
  %v169 = vpack.c.bf16 %v151, %v150
  %v170 = vpack.c.bf16 %v153, %v152
  %v171 = vpack.c.bf16 %v155, %v154
  %v188 = vunpack.c.l.b16 %v156
  %v189 = vunpack.c.h.b16 %v156
  %v190 = vunpack.c.l.b16 %v157
  %v191 = vunpack.c.h.b16 %v157
  %v192 = vunpack.c.l.b16 %v158
  %v193 = vunpack.c.h.b16 %v158
  %v194 = vunpack.c.l.b16 %v159
  %v195 = vunpack.c.h.b16 %v159
  %v196 = vunpack.c.l.b16 %v160
  %v197 = vunpack.c.h.b16 %v160
  %v198 = vunpack.c.l.b16 %v161
  %v199 = vunpack.c.h.b16 %v161
  %v200 = vunpack.c.l.b16 %v162
  %v201 = vunpack.c.h.b16 %v162
  %v202 = vunpack.c.l.b16 %v163
  %v203 = vunpack.c.h.b16 %v163
  %v204 = vunpack.c.l.b16 %v164
  %v205 = vunpack.c.h.b16 %v164
  %v206 = vunpack.c.l.b16 %v165
  %v207 = vunpack.c.h.b16 %v165
  %v208 = vunpack.c.l.b16 %v166
  %v209 = vunpack.c.h.b16 %v166
  %v210 = vunpack.c.l.b16 %v167
  %v211 = vunpack.c.h.b16 %v167
  %v212 = vunpack.c.l.b16 %v168
  %v213 = vunpack.c.h.b16 %v168
  %v214 = vunpack.c.l.b16 %v169
  %v215 = vunpack.c.h.b16 %v169
  %v216 = vunpack.c.l.b16 %v170
  %v217 = vunpack.c.h.b16 %v170
  %v218 = vunpack.c.l.b16 %v171
  %v219 = vunpack.c.h.b16 %v171
  %v220 = vpack.c.b16 %v188, %v188
  %v221 = vpack.c.b16 %v189, %v189
  %v222 = vpack.c.b16 %v190, %v190
  %v223 = vpack.c.b16 %v191, %v191
  %v224 = vpack.c.b16 %v192, %v192
  %v225 = vpack.c.b16 %v193, %v193
  %v226 = vpack.c.b16 %v194, %v194
  %v227 = vpack.c.b16 %v195, %v195
  %v228 = vpack.c.b16 %v196, %v196
  %v229 = vpack.c.b16 %v197, %v197
  %v230 = vpack.c.b16 %v198, %v198
  %v231 = vpack.c.b16 %v199, %v199
  %v232 = vpack.c.b16 %v200, %v200
  %v233 = vpack.c.b16 %v201, %v201
  %v234 = vpack.c.b16 %v202, %v202
  %v235 = vpack.c.b16 %v203, %v203
  %v236 = vpack.c.b16 %v204, %v204
  %v237 = vpack.c.b16 %v205, %v205
  %v238 = vpack.c.b16 %v206, %v206
  %v239 = vpack.c.b16 %v207, %v207
  %v240 = vpack.c.b16 %v208, %v208
  %v241 = vpack.c.b16 %v209, %v209
  %v242 = vpack.c.b16 %v210, %v210
  %v243 = vpack.c.b16 %v211, %v211
  %v244 = vpack.c.b16 %v212, %v212
  %v245 = vpack.c.b16 %v213, %v213
  %v246 = vpack.c.b16 %v214, %v214
  %v247 = vpack.c.b16 %v215, %v215
  %v248 = vpack.c.b16 %v216, %v216
  %v249 = vpack.c.b16 %v217, %v217
  %v250 = vpack.c.b16 %v218, %v218
  %v251 = vpack.c.b16 %v219, %v219
  %284 = vst [vmem:[%s3] sm:$0xf] %v220
  %285 = vst [vmem:[%s3 + $0x4] sm:$0xf] %v221
  %286 = vst [vmem:[%s3 + $0x8] sm:$0xf] %v222
  %287 = vst [vmem:[%s3 + $0xc] sm:$0xf] %v223
  %288 = vst [vmem:[%s3 + $0x10] sm:$0xf] %v224
  %289 = vst [vmem:[%s3 + $0x14] sm:$0xf] %v225
  %290 = vst [vmem:[%s3 + $0x18] sm:$0xf] %v226
  %291 = vst [vmem:[%s3 + $0x1c] sm:$0xf] %v227
  %292 = vst [vmem:[%s3 + $0x20] sm:$0xf] %v228
  %293 = vst [vmem:[%s3 + $0x24] sm:$0xf] %v229
  %294 = vst [vmem:[%s3 + $0x28] sm:$0xf] %v230
  %295 = vst [vmem:[%s3 + $0x2c] sm:$0xf] %v231
  %296 = vst [vmem:[%s3 + $0x30] sm:$0xf] %v232
  %297 = vst [vmem:[%s3 + $0x34] sm:$0xf] %v233
  %298 = vst [vmem:[%s3 + $0x38] sm:$0xf] %v234
  %299 = vst [vmem:[%s3 + $0x3c] sm:$0xf] %v235
  %300 = vst [vmem:[%s3 + $0x40] sm:$0xf] %v236
  %301 = vst [vmem:[%s3 + $0x44] sm:$0xf] %v237
  %302 = vst [vmem:[%s3 + $0x48] sm:$0xf] %v238
  %303 = vst [vmem:[%s3 + $0x4c] sm:$0xf] %v239
  %304 = vst [vmem:[%s3 + $0x50] sm:$0xf] %v240
  %305 = vst [vmem:[%s3 + $0x54] sm:$0xf] %v241
  %306 = vst [vmem:[%s3 + $0x58] sm:$0xf] %v242
  %307 = vst [vmem:[%s3 + $0x5c] sm:$0xf] %v243
  %308 = vst [vmem:[%s3 + $0x60] sm:$0xf] %v244
  %309 = vst [vmem:[%s3 + $0x64] sm:$0xf] %v245
  %310 = vst [vmem:[%s3 + $0x68] sm:$0xf] %v246
  %311 = vst [vmem:[%s3 + $0x6c] sm:$0xf] %v247
  %312 = vst [vmem:[%s3 + $0x70] sm:$0xf] %v248
  %313 = vst [vmem:[%s3 + $0x74] sm:$0xf] %v249
  %314 = vst [vmem:[%s3 + $0x78] sm:$0xf] %v250
  %315 = vst [vmem:[%s3 + $0x7c] sm:$0xf] %v251
  // Predicated region
  $region14: #{generator_forward.16} parent=0 // pred_check
    _
  $region15: #{generator_forward.16} parent=0 // pred_check_branch
    %317 = sbr.rel (0) target = $region17
  $region16: #{generator_forward.16} parent=0 // pred_region
    _
  $region17: #{generator_forward.16} parent=0 // pred_fallthru
    _
  // Predicated region
  $region18: #{generator_forward.16} parent=0 // pred_check
    _
  $region19: #{generator_forward.16} parent=0 // pred_check_branch
    %319 = sbr.rel (0) target = $region21
  $region20: #{generator_forward.16} parent=0 // pred_region
    _
  $region21: #{generator_forward.16} parent=0 // pred_fallthru
    _

// kernel: generator_forward.15
$region0: #{generator_forward.15}
  #allocation0 [shape = 'u32[]', space=smem, size = 0x4, offset = 0x4, fixed_abs, tag = 'smem constant byte address 0x4 - core index']
  #allocation1 [shape = 'u32[144,128]{1,0:T(1,128)}', space=vmem, size = 0x12000, scoped, tag = 'internal scratch']
  %s0 = inlined_call_operand.vmem [shape: bf16[4,512,128], index: 0, kind: input, shape index: {}]
  %s1 = inlined_call_operand.vmem [shape: bf16[4,128,16], index: 1, kind: input, shape index: {}]
  %s2 = inlined_call_operand.vmem [shape: f32[4,512,16], index: 2, kind: output, shape index: {0}]
  %s3 = inlined_call_operand.vmem [shape: f32[4,1,16], index: 3, kind: output, shape index: {1}]
  %s4 = inlined_call_operand.vmem [shape: f32[4,1,16], index: 4, kind: output, shape index: {2}]
  %5 = xla_tuple %s2, %s3, %s4
  %s6 = sld [smem:[#allocation0]]
  $region61: #{generator_forward.15} parent=0
    _
  %s8 = ssub.s32 1, %s6
  %s9 = scalar_select 0, %s8, %s6
  loop: start=0, step=1, limit=6
  $region2: #{generator_forward.15} parent=0 // loop_pre_header
    _
  $region3: #{generator_forward.15} parent=0 // loop_header
    %s11 = sphi 0, %s15
    %p12 = scmp.ge.s32.totalorder %s11, 6
    %s18 = sphi 0, %s30
    %s19 = sphi 0, %s26
    %s20 = sphi 0, %s18
    %s21 = sphi 0, %s19
    %s22 = sphi 0, %s20
    %s23 = sphi 0, %s21
    %s35 = sphi 0, %s37
    %s38 = sphi 0, %s35
    %s39 = sphi 0, %s38
    %s55 = sphi 0, %s39
    %s61 = sphi 0, %s63
    %s64 = sphi 0, %s61
    %s65 = sphi 0, %s64
    %s81 = sphi 0, %s65
    %s89 = sphi 0, %s91
    %s92 = sphi 0, %s89
    %s93 = sphi 0, %s92
    %s109 = sphi 0, %s93
    %s115 = sphi 0, %s117
    %s118 = sphi 0, %s115
    %s119 = sphi 0, %s118
    %s135 = sphi 0, %s119
    %s141 = sphi 0, %s143
    %s144 = sphi 0, %s141
    %s145 = sphi 0, %s144
    %s161 = sphi 0, %s145
  $region4: #{generator_forward.15} parent=0 // loop_header_branch
    %14 = sbr.rel (%p12) target = $region8
  $region5: #{generator_forward.15} parent=0 // loop_body
    %s16 = ssub.s32 %s11, 1
    %s17 = ssub.s32 %s11, 2
    %s24 = sadd.s32 1, %s19
    %p25 = scmp.ge.s32.totalorder %s24, 1
    %s26 = scalar_select %p25, 0, %s24
    %s27 = sadd.s32 1, %s18
    %s28 = scalar_select %p25, %s27, %s18
    %p29 = scmp.ge.s32.totalorder %s28, 4
    %s30 = scalar_select %p29, 0, %s28
    %s31 = ssub.s32 %s18, %s30
    %s32 = ssub.s32 %s19, %s26
    %s33 = sor.u32 %s31, %s32
    %p34 = scmp.eq.s32.totalorder %s33, 0
    %s36 = sadd.s32 %s35, 1
    %s37 = scalar_select %p34, %s35, %s36
    %p40 = pneg %p34
    %p41 = scmp.eq.s32.totalorder %s11, 3
    %p42 = por %p40, %p41
    %p43 = scmp.ne.s32.totalorder %s35, %s38
    %p44 = scmp.eq.s32.totalorder %s11, 0
    %p45 = por %p43, %p44
    %p46 = scmp.ne.s32.totalorder %s35, %s38
    %p47 = scmp.eq.s32.totalorder %s16, 3
    %p48 = por %p46, %p47
    %p49 = scmp.ne.s32.totalorder %s38, %s39
    %p50 = scmp.eq.s32.totalorder %s16, 0
    %p51 = por %p49, %p50
    %p52 = scmp.ne.s32.totalorder %s38, %s39
    %p53 = scmp.eq.s32.totalorder %s17, 3
    %p54 = por %p52, %p53
    %p56 = scmp.ne.s32.totalorder %s39, %s55
    %p57 = scmp.eq.s32.totalorder %s17, 0
    %p58 = por %p56, %p57
    %s59 = ssub.s32 %s18, %s30
    %p60 = scmp.eq.s32.totalorder %s59, 0
    %s62 = sadd.s32 %s61, 1
    %s63 = scalar_select %p60, %s61, %s62
    %p66 = pneg %p60
    %p67 = scmp.eq.s32.totalorder %s11, 3
    %p68 = por %p66, %p67
    %p69 = scmp.ne.s32.totalorder %s61, %s64
    %p70 = scmp.eq.s32.totalorder %s11, 0
    %p71 = por %p69, %p70
    %p72 = scmp.ne.s32.totalorder %s61, %s64
    %p73 = scmp.eq.s32.totalorder %s16, 3
    %p74 = por %p72, %p73
    %p75 = scmp.ne.s32.totalorder %s64, %s65
    %p76 = scmp.eq.s32.totalorder %s16, 0
    %p77 = por %p75, %p76
    %p78 = scmp.ne.s32.totalorder %s64, %s65
    %p79 = scmp.eq.s32.totalorder %s17, 3
    %p80 = por %p78, %p79
    %p82 = scmp.ne.s32.totalorder %s65, %s81
    %p83 = scmp.eq.s32.totalorder %s17, 0
    %p84 = por %p82, %p83
    %s85 = ssub.s32 %s18, %s30
    %s86 = ssub.s32 %s19, %s26
    %s87 = sor.u32 %s85, %s86
    %p88 = scmp.eq.s32.totalorder %s87, 0
    %s90 = sadd.s32 %s89, 1
    %s91 = scalar_select %p88, %s89, %s90
    %p94 = pneg %p88
    %p95 = scmp.eq.s32.totalorder %s11, 3
    %p96 = por %p94, %p95
    %p97 = scmp.ne.s32.totalorder %s89, %s92
    %p98 = scmp.eq.s32.totalorder %s11, 0
    %p99 = por %p97, %p98
    %p100 = scmp.ne.s32.totalorder %s89, %s92
    %p101 = scmp.eq.s32.totalorder %s16, 3
    %p102 = por %p100, %p101
    %p103 = scmp.ne.s32.totalorder %s92, %s93
    %p104 = scmp.eq.s32.totalorder %s16, 0
    %p105 = por %p103, %p104
    %p106 = scmp.ne.s32.totalorder %s92, %s93
    %p107 = scmp.eq.s32.totalorder %s17, 3
    %p108 = por %p106, %p107
    %p110 = scmp.ne.s32.totalorder %s93, %s109
    %p111 = scmp.eq.s32.totalorder %s17, 0
    %p112 = por %p110, %p111
    %s113 = ssub.s32 %s18, %s30
    %p114 = scmp.eq.s32.totalorder %s113, 0
    %s116 = sadd.s32 %s115, 1
    %s117 = scalar_select %p114, %s115, %s116
    %p120 = pneg %p114
    %p121 = scmp.eq.s32.totalorder %s11, 3
    %p122 = por %p120, %p121
    %p123 = scmp.ne.s32.totalorder %s115, %s118
    %p124 = scmp.eq.s32.totalorder %s11, 0
    %p125 = por %p123, %p124
    %p126 = scmp.ne.s32.totalorder %s115, %s118
    %p127 = scmp.eq.s32.totalorder %s16, 3
    %p128 = por %p126, %p127
    %p129 = scmp.ne.s32.totalorder %s118, %s119
    %p130 = scmp.eq.s32.totalorder %s16, 0
    %p131 = por %p129, %p130
    %p132 = scmp.ne.s32.totalorder %s118, %s119
    %p133 = scmp.eq.s32.totalorder %s17, 3
    %p134 = por %p132, %p133
    %p136 = scmp.ne.s32.totalorder %s119, %s135
    %p137 = scmp.eq.s32.totalorder %s17, 0
    %p138 = por %p136, %p137
    %s139 = ssub.s32 %s18, %s30
    %p140 = scmp.eq.s32.totalorder %s139, 0
    %s142 = sadd.s32 %s141, 1
    %s143 = scalar_select %p140, %s141, %s142
    %p146 = pneg %p140
    %p147 = scmp.eq.s32.totalorder %s11, 3
    %p148 = por %p146, %p147
    %p149 = scmp.ne.s32.totalorder %s141, %s144
    %p150 = scmp.eq.s32.totalorder %s11, 0
    %p151 = por %p149, %p150
    %p152 = scmp.ne.s32.totalorder %s141, %s144
    %p153 = scmp.eq.s32.totalorder %s16, 3
    %p154 = por %p152, %p153
    %p155 = scmp.ne.s32.totalorder %s144, %s145
    %p156 = scmp.eq.s32.totalorder %s16, 0
    %p157 = por %p155, %p156
    %p158 = scmp.ne.s32.totalorder %s144, %s145
    %p159 = scmp.eq.s32.totalorder %s17, 3
    %p160 = por %p158, %p159
    %p162 = scmp.ne.s32.totalorder %s145, %s161
    %p163 = scmp.eq.s32.totalorder %s17, 0
    %p164 = por %p162, %p163
    %p165 = scmp.le.s32.totalorder 1, %s11
    %p166 = scmp.lt.s32.totalorder %s11, 5
    %p167 = pnand %p165, %p166
    %p168 = pneg %p167
    // Predicated region
    $region9: #{generator_forward.15} parent=5 // pred_check
      _
    $region10: #{generator_forward.15} parent=5 // pred_check_branch
      %170 = sbr.rel (%p167) target = $region12
    $region11: #{generator_forward.15} parent=5 // pred_region
      %s171 = ssub.s32 %s11, 1
    $region12: #{generator_forward.15} parent=5 // pred_fallthru
      _
    %p172 = scmp.lt.s32.totalorder %s11, 4
    // Predicated region
    $region13: #{generator_forward.15} parent=5 // pred_check
      %p173 = pneg %p172
    $region14: #{generator_forward.15} parent=5 // pred_check_branch
      %175 = sbr.rel (%p173) target = $region16
    $region15: #{generator_forward.15} parent=5 // pred_region
      // Predicated region
      $region17: #{generator_forward.15} parent=15 // pred_check
        %p176 = pneg %p45
      $region18: #{generator_forward.15} parent=15 // pred_check_branch
        %178 = sbr.rel (%p176) target = $region20
      $region19: #{generator_forward.15} parent=15 // pred_region
        %s179 = smul.u32 64, %s19
        %p180 = scmp.lt.s32.totalorder %s18, 3
        %s181 = scalar_select %p180, %s18, 3
        %p182 = scmp.lt.s32.totalorder %s179, 63
        %s183 = scalar_select %p182, %s179, 63
        %s184 = smul.addr %s181, 64
        %s185 = sadd.s32 %s183, %s184
        %s186 = smul.addr %s185, 4
        %s187 = scalar_lea.vmem %s0, %s186
        %s188 = smul.u32 64, %s19
      $region20: #{generator_forward.15} parent=15 // pred_fallthru
        _
      // Predicated region
      $region21: #{generator_forward.15} parent=15 // pred_check
        %p189 = pneg %p71
      $region22: #{generator_forward.15} parent=15 // pred_check_branch
        %191 = sbr.rel (%p189) target = $region24
      $region23: #{generator_forward.15} parent=15 // pred_region
        %p192 = scmp.lt.s32.totalorder %s18, 3
        %s193 = scalar_select %p192, %s18, 3
        %s194 = smul.addr %s193, 16
        %s195 = smul.addr %s194, 4
        %s196 = scalar_lea.vmem %s1, %s195
      $region24: #{generator_forward.15} parent=15 // pred_fallthru
        _
    $region16: #{generator_forward.15} parent=5 // pred_fallthru
      _
    %p197 = scmp.le.s32.totalorder 1, %s11
    %p198 = scmp.lt.s32.totalorder %s11, 5
    %p199 = pnand %p197, %p198
    %p200 = pneg %p199
    // Predicated region
    $region25: #{generator_forward.15} parent=5 // pred_check
      _
    $region26: #{generator_forward.15} parent=5 // pred_check_branch
      %202 = sbr.rel (%p199) target = $region28
    $region27: #{generator_forward.15} parent=5 // pred_region
      %s203 = ssub.s32 %s11, 1
      %s204 = smul.u32 64, %s21
      %p205 = scmp.lt.s32.totalorder %s20, 3
      %s206 = scalar_select %p205, %s20, 3
      %p207 = scmp.lt.s32.totalorder %s204, 63
      %s208 = scalar_select %p207, %s204, 63
      %s209 = smul.addr %s206, 64
      %s210 = sadd.s32 %s208, %s209
      %s211 = smul.addr %s210, 4
      %s212 = scalar_lea.vmem %s0, %s211
      %p213 = pneg %p51
      %p214 = pneg %p48
      %p215 = scmp.lt.s32.totalorder %s20, 3
      %s216 = scalar_select %p215, %s20, 3
      %s217 = smul.addr %s216, 16
      %s218 = smul.addr %s217, 4
      %s219 = scalar_lea.vmem %s1, %s218
      %p220 = pneg %p77
      %p221 = pneg %p74
      %p222 = pneg %p105
      %p223 = pneg %p102
      %s224 = smul.u32 64, %s21
      %p225 = scmp.lt.s32.totalorder %s20, 3
      %s226 = scalar_select %p225, %s20, 3
      %p227 = scmp.lt.s32.totalorder %s224, 63
      %s228 = scalar_select %p227, %s224, 63
      %s229 = smul.addr %s226, 64
      %s230 = sadd.s32 %s228, %s229
      %s231 = smul.addr %s230, 8
      %s232 = scalar_lea.vmem %s2, %s231
      %p233 = pneg %p131
      %p234 = pneg %p128
      %p235 = scmp.lt.s32.totalorder %s20, 3
      %s236 = scalar_select %p235, %s20, 3
      %s237 = scalar_lea.vmem %s3, %s236
      %p238 = pneg %p157
      %p239 = pneg %p154
      %p240 = scmp.lt.s32.totalorder %s20, 3
      %s241 = scalar_select %p240, %s20, 3
      %s242 = scalar_lea.vmem %s4, %s241
      %s243 = smul.u32 64, %s21
      %p244 = scmp.lt.s32.totalorder %s20, 3
      %s245 = scalar_select %p244, %s20, 3
      %p246 = scmp.lt.s32.totalorder %s243, 63
      %s247 = scalar_select %p246, %s243, 63
      %s248 = smul.addr %s245, 64
      %s249 = sadd.s32 %s247, %s248
      %s250 = smul.addr %s249, 4
      %s251 = scalar_lea.vmem %s0, %s250
      %s252 = smul.u32 64, %s21
      %p253 = scmp.lt.s32.totalorder %s20, 3
      %s254 = scalar_select %p253, %s20, 3
      %s255 = smul.addr %s254, 16
      %s256 = smul.addr %s255, 4
      %s257 = scalar_lea.vmem %s1, %s256
      %s258 = smul.u32 64, %s21
      %p259 = scmp.lt.s32.totalorder %s20, 3
      %s260 = scalar_select %p259, %s20, 3
      %p261 = scmp.lt.s32.totalorder %s258, 63
      %s262 = scalar_select %p261, %s258, 63
      %s263 = smul.addr %s260, 64
      %s264 = sadd.s32 %s262, %s263
      %s265 = smul.addr %s264, 8
      %s266 = scalar_lea.vmem %s2, %s265
      %s267 = smul.u32 64, %s21
      %p268 = scmp.lt.s32.totalorder %s20, 3
      %s269 = scalar_select %p268, %s20, 3
      %s270 = scalar_lea.vmem %s3, %s269
      %p271 = scmp.lt.s32.totalorder %s20, 3
      %s272 = scalar_select %p271, %s20, 3
      %s273 = scalar_lea.vmem %s4, %s272
      %p275 = scmp.eq.s32.totalorder %s21, 0
      // Predicated region
      $region29: #{generator_forward.15} parent=27 // pred_check
        %p276 = pneg %p275
      $region30: #{generator_forward.15} parent=27 // pred_check_branch
        %278 = sbr.rel (%p276) target = $region32
      $region31: #{generator_forward.15} parent=27 // pred_region
        %vm279 = vcmask 122880
        %280 = vst.msk [vmem:[%s270] sm:$0x1] %vm279, 0.0
        %281 = vst.msk [vmem:[%s273] sm:$0x1] %vm279, 0.0
      $region32: #{generator_forward.15} parent=27 // pred_fallthru
        _
      %v282 = vld [vmem:[%s251] sm:$0xf]
      %v283 = vld [vmem:[%s251 + $0x4] sm:$0xf]
      %v284 = vld [vmem:[%s251 + $0x8] sm:$0xf]
      %v285 = vld [vmem:[%s251 + $0xc] sm:$0xf]
      %v286 = vld [vmem:[%s251 + $0x10] sm:$0xf]
      %v287 = vld [vmem:[%s251 + $0x14] sm:$0xf]
      %v288 = vld [vmem:[%s251 + $0x18] sm:$0xf]
      %v289 = vld [vmem:[%s251 + $0x1c] sm:$0xf]
      %v290 = vld [vmem:[%s251 + $0x20] sm:$0xf]
      %v291 = vld [vmem:[%s251 + $0x24] sm:$0xf]
      %v292 = vld [vmem:[%s251 + $0x28] sm:$0xf]
      %v293 = vld [vmem:[%s251 + $0x2c] sm:$0xf]
      %v294 = vld [vmem:[%s251 + $0x30] sm:$0xf]
      %v295 = vld [vmem:[%s251 + $0x34] sm:$0xf]
      %v296 = vld [vmem:[%s251 + $0x38] sm:$0xf]
      %v297 = vld [vmem:[%s251 + $0x3c] sm:$0xf]
      %v298 = vld [vmem:[%s251 + $0x40] sm:$0xf]
      %v299 = vld [vmem:[%s251 + $0x44] sm:$0xf]
      %v300 = vld [vmem:[%s251 + $0x48] sm:$0xf]
      %v301 = vld [vmem:[%s251 + $0x4c] sm:$0xf]
      %v302 = vld [vmem:[%s251 + $0x50] sm:$0xf]
      %v303 = vld [vmem:[%s251 + $0x54] sm:$0xf]
      %v304 = vld [vmem:[%s251 + $0x58] sm:$0xf]
      %v305 = vld [vmem:[%s251 + $0x5c] sm:$0xf]
      %v306 = vld [vmem:[%s251 + $0x60] sm:$0xf]
      %v307 = vld [vmem:[%s251 + $0x64] sm:$0xf]
      %v308 = vld [vmem:[%s251 + $0x68] sm:$0xf]
      %v309 = vld [vmem:[%s251 + $0x6c] sm:$0xf]
      %v310 = vld [vmem:[%s251 + $0x70] sm:$0xf]
      %v311 = vld [vmem:[%s251 + $0x74] sm:$0xf]
      %v312 = vld [vmem:[%s251 + $0x78] sm:$0xf]
      %v313 = vld [vmem:[%s251 + $0x7c] sm:$0xf]
      %v314 = vld [vmem:[%s251 + $0x80] sm:$0xf]
      %v315 = vld [vmem:[%s251 + $0x84] sm:$0xf]
      %v316 = vld [vmem:[%s251 + $0x88] sm:$0xf]
      %v317 = vld [vmem:[%s251 + $0x8c] sm:$0xf]
      %v318 = vld [vmem:[%s251 + $0x90] sm:$0xf]
      %v319 = vld [vmem:[%s251 + $0x94] sm:$0xf]
      %v320 = vld [vmem:[%s251 + $0x98] sm:$0xf]
      %v321 = vld [vmem:[%s251 + $0x9c] sm:$0xf]
      %v322 = vld [vmem:[%s251 + $0xa0] sm:$0xf]
      %v323 = vld [vmem:[%s251 + $0xa4] sm:$0xf]
      %v324 = vld [vmem:[%s251 + $0xa8] sm:$0xf]
      %v325 = vld [vmem:[%s251 + $0xac] sm:$0xf]
      %v326 = vld [vmem:[%s251 + $0xb0] sm:$0xf]
      %v327 = vld [vmem:[%s251 + $0xb4] sm:$0xf]
      %v328 = vld [vmem:[%s251 + $0xb8] sm:$0xf]
      %v329 = vld [vmem:[%s251 + $0xbc] sm:$0xf]
      %v330 = vld [vmem:[%s251 + $0xc0] sm:$0xf]
      %v331 = vld [vmem:[%s251 + $0xc4] sm:$0xf]
      %v332 = vld [vmem:[%s251 + $0xc8] sm:$0xf]
      %v333 = vld [vmem:[%s251 + $0xcc] sm:$0xf]
      %v334 = vld [vmem:[%s251 + $0xd0] sm:$0xf]
      %v335 = vld [vmem:[%s251 + $0xd4] sm:$0xf]
      %v336 = vld [vmem:[%s251 + $0xd8] sm:$0xf]
      %v337 = vld [vmem:[%s251 + $0xdc] sm:$0xf]
      %v338 = vld [vmem:[%s251 + $0xe0] sm:$0xf]
      %v339 = vld [vmem:[%s251 + $0xe4] sm:$0xf]
      %v340 = vld [vmem:[%s251 + $0xe8] sm:$0xf]
      %v341 = vld [vmem:[%s251 + $0xec] sm:$0xf]
      %v342 = vld [vmem:[%s251 + $0xf0] sm:$0xf]
      %v343 = vld [vmem:[%s251 + $0xf4] sm:$0xf]
      %v344 = vld [vmem:[%s251 + $0xf8] sm:$0xf]
      %v345 = vld [vmem:[%s251 + $0xfc] sm:$0xf]
      %v346 = vld [vmem:[%s257] sm:$0xf]
      %v347 = vld [vmem:[%s257 + $0x4] sm:$0xf]
      %v348 = vld [vmem:[%s257 + $0x8] sm:$0xf]
      %v349 = vld [vmem:[%s257 + $0xc] sm:$0xf]
      %v350 = vld [vmem:[%s257 + $0x10] sm:$0xf]
      %v351 = vld [vmem:[%s257 + $0x14] sm:$0xf]
      %v352 = vld [vmem:[%s257 + $0x18] sm:$0xf]
      %v353 = vld [vmem:[%s257 + $0x1c] sm:$0xf]
      %v354 = vld [vmem:[%s257 + $0x20] sm:$0xf]
      %v355 = vld [vmem:[%s257 + $0x24] sm:$0xf]
      %v356 = vld [vmem:[%s257 + $0x28] sm:$0xf]
      %v357 = vld [vmem:[%s257 + $0x2c] sm:$0xf]
      %v358 = vld [vmem:[%s257 + $0x30] sm:$0xf]
      %v359 = vld [vmem:[%s257 + $0x34] sm:$0xf]
      %v360 = vld [vmem:[%s257 + $0x38] sm:$0xf]
      %v361 = vld [vmem:[%s257 + $0x3c] sm:$0xf]
      %v426 = vunpack.c.l.b16 %v282
      %v427 = vunpack.c.l.b16 %v283
      %v428 = vunpack.c.l.b16 %v284
      %v429 = vunpack.c.l.b16 %v285
      %v430 = vunpack.c.l.b16 %v286
      %v431 = vunpack.c.l.b16 %v287
      %v432 = vunpack.c.l.b16 %v288
      %v433 = vunpack.c.l.b16 %v289
      %v434 = vunpack.c.l.b16 %v290
      %v435 = vunpack.c.l.b16 %v291
      %v436 = vunpack.c.l.b16 %v292
      %v437 = vunpack.c.l.b16 %v293
      %v438 = vunpack.c.l.b16 %v294
      %v439 = vunpack.c.l.b16 %v295
      %v440 = vunpack.c.l.b16 %v296
      %v441 = vunpack.c.l.b16 %v297
      %v442 = vunpack.c.l.b16 %v298
      %v443 = vunpack.c.l.b16 %v299
      %v444 = vunpack.c.l.b16 %v300
      %v445 = vunpack.c.l.b16 %v301
      %v446 = vunpack.c.l.b16 %v302
      %v447 = vunpack.c.l.b16 %v303
      %v448 = vunpack.c.l.b16 %v304
      %v449 = vunpack.c.l.b16 %v305
      %v450 = vunpack.c.l.b16 %v306
      %v451 = vunpack.c.l.b16 %v307
      %v452 = vunpack.c.l.b16 %v308
      %v453 = vunpack.c.l.b16 %v309
      %v454 = vunpack.c.l.b16 %v310
      %v455 = vunpack.c.l.b16 %v311
      %v456 = vunpack.c.l.b16 %v312
      %v457 = vunpack.c.l.b16 %v313
      %v458 = vunpack.c.l.b16 %v314
      %v459 = vunpack.c.l.b16 %v315
      %v460 = vunpack.c.l.b16 %v316
      %v461 = vunpack.c.l.b16 %v317
      %v462 = vunpack.c.l.b16 %v318
      %v463 = vunpack.c.l.b16 %v319
      %v464 = vunpack.c.l.b16 %v320
      %v465 = vunpack.c.l.b16 %v321
      %v466 = vunpack.c.l.b16 %v322
      %v467 = vunpack.c.l.b16 %v323
      %v468 = vunpack.c.l.b16 %v324
      %v469 = vunpack.c.l.b16 %v325
      %v470 = vunpack.c.l.b16 %v326
      %v471 = vunpack.c.l.b16 %v327
      %v472 = vunpack.c.l.b16 %v328
      %v473 = vunpack.c.l.b16 %v329
      %v474 = vunpack.c.l.b16 %v330
      %v475 = vunpack.c.l.b16 %v331
      %v476 = vunpack.c.l.b16 %v332
      %v477 = vunpack.c.l.b16 %v333
      %v478 = vunpack.c.l.b16 %v334
      %v479 = vunpack.c.l.b16 %v335
      %v480 = vunpack.c.l.b16 %v336
      %v481 = vunpack.c.l.b16 %v337
      %v482 = vunpack.c.l.b16 %v338
      %v483 = vunpack.c.l.b16 %v339
      %v484 = vunpack.c.l.b16 %v340
      %v485 = vunpack.c.l.b16 %v341
      %v486 = vunpack.c.l.b16 %v342
      %v487 = vunpack.c.l.b16 %v343
      %v488 = vunpack.c.l.b16 %v344
      %v489 = vunpack.c.l.b16 %v345
      %v490 = vpack.c.b16 %v427, %v426
      %v491 = vpack.c.b16 %v429, %v428
      %v492 = vpack.c.b16 %v431, %v430
      %v493 = vpack.c.b16 %v433, %v432
      %v494 = vpack.c.b16 %v435, %v434
      %v495 = vpack.c.b16 %v437, %v436
      %v496 = vpack.c.b16 %v439, %v438
      %v497 = vpack.c.b16 %v441, %v440
      %v498 = vpack.c.b16 %v443, %v442
      %v499 = vpack.c.b16 %v445, %v444
      %v500 = vpack.c.b16 %v447, %v446
      %v501 = vpack.c.b16 %v449, %v448
      %v502 = vpack.c.b16 %v451, %v450
      %v503 = vpack.c.b16 %v453, %v452
      %v504 = vpack.c.b16 %v455, %v454
      %v505 = vpack.c.b16 %v457, %v456
      %v506 = vpack.c.b16 %v459, %v458
      %v507 = vpack.c.b16 %v461, %v460
      %v508 = vpack.c.b16 %v463, %v462
      %v509 = vpack.c.b16 %v465, %v464
      %v510 = vpack.c.b16 %v467, %v466
      %v511 = vpack.c.b16 %v469, %v468
      %v512 = vpack.c.b16 %v471, %v470
      %v513 = vpack.c.b16 %v473, %v472
      %v514 = vpack.c.b16 %v475, %v474
      %v515 = vpack.c.b16 %v477, %v476
      %v516 = vpack.c.b16 %v479, %v478
      %v517 = vpack.c.b16 %v481, %v480
      %v518 = vpack.c.b16 %v483, %v482
      %v519 = vpack.c.b16 %v485, %v484
      %v520 = vpack.c.b16 %v487, %v486
      %v521 = vpack.c.b16 %v489, %v488
      %v570 = vunpack.c.l.b16 %v346
      %v571 = vunpack.c.l.b16 %v347
      %v572 = vunpack.c.l.b16 %v348
      %v573 = vunpack.c.l.b16 %v349
      %v574 = vunpack.c.l.b16 %v350
      %v575 = vunpack.c.l.b16 %v351
      %v576 = vunpack.c.l.b16 %v352
      %v577 = vunpack.c.l.b16 %v353
      %v578 = vunpack.c.l.b16 %v354
      %v579 = vunpack.c.l.b16 %v355
      %v580 = vunpack.c.l.b16 %v356
      %v581 = vunpack.c.l.b16 %v357
      %v582 = vunpack.c.l.b16 %v358
      %v583 = vunpack.c.l.b16 %v359
      %v584 = vunpack.c.l.b16 %v360
      %v585 = vunpack.c.l.b16 %v361
      %v586 = vpack.c.b16 %v571, %v570
      %v587 = vpack.c.b16 %v573, %v572
      %v588 = vpack.c.b16 %v575, %v574
      %v589 = vpack.c.b16 %v577, %v576
      %v590 = vpack.c.b16 %v579, %v578
      %v591 = vpack.c.b16 %v581, %v580
      %v592 = vpack.c.b16 %v583, %v582
      %v593 = vpack.c.b16 %v585, %v584
      %602 = vmatprep.subr.bf16.mxu0 0
      %603 = vmatpush1.bf16.msra.mxu0 %v586
      %604 = vmatprep.subr.bf16.mxu0 0
      %605 = vmatpush1.bf16.msra.mxu0 %v587
      %606 = vmatprep.subr.bf16.mxu0 0
      %607 = vmatpush1.bf16.msra.mxu0 %v588
      %608 = vmatprep.subr.bf16.mxu0 0
      %609 = vmatpush1.bf16.msra.mxu0 %v589
      %610 = vmatprep.subr.bf16.mxu0 0
      %611 = vmatpush1.bf16.msra.mxu0 %v590
      %612 = vmatprep.subr.bf16.mxu0 0
      %613 = vmatpush1.bf16.msra.mxu0 %v591
      %614 = vmatprep.subr.bf16.mxu0 0
      %615 = vmatpush1.bf16.msra.mxu0 %v592
      %616 = vmatprep.subr.bf16.mxu0 0
      %617 = vmatpush1.bf16.msra.mxu0 %v593
      %618 = vmatprep.subr.bf16.mxu0 0
      %619 = vmatpush1.bf16.msra.mxu0 0
      %620 = vmatprep.subr.bf16.mxu0 0
      %621 = vmatpush1.bf16.msra.mxu0 0
      %622 = vmatprep.subr.bf16.mxu0 0
      %623 = vmatpush1.bf16.msra.mxu0 0
      %624 = vmatprep.subr.bf16.mxu0 0
      %625 = vmatpush1.bf16.msra.mxu0 0
      %626 = vmatprep.subr.bf16.mxu0 0
      %627 = vmatpush1.bf16.msra.mxu0 0
      %628 = vmatprep.subr.bf16.mxu0 0
      %629 = vmatpush1.bf16.msra.mxu0 0
      %630 = vmatprep.subr.bf16.mxu0 0
      %631 = vmatpush1.bf16.msra.mxu0 0
      %632 = vmatprep.subr.bf16.mxu0 0
      %633 = vmatpush1.bf16.msra.mxu0 0
      %634 = vmatprep.mubr.bf16.mxu0 0
      %635 = vmatmul.mubr.bf16.gmra.mrb[0].mxu0 %v490
      %v636 = vpop.f32.mrb[0].mxu0
      %v637 = vadd.f32 0.0, %v636
      %v638 = vpop.f32.mrb[0].mxu0
      %v639 = vpop.f32.mrb[0].mxu0
      %v640 = vadd.f32 0.0, %v639
      %v641 = vpop.f32.mrb[0].mxu0
      %642 = vmatprep.mubr.bf16.mxu0 0
      %643 = vmatmul.mubr.bf16.gmra.mrb[0].mxu0 %v491
      %v644 = vpop.f32.mrb[0].mxu0
      %v645 = vadd.f32 0.0, %v644
      %v646 = vpop.f32.mrb[0].mxu0
      %v647 = vpop.f32.mrb[0].mxu0
      %v648 = vadd.f32 0.0, %v647
      %v649 = vpop.f32.mrb[0].mxu0
      %650 = vmatprep.mubr.bf16.mxu0 0
      %651 = vmatmul.mubr.bf16.gmra.mrb[0].mxu0 %v492
      %v652 = vpop.f32.mrb[0].mxu0
      %v653 = vadd.f32 0.0, %v652
      %v654 = vpop.f32.mrb[0].mxu0
      %v655 = vpop.f32.mrb[0].mxu0
      %v656 = vadd.f32 0.0, %v655
      %v657 = vpop.f32.mrb[0].mxu0
      %658 = vmatprep.mubr.bf16.mxu0 0
      %659 = vmatmul.mubr.bf16.gmra.mrb[0].mxu0 %v493
      %v660 = vpop.f32.mrb[0].mxu0
      %v661 = vadd.f32 0.0, %v660
      %v662 = vpop.f32.mrb[0].mxu0
      %v663 = vpop.f32.mrb[0].mxu0
      %v664 = vadd.f32 0.0, %v663
      %v665 = vpop.f32.mrb[0].mxu0
      %666 = vmatprep.mubr.bf16.mxu0 0
      %667 = vmatmul.mubr.bf16.gmra.mrb[0].mxu0 %v494
      %v668 = vpop.f32.mrb[0].mxu0
      %v669 = vadd.f32 0.0, %v668
      %v670 = vpop.f32.mrb[0].mxu0
      %v671 = vpop.f32.mrb[0].mxu0
      %v672 = vadd.f32 0.0, %v671
      %v673 = vpop.f32.mrb[0].mxu0
      %674 = vmatprep.mubr.bf16.mxu0 0
      %675 = vmatmul.mubr.bf16.gmra.mrb[0].mxu0 %v495
      %v676 = vpop.f32.mrb[0].mxu0
      %v677 = vadd.f32 0.0, %v676
      %v678 = vpop.f32.mrb[0].mxu0
      %v679 = vpop.f32.mrb[0].mxu0
      %v680 = vadd.f32 0.0, %v679
      %v681 = vpop.f32.mrb[0].mxu0
      %682 = vmatprep.mubr.bf16.mxu0 0
      %683 = vmatmul.mubr.bf16.gmra.mrb[0].mxu0 %v496
      %v684 = vpop.f32.mrb[0].mxu0
      %v685 = vadd.f32 0.0, %v684
      %v686 = vpop.f32.mrb[0].mxu0
      %v687 = vpop.f32.mrb[0].mxu0
      %v688 = vadd.f32 0.0, %v687
      %v689 = vpop.f32.mrb[0].mxu0
      %690 = vmatprep.mubr.bf16.mxu0 0
      %691 = vmatmul.mubr.bf16.gmra.mrb[0].mxu0 %v497
      %v692 = vpop.f32.mrb[0].mxu0
      %v693 = vadd.f32 0.0, %v692
      %v694 = vpop.f32.mrb[0].mxu0
      %v695 = vpop.f32.mrb[0].mxu0
      %v696 = vadd.f32 0.0, %v695
      %v697 = vpop.f32.mrb[0].mxu0
      %698 = vmatprep.mubr.bf16.mxu0 0
      %699 = vmatmul.mubr.bf16.gmra.mrb[0].mxu0 %v498
      %v700 = vpop.f32.mrb[0].mxu0
      %v701 = vadd.f32 0.0, %v700
      %v702 = vpop.f32.mrb[0].mxu0
      %v703 = vpop.f32.mrb[0].mxu0
      %v704 = vadd.f32 0.0, %v703
      %v705 = vpop.f32.mrb[0].mxu0
      %706 = vmatprep.mubr.bf16.mxu0 0
      %707 = vmatmul.mubr.bf16.gmra.mrb[0].mxu0 %v499
      %v708 = vpop.f32.mrb[0].mxu0
      %v709 = vadd.f32 0.0, %v708
      %v710 = vpop.f32.mrb[0].mxu0
      %v711 = vpop.f32.mrb[0].mxu0
      %v712 = vadd.f32 0.0, %v711
      %v713 = vpop.f32.mrb[0].mxu0
      %714 = vmatprep.mubr.bf16.mxu0 0
      %715 = vmatmul.mubr.bf16.gmra.mrb[0].mxu0 %v500
      %v716 = vpop.f32.mrb[0].mxu0
      %v717 = vadd.f32 0.0, %v716
      %v718 = vpop.f32.mrb[0].mxu0
      %v719 = vpop.f32.mrb[0].mxu0
      %v720 = vadd.f32 0.0, %v719
      %v721 = vpop.f32.mrb[0].mxu0
      %722 = vmatprep.mubr.bf16.mxu0 0
      %723 = vmatmul.mubr.bf16.gmra.mrb[0].mxu0 %v501
      %v724 = vpop.f32.mrb[0].mxu0
      %v725 = vadd.f32 0.0, %v724
      %v726 = vpop.f32.mrb[0].mxu0
      %v727 = vpop.f32.mrb[0].mxu0
      %v728 = vadd.f32 0.0, %v727
      %v729 = vpop.f32.mrb[0].mxu0
      %730 = vmatprep.mubr.bf16.mxu0 0
      %731 = vmatmul.mubr.bf16.gmra.mrb[0].mxu0 %v502
      %v732 = vpop.f32.mrb[0].mxu0
      %v733 = vadd.f32 0.0, %v732
      %v734 = vpop.f32.mrb[0].mxu0
      %v735 = vpop.f32.mrb[0].mxu0
      %v736 = vadd.f32 0.0, %v735
      %v737 = vpop.f32.mrb[0].mxu0
      %738 = vmatprep.mubr.bf16.mxu0 0
      %739 = vmatmul.mubr.bf16.gmra.mrb[0].mxu0 %v503
      %v740 = vpop.f32.mrb[0].mxu0
      %v741 = vadd.f32 0.0, %v740
      %v742 = vpop.f32.mrb[0].mxu0
      %v743 = vpop.f32.mrb[0].mxu0
      %v744 = vadd.f32 0.0, %v743
      %v745 = vpop.f32.mrb[0].mxu0
      %746 = vmatprep.mubr.bf16.mxu0 0
      %747 = vmatmul.mubr.bf16.gmra.mrb[0].mxu0 %v504
      %v748 = vpop.f32.mrb[0].mxu0
      %v749 = vadd.f32 0.0, %v748
      %v750 = vpop.f32.mrb[0].mxu0
      %v751 = vpop.f32.mrb[0].mxu0
      %v752 = vadd.f32 0.0, %v751
      %v753 = vpop.f32.mrb[0].mxu0
      %754 = vmatprep.mubr.bf16.mxu0 0
      %755 = vmatmul.mubr.bf16.gmra.mrb[0].mxu0 %v505
      %v756 = vpop.f32.mrb[0].mxu0
      %v757 = vadd.f32 0.0, %v756
      %v758 = vpop.f32.mrb[0].mxu0
      %v759 = vpop.f32.mrb[0].mxu0
      %v760 = vadd.f32 0.0, %v759
      %v761 = vpop.f32.mrb[0].mxu0
      %762 = vmatprep.mubr.bf16.mxu0 0
      %763 = vmatmul.mubr.bf16.gmra.mrb[0].mxu0 %v506
      %v764 = vpop.f32.mrb[0].mxu0
      %v765 = vadd.f32 0.0, %v764
      %v766 = vpop.f32.mrb[0].mxu0
      %v767 = vpop.f32.mrb[0].mxu0
      %v768 = vadd.f32 0.0, %v767
      %v769 = vpop.f32.mrb[0].mxu0
      %770 = vmatprep.mubr.bf16.mxu0 0
      %771 = vmatmul.mubr.bf16.gmra.mrb[0].mxu0 %v507
      %v772 = vpop.f32.mrb[0].mxu0
      %v773 = vadd.f32 0.0, %v772
      %v774 = vpop.f32.mrb[0].mxu0
      %v775 = vpop.f32.mrb[0].mxu0
      %v776 = vadd.f32 0.0, %v775
      %v777 = vpop.f32.mrb[0].mxu0
      %778 = vmatprep.mubr.bf16.mxu0 0
      %779 = vmatmul.mubr.bf16.gmra.mrb[0].mxu0 %v508
      %v780 = vpop.f32.mrb[0].mxu0
      %v781 = vadd.f32 0.0, %v780
      %v782 = vpop.f32.mrb[0].mxu0
      %v783 = vpop.f32.mrb[0].mxu0
      %v784 = vadd.f32 0.0, %v783
      %v785 = vpop.f32.mrb[0].mxu0
      %786 = vmatprep.mubr.bf16.mxu0 0
      %787 = vmatmul.mubr.bf16.gmra.mrb[0].mxu0 %v509
      %v788 = vpop.f32.mrb[0].mxu0
      %v789 = vadd.f32 0.0, %v788
      %v790 = vpop.f32.mrb[0].mxu0
      %v791 = vpop.f32.mrb[0].mxu0
      %v792 = vadd.f32 0.0, %v791
      %v793 = vpop.f32.mrb[0].mxu0
      %794 = vmatprep.mubr.bf16.mxu0 0
      %795 = vmatmul.mubr.bf16.gmra.mrb[0].mxu0 %v510
      %v796 = vpop.f32.mrb[0].mxu0
      %v797 = vadd.f32 0.0, %v796
      %v798 = vpop.f32.mrb[0].mxu0
      %v799 = vpop.f32.mrb[0].mxu0
      %v800 = vadd.f32 0.0, %v799
      %v801 = vpop.f32.mrb[0].mxu0
      %802 = vmatprep.mubr.bf16.mxu0 0
      %803 = vmatmul.mubr.bf16.gmra.mrb[0].mxu0 %v511
      %v804 = vpop.f32.mrb[0].mxu0
      %v805 = vadd.f32 0.0, %v804
      %v806 = vpop.f32.mrb[0].mxu0
      %v807 = vpop.f32.mrb[0].mxu0
      %v808 = vadd.f32 0.0, %v807
      %v809 = vpop.f32.mrb[0].mxu0
      %810 = vmatprep.mubr.bf16.mxu0 0
      %811 = vmatmul.mubr.bf16.gmra.mrb[0].mxu0 %v512
      %v812 = vpop.f32.mrb[0].mxu0
      %v813 = vadd.f32 0.0, %v812
      %v814 = vpop.f32.mrb[0].mxu0
      %v815 = vpop.f32.mrb[0].mxu0
      %v816 = vadd.f32 0.0, %v815
      %v817 = vpop.f32.mrb[0].mxu0
      %818 = vmatprep.mubr.bf16.mxu0 0
      %819 = vmatmul.mubr.bf16.gmra.mrb[0].mxu0 %v513
      %v820 = vpop.f32.mrb[0].mxu0
      %v821 = vadd.f32 0.0, %v820
      %v822 = vpop.f32.mrb[0].mxu0
      %v823 = vpop.f32.mrb[0].mxu0
      %v824 = vadd.f32 0.0, %v823
      %v825 = vpop.f32.mrb[0].mxu0
      %826 = vmatprep.mubr.bf16.mxu0 0
      %827 = vmatmul.mubr.bf16.gmra.mrb[0].mxu0 %v514
      %v828 = vpop.f32.mrb[0].mxu0
      %v829 = vadd.f32 0.0, %v828
      %v830 = vpop.f32.mrb[0].mxu0
      %v831 = vpop.f32.mrb[0].mxu0
      %v832 = vadd.f32 0.0, %v831
      %v833 = vpop.f32.mrb[0].mxu0
      %834 = vmatprep.mubr.bf16.mxu0 0
      %835 = vmatmul.mubr.bf16.gmra.mrb[0].mxu0 %v515
      %v836 = vpop.f32.mrb[0].mxu0
      %v837 = vadd.f32 0.0, %v836
      %v838 = vpop.f32.mrb[0].mxu0
      %v839 = vpop.f32.mrb[0].mxu0
      %v840 = vadd.f32 0.0, %v839
      %v841 = vpop.f32.mrb[0].mxu0
      %842 = vmatprep.mubr.bf16.mxu0 0
      %843 = vmatmul.mubr.bf16.gmra.mrb[0].mxu0 %v516
      %v844 = vpop.f32.mrb[0].mxu0
      %v845 = vadd.f32 0.0, %v844
      %v846 = vpop.f32.mrb[0].mxu0
      %v847 = vpop.f32.mrb[0].mxu0
      %v848 = vadd.f32 0.0, %v847
      %v849 = vpop.f32.mrb[0].mxu0
      %850 = vmatprep.mubr.bf16.mxu0 0
      %851 = vmatmul.mubr.bf16.gmra.mrb[0].mxu0 %v517
      %v852 = vpop.f32.mrb[0].mxu0
      %v853 = vadd.f32 0.0, %v852
      %v854 = vpop.f32.mrb[0].mxu0
      %v855 = vpop.f32.mrb[0].mxu0
      %v856 = vadd.f32 0.0, %v855
      %v857 = vpop.f32.mrb[0].mxu0
      %858 = vmatprep.mubr.bf16.mxu0 0
      %859 = vmatmul.mubr.bf16.gmra.mrb[0].mxu0 %v518
      %v860 = vpop.f32.mrb[0].mxu0
      %v861 = vadd.f32 0.0, %v860
      %v862 = vpop.f32.mrb[0].mxu0
      %v863 = vpop.f32.mrb[0].mxu0
      %v864 = vadd.f32 0.0, %v863
      %v865 = vpop.f32.mrb[0].mxu0
      %866 = vmatprep.mubr.bf16.mxu0 0
      %867 = vmatmul.mubr.bf16.gmra.mrb[0].mxu0 %v519
      %v868 = vpop.f32.mrb[0].mxu0
      %v869 = vadd.f32 0.0, %v868
      %v870 = vpop.f32.mrb[0].mxu0
      %v871 = vpop.f32.mrb[0].mxu0
      %v872 = vadd.f32 0.0, %v871
      %v873 = vpop.f32.mrb[0].mxu0
      %874 = vmatprep.mubr.bf16.mxu0 0
      %875 = vmatmul.mubr.bf16.gmra.mrb[0].mxu0 %v520
      %v876 = vpop.f32.mrb[0].mxu0
      %v877 = vadd.f32 0.0, %v876
      %v878 = vpop.f32.mrb[0].mxu0
      %v879 = vpop.f32.mrb[0].mxu0
      %v880 = vadd.f32 0.0, %v879
      %v881 = vpop.f32.mrb[0].mxu0
      %882 = vmatprep.mubr.bf16.mxu0 0
      %883 = vmatmul.mubr.bf16.gmra.mrb[0].mxu0 %v521
      %v884 = vpop.f32.mrb[0].mxu0
      %v885 = vadd.f32 0.0, %v884
      %v886 = vpop.f32.mrb[0].mxu0
      %v887 = vpop.f32.mrb[0].mxu0
      %v888 = vadd.f32 0.0, %v887
      %v889 = vpop.f32.mrb[0].mxu0
      %890 = vdwg.mxu0
      %vm891 = vcmask 130048
      %892 = vst.msk [vmem:[%s266] sm:$0xff] %vm891, %v637
      %893 = vst.msk [vmem:[%s266 + $0x8] sm:$0xff] %vm891, %v640
      %894 = vst.msk [vmem:[%s266 + $0x10] sm:$0xff] %vm891, %v645
      %895 = vst.msk [vmem:[%s266 + $0x18] sm:$0xff] %vm891, %v648
      %896 = vst.msk [vmem:[%s266 + $0x20] sm:$0xff] %vm891, %v653
      %897 = vst.msk [vmem:[%s266 + $0x28] sm:$0xff] %vm891, %v656
      %898 = vst.msk [vmem:[%s266 + $0x30] sm:$0xff] %vm891, %v661
      %899 = vst.msk [vmem:[%s266 + $0x38] sm:$0xff] %vm891, %v664
      %900 = vst.msk [vmem:[%s266 + $0x40] sm:$0xff] %vm891, %v669
      %901 = vst.msk [vmem:[%s266 + $0x48] sm:$0xff] %vm891, %v672
      %902 = vst.msk [vmem:[%s266 + $0x50] sm:$0xff] %vm891, %v677
      %903 = vst.msk [vmem:[%s266 + $0x58] sm:$0xff] %vm891, %v680
      %904 = vst.msk [vmem:[%s266 + $0x60] sm:$0xff] %vm891, %v685
      %905 = vst.msk [vmem:[%s266 + $0x68] sm:$0xff] %vm891, %v688
      %906 = vst.msk [vmem:[%s266 + $0x70] sm:$0xff] %vm891, %v693
      %907 = vst.msk [vmem:[%s266 + $0x78] sm:$0xff] %vm891, %v696
      %908 = vst.msk [vmem:[%s266 + $0x80] sm:$0xff] %vm891, %v701
      %909 = vst.msk [vmem:[%s266 + $0x88] sm:$0xff] %vm891, %v704
      %910 = vst.msk [vmem:[%s266 + $0x90] sm:$0xff] %vm891, %v709
      %911 = vst.msk [vmem:[%s266 + $0x98] sm:$0xff] %vm891, %v712
      %912 = vst.msk [vmem:[%s266 + $0xa0] sm:$0xff] %vm891, %v717
      %913 = vst.msk [vmem:[%s266 + $0xa8] sm:$0xff] %vm891, %v720
      %914 = vst.msk [vmem:[%s266 + $0xb0] sm:$0xff] %vm891, %v725
      %915 = vst.msk [vmem:[%s266 + $0xb8] sm:$0xff] %vm891, %v728
      %916 = vst.msk [vmem:[%s266 + $0xc0] sm:$0xff] %vm891, %v733
      %917 = vst.msk [vmem:[%s266 + $0xc8] sm:$0xff] %vm891, %v736
      %918 = vst.msk [vmem:[%s266 + $0xd0] sm:$0xff] %vm891, %v741
      %919 = vst.msk [vmem:[%s266 + $0xd8] sm:$0xff] %vm891, %v744
      %920 = vst.msk [vmem:[%s266 + $0xe0] sm:$0xff] %vm891, %v749
      %921 = vst.msk [vmem:[%s266 + $0xe8] sm:$0xff] %vm891, %v752
      %922 = vst.msk [vmem:[%s266 + $0xf0] sm:$0xff] %vm891, %v757
      %923 = vst.msk [vmem:[%s266 + $0xf8] sm:$0xff] %vm891, %v760
      %924 = vst.msk [vmem:[%s266 + $0x100] sm:$0xff] %vm891, %v765
      %925 = vst.msk [vmem:[%s266 + $0x108] sm:$0xff] %vm891, %v768
      %926 = vst.msk [vmem:[%s266 + $0x110] sm:$0xff] %vm891, %v773
      %927 = vst.msk [vmem:[%s266 + $0x118] sm:$0xff] %vm891, %v776
      %928 = vst.msk [vmem:[%s266 + $0x120] sm:$0xff] %vm891, %v781
      %929 = vst.msk [vmem:[%s266 + $0x128] sm:$0xff] %vm891, %v784
      %930 = vst.msk [vmem:[%s266 + $0x130] sm:$0xff] %vm891, %v789
      %931 = vst.msk [vmem:[%s266 + $0x138] sm:$0xff] %vm891, %v792
      %932 = vst.msk [vmem:[%s266 + $0x140] sm:$0xff] %vm891, %v797
      %933 = vst.msk [vmem:[%s266 + $0x148] sm:$0xff] %vm891, %v800
      %934 = vst.msk [vmem:[%s266 + $0x150] sm:$0xff] %vm891, %v805
      %935 = vst.msk [vmem:[%s266 + $0x158] sm:$0xff] %vm891, %v808
      %936 = vst.msk [vmem:[%s266 + $0x160] sm:$0xff] %vm891, %v813
      %937 = vst.msk [vmem:[%s266 + $0x168] sm:$0xff] %vm891, %v816
      %938 = vst.msk [vmem:[%s266 + $0x170] sm:$0xff] %vm891, %v821
      %939 = vst.msk [vmem:[%s266 + $0x178] sm:$0xff] %vm891, %v824
      %940 = vst.msk [vmem:[%s266 + $0x180] sm:$0xff] %vm891, %v829
      %941 = vst.msk [vmem:[%s266 + $0x188] sm:$0xff] %vm891, %v832
      %942 = vst.msk [vmem:[%s266 + $0x190] sm:$0xff] %vm891, %v837
      %943 = vst.msk [vmem:[%s266 + $0x198] sm:$0xff] %vm891, %v840
      %944 = vst.msk [vmem:[%s266 + $0x1a0] sm:$0xff] %vm891, %v845
      %945 = vst.msk [vmem:[%s266 + $0x1a8] sm:$0xff] %vm891, %v848
      %946 = vst.msk [vmem:[%s266 + $0x1b0] sm:$0xff] %vm891, %v853
      %947 = vst.msk [vmem:[%s266 + $0x1b8] sm:$0xff] %vm891, %v856
      %948 = vst.msk [vmem:[%s266 + $0x1c0] sm:$0xff] %vm891, %v861
      %949 = vst.msk [vmem:[%s266 + $0x1c8] sm:$0xff] %vm891, %v864
      %950 = vst.msk [vmem:[%s266 + $0x1d0] sm:$0xff] %vm891, %v869
      %951 = vst.msk [vmem:[%s266 + $0x1d8] sm:$0xff] %vm891, %v872
      %952 = vst.msk [vmem:[%s266 + $0x1e0] sm:$0xff] %vm891, %v877
      %953 = vst.msk [vmem:[%s266 + $0x1e8] sm:$0xff] %vm891, %v880
      %954 = vst.msk [vmem:[%s266 + $0x1f0] sm:$0xff] %vm891, %v885
      %955 = vst.msk [vmem:[%s266 + $0x1f8] sm:$0xff] %vm891, %v888
      %v956 = vld [vmem:[%s270] sm:$0x1]
      %v957 = vsel %vm891, %v637, 0.0
      %v958 = vsel %vm891, %v640, 0.0
      %v959 = vadd.f32 %v957, %v958
      %v960 = vsel %vm891, %v645, 0.0
      %v961 = vadd.f32 %v959, %v960
      %v962 = vsel %vm891, %v648, 0.0
      %v963 = vadd.f32 %v961, %v962
      %v964 = vsel %vm891, %v653, 0.0
      %v965 = vadd.f32 %v963, %v964
      %v966 = vsel %vm891, %v656, 0.0
      %v967 = vadd.f32 %v965, %v966
      %v968 = vsel %vm891, %v661, 0.0
      %v969 = vadd.f32 %v967, %v968
      %v970 = vsel %vm891, %v664, 0.0
      %v971 = vadd.f32 %v969, %v970
      %v972 = vsel %vm891, %v669, 0.0
      %v973 = vadd.f32 %v971, %v972
      %v974 = vsel %vm891, %v672, 0.0
      %v975 = vadd.f32 %v973, %v974
      %v976 = vsel %vm891, %v677, 0.0
      %v977 = vadd.f32 %v975, %v976
      %v978 = vsel %vm891, %v680, 0.0
      %v979 = vadd.f32 %v977, %v978
      %v980 = vsel %vm891, %v685, 0.0
      %v981 = vadd.f32 %v979, %v980
      %v982 = vsel %vm891, %v688, 0.0
      %v983 = vadd.f32 %v981, %v982
      %v984 = vsel %vm891, %v693, 0.0
      %v985 = vadd.f32 %v983, %v984
      %v986 = vsel %vm891, %v696, 0.0
      %v987 = vadd.f32 %v985, %v986
      %v988 = vsel %vm891, %v701, 0.0
      %v989 = vadd.f32 %v987, %v988
      %v990 = vsel %vm891, %v704, 0.0
      %v991 = vadd.f32 %v989, %v990
      %v992 = vsel %vm891, %v709, 0.0
      %v993 = vadd.f32 %v991, %v992
      %v994 = vsel %vm891, %v712, 0.0
      %v995 = vadd.f32 %v993, %v994
      %v996 = vsel %vm891, %v717, 0.0
      %v997 = vadd.f32 %v995, %v996
      %v998 = vsel %vm891, %v720, 0.0
      %v999 = vadd.f32 %v997, %v998
      %v1000 = vsel %vm891, %v725, 0.0
      %v1001 = vadd.f32 %v999, %v1000
      %v1002 = vsel %vm891, %v728, 0.0
      %v1003 = vadd.f32 %v1001, %v1002
      %v1004 = vsel %vm891, %v733, 0.0
      %v1005 = vadd.f32 %v1003, %v1004
      %v1006 = vsel %vm891, %v736, 0.0
      %v1007 = vadd.f32 %v1005, %v1006
      %v1008 = vsel %vm891, %v741, 0.0
      %v1009 = vadd.f32 %v1007, %v1008
      %v1010 = vsel %vm891, %v744, 0.0
      %v1011 = vadd.f32 %v1009, %v1010
      %v1012 = vsel %vm891, %v749, 0.0
      %v1013 = vadd.f32 %v1011, %v1012
      %v1014 = vsel %vm891, %v752, 0.0
      %v1015 = vadd.f32 %v1013, %v1014
      %v1016 = vsel %vm891, %v757, 0.0
      %v1017 = vadd.f32 %v1015, %v1016
      %v1018 = vsel %vm891, %v760, 0.0
      %v1019 = vadd.f32 %v1017, %v1018
      %v1020 = vsel %vm891, %v765, 0.0
      %v1021 = vadd.f32 %v1019, %v1020
      %v1022 = vsel %vm891, %v768, 0.0
      %v1023 = vadd.f32 %v1021, %v1022
      %v1024 = vsel %vm891, %v773, 0.0
      %v1025 = vadd.f32 %v1023, %v1024
      %v1026 = vsel %vm891, %v776, 0.0
      %v1027 = vadd.f32 %v1025, %v1026
      %v1028 = vsel %vm891, %v781, 0.0
      %v1029 = vadd.f32 %v1027, %v1028
      %v1030 = vsel %vm891, %v784, 0.0
      %v1031 = vadd.f32 %v1029, %v1030
      %v1032 = vsel %vm891, %v789, 0.0
      %v1033 = vadd.f32 %v1031, %v1032
      %v1034 = vsel %vm891, %v792, 0.0
      %v1035 = vadd.f32 %v1033, %v1034
      %v1036 = vsel %vm891, %v797, 0.0
      %v1037 = vadd.f32 %v1035, %v1036
      %v1038 = vsel %vm891, %v800, 0.0
      %v1039 = vadd.f32 %v1037, %v1038
      %v1040 = vsel %vm891, %v805, 0.0
      %v1041 = vadd.f32 %v1039, %v1040
      %v1042 = vsel %vm891, %v808, 0.0
      %v1043 = vadd.f32 %v1041, %v1042
      %v1044 = vsel %vm891, %v813, 0.0
      %v1045 = vadd.f32 %v1043, %v1044
      %v1046 = vsel %vm891, %v816, 0.0
      %v1047 = vadd.f32 %v1045, %v1046
      %v1048 = vsel %vm891, %v821, 0.0
      %v1049 = vadd.f32 %v1047, %v1048
      %v1050 = vsel %vm891, %v824, 0.0
      %v1051 = vadd.f32 %v1049, %v1050
      %v1052 = vsel %vm891, %v829, 0.0
      %v1053 = vadd.f32 %v1051, %v1052
      %v1054 = vsel %vm891, %v832, 0.0
      %v1055 = vadd.f32 %v1053, %v1054
      %v1056 = vsel %vm891, %v837, 0.0
      %v1057 = vadd.f32 %v1055, %v1056
      %v1058 = vsel %vm891, %v840, 0.0
      %v1059 = vadd.f32 %v1057, %v1058
      %v1060 = vsel %vm891, %v845, 0.0
      %v1061 = vadd.f32 %v1059, %v1060
      %v1062 = vsel %vm891, %v848, 0.0
      %v1063 = vadd.f32 %v1061, %v1062
      %v1064 = vsel %vm891, %v853, 0.0
      %v1065 = vadd.f32 %v1063, %v1064
      %v1066 = vsel %vm891, %v856, 0.0
      %v1067 = vadd.f32 %v1065, %v1066
      %v1068 = vsel %vm891, %v861, 0.0
      %v1069 = vadd.f32 %v1067, %v1068
      %v1070 = vsel %vm891, %v864, 0.0
      %v1071 = vadd.f32 %v1069, %v1070
      %v1072 = vsel %vm891, %v869, 0.0
      %v1073 = vadd.f32 %v1071, %v1072
      %v1074 = vsel %vm891, %v872, 0.0
      %v1075 = vadd.f32 %v1073, %v1074
      %v1076 = vsel %vm891, %v877, 0.0
      %v1077 = vadd.f32 %v1075, %v1076
      %v1078 = vsel %vm891, %v880, 0.0
      %v1079 = vadd.f32 %v1077, %v1078
      %v1080 = vsel %vm891, %v885, 0.0
      %v1081 = vadd.f32 %v1079, %v1080
      %v1082 = vsel %vm891, %v888, 0.0
      %v1083 = vadd.f32 %v1081, %v1082
      %v1084 = vrot.slane %v1083, 4
      %v1085 = vadd.f32 %v1083, %v1084
      %v1086 = vrot.slane %v1085, 2
      %v1087 = vadd.f32 %v1085, %v1086
      %v1088 = vrot.slane %v1087, 1
      %v1089 = vadd.f32 %v1087, %v1088
      %v1090 = vadd.f32 %v956, %v1089
      %vm1091 = vcmask 122880
      %1092 = vst.msk [vmem:[%s270] sm:$0x1] %vm1091, %v1090
      %v1093 = vld [vmem:[%s273] sm:$0x1]
      %v1094 = vmul.f32 %v637, %v637
      %v1095 = vmul.f32 %v640, %v640
      %v1096 = vmul.f32 %v645, %v645
      %v1097 = vmul.f32 %v648, %v648
      %v1098 = vmul.f32 %v653, %v653
      %v1099 = vmul.f32 %v656, %v656
      %v1100 = vmul.f32 %v661, %v661
      %v1101 = vmul.f32 %v664, %v664
      %v1102 = vmul.f32 %v669, %v669
      %v1103 = vmul.f32 %v672, %v672
      %v1104 = vmul.f32 %v677, %v677
      %v1105 = vmul.f32 %v680, %v680
      %v1106 = vmul.f32 %v685, %v685
      %v1107 = vmul.f32 %v688, %v688
      %v1108 = vmul.f32 %v693, %v693
      %v1109 = vmul.f32 %v696, %v696
      %v1110 = vmul.f32 %v701, %v701
      %v1111 = vmul.f32 %v704, %v704
      %v1112 = vmul.f32 %v709, %v709
      %v1113 = vmul.f32 %v712, %v712
      %v1114 = vmul.f32 %v717, %v717
      %v1115 = vmul.f32 %v720, %v720
      %v1116 = vmul.f32 %v725, %v725
      %v1117 = vmul.f32 %v728, %v728
      %v1118 = vmul.f32 %v733, %v733
      %v1119 = vmul.f32 %v736, %v736
      %v1120 = vmul.f32 %v741, %v741
      %v1121 = vmul.f32 %v744, %v744
      %v1122 = vmul.f32 %v749, %v749
      %v1123 = vmul.f32 %v752, %v752
      %v1124 = vmul.f32 %v757, %v757
      %v1125 = vmul.f32 %v760, %v760
      %v1126 = vmul.f32 %v765, %v765
      %v1127 = vmul.f32 %v768, %v768
      %v1128 = vmul.f32 %v773, %v773
      %v1129 = vmul.f32 %v776, %v776
      %v1130 = vmul.f32 %v781, %v781
      %v1131 = vmul.f32 %v784, %v784
      %v1132 = vmul.f32 %v789, %v789
      %v1133 = vmul.f32 %v792, %v792
      %v1134 = vmul.f32 %v797, %v797
      %v1135 = vmul.f32 %v800, %v800
      %v1136 = vmul.f32 %v805, %v805
      %v1137 = vmul.f32 %v808, %v808
      %v1138 = vmul.f32 %v813, %v813
      %v1139 = vmul.f32 %v816, %v816
      %v1140 = vmul.f32 %v821, %v821
      %v1141 = vmul.f32 %v824, %v824
      %v1142 = vmul.f32 %v829, %v829
      %v1143 = vmul.f32 %v832, %v832
      %v1144 = vmul.f32 %v837, %v837
      %v1145 = vmul.f32 %v840, %v840
      %v1146 = vmul.f32 %v845, %v845
      %v1147 = vmul.f32 %v848, %v848
      %v1148 = vmul.f32 %v853, %v853
      %v1149 = vmul.f32 %v856, %v856
      %v1150 = vmul.f32 %v861, %v861
      %v1151 = vmul.f32 %v864, %v864
      %v1152 = vmul.f32 %v869, %v869
      %v1153 = vmul.f32 %v872, %v872
      %v1154 = vmul.f32 %v877, %v877
      %v1155 = vmul.f32 %v880, %v880
      %v1156 = vmul.f32 %v885, %v885
      %v1157 = vmul.f32 %v888, %v888
      %v1158 = vsel %vm891, %v1094, 0.0
      %v1159 = vsel %vm891, %v1095, 0.0
      %v1160 = vadd.f32 %v1158, %v1159
      %v1161 = vsel %vm891, %v1096, 0.0
      %v1162 = vadd.f32 %v1160, %v1161
      %v1163 = vsel %vm891, %v1097, 0.0
      %v1164 = vadd.f32 %v1162, %v1163
      %v1165 = vsel %vm891, %v1098, 0.0
      %v1166 = vadd.f32 %v1164, %v1165
      %v1167 = vsel %vm891, %v1099, 0.0
      %v1168 = vadd.f32 %v1166, %v1167
      %v1169 = vsel %vm891, %v1100, 0.0
      %v1170 = vadd.f32 %v1168, %v1169
      %v1171 = vsel %vm891, %v1101, 0.0
      %v1172 = vadd.f32 %v1170, %v1171
      %v1173 = vsel %vm891, %v1102, 0.0
      %v1174 = vadd.f32 %v1172, %v1173
      %v1175 = vsel %vm891, %v1103, 0.0
      %v1176 = vadd.f32 %v1174, %v1175
      %v1177 = vsel %vm891, %v1104, 0.0
      %v1178 = vadd.f32 %v1176, %v1177
      %v1179 = vsel %vm891, %v1105, 0.0
      %v1180 = vadd.f32 %v1178, %v1179
      %v1181 = vsel %vm891, %v1106, 0.0
      %v1182 = vadd.f32 %v1180, %v1181
      %v1183 = vsel %vm891, %v1107, 0.0
      %v1184 = vadd.f32 %v1182, %v1183
      %v1185 = vsel %vm891, %v1108, 0.0
      %v1186 = vadd.f32 %v1184, %v1185
      %v1187 = vsel %vm891, %v1109, 0.0
      %v1188 = vadd.f32 %v1186, %v1187
      %v1189 = vsel %vm891, %v1110, 0.0
      %v1190 = vadd.f32 %v1188, %v1189
      %v1191 = vsel %vm891, %v1111, 0.0
      %v1192 = vadd.f32 %v1190, %v1191
      %v1193 = vsel %vm891, %v1112, 0.0
      %v1194 = vadd.f32 %v1192, %v1193
      %v1195 = vsel %vm891, %v1113, 0.0
      %v1196 = vadd.f32 %v1194, %v1195
      %v1197 = vsel %vm891, %v1114, 0.0
      %v1198 = vadd.f32 %v1196, %v1197
      %v1199 = vsel %vm891, %v1115, 0.0
      %v1200 = vadd.f32 %v1198, %v1199
      %v1201 = vsel %vm891, %v1116, 0.0
      %v1202 = vadd.f32 %v1200, %v1201
      %v1203 = vsel %vm891, %v1117, 0.0
      %v1204 = vadd.f32 %v1202, %v1203
      %v1205 = vsel %vm891, %v1118, 0.0
      %v1206 = vadd.f32 %v1204, %v1205
      %v1207 = vsel %vm891, %v1119, 0.0
      %v1208 = vadd.f32 %v1206, %v1207
      %v1209 = vsel %vm891, %v1120, 0.0
      %v1210 = vadd.f32 %v1208, %v1209
      %v1211 = vsel %vm891, %v1121, 0.0
      %v1212 = vadd.f32 %v1210, %v1211
      %v1213 = vsel %vm891, %v1122, 0.0
      %v1214 = vadd.f32 %v1212, %v1213
      %v1215 = vsel %vm891, %v1123, 0.0
      %v1216 = vadd.f32 %v1214, %v1215
      %v1217 = vsel %vm891, %v1124, 0.0
      %v1218 = vadd.f32 %v1216, %v1217
      %v1219 = vsel %vm891, %v1125, 0.0
      %v1220 = vadd.f32 %v1218, %v1219
      %v1221 = vsel %vm891, %v1126, 0.0
      %v1222 = vadd.f32 %v1220, %v1221
      %v1223 = vsel %vm891, %v1127, 0.0
      %v1224 = vadd.f32 %v1222, %v1223
      %v1225 = vsel %vm891, %v1128, 0.0
      %v1226 = vadd.f32 %v1224, %v1225
      %v1227 = vsel %vm891, %v1129, 0.0
      %v1228 = vadd.f32 %v1226, %v1227
      %v1229 = vsel %vm891, %v1130, 0.0
      %v1230 = vadd.f32 %v1228, %v1229
      %v1231 = vsel %vm891, %v1131, 0.0
      %v1232 = vadd.f32 %v1230, %v1231
      %v1233 = vsel %vm891, %v1132, 0.0
      %v1234 = vadd.f32 %v1232, %v1233
      %v1235 = vsel %vm891, %v1133, 0.0
      %v1236 = vadd.f32 %v1234, %v1235
      %v1237 = vsel %vm891, %v1134, 0.0
      %v1238 = vadd.f32 %v1236, %v1237
      %v1239 = vsel %vm891, %v1135, 0.0
      %v1240 = vadd.f32 %v1238, %v1239
      %v1241 = vsel %vm891, %v1136, 0.0
      %v1242 = vadd.f32 %v1240, %v1241
      %v1243 = vsel %vm891, %v1137, 0.0
      %v1244 = vadd.f32 %v1242, %v1243
      %v1245 = vsel %vm891, %v1138, 0.0
      %v1246 = vadd.f32 %v1244, %v1245
      %v1247 = vsel %vm891, %v1139, 0.0
      %v1248 = vadd.f32 %v1246, %v1247
      %v1249 = vsel %vm891, %v1140, 0.0
      %v1250 = vadd.f32 %v1248, %v1249
      %v1251 = vsel %vm891, %v1141, 0.0
      %v1252 = vadd.f32 %v1250, %v1251
      %v1253 = vsel %vm891, %v1142, 0.0
      %v1254 = vadd.f32 %v1252, %v1253
      %v1255 = vsel %vm891, %v1143, 0.0
      %v1256 = vadd.f32 %v1254, %v1255
      %v1257 = vsel %vm891, %v1144, 0.0
      %v1258 = vadd.f32 %v1256, %v1257
      %v1259 = vsel %vm891, %v1145, 0.0
      %v1260 = vadd.f32 %v1258, %v1259
      %v1261 = vsel %vm891, %v1146, 0.0
      %v1262 = vadd.f32 %v1260, %v1261
      %v1263 = vsel %vm891, %v1147, 0.0
      %v1264 = vadd.f32 %v1262, %v1263
      %v1265 = vsel %vm891, %v1148, 0.0
      %v1266 = vadd.f32 %v1264, %v1265
      %v1267 = vsel %vm891, %v1149, 0.0
      %v1268 = vadd.f32 %v1266, %v1267
      %v1269 = vsel %vm891, %v1150, 0.0
      %v1270 = vadd.f32 %v1268, %v1269
      %v1271 = vsel %vm891, %v1151, 0.0
      %v1272 = vadd.f32 %v1270, %v1271
      %v1273 = vsel %vm891, %v1152, 0.0
      %v1274 = vadd.f32 %v1272, %v1273
      %v1275 = vsel %vm891, %v1153, 0.0
      %v1276 = vadd.f32 %v1274, %v1275
      %v1277 = vsel %vm891, %v1154, 0.0
      %v1278 = vadd.f32 %v1276, %v1277
      %v1279 = vsel %vm891, %v1155, 0.0
      %v1280 = vadd.f32 %v1278, %v1279
      %v1281 = vsel %vm891, %v1156, 0.0
      %v1282 = vadd.f32 %v1280, %v1281
      %v1283 = vsel %vm891, %v1157, 0.0
      %v1284 = vadd.f32 %v1282, %v1283
      %v1285 = vrot.slane %v1284, 4
      %v1286 = vadd.f32 %v1284, %v1285
      %v1287 = vrot.slane %v1286, 2
      %v1288 = vadd.f32 %v1286, %v1287
      %v1289 = vrot.slane %v1288, 1
      %v1290 = vadd.f32 %v1288, %v1289
      %v1291 = vadd.f32 %v1093, %v1290
      %1292 = vst.msk [vmem:[%s273] sm:$0x1] %vm1091, %v1291
      %s1293 = smul.u32 64, %s21
      %p1294 = scmp.lt.s32.totalorder %s20, 3
      %s1295 = scalar_select %p1294, %s20, 3
      %p1296 = scmp.lt.s32.totalorder %s1293, 63
      %s1297 = scalar_select %p1296, %s1293, 63
      %s1298 = smul.addr %s1295, 64
      %s1299 = sadd.s32 %s1297, %s1298
      %s1300 = smul.addr %s1299, 8
      %s1301 = scalar_lea.vmem %s2, %s1300
      %p1302 = scmp.lt.s32.totalorder %s20, 3
      %s1303 = scalar_select %p1302, %s20, 3
      %s1304 = scalar_lea.vmem %s3, %s1303
      %p1305 = scmp.lt.s32.totalorder %s20, 3
      %s1306 = scalar_select %p1305, %s20, 3
      %s1307 = scalar_lea.vmem %s4, %s1306
      // Predicated region
      $region33: #{generator_forward.15} parent=27 // pred_check
        %p1308 = pneg %p102
      $region34: #{generator_forward.15} parent=27 // pred_check_branch
        %1310 = sbr.rel (%p1308) target = $region36
      $region35: #{generator_forward.15} parent=27 // pred_region
        %s1311 = smul.u32 64, %s21
      $region36: #{generator_forward.15} parent=27 // pred_fallthru
        _
      // Predicated region
      $region37: #{generator_forward.15} parent=27 // pred_check
        %p1312 = pneg %p128
      $region38: #{generator_forward.15} parent=27 // pred_check_branch
        %1314 = sbr.rel (%p1312) target = $region40
      $region39: #{generator_forward.15} parent=27 // pred_region
        _
      $region40: #{generator_forward.15} parent=27 // pred_fallthru
        _
      // Predicated region
      $region41: #{generator_forward.15} parent=27 // pred_check
        %p1315 = pneg %p154
      $region42: #{generator_forward.15} parent=27 // pred_check_branch
        %1317 = sbr.rel (%p1315) target = $region44
      $region43: #{generator_forward.15} parent=27 // pred_region
        _
      $region44: #{generator_forward.15} parent=27 // pred_fallthru
        _
    $region28: #{generator_forward.15} parent=5 // pred_fallthru
      _
    %p1318 = scmp.le.s32.totalorder 2, %s11
    // Predicated region
    $region45: #{generator_forward.15} parent=5 // pred_check
      %p1319 = pneg %p1318
    $region46: #{generator_forward.15} parent=5 // pred_check_branch
      %1321 = sbr.rel (%p1319) target = $region48
    $region47: #{generator_forward.15} parent=5 // pred_region
      %s1322 = ssub.s32 %s11, 2
      // Predicated region
      $region49: #{generator_forward.15} parent=47 // pred_check
        %p1323 = pneg %p108
      $region50: #{generator_forward.15} parent=47 // pred_check_branch
        %1325 = sbr.rel (%p1323) target = $region52
      $region51: #{generator_forward.15} parent=47 // pred_region
        %s1326 = smul.u32 64, %s23
        %p1327 = scmp.lt.s32.totalorder %s22, 3
        %s1328 = scalar_select %p1327, %s22, 3
        %p1329 = scmp.lt.s32.totalorder %s1326, 63
        %s1330 = scalar_select %p1329, %s1326, 63
        %s1331 = smul.addr %s1328, 64
        %s1332 = sadd.s32 %s1330, %s1331
        %s1333 = smul.addr %s1332, 8
        %s1334 = scalar_lea.vmem %s2, %s1333
      $region52: #{generator_forward.15} parent=47 // pred_fallthru
        _
      // Predicated region
      $region53: #{generator_forward.15} parent=47 // pred_check
        %p1335 = pneg %p134
      $region54: #{generator_forward.15} parent=47 // pred_check_branch
        %1337 = sbr.rel (%p1335) target = $region56
      $region55: #{generator_forward.15} parent=47 // pred_region
        %p1338 = scmp.lt.s32.totalorder %s22, 3
        %s1339 = scalar_select %p1338, %s22, 3
        %s1340 = scalar_lea.vmem %s3, %s1339
      $region56: #{generator_forward.15} parent=47 // pred_fallthru
        _
      // Predicated region
      $region57: #{generator_forward.15} parent=47 // pred_check
        %p1341 = pneg %p160
      $region58: #{generator_forward.15} parent=47 // pred_check_branch
        %1343 = sbr.rel (%p1341) target = $region60
      $region59: #{generator_forward.15} parent=47 // pred_region
        %p1344 = scmp.lt.s32.totalorder %s22, 3
        %s1345 = scalar_select %p1344, %s22, 3
        %s1346 = scalar_lea.vmem %s4, %s1345
      $region60: #{generator_forward.15} parent=47 // pred_fallthru
        _
    $region48: #{generator_forward.15} parent=5 // pred_fallthru
      _
  $region6: #{generator_forward.15} parent=0 // loop_footer
    %s15 = sadd.s32 1, %s11
  $region7: #{generator_forward.15} parent=0 // loop_footer_branch
    %10 = sbr.rel target = $region3
  $region8: #{generator_forward.15} parent=0 // loop_exit
    _

// kernel: generator_forward.17
$region0: #{generator_forward.17}
  #allocation0 [shape = 'u32[]', space=smem, size = 0x4, offset = 0x4, fixed_abs, tag = 'smem constant byte address 0x4 - core index']
  #allocation1 [shape = 'u32[144,128]{1,0:T(1,128)}', space=vmem, size = 0x12000, scoped, tag = 'internal scratch']
  %s0 = inlined_call_operand.vmem [shape: bf16[4,2048,64], index: 0, kind: input, shape index: {}]
  %s1 = inlined_call_operand.vmem [shape: bf16[4,64,3], index: 1, kind: input, shape index: {}]
  %s2 = inlined_call_operand.vmem [shape: f32[4,2048,3], index: 2, kind: output, shape index: {}]
  %s3 = sld [smem:[#allocation0]]
  $region41: #{generator_forward.17} parent=0
    _
  %s5 = ssub.s32 1, %s3
  %s6 = scalar_select 0, %s5, %s3
  loop: start=0, step=1, limit=18
  $region2: #{generator_forward.17} parent=0 // loop_pre_header
    _
  $region3: #{generator_forward.17} parent=0 // loop_header
    %s8 = sphi 0, %s12
    %p9 = scmp.ge.s32.totalorder %s8, 18
    %s15 = sphi 0, %s27
    %s16 = sphi 0, %s23
    %s17 = sphi 0, %s15
    %s18 = sphi 0, %s16
    %s19 = sphi 0, %s17
    %s20 = sphi 0, %s18
    %s32 = sphi 0, %s34
    %s35 = sphi 0, %s32
    %s36 = sphi 0, %s35
    %s52 = sphi 0, %s36
    %s58 = sphi 0, %s60
    %s61 = sphi 0, %s58
    %s62 = sphi 0, %s61
    %s78 = sphi 0, %s62
    %s86 = sphi 0, %s88
    %s89 = sphi 0, %s86
    %s90 = sphi 0, %s89
    %s106 = sphi 0, %s90
  $region4: #{generator_forward.17} parent=0 // loop_header_branch
    %11 = sbr.rel (%p9) target = $region8
  $region5: #{generator_forward.17} parent=0 // loop_body
    %s13 = ssub.s32 %s8, 1
    %s14 = ssub.s32 %s8, 2
    %s21 = sadd.s32 1, %s16
    %p22 = scmp.ge.s32.totalorder %s21, 4
    %s23 = scalar_select %p22, 0, %s21
    %s24 = sadd.s32 1, %s15
    %s25 = scalar_select %p22, %s24, %s15
    %p26 = scmp.ge.s32.totalorder %s25, 4
    %s27 = scalar_select %p26, 0, %s25
    %s28 = ssub.s32 %s15, %s27
    %s29 = ssub.s32 %s16, %s23
    %s30 = sor.u32 %s28, %s29
    %p31 = scmp.eq.s32.totalorder %s30, 0
    %s33 = sadd.s32 %s32, 1
    %s34 = scalar_select %p31, %s32, %s33
    %p37 = pneg %p31
    %p38 = scmp.eq.s32.totalorder %s8, 15
    %p39 = por %p37, %p38
    %p40 = scmp.ne.s32.totalorder %s32, %s35
    %p41 = scmp.eq.s32.totalorder %s8, 0
    %p42 = por %p40, %p41
    %p43 = scmp.ne.s32.totalorder %s32, %s35
    %p44 = scmp.eq.s32.totalorder %s13, 15
    %p45 = por %p43, %p44
    %p46 = scmp.ne.s32.totalorder %s35, %s36
    %p47 = scmp.eq.s32.totalorder %s13, 0
    %p48 = por %p46, %p47
    %p49 = scmp.ne.s32.totalorder %s35, %s36
    %p50 = scmp.eq.s32.totalorder %s14, 15
    %p51 = por %p49, %p50
    %p53 = scmp.ne.s32.totalorder %s36, %s52
    %p54 = scmp.eq.s32.totalorder %s14, 0
    %p55 = por %p53, %p54
    %s56 = ssub.s32 %s15, %s27
    %p57 = scmp.eq.s32.totalorder %s56, 0
    %s59 = sadd.s32 %s58, 1
    %s60 = scalar_select %p57, %s58, %s59
    %p63 = pneg %p57
    %p64 = scmp.eq.s32.totalorder %s8, 15
    %p65 = por %p63, %p64
    %p66 = scmp.ne.s32.totalorder %s58, %s61
    %p67 = scmp.eq.s32.totalorder %s8, 0
    %p68 = por %p66, %p67
    %p69 = scmp.ne.s32.totalorder %s58, %s61
    %p70 = scmp.eq.s32.totalorder %s13, 15
    %p71 = por %p69, %p70
    %p72 = scmp.ne.s32.totalorder %s61, %s62
    %p73 = scmp.eq.s32.totalorder %s13, 0
    %p74 = por %p72, %p73
    %p75 = scmp.ne.s32.totalorder %s61, %s62
    %p76 = scmp.eq.s32.totalorder %s14, 15
    %p77 = por %p75, %p76
    %p79 = scmp.ne.s32.totalorder %s62, %s78
    %p80 = scmp.eq.s32.totalorder %s14, 0
    %p81 = por %p79, %p80
    %s82 = ssub.s32 %s15, %s27
    %s83 = ssub.s32 %s16, %s23
    %s84 = sor.u32 %s82, %s83
    %p85 = scmp.eq.s32.totalorder %s84, 0
    %s87 = sadd.s32 %s86, 1
    %s88 = scalar_select %p85, %s86, %s87
    %p91 = pneg %p85
    %p92 = scmp.eq.s32.totalorder %s8, 15
    %p93 = por %p91, %p92
    %p94 = scmp.ne.s32.totalorder %s86, %s89
    %p95 = scmp.eq.s32.totalorder %s8, 0
    %p96 = por %p94, %p95
    %p97 = scmp.ne.s32.totalorder %s86, %s89
    %p98 = scmp.eq.s32.totalorder %s13, 15
    %p99 = por %p97, %p98
    %p100 = scmp.ne.s32.totalorder %s89, %s90
    %p101 = scmp.eq.s32.totalorder %s13, 0
    %p102 = por %p100, %p101
    %p103 = scmp.ne.s32.totalorder %s89, %s90
    %p104 = scmp.eq.s32.totalorder %s14, 15
    %p105 = por %p103, %p104
    %p107 = scmp.ne.s32.totalorder %s90, %s106
    %p108 = scmp.eq.s32.totalorder %s14, 0
    %p109 = por %p107, %p108
    %p110 = scmp.le.s32.totalorder 1, %s8
    %p111 = scmp.lt.s32.totalorder %s8, 17
    %p112 = pnand %p110, %p111
    %p113 = pneg %p112
    // Predicated region
    $region9: #{generator_forward.17} parent=5 // pred_check
      _
    $region10: #{generator_forward.17} parent=5 // pred_check_branch
      %115 = sbr.rel (%p112) target = $region12
    $region11: #{generator_forward.17} parent=5 // pred_region
      %s116 = ssub.s32 %s8, 1
    $region12: #{generator_forward.17} parent=5 // pred_fallthru
      _
    %p117 = scmp.lt.s32.totalorder %s8, 16
    // Predicated region
    $region13: #{generator_forward.17} parent=5 // pred_check
      %p118 = pneg %p117
    $region14: #{generator_forward.17} parent=5 // pred_check_branch
      %120 = sbr.rel (%p118) target = $region16
    $region15: #{generator_forward.17} parent=5 // pred_region
      // Predicated region
      $region17: #{generator_forward.17} parent=15 // pred_check
        %p121 = pneg %p42
      $region18: #{generator_forward.17} parent=15 // pred_check_branch
        %123 = sbr.rel (%p121) target = $region20
      $region19: #{generator_forward.17} parent=15 // pred_region
        %s124 = smul.u32 64, %s16
        %p125 = scmp.lt.s32.totalorder %s15, 3
        %s126 = scalar_select %p125, %s15, 3
        %p127 = scmp.lt.s32.totalorder %s124, 255
        %s128 = scalar_select %p127, %s124, 255
        %s129 = smul.addr %s126, 256
        %s130 = sadd.s32 %s128, %s129
        %s131 = smul.addr %s130, 4
        %s132 = scalar_lea.vmem %s0, %s131
        %s133 = smul.u32 64, %s16
      $region20: #{generator_forward.17} parent=15 // pred_fallthru
        _
      // Predicated region
      $region21: #{generator_forward.17} parent=15 // pred_check
        %p134 = pneg %p68
      $region22: #{generator_forward.17} parent=15 // pred_check_branch
        %136 = sbr.rel (%p134) target = $region24
      $region23: #{generator_forward.17} parent=15 // pred_region
        %p137 = scmp.lt.s32.totalorder %s15, 3
        %s138 = scalar_select %p137, %s15, 3
        %s139 = smul.addr %s138, 8
        %s140 = smul.addr %s139, 4
        %s141 = scalar_lea.vmem %s1, %s140
      $region24: #{generator_forward.17} parent=15 // pred_fallthru
        _
    $region16: #{generator_forward.17} parent=5 // pred_fallthru
      _
    %p142 = scmp.le.s32.totalorder 1, %s8
    %p143 = scmp.lt.s32.totalorder %s8, 17
    %p144 = pnand %p142, %p143
    %p145 = pneg %p144
    // Predicated region
    $region25: #{generator_forward.17} parent=5 // pred_check
      _
    $region26: #{generator_forward.17} parent=5 // pred_check_branch
      %147 = sbr.rel (%p144) target = $region28
    $region27: #{generator_forward.17} parent=5 // pred_region
      %s148 = ssub.s32 %s8, 1
      %s149 = smul.u32 64, %s18
      %p150 = scmp.lt.s32.totalorder %s17, 3
      %s151 = scalar_select %p150, %s17, 3
      %p152 = scmp.lt.s32.totalorder %s149, 255
      %s153 = scalar_select %p152, %s149, 255
      %s154 = smul.addr %s151, 256
      %s155 = sadd.s32 %s153, %s154
      %s156 = smul.addr %s155, 4
      %s157 = scalar_lea.vmem %s0, %s156
      %p158 = pneg %p48
      %p159 = pneg %p45
      %p160 = scmp.lt.s32.totalorder %s17, 3
      %s161 = scalar_select %p160, %s17, 3
      %s162 = smul.addr %s161, 8
      %s163 = smul.addr %s162, 4
      %s164 = scalar_lea.vmem %s1, %s163
      %p165 = pneg %p74
      %p166 = pneg %p71
      %p167 = pneg %p102
      %p168 = pneg %p99
      %s169 = smul.u32 64, %s18
      %p170 = scmp.lt.s32.totalorder %s17, 3
      %s171 = scalar_select %p170, %s17, 3
      %p172 = scmp.lt.s32.totalorder %s169, 255
      %s173 = scalar_select %p172, %s169, 255
      %s174 = smul.addr %s171, 256
      %s175 = sadd.s32 %s173, %s174
      %s176 = smul.addr %s175, 8
      %s177 = scalar_lea.vmem %s2, %s176
      %s178 = smul.u32 64, %s18
      %p179 = scmp.lt.s32.totalorder %s17, 3
      %s180 = scalar_select %p179, %s17, 3
      %p181 = scmp.lt.s32.totalorder %s178, 255
      %s182 = scalar_select %p181, %s178, 255
      %s183 = smul.addr %s180, 256
      %s184 = sadd.s32 %s182, %s183
      %s185 = smul.addr %s184, 4
      %s186 = scalar_lea.vmem %s0, %s185
      %s187 = smul.u32 64, %s18
      %p188 = scmp.lt.s32.totalorder %s17, 3
      %s189 = scalar_select %p188, %s17, 3
      %s190 = smul.addr %s189, 8
      %s191 = smul.addr %s190, 4
      %s192 = scalar_lea.vmem %s1, %s191
      %s193 = smul.u32 64, %s18
      %p194 = scmp.lt.s32.totalorder %s17, 3
      %s195 = scalar_select %p194, %s17, 3
      %p196 = scmp.lt.s32.totalorder %s193, 255
      %s197 = scalar_select %p196, %s193, 255
      %s198 = smul.addr %s195, 256
      %s199 = sadd.s32 %s197, %s198
      %s200 = smul.addr %s199, 8
      %s201 = scalar_lea.vmem %s2, %s200
      %s202 = smul.u32 64, %s18
      %v204 = vld [vmem:[%s186] sm:$0xf]
      %v205 = vld [vmem:[%s186 + $0x4] sm:$0xf]
      %v206 = vld [vmem:[%s186 + $0x8] sm:$0xf]
      %v207 = vld [vmem:[%s186 + $0xc] sm:$0xf]
      %v208 = vld [vmem:[%s186 + $0x10] sm:$0xf]
      %v209 = vld [vmem:[%s186 + $0x14] sm:$0xf]
      %v210 = vld [vmem:[%s186 + $0x18] sm:$0xf]
      %v211 = vld [vmem:[%s186 + $0x1c] sm:$0xf]
      %v212 = vld [vmem:[%s186 + $0x20] sm:$0xf]
      %v213 = vld [vmem:[%s186 + $0x24] sm:$0xf]
      %v214 = vld [vmem:[%s186 + $0x28] sm:$0xf]
      %v215 = vld [vmem:[%s186 + $0x2c] sm:$0xf]
      %v216 = vld [vmem:[%s186 + $0x30] sm:$0xf]
      %v217 = vld [vmem:[%s186 + $0x34] sm:$0xf]
      %v218 = vld [vmem:[%s186 + $0x38] sm:$0xf]
      %v219 = vld [vmem:[%s186 + $0x3c] sm:$0xf]
      %v220 = vld [vmem:[%s186 + $0x40] sm:$0xf]
      %v221 = vld [vmem:[%s186 + $0x44] sm:$0xf]
      %v222 = vld [vmem:[%s186 + $0x48] sm:$0xf]
      %v223 = vld [vmem:[%s186 + $0x4c] sm:$0xf]
      %v224 = vld [vmem:[%s186 + $0x50] sm:$0xf]
      %v225 = vld [vmem:[%s186 + $0x54] sm:$0xf]
      %v226 = vld [vmem:[%s186 + $0x58] sm:$0xf]
      %v227 = vld [vmem:[%s186 + $0x5c] sm:$0xf]
      %v228 = vld [vmem:[%s186 + $0x60] sm:$0xf]
      %v229 = vld [vmem:[%s186 + $0x64] sm:$0xf]
      %v230 = vld [vmem:[%s186 + $0x68] sm:$0xf]
      %v231 = vld [vmem:[%s186 + $0x6c] sm:$0xf]
      %v232 = vld [vmem:[%s186 + $0x70] sm:$0xf]
      %v233 = vld [vmem:[%s186 + $0x74] sm:$0xf]
      %v234 = vld [vmem:[%s186 + $0x78] sm:$0xf]
      %v235 = vld [vmem:[%s186 + $0x7c] sm:$0xf]
      %v236 = vld [vmem:[%s186 + $0x80] sm:$0xf]
      %v237 = vld [vmem:[%s186 + $0x84] sm:$0xf]
      %v238 = vld [vmem:[%s186 + $0x88] sm:$0xf]
      %v239 = vld [vmem:[%s186 + $0x8c] sm:$0xf]
      %v240 = vld [vmem:[%s186 + $0x90] sm:$0xf]
      %v241 = vld [vmem:[%s186 + $0x94] sm:$0xf]
      %v242 = vld [vmem:[%s186 + $0x98] sm:$0xf]
      %v243 = vld [vmem:[%s186 + $0x9c] sm:$0xf]
      %v244 = vld [vmem:[%s186 + $0xa0] sm:$0xf]
      %v245 = vld [vmem:[%s186 + $0xa4] sm:$0xf]
      %v246 = vld [vmem:[%s186 + $0xa8] sm:$0xf]
      %v247 = vld [vmem:[%s186 + $0xac] sm:$0xf]
      %v248 = vld [vmem:[%s186 + $0xb0] sm:$0xf]
      %v249 = vld [vmem:[%s186 + $0xb4] sm:$0xf]
      %v250 = vld [vmem:[%s186 + $0xb8] sm:$0xf]
      %v251 = vld [vmem:[%s186 + $0xbc] sm:$0xf]
      %v252 = vld [vmem:[%s186 + $0xc0] sm:$0xf]
      %v253 = vld [vmem:[%s186 + $0xc4] sm:$0xf]
      %v254 = vld [vmem:[%s186 + $0xc8] sm:$0xf]
      %v255 = vld [vmem:[%s186 + $0xcc] sm:$0xf]
      %v256 = vld [vmem:[%s186 + $0xd0] sm:$0xf]
      %v257 = vld [vmem:[%s186 + $0xd4] sm:$0xf]
      %v258 = vld [vmem:[%s186 + $0xd8] sm:$0xf]
      %v259 = vld [vmem:[%s186 + $0xdc] sm:$0xf]
      %v260 = vld [vmem:[%s186 + $0xe0] sm:$0xf]
      %v261 = vld [vmem:[%s186 + $0xe4] sm:$0xf]
      %v262 = vld [vmem:[%s186 + $0xe8] sm:$0xf]
      %v263 = vld [vmem:[%s186 + $0xec] sm:$0xf]
      %v264 = vld [vmem:[%s186 + $0xf0] sm:$0xf]
      %v265 = vld [vmem:[%s186 + $0xf4] sm:$0xf]
      %v266 = vld [vmem:[%s186 + $0xf8] sm:$0xf]
      %v267 = vld [vmem:[%s186 + $0xfc] sm:$0xf]
      %v268 = vld [vmem:[%s192] sm:$0xf]
      %v269 = vld [vmem:[%s192 + $0x4] sm:$0xf]
      %v270 = vld [vmem:[%s192 + $0x8] sm:$0xf]
      %v271 = vld [vmem:[%s192 + $0xc] sm:$0xf]
      %v272 = vld [vmem:[%s192 + $0x10] sm:$0xf]
      %v273 = vld [vmem:[%s192 + $0x14] sm:$0xf]
      %v274 = vld [vmem:[%s192 + $0x18] sm:$0xf]
      %v275 = vld [vmem:[%s192 + $0x1c] sm:$0xf]
      %v340 = vunpack.c.l.b16 %v204
      %v341 = vunpack.c.l.b16 %v205
      %v342 = vunpack.c.l.b16 %v206
      %v343 = vunpack.c.l.b16 %v207
      %v344 = vunpack.c.l.b16 %v208
      %v345 = vunpack.c.l.b16 %v209
      %v346 = vunpack.c.l.b16 %v210
      %v347 = vunpack.c.l.b16 %v211
      %v348 = vunpack.c.l.b16 %v212
      %v349 = vunpack.c.l.b16 %v213
      %v350 = vunpack.c.l.b16 %v214
      %v351 = vunpack.c.l.b16 %v215
      %v352 = vunpack.c.l.b16 %v216
      %v353 = vunpack.c.l.b16 %v217
      %v354 = vunpack.c.l.b16 %v218
      %v355 = vunpack.c.l.b16 %v219
      %v356 = vunpack.c.l.b16 %v220
      %v357 = vunpack.c.l.b16 %v221
      %v358 = vunpack.c.l.b16 %v222
      %v359 = vunpack.c.l.b16 %v223
      %v360 = vunpack.c.l.b16 %v224
      %v361 = vunpack.c.l.b16 %v225
      %v362 = vunpack.c.l.b16 %v226
      %v363 = vunpack.c.l.b16 %v227
      %v364 = vunpack.c.l.b16 %v228
      %v365 = vunpack.c.l.b16 %v229
      %v366 = vunpack.c.l.b16 %v230
      %v367 = vunpack.c.l.b16 %v231
      %v368 = vunpack.c.l.b16 %v232
      %v369 = vunpack.c.l.b16 %v233
      %v370 = vunpack.c.l.b16 %v234
      %v371 = vunpack.c.l.b16 %v235
      %v372 = vunpack.c.l.b16 %v236
      %v373 = vunpack.c.l.b16 %v237
      %v374 = vunpack.c.l.b16 %v238
      %v375 = vunpack.c.l.b16 %v239
      %v376 = vunpack.c.l.b16 %v240
      %v377 = vunpack.c.l.b16 %v241
      %v378 = vunpack.c.l.b16 %v242
      %v379 = vunpack.c.l.b16 %v243
      %v380 = vunpack.c.l.b16 %v244
      %v381 = vunpack.c.l.b16 %v245
      %v382 = vunpack.c.l.b16 %v246
      %v383 = vunpack.c.l.b16 %v247
      %v384 = vunpack.c.l.b16 %v248
      %v385 = vunpack.c.l.b16 %v249
      %v386 = vunpack.c.l.b16 %v250
      %v387 = vunpack.c.l.b16 %v251
      %v388 = vunpack.c.l.b16 %v252
      %v389 = vunpack.c.l.b16 %v253
      %v390 = vunpack.c.l.b16 %v254
      %v391 = vunpack.c.l.b16 %v255
      %v392 = vunpack.c.l.b16 %v256
      %v393 = vunpack.c.l.b16 %v257
      %v394 = vunpack.c.l.b16 %v258
      %v395 = vunpack.c.l.b16 %v259
      %v396 = vunpack.c.l.b16 %v260
      %v397 = vunpack.c.l.b16 %v261
      %v398 = vunpack.c.l.b16 %v262
      %v399 = vunpack.c.l.b16 %v263
      %v400 = vunpack.c.l.b16 %v264
      %v401 = vunpack.c.l.b16 %v265
      %v402 = vunpack.c.l.b16 %v266
      %v403 = vunpack.c.l.b16 %v267
      %v404 = vpack.c.b16 %v341, %v340
      %v405 = vpack.c.b16 %v343, %v342
      %v406 = vpack.c.b16 %v345, %v344
      %v407 = vpack.c.b16 %v347, %v346
      %v408 = vpack.c.b16 %v349, %v348
      %v409 = vpack.c.b16 %v351, %v350
      %v410 = vpack.c.b16 %v353, %v352
      %v411 = vpack.c.b16 %v355, %v354
      %v412 = vpack.c.b16 %v357, %v356
      %v413 = vpack.c.b16 %v359, %v358
      %v414 = vpack.c.b16 %v361, %v360
      %v415 = vpack.c.b16 %v363, %v362
      %v416 = vpack.c.b16 %v365, %v364
      %v417 = vpack.c.b16 %v367, %v366
      %v418 = vpack.c.b16 %v369, %v368
      %v419 = vpack.c.b16 %v371, %v370
      %v420 = vpack.c.b16 %v373, %v372
      %v421 = vpack.c.b16 %v375, %v374
      %v422 = vpack.c.b16 %v377, %v376
      %v423 = vpack.c.b16 %v379, %v378
      %v424 = vpack.c.b16 %v381, %v380
      %v425 = vpack.c.b16 %v383, %v382
      %v426 = vpack.c.b16 %v385, %v384
      %v427 = vpack.c.b16 %v387, %v386
      %v428 = vpack.c.b16 %v389, %v388
      %v429 = vpack.c.b16 %v391, %v390
      %v430 = vpack.c.b16 %v393, %v392
      %v431 = vpack.c.b16 %v395, %v394
      %v432 = vpack.c.b16 %v397, %v396
      %v433 = vpack.c.b16 %v399, %v398
      %v434 = vpack.c.b16 %v401, %v400
      %v435 = vpack.c.b16 %v403, %v402
      %v444 = vunpack.c.l.b16 %v268
      %v445 = vunpack.c.l.b16 %v269
      %v446 = vunpack.c.l.b16 %v270
      %v447 = vunpack.c.l.b16 %v271
      %v448 = vunpack.c.l.b16 %v272
      %v449 = vunpack.c.l.b16 %v273
      %v450 = vunpack.c.l.b16 %v274
      %v451 = vunpack.c.l.b16 %v275
      %v452 = vpack.c.b16 %v445, %v444
      %v453 = vpack.c.b16 %v447, %v446
      %v454 = vpack.c.b16 %v449, %v448
      %v455 = vpack.c.b16 %v451, %v450
      %vm460 = vcmask 523264
      %v462 = vsel %vm460, %v404, 0
      %v465 = vsel %vm460, %v405, 0
      %v468 = vsel %vm460, %v406, 0
      %v471 = vsel %vm460, %v407, 0
      %v474 = vsel %vm460, %v408, 0
      %v477 = vsel %vm460, %v409, 0
      %v480 = vsel %vm460, %v410, 0
      %v483 = vsel %vm460, %v411, 0
      %v486 = vsel %vm460, %v412, 0
      %v489 = vsel %vm460, %v413, 0
      %v492 = vsel %vm460, %v414, 0
      %v495 = vsel %vm460, %v415, 0
      %v498 = vsel %vm460, %v416, 0
      %v501 = vsel %vm460, %v417, 0
      %v504 = vsel %vm460, %v418, 0
      %v507 = vsel %vm460, %v419, 0
      %v510 = vsel %vm460, %v420, 0
      %v513 = vsel %vm460, %v421, 0
      %v516 = vsel %vm460, %v422, 0
      %v519 = vsel %vm460, %v423, 0
      %v522 = vsel %vm460, %v424, 0
      %v525 = vsel %vm460, %v425, 0
      %v528 = vsel %vm460, %v426, 0
      %v531 = vsel %vm460, %v427, 0
      %v534 = vsel %vm460, %v428, 0
      %v537 = vsel %vm460, %v429, 0
      %v540 = vsel %vm460, %v430, 0
      %v543 = vsel %vm460, %v431, 0
      %v546 = vsel %vm460, %v432, 0
      %v549 = vsel %vm460, %v433, 0
      %v552 = vsel %vm460, %v434, 0
      %v555 = vsel %vm460, %v435, 0
      %557 = vmatprep.subr.bf16.mxu0 0
      %558 = vmatpush1.bf16.msra.mxu0 %v452
      %559 = vmatprep.subr.bf16.mxu0 0
      %560 = vmatpush1.bf16.msra.mxu0 %v453
      %561 = vmatprep.subr.bf16.mxu0 0
      %562 = vmatpush1.bf16.msra.mxu0 %v454
      %563 = vmatprep.subr.bf16.mxu0 0
      %564 = vmatpush1.bf16.msra.mxu0 %v455
      %565 = vmatprep.subr.bf16.mxu0 0
      %566 = vmatpush1.bf16.msra.mxu0 0
      %567 = vmatprep.subr.bf16.mxu0 0
      %568 = vmatpush1.bf16.msra.mxu0 0
      %569 = vmatprep.subr.bf16.mxu0 0
      %570 = vmatpush1.bf16.msra.mxu0 0
      %571 = vmatprep.subr.bf16.mxu0 0
      %572 = vmatpush1.bf16.msra.mxu0 0
      %573 = vmatprep.subr.bf16.mxu0 0
      %574 = vmatpush1.bf16.msra.mxu0 0
      %575 = vmatprep.subr.bf16.mxu0 0
      %576 = vmatpush1.bf16.msra.mxu0 0
      %577 = vmatprep.subr.bf16.mxu0 0
      %578 = vmatpush1.bf16.msra.mxu0 0
      %579 = vmatprep.subr.bf16.mxu0 0
      %580 = vmatpush1.bf16.msra.mxu0 0
      %581 = vmatprep.subr.bf16.mxu0 0
      %582 = vmatpush1.bf16.msra.mxu0 0
      %583 = vmatprep.subr.bf16.mxu0 0
      %584 = vmatpush1.bf16.msra.mxu0 0
      %585 = vmatprep.subr.bf16.mxu0 0
      %586 = vmatpush1.bf16.msra.mxu0 0
      %587 = vmatprep.subr.bf16.mxu0 0
      %588 = vmatpush1.bf16.msra.mxu0 0
      %589 = vmatprep.mubr.bf16.mxu0 0
      %590 = vmatmul.mubr.bf16.gmra.mrb[0].mxu0 %v462
      %v591 = vpop.f32.mrb[0].mxu0
      %v592 = vadd.f32 0.0, %v591
      %v593 = vpop.f32.mrb[0].mxu0
      %v594 = vpop.f32.mrb[0].mxu0
      %v595 = vadd.f32 0.0, %v594
      %v596 = vpop.f32.mrb[0].mxu0
      %597 = vmatprep.mubr.bf16.mxu0 0
      %598 = vmatmul.mubr.bf16.gmra.mrb[0].mxu0 %v465
      %v599 = vpop.f32.mrb[0].mxu0
      %v600 = vadd.f32 0.0, %v599
      %v601 = vpop.f32.mrb[0].mxu0
      %v602 = vpop.f32.mrb[0].mxu0
      %v603 = vadd.f32 0.0, %v602
      %v604 = vpop.f32.mrb[0].mxu0
      %605 = vmatprep.mubr.bf16.mxu0 0
      %606 = vmatmul.mubr.bf16.gmra.mrb[0].mxu0 %v468
      %v607 = vpop.f32.mrb[0].mxu0
      %v608 = vadd.f32 0.0, %v607
      %v609 = vpop.f32.mrb[0].mxu0
      %v610 = vpop.f32.mrb[0].mxu0
      %v611 = vadd.f32 0.0, %v610
      %v612 = vpop.f32.mrb[0].mxu0
      %613 = vmatprep.mubr.bf16.mxu0 0
      %614 = vmatmul.mubr.bf16.gmra.mrb[0].mxu0 %v471
      %v615 = vpop.f32.mrb[0].mxu0
      %v616 = vadd.f32 0.0, %v615
      %v617 = vpop.f32.mrb[0].mxu0
      %v618 = vpop.f32.mrb[0].mxu0
      %v619 = vadd.f32 0.0, %v618
      %v620 = vpop.f32.mrb[0].mxu0
      %621 = vmatprep.mubr.bf16.mxu0 0
      %622 = vmatmul.mubr.bf16.gmra.mrb[0].mxu0 %v474
      %v623 = vpop.f32.mrb[0].mxu0
      %v624 = vadd.f32 0.0, %v623
      %v625 = vpop.f32.mrb[0].mxu0
      %v626 = vpop.f32.mrb[0].mxu0
      %v627 = vadd.f32 0.0, %v626
      %v628 = vpop.f32.mrb[0].mxu0
      %629 = vmatprep.mubr.bf16.mxu0 0
      %630 = vmatmul.mubr.bf16.gmra.mrb[0].mxu0 %v477
      %v631 = vpop.f32.mrb[0].mxu0
      %v632 = vadd.f32 0.0, %v631
      %v633 = vpop.f32.mrb[0].mxu0
      %v634 = vpop.f32.mrb[0].mxu0
      %v635 = vadd.f32 0.0, %v634
      %v636 = vpop.f32.mrb[0].mxu0
      %637 = vmatprep.mubr.bf16.mxu0 0
      %638 = vmatmul.mubr.bf16.gmra.mrb[0].mxu0 %v480
      %v639 = vpop.f32.mrb[0].mxu0
      %v640 = vadd.f32 0.0, %v639
      %v641 = vpop.f32.mrb[0].mxu0
      %v642 = vpop.f32.mrb[0].mxu0
      %v643 = vadd.f32 0.0, %v642
      %v644 = vpop.f32.mrb[0].mxu0
      %645 = vmatprep.mubr.bf16.mxu0 0
      %646 = vmatmul.mubr.bf16.gmra.mrb[0].mxu0 %v483
      %v647 = vpop.f32.mrb[0].mxu0
      %v648 = vadd.f32 0.0, %v647
      %v649 = vpop.f32.mrb[0].mxu0
      %v650 = vpop.f32.mrb[0].mxu0
      %v651 = vadd.f32 0.0, %v650
      %v652 = vpop.f32.mrb[0].mxu0
      %653 = vmatprep.mubr.bf16.mxu0 0
      %654 = vmatmul.mubr.bf16.gmra.mrb[0].mxu0 %v486
      %v655 = vpop.f32.mrb[0].mxu0
      %v656 = vadd.f32 0.0, %v655
      %v657 = vpop.f32.mrb[0].mxu0
      %v658 = vpop.f32.mrb[0].mxu0
      %v659 = vadd.f32 0.0, %v658
      %v660 = vpop.f32.mrb[0].mxu0
      %661 = vmatprep.mubr.bf16.mxu0 0
      %662 = vmatmul.mubr.bf16.gmra.mrb[0].mxu0 %v489
      %v663 = vpop.f32.mrb[0].mxu0
      %v664 = vadd.f32 0.0, %v663
      %v665 = vpop.f32.mrb[0].mxu0
      %v666 = vpop.f32.mrb[0].mxu0
      %v667 = vadd.f32 0.0, %v666
      %v668 = vpop.f32.mrb[0].mxu0
      %669 = vmatprep.mubr.bf16.mxu0 0
      %670 = vmatmul.mubr.bf16.gmra.mrb[0].mxu0 %v492
      %v671 = vpop.f32.mrb[0].mxu0
      %v672 = vadd.f32 0.0, %v671
      %v673 = vpop.f32.mrb[0].mxu0
      %v674 = vpop.f32.mrb[0].mxu0
      %v675 = vadd.f32 0.0, %v674
      %v676 = vpop.f32.mrb[0].mxu0
      %677 = vmatprep.mubr.bf16.mxu0 0
      %678 = vmatmul.mubr.bf16.gmra.mrb[0].mxu0 %v495
      %v679 = vpop.f32.mrb[0].mxu0
      %v680 = vadd.f32 0.0, %v679
      %v681 = vpop.f32.mrb[0].mxu0
      %v682 = vpop.f32.mrb[0].mxu0
      %v683 = vadd.f32 0.0, %v682
      %v684 = vpop.f32.mrb[0].mxu0
      %685 = vmatprep.mubr.bf16.mxu0 0
      %686 = vmatmul.mubr.bf16.gmra.mrb[0].mxu0 %v498
      %v687 = vpop.f32.mrb[0].mxu0
      %v688 = vadd.f32 0.0, %v687
      %v689 = vpop.f32.mrb[0].mxu0
      %v690 = vpop.f32.mrb[0].mxu0
      %v691 = vadd.f32 0.0, %v690
      %v692 = vpop.f32.mrb[0].mxu0
      %693 = vmatprep.mubr.bf16.mxu0 0
      %694 = vmatmul.mubr.bf16.gmra.mrb[0].mxu0 %v501
      %v695 = vpop.f32.mrb[0].mxu0
      %v696 = vadd.f32 0.0, %v695
      %v697 = vpop.f32.mrb[0].mxu0
      %v698 = vpop.f32.mrb[0].mxu0
      %v699 = vadd.f32 0.0, %v698
      %v700 = vpop.f32.mrb[0].mxu0
      %701 = vmatprep.mubr.bf16.mxu0 0
      %702 = vmatmul.mubr.bf16.gmra.mrb[0].mxu0 %v504
      %v703 = vpop.f32.mrb[0].mxu0
      %v704 = vadd.f32 0.0, %v703
      %v705 = vpop.f32.mrb[0].mxu0
      %v706 = vpop.f32.mrb[0].mxu0
      %v707 = vadd.f32 0.0, %v706
      %v708 = vpop.f32.mrb[0].mxu0
      %709 = vmatprep.mubr.bf16.mxu0 0
      %710 = vmatmul.mubr.bf16.gmra.mrb[0].mxu0 %v507
      %v711 = vpop.f32.mrb[0].mxu0
      %v712 = vadd.f32 0.0, %v711
      %v713 = vpop.f32.mrb[0].mxu0
      %v714 = vpop.f32.mrb[0].mxu0
      %v715 = vadd.f32 0.0, %v714
      %v716 = vpop.f32.mrb[0].mxu0
      %717 = vmatprep.mubr.bf16.mxu0 0
      %718 = vmatmul.mubr.bf16.gmra.mrb[0].mxu0 %v510
      %v719 = vpop.f32.mrb[0].mxu0
      %v720 = vadd.f32 0.0, %v719
      %v721 = vpop.f32.mrb[0].mxu0
      %v722 = vpop.f32.mrb[0].mxu0
      %v723 = vadd.f32 0.0, %v722
      %v724 = vpop.f32.mrb[0].mxu0
      %725 = vmatprep.mubr.bf16.mxu0 0
      %726 = vmatmul.mubr.bf16.gmra.mrb[0].mxu0 %v513
      %v727 = vpop.f32.mrb[0].mxu0
      %v728 = vadd.f32 0.0, %v727
      %v729 = vpop.f32.mrb[0].mxu0
      %v730 = vpop.f32.mrb[0].mxu0
      %v731 = vadd.f32 0.0, %v730
      %v732 = vpop.f32.mrb[0].mxu0
      %733 = vmatprep.mubr.bf16.mxu0 0
      %734 = vmatmul.mubr.bf16.gmra.mrb[0].mxu0 %v516
      %v735 = vpop.f32.mrb[0].mxu0
      %v736 = vadd.f32 0.0, %v735
      %v737 = vpop.f32.mrb[0].mxu0
      %v738 = vpop.f32.mrb[0].mxu0
      %v739 = vadd.f32 0.0, %v738
      %v740 = vpop.f32.mrb[0].mxu0
      %741 = vmatprep.mubr.bf16.mxu0 0
      %742 = vmatmul.mubr.bf16.gmra.mrb[0].mxu0 %v519
      %v743 = vpop.f32.mrb[0].mxu0
      %v744 = vadd.f32 0.0, %v743
      %v745 = vpop.f32.mrb[0].mxu0
      %v746 = vpop.f32.mrb[0].mxu0
      %v747 = vadd.f32 0.0, %v746
      %v748 = vpop.f32.mrb[0].mxu0
      %749 = vmatprep.mubr.bf16.mxu0 0
      %750 = vmatmul.mubr.bf16.gmra.mrb[0].mxu0 %v522
      %v751 = vpop.f32.mrb[0].mxu0
      %v752 = vadd.f32 0.0, %v751
      %v753 = vpop.f32.mrb[0].mxu0
      %v754 = vpop.f32.mrb[0].mxu0
      %v755 = vadd.f32 0.0, %v754
      %v756 = vpop.f32.mrb[0].mxu0
      %757 = vmatprep.mubr.bf16.mxu0 0
      %758 = vmatmul.mubr.bf16.gmra.mrb[0].mxu0 %v525
      %v759 = vpop.f32.mrb[0].mxu0
      %v760 = vadd.f32 0.0, %v759
      %v761 = vpop.f32.mrb[0].mxu0
      %v762 = vpop.f32.mrb[0].mxu0
      %v763 = vadd.f32 0.0, %v762
      %v764 = vpop.f32.mrb[0].mxu0
      %765 = vmatprep.mubr.bf16.mxu0 0
      %766 = vmatmul.mubr.bf16.gmra.mrb[0].mxu0 %v528
      %v767 = vpop.f32.mrb[0].mxu0
      %v768 = vadd.f32 0.0, %v767
      %v769 = vpop.f32.mrb[0].mxu0
      %v770 = vpop.f32.mrb[0].mxu0
      %v771 = vadd.f32 0.0, %v770
      %v772 = vpop.f32.mrb[0].mxu0
      %773 = vmatprep.mubr.bf16.mxu0 0
      %774 = vmatmul.mubr.bf16.gmra.mrb[0].mxu0 %v531
      %v775 = vpop.f32.mrb[0].mxu0
      %v776 = vadd.f32 0.0, %v775
      %v777 = vpop.f32.mrb[0].mxu0
      %v778 = vpop.f32.mrb[0].mxu0
      %v779 = vadd.f32 0.0, %v778
      %v780 = vpop.f32.mrb[0].mxu0
      %781 = vmatprep.mubr.bf16.mxu0 0
      %782 = vmatmul.mubr.bf16.gmra.mrb[0].mxu0 %v534
      %v783 = vpop.f32.mrb[0].mxu0
      %v784 = vadd.f32 0.0, %v783
      %v785 = vpop.f32.mrb[0].mxu0
      %v786 = vpop.f32.mrb[0].mxu0
      %v787 = vadd.f32 0.0, %v786
      %v788 = vpop.f32.mrb[0].mxu0
      %789 = vmatprep.mubr.bf16.mxu0 0
      %790 = vmatmul.mubr.bf16.gmra.mrb[0].mxu0 %v537
      %v791 = vpop.f32.mrb[0].mxu0
      %v792 = vadd.f32 0.0, %v791
      %v793 = vpop.f32.mrb[0].mxu0
      %v794 = vpop.f32.mrb[0].mxu0
      %v795 = vadd.f32 0.0, %v794
      %v796 = vpop.f32.mrb[0].mxu0
      %797 = vmatprep.mubr.bf16.mxu0 0
      %798 = vmatmul.mubr.bf16.gmra.mrb[0].mxu0 %v540
      %v799 = vpop.f32.mrb[0].mxu0
      %v800 = vadd.f32 0.0, %v799
      %v801 = vpop.f32.mrb[0].mxu0
      %v802 = vpop.f32.mrb[0].mxu0
      %v803 = vadd.f32 0.0, %v802
      %v804 = vpop.f32.mrb[0].mxu0
      %805 = vmatprep.mubr.bf16.mxu0 0
      %806 = vmatmul.mubr.bf16.gmra.mrb[0].mxu0 %v543
      %v807 = vpop.f32.mrb[0].mxu0
      %v808 = vadd.f32 0.0, %v807
      %v809 = vpop.f32.mrb[0].mxu0
      %v810 = vpop.f32.mrb[0].mxu0
      %v811 = vadd.f32 0.0, %v810
      %v812 = vpop.f32.mrb[0].mxu0
      %813 = vmatprep.mubr.bf16.mxu0 0
      %814 = vmatmul.mubr.bf16.gmra.mrb[0].mxu0 %v546
      %v815 = vpop.f32.mrb[0].mxu0
      %v816 = vadd.f32 0.0, %v815
      %v817 = vpop.f32.mrb[0].mxu0
      %v818 = vpop.f32.mrb[0].mxu0
      %v819 = vadd.f32 0.0, %v818
      %v820 = vpop.f32.mrb[0].mxu0
      %821 = vmatprep.mubr.bf16.mxu0 0
      %822 = vmatmul.mubr.bf16.gmra.mrb[0].mxu0 %v549
      %v823 = vpop.f32.mrb[0].mxu0
      %v824 = vadd.f32 0.0, %v823
      %v825 = vpop.f32.mrb[0].mxu0
      %v826 = vpop.f32.mrb[0].mxu0
      %v827 = vadd.f32 0.0, %v826
      %v828 = vpop.f32.mrb[0].mxu0
      %829 = vmatprep.mubr.bf16.mxu0 0
      %830 = vmatmul.mubr.bf16.gmra.mrb[0].mxu0 %v552
      %v831 = vpop.f32.mrb[0].mxu0
      %v832 = vadd.f32 0.0, %v831
      %v833 = vpop.f32.mrb[0].mxu0
      %v834 = vpop.f32.mrb[0].mxu0
      %v835 = vadd.f32 0.0, %v834
      %v836 = vpop.f32.mrb[0].mxu0
      %837 = vmatprep.mubr.bf16.mxu0 0
      %838 = vmatmul.mubr.bf16.gmra.mrb[0].mxu0 %v555
      %v839 = vpop.f32.mrb[0].mxu0
      %v840 = vadd.f32 0.0, %v839
      %v841 = vpop.f32.mrb[0].mxu0
      %v842 = vpop.f32.mrb[0].mxu0
      %v843 = vadd.f32 0.0, %v842
      %v844 = vpop.f32.mrb[0].mxu0
      %845 = vdwg.mxu0
      %v846 = vtanh.pop %v592
      %v847 = vtanh.pop %v595
      %v848 = vtanh.pop %v600
      %v849 = vtanh.pop %v603
      %v850 = vtanh.pop %v608
      %v851 = vtanh.pop %v611
      %v852 = vtanh.pop %v616
      %v853 = vtanh.pop %v619
      %v854 = vtanh.pop %v624
      %v855 = vtanh.pop %v627
      %v856 = vtanh.pop %v632
      %v857 = vtanh.pop %v635
      %v858 = vtanh.pop %v640
      %v859 = vtanh.pop %v643
      %v860 = vtanh.pop %v648
      %v861 = vtanh.pop %v651
      %v862 = vtanh.pop %v656
      %v863 = vtanh.pop %v659
      %v864 = vtanh.pop %v664
      %v865 = vtanh.pop %v667
      %v866 = vtanh.pop %v672
      %v867 = vtanh.pop %v675
      %v868 = vtanh.pop %v680
      %v869 = vtanh.pop %v683
      %v870 = vtanh.pop %v688
      %v871 = vtanh.pop %v691
      %v872 = vtanh.pop %v696
      %v873 = vtanh.pop %v699
      %v874 = vtanh.pop %v704
      %v875 = vtanh.pop %v707
      %v876 = vtanh.pop %v712
      %v877 = vtanh.pop %v715
      %v878 = vtanh.pop %v720
      %v879 = vtanh.pop %v723
      %v880 = vtanh.pop %v728
      %v881 = vtanh.pop %v731
      %v882 = vtanh.pop %v736
      %v883 = vtanh.pop %v739
      %v884 = vtanh.pop %v744
      %v885 = vtanh.pop %v747
      %v886 = vtanh.pop %v752
      %v887 = vtanh.pop %v755
      %v888 = vtanh.pop %v760
      %v889 = vtanh.pop %v763
      %v890 = vtanh.pop %v768
      %v891 = vtanh.pop %v771
      %v892 = vtanh.pop %v776
      %v893 = vtanh.pop %v779
      %v894 = vtanh.pop %v784
      %v895 = vtanh.pop %v787
      %v896 = vtanh.pop %v792
      %v897 = vtanh.pop %v795
      %v898 = vtanh.pop %v800
      %v899 = vtanh.pop %v803
      %v900 = vtanh.pop %v808
      %v901 = vtanh.pop %v811
      %v902 = vtanh.pop %v816
      %v903 = vtanh.pop %v819
      %v904 = vtanh.pop %v824
      %v905 = vtanh.pop %v827
      %v906 = vtanh.pop %v832
      %v907 = vtanh.pop %v835
      %v908 = vtanh.pop %v840
      %v909 = vtanh.pop %v843
      %vm910 = vcmask 23552
      %911 = vst.msk [vmem:[%s201] sm:$0xff] %vm910, %v846
      %912 = vst.msk [vmem:[%s201 + $0x8] sm:$0xff] %vm910, %v847
      %913 = vst.msk [vmem:[%s201 + $0x10] sm:$0xff] %vm910, %v848
      %914 = vst.msk [vmem:[%s201 + $0x18] sm:$0xff] %vm910, %v849
      %915 = vst.msk [vmem:[%s201 + $0x20] sm:$0xff] %vm910, %v850
      %916 = vst.msk [vmem:[%s201 + $0x28] sm:$0xff] %vm910, %v851
      %917 = vst.msk [vmem:[%s201 + $0x30] sm:$0xff] %vm910, %v852
      %918 = vst.msk [vmem:[%s201 + $0x38] sm:$0xff] %vm910, %v853
      %919 = vst.msk [vmem:[%s201 + $0x40] sm:$0xff] %vm910, %v854
      %920 = vst.msk [vmem:[%s201 + $0x48] sm:$0xff] %vm910, %v855
      %921 = vst.msk [vmem:[%s201 + $0x50] sm:$0xff] %vm910, %v856
      %922 = vst.msk [vmem:[%s201 + $0x58] sm:$0xff] %vm910, %v857
      %923 = vst.msk [vmem:[%s201 + $0x60] sm:$0xff] %vm910, %v858
      %924 = vst.msk [vmem:[%s201 + $0x68] sm:$0xff] %vm910, %v859
      %925 = vst.msk [vmem:[%s201 + $0x70] sm:$0xff] %vm910, %v860
      %926 = vst.msk [vmem:[%s201 + $0x78] sm:$0xff] %vm910, %v861
      %927 = vst.msk [vmem:[%s201 + $0x80] sm:$0xff] %vm910, %v862
      %928 = vst.msk [vmem:[%s201 + $0x88] sm:$0xff] %vm910, %v863
      %929 = vst.msk [vmem:[%s201 + $0x90] sm:$0xff] %vm910, %v864
      %930 = vst.msk [vmem:[%s201 + $0x98] sm:$0xff] %vm910, %v865
      %931 = vst.msk [vmem:[%s201 + $0xa0] sm:$0xff] %vm910, %v866
      %932 = vst.msk [vmem:[%s201 + $0xa8] sm:$0xff] %vm910, %v867
      %933 = vst.msk [vmem:[%s201 + $0xb0] sm:$0xff] %vm910, %v868
      %934 = vst.msk [vmem:[%s201 + $0xb8] sm:$0xff] %vm910, %v869
      %935 = vst.msk [vmem:[%s201 + $0xc0] sm:$0xff] %vm910, %v870
      %936 = vst.msk [vmem:[%s201 + $0xc8] sm:$0xff] %vm910, %v871
      %937 = vst.msk [vmem:[%s201 + $0xd0] sm:$0xff] %vm910, %v872
      %938 = vst.msk [vmem:[%s201 + $0xd8] sm:$0xff] %vm910, %v873
      %939 = vst.msk [vmem:[%s201 + $0xe0] sm:$0xff] %vm910, %v874
      %940 = vst.msk [vmem:[%s201 + $0xe8] sm:$0xff] %vm910, %v875
      %941 = vst.msk [vmem:[%s201 + $0xf0] sm:$0xff] %vm910, %v876
      %942 = vst.msk [vmem:[%s201 + $0xf8] sm:$0xff] %vm910, %v877
      %943 = vst.msk [vmem:[%s201 + $0x100] sm:$0xff] %vm910, %v878
      %944 = vst.msk [vmem:[%s201 + $0x108] sm:$0xff] %vm910, %v879
      %945 = vst.msk [vmem:[%s201 + $0x110] sm:$0xff] %vm910, %v880
      %946 = vst.msk [vmem:[%s201 + $0x118] sm:$0xff] %vm910, %v881
      %947 = vst.msk [vmem:[%s201 + $0x120] sm:$0xff] %vm910, %v882
      %948 = vst.msk [vmem:[%s201 + $0x128] sm:$0xff] %vm910, %v883
      %949 = vst.msk [vmem:[%s201 + $0x130] sm:$0xff] %vm910, %v884
      %950 = vst.msk [vmem:[%s201 + $0x138] sm:$0xff] %vm910, %v885
      %951 = vst.msk [vmem:[%s201 + $0x140] sm:$0xff] %vm910, %v886
      %952 = vst.msk [vmem:[%s201 + $0x148] sm:$0xff] %vm910, %v887
      %953 = vst.msk [vmem:[%s201 + $0x150] sm:$0xff] %vm910, %v888
      %954 = vst.msk [vmem:[%s201 + $0x158] sm:$0xff] %vm910, %v889
      %955 = vst.msk [vmem:[%s201 + $0x160] sm:$0xff] %vm910, %v890
      %956 = vst.msk [vmem:[%s201 + $0x168] sm:$0xff] %vm910, %v891
      %957 = vst.msk [vmem:[%s201 + $0x170] sm:$0xff] %vm910, %v892
      %958 = vst.msk [vmem:[%s201 + $0x178] sm:$0xff] %vm910, %v893
      %959 = vst.msk [vmem:[%s201 + $0x180] sm:$0xff] %vm910, %v894
      %960 = vst.msk [vmem:[%s201 + $0x188] sm:$0xff] %vm910, %v895
      %961 = vst.msk [vmem:[%s201 + $0x190] sm:$0xff] %vm910, %v896
      %962 = vst.msk [vmem:[%s201 + $0x198] sm:$0xff] %vm910, %v897
      %963 = vst.msk [vmem:[%s201 + $0x1a0] sm:$0xff] %vm910, %v898
      %964 = vst.msk [vmem:[%s201 + $0x1a8] sm:$0xff] %vm910, %v899
      %965 = vst.msk [vmem:[%s201 + $0x1b0] sm:$0xff] %vm910, %v900
      %966 = vst.msk [vmem:[%s201 + $0x1b8] sm:$0xff] %vm910, %v901
      %967 = vst.msk [vmem:[%s201 + $0x1c0] sm:$0xff] %vm910, %v902
      %968 = vst.msk [vmem:[%s201 + $0x1c8] sm:$0xff] %vm910, %v903
      %969 = vst.msk [vmem:[%s201 + $0x1d0] sm:$0xff] %vm910, %v904
      %970 = vst.msk [vmem:[%s201 + $0x1d8] sm:$0xff] %vm910, %v905
      %971 = vst.msk [vmem:[%s201 + $0x1e0] sm:$0xff] %vm910, %v906
      %972 = vst.msk [vmem:[%s201 + $0x1e8] sm:$0xff] %vm910, %v907
      %973 = vst.msk [vmem:[%s201 + $0x1f0] sm:$0xff] %vm910, %v908
      %974 = vst.msk [vmem:[%s201 + $0x1f8] sm:$0xff] %vm910, %v909
      %s975 = smul.u32 64, %s18
      %p976 = scmp.lt.s32.totalorder %s17, 3
      %s977 = scalar_select %p976, %s17, 3
      %p978 = scmp.lt.s32.totalorder %s975, 255
      %s979 = scalar_select %p978, %s975, 255
      %s980 = smul.addr %s977, 256
      %s981 = sadd.s32 %s979, %s980
      %s982 = smul.addr %s981, 8
      %s983 = scalar_lea.vmem %s2, %s982
      // Predicated region
      $region29: #{generator_forward.17} parent=27 // pred_check
        %p984 = pneg %p99
      $region30: #{generator_forward.17} parent=27 // pred_check_branch
        %986 = sbr.rel (%p984) target = $region32
      $region31: #{generator_forward.17} parent=27 // pred_region
        %s987 = smul.u32 64, %s18
      $region32: #{generator_forward.17} parent=27 // pred_fallthru
        _
    $region28: #{generator_forward.17} parent=5 // pred_fallthru
      _
    %p988 = scmp.le.s32.totalorder 2, %s8
    // Predicated region
    $region33: #{generator_forward.17} parent=5 // pred_check
      %p989 = pneg %p988
    $region34: #{generator_forward.17} parent=5 // pred_check_branch
      %991 = sbr.rel (%p989) target = $region36
    $region35: #{generator_forward.17} parent=5 // pred_region
      %s992 = ssub.s32 %s8, 2
      // Predicated region
      $region37: #{generator_forward.17} parent=35 // pred_check
        %p993 = pneg %p105
      $region38: #{generator_forward.17} parent=35 // pred_check_branch
        %995 = sbr.rel (%p993) target = $region40
      $region39: #{generator_forward.17} parent=35 // pred_region
        %s996 = smul.u32 64, %s20
        %p997 = scmp.lt.s32.totalorder %s19, 3
        %s998 = scalar_select %p997, %s19, 3
        %p999 = scmp.lt.s32.totalorder %s996, 255
        %s1000 = scalar_select %p999, %s996, 255
        %s1001 = smul.addr %s998, 256
        %s1002 = sadd.s32 %s1000, %s1001
        %s1003 = smul.addr %s1002, 8
        %s1004 = scalar_lea.vmem %s2, %s1003
      $region40: #{generator_forward.17} parent=35 // pred_fallthru
        _
    $region36: #{generator_forward.17} parent=5 // pred_fallthru
      _
  $region6: #{generator_forward.17} parent=0 // loop_footer
    %s12 = sadd.s32 1, %s8
  $region7: #{generator_forward.17} parent=0 // loop_footer_branch
    %7 = sbr.rel target = $region3
  $region8: #{generator_forward.17} parent=0 // loop_exit
    _

</llo_original>
